<compile_context>
chip_gen: v6e
topology: v6e:2x2x1
jax: 0.10.0
libtpu: 0.0.40
codegen_flags: <defaults>
</compile_context>

<pallas_src>
import functools

import numpy as np
import jax
import jax.numpy as jnp
from jax import lax
from jax.experimental import pallas as pl
from jax.experimental.pallas import tpu as pltpu


# ----------------------------------------------------------------------------
# Helpers
# ----------------------------------------------------------------------------
def _round_up(x, m):
    return ((x + m - 1) // m) * m


def _choose_tiles(M, K, N):
    """Pick (tm, Mp, tn, Np, tk, Kp) — sublane/lane aligned, biggest tiles
    that keep >=2 M blocks when possible (v7x dual-TC) and stay tiny in VMEM."""
    # M tile (multiple of 8)
    Mp8 = _round_up(M, 8)
    if Mp8 <= 8:
        tm = 8
    elif Mp8 <= 512:
        tm = min(256, _round_up(Mp8 // 2, 8))     # aim for >= 2 blocks
    else:
        tm = 256
    Mp = _round_up(M, tm)

    # N tile: widest lane-dense tile dividing padded N
    Np = _round_up(N, 128)
    tn = next(t for t in (512, 256, 128) if Np % t == 0)

    # K tile: full-K whenever it fits comfortably, else 2048-wide blocks
    Kp = _round_up(K, 8)
    if Kp <= 2048:
        tk = Kp
    else:
        tk = 2048
        Kp = _round_up(K, tk)
    return tm, Mp, tn, Np, tk, Kp


def _vmem_limit(tm, tn, tk, out_bytes):
    # double-buffered bf16 inputs + f32 bias, double-buffered output, f32 acc
    inputs = 2 * (tm * tk * 2 + tk * tn * 2 + tn * 4)
    outputs = 2 * tm * tn * out_bytes
    scratch = tm * tn * 4
    need = inputs + outputs + scratch
    # 2x headroom for Mosaic internal scratch, capped below v7x's 64 MiB VMEM.
    return int(min(48 * 1024 * 1024, max(8 * 1024 * 1024, 2 * need)))


# ----------------------------------------------------------------------------
# Pallas kernel: tiled matmul + bias (+ LeakyReLU(0.2)) with f32 accumulator
# ----------------------------------------------------------------------------
def _matmul_kernel(p_ref, w_ref, b_ref, o_ref, acc_ref, *, act):
    # p_ref: (tm, tk) bf16, w_ref: (tk, tn) bf16, b_ref: (1, tn) f32
    @pl.when(pl.program_id(2) == 0)
    def _():
        acc_ref[...] = jnp.zeros_like(acc_ref)

    acc_ref[...] += jnp.dot(p_ref[...], w_ref[...],
                            preferred_element_type=jnp.float32)

    @pl.when(pl.program_id(2) == pl.num_programs(2) - 1)
    def _():
        h = acc_ref[...] + b_ref[...]
        if act:
            h = jnp.where(h >= 0, h, 0.2 * h)       # LeakyReLU(0.2), f32 epilogue
        o_ref[...] = h.astype(o_ref.dtype)


def _fused_matmul(p, w, b, *, act, out_dtype):
    """out[:M,:N] = act(p @ w + b), tiled over (M, N, K) with padding to
    lane/sublane-friendly sizes.  Zero padding is exact (padded K rows are zero
    on both operands, padded N columns have zero weight and bias)."""
    M, K = p.shape
    K2, N = w.shape
    assert K == K2

    tm, Mp, tn, Np, tk, Kp = _choose_tiles(M, K, N)

    p = jnp.pad(p, ((0, Mp - M), (0, Kp - K))).astype(jnp.bfloat16)
    w = jnp.pad(w, ((0, Kp - K), (0, Np - N))).astype(jnp.bfloat16)
    b = jnp.pad(b.reshape(1, N), ((0, 0), (0, Np - N))).astype(jnp.float32)

    grid = (Mp // tm, Np // tn, Kp // tk)
    out_bytes = jnp.dtype(out_dtype).itemsize

    out = pl.pallas_call(
        functools.partial(_matmul_kernel, act=act),
        out_shape=jax.ShapeDtypeStruct((Mp, Np), out_dtype),
        grid_spec=pltpu.PrefetchScalarGridSpec(
            num_scalar_prefetch=0,
            grid=grid,
            in_specs=[
                pl.BlockSpec((tm, tk), lambda i, j, k: (i, k)),
                pl.BlockSpec((tk, tn), lambda i, j, k: (k, j)),
                pl.BlockSpec((1, tn), lambda i, j, k: (0, j)),
            ],
            out_specs=pl.BlockSpec((tm, tn), lambda i, j, k: (i, j)),
            scratch_shapes=[pltpu.VMEM((tm, tn), jnp.float32)],
        ),
        compiler_params=pltpu.CompilerParams(
            dimension_semantics=("parallel", "parallel", "arbitrary"),
            vmem_limit_bytes=_vmem_limit(tm, tn, tk, out_bytes),
        ),
    )(p, w, b)
    return out[:M, :N]


# ----------------------------------------------------------------------------
# Layout glue (plain JAX): im2col for a k x k / stride / pad conv in NHWC.
# Patch channel order is (ki, kj, cin), matching transpose(2,3,1,0) below.
# ----------------------------------------------------------------------------
def _im2col(x_nhwc, k, stride, pad):
    B, H, W, C = x_nhwc.shape
    xp = jnp.pad(x_nhwc, ((0, 0), (pad, pad), (pad, pad), (0, 0)))
    Ho = (H + 2 * pad - k) // stride + 1
    Wo = (W + 2 * pad - k) // stride + 1
    cols = []
    for ki in range(k):
        for kj in range(k):
            cols.append(
                xp[:, ki:ki + stride * Ho:stride, kj:kj + stride * Wo:stride, :]
            )
    patches = jnp.concatenate(cols, axis=-1)        # (B, Ho, Wo, k*k*C)
    return patches.reshape(B * Ho * Wo, k * k * C), B, Ho, Wo


def _weight_to_matmul(w_oihw):
    # (Cout, Cin, kh, kw) -> (kh*kw*Cin, Cout), matching _im2col ordering.
    cout, cin, kh, kw = w_oihw.shape
    return jnp.transpose(w_oihw, (2, 3, 1, 0)).reshape(kh * kw * cin, cout)


# ----------------------------------------------------------------------------
# Pallas-backed layers
# ----------------------------------------------------------------------------
def _feature_layer(x_nhwc, w_mat, bias):
    patches, B, Ho, Wo = _im2col(x_nhwc, k=4, stride=2, pad=1)
    Cout = w_mat.shape[1]
    out = _fused_matmul(patches, w_mat, bias, act=True, out_dtype=jnp.bfloat16)
    return out.reshape(B, Ho, Wo, Cout)


def _dense_encode(x_nhwc, w_mat, bias):
    # Conv with kernel == full spatial extent, pad 0, stride 1 <=> flatten+matmul.
    B = x_nhwc.shape[0]
    patches = x_nhwc.reshape(B, -1)                 # NHWC flatten == (ki,kj,c) order
    return _fused_matmul(patches, w_mat, bias, act=False, out_dtype=jnp.float32)


# ----------------------------------------------------------------------------
# Parameters (deterministic synthetic init, shapes as in Embedder.__init__)
# ----------------------------------------------------------------------------
def init_embedder_params(key, in_channels, in_spatial, emb_dim, n_down=4):
    params = {"features": []}
    cin = in_channels
    for scale in range(n_down):
        cout = 64 * min(2 ** scale, 16)
        key, kw, kl, ks = jax.random.split(key, 4)
        w = jax.random.normal(kw, (cout, cin, 4, 4), jnp.float32) / np.sqrt(cin * 16)
        loc = 0.1 * jax.random.normal(kl, (cout,), jnp.float32)
        sc = 1.0 + 0.1 * jax.random.normal(ks, (cout,), jnp.float32)
        # Fold ActNorm into the matmul: scale*(Wx+loc) == (scale*W)x + scale*loc
        params["features"].append(
            dict(
                w=w, loc=loc, scale=sc,
                w_mat=_weight_to_matmul(w) * sc[None, :],
                b=sc * loc,
            )
        )
        cin = cout
    bottleneck = in_spatial // 2 ** n_down
    key, kw, kb = jax.random.split(key, 3)
    wd = jax.random.normal(kw, (emb_dim, cin, bottleneck, bottleneck), jnp.float32)
    wd = wd / np.sqrt(cin * bottleneck * bottleneck)
    bd = 0.1 * jax.random.normal(kb, (emb_dim,), jnp.float32)
    params["dense"] = dict(w=wd, w_mat=_weight_to_matmul(wd), b=bd)
    return params


# ----------------------------------------------------------------------------
# Forward pass (NCHW in, like the PyTorch module; NHWC / bf16 internally)
# ----------------------------------------------------------------------------
def embedder_forward(x_nchw, params):
    h = jnp.transpose(x_nchw, (0, 2, 3, 1))          # NCHW -> NHWC
    for p in params["features"]:
        h = _feature_layer(h, p["w_mat"], p["b"])
    out = _dense_encode(h, params["dense"]["w_mat"], params["dense"]["b"])
    return out                                       # (B, emb_dim) == squeeze(-1).squeeze(-1)


# ----------------------------------------------------------------------------
# Pure-JAX f32 reference (semantics of the PyTorch module) for validation
# ----------------------------------------------------------------------------
def embedder_reference(x_nchw, params):
    h = x_nchw
    for p in params["features"]:
        h = lax.conv_general_dilated(
            h, p["w"], window_strides=(2, 2), padding=((1, 1), (1, 1)),
            dimension_numbers=("NCHW", "OIHW", "NCHW"))
        h = p["scale"].reshape(1, -1, 1, 1) * (h + p["loc"].reshape(1, -1, 1, 1))
        h = jnp.where(h >= 0, h, 0.2 * h)
    h = lax.conv_general_dilated(
        h, params["dense"]["w"], window_strides=(1, 1), padding="VALID",
        dimension_numbers=("NCHW", "OIHW", "NCHW"))
    h = h + params["dense"]["b"].reshape(1, -1, 1, 1)
    return h[:, :, 0, 0]


if __name__ == "__main__":
    B, C, S = 2, 4, 16          # batch, in_channels, in_spatial_size
    emb_dim, n_down = 32, 4

    key = jax.random.PRNGKey(0)
    kx, kp = jax.random.split(key)
    x = jax.random.normal(kx, (B, C, S, S), jnp.float32)   # NCHW like PyTorch
    params = init_embedder_params(kp, C, S, emb_dim, n_down)

    fwd = jax.jit(embedder_forward)
    out = jax.block_until_ready(fwd(x, params))

    assert out.shape == (B, emb_dim), out.shape
    assert bool(jnp.all(jnp.isfinite(out)))

    ref = jax.block_until_ready(embedder_reference(x, params))
    # bf16 operands (f32 accumulation) vs f32 reference -> loosened tolerance.
    err = float(jnp.max(jnp.abs(out - ref)))
    assert bool(jnp.allclose(out, ref, atol=1.5e-1, rtol=1.5e-1)), err

    print("KERNEL_OK")
</pallas_src>

<mosaic_0001>
module attributes {stable_mosaic.version = 11 : i64} {
  func.func @_matmul_kernel(%arg0: i32, %arg1: i32, %arg2: i32, %arg3: memref<64x64xbf16, #tpu.memory_space<vmem>>, %arg4: memref<64x128xbf16, #tpu.memory_space<vmem>>, %arg5: memref<1x128xf32, #tpu.memory_space<vmem>>, %arg6: memref<64x128xbf16, #tpu.memory_space<vmem>>, %arg7: memref<64x128xf32, #tpu.memory_space<vmem>>) attributes {dimension_semantics = [#tpu.dimension_semantics<parallel>, #tpu.dimension_semantics<parallel>, #tpu.dimension_semantics<arbitrary>], iteration_bounds = array<i64: 2, 1, 1>, scalar_prefetch = 0 : i64, scratch_operands = 1 : i64, tpu.core_type = #tpu.core_type<tc>, window_params = [{transform_indices = @transform_0, window_bounds = array<i64: 64, 64>}, {transform_indices = @transform_1, window_bounds = array<i64: 64, 128>}, {transform_indices = @transform_2, window_bounds = array<i64: 1, 128>}, {transform_indices = @transform_3, window_bounds = array<i64: 64, 128>}]} {
    %c0_i32 = arith.constant 0 : i32
    %0 = arith.cmpi eq, %arg2, %c0_i32 : i32
    %1 = arith.extui %0 : i1 to i32
    %c0_i32_0 = arith.constant 0 : i32
    %2 = arith.cmpi ne, %1, %c0_i32_0 : i32
    scf.if %2 {
      %cst_10 = arith.constant 0.000000e+00 : f32
      %12 = vector.broadcast %cst_10 : f32 to vector<64x128xf32>
      %c0_11 = arith.constant 0 : index
      %c0_12 = arith.constant 0 : index
      %13 = vector.load %arg7[%c0_11, %c0_12] : memref<64x128xf32, #tpu.memory_space<vmem>>, vector<64x128xf32>
      tpu.vector_store %arg7[%c0_11, %c0_12], %12 {strides = array<i32>} : memref<64x128xf32, #tpu.memory_space<vmem>>, vector<64x128xf32>,
    } else {
    }
    %c0 = arith.constant 0 : index
    %c0_1 = arith.constant 0 : index
    %3 = vector.load %arg7[%c0, %c0_1] : memref<64x128xf32, #tpu.memory_space<vmem>>, vector<64x128xf32>
    %c0_2 = arith.constant 0 : index
    %c0_3 = arith.constant 0 : index
    %4 = vector.load %arg3[%c0_2, %c0_3] : memref<64x64xbf16, #tpu.memory_space<vmem>>, vector<64x64xbf16>
    %c0_4 = arith.constant 0 : index
    %c0_5 = arith.constant 0 : index
    %5 = vector.load %arg4[%c0_4, %c0_5] : memref<64x128xbf16, #tpu.memory_space<vmem>>, vector<64x128xbf16>
    %cst = arith.constant dense<0.000000e+00> : vector<64x128xf32>
    %6 = tpu.matmul %4, %5, %cst {dimension_numbers = #tpu.dot_dimension_numbers<[1], [0], [0], [1], [0, 0, 1, 1], [], []>} : vector<64x64xbf16>, vector<64x128xbf16>, vector<64x128xf32> -> vector<64x128xf32>
    %7 = arith.addf %3, %6 : vector<64x128xf32>
    %c0_6 = arith.constant 0 : index
    %c0_7 = arith.constant 0 : index
    %8 = vector.load %arg7[%c0_6, %c0_7] : memref<64x128xf32, #tpu.memory_space<vmem>>, vector<64x128xf32>
    tpu.vector_store %arg7[%c0_6, %c0_7], %7 {strides = array<i32>} : memref<64x128xf32, #tpu.memory_space<vmem>>, vector<64x128xf32>,
    %c0_i32_8 = arith.constant 0 : i32
    %9 = arith.cmpi eq, %arg2, %c0_i32_8 : i32
    %10 = arith.extui %9 : i1 to i32
    %c0_i32_9 = arith.constant 0 : i32
    %11 = arith.cmpi ne, %10, %c0_i32_9 : i32
    scf.if %11 {
      %c0_10 = arith.constant 0 : index
      %c0_11 = arith.constant 0 : index
      %12 = vector.load %arg7[%c0_10, %c0_11] : memref<64x128xf32, #tpu.memory_space<vmem>>, vector<64x128xf32>
      %c0_12 = arith.constant 0 : index
      %c0_13 = arith.constant 0 : index
      %13 = vector.load %arg5[%c0_12, %c0_13] : memref<1x128xf32, #tpu.memory_space<vmem>>, vector<1x128xf32>
      %14 = vector.broadcast %13 : vector<1x128xf32> to vector<64x128xf32>
      %15 = arith.addf %12, %14 : vector<64x128xf32>
      %cst_14 = arith.constant 0.000000e+00 : f32
      %16 = vector.broadcast %cst_14 : f32 to vector<64x128xf32>
      %17 = arith.cmpf oge, %15, %16 : vector<64x128xf32>
      %cst_15 = arith.constant 2.000000e-01 : f32
      %18 = vector.broadcast %cst_15 : f32 to vector<64x128xf32>
      %19 = arith.mulf %18, %15 : vector<64x128xf32>
      %20 = arith.select %17, %15, %19 : vector<64x128xi1>, vector<64x128xf32>
      %21 = arith.truncf %20 : vector<64x128xf32> to vector<64x128xbf16>
      %c0_16 = arith.constant 0 : index
      %c0_17 = arith.constant 0 : index
      %22 = vector.load %arg6[%c0_16, %c0_17] : memref<64x128xbf16, #tpu.memory_space<vmem>>, vector<64x128xbf16>
      tpu.vector_store %arg6[%c0_16, %c0_17], %21 {strides = array<i32>} : memref<64x128xbf16, #tpu.memory_space<vmem>>, vector<64x128xbf16>,
    } else {
    }
    return
  }
  func.func @transform_0(%arg0: i32, %arg1: i32, %arg2: i32) -> (i32, i32) {
    %c0_i32 = arith.constant 0 : i32
    return %arg0, %arg2 : i32, i32
  }
  func.func @transform_1(%arg0: i32, %arg1: i32, %arg2: i32) -> (i32, i32) {
    %c0_i32 = arith.constant 0 : i32
    return %arg2, %arg1 : i32, i32
  }
  func.func @transform_2(%arg0: i32, %arg1: i32, %arg2: i32) -> (i32, i32) {
    %c0_i32 = arith.constant 0 : i32
    %c0_i32_0 = arith.constant 0 : i32
    return %c0_i32, %arg1 : i32, i32
  }
  func.func @transform_3(%arg0: i32, %arg1: i32, %arg2: i32) -> (i32, i32) {
    %c0_i32 = arith.constant 0 : i32
    return %arg0, %arg1 : i32, i32
  }
}

module attributes {stable_mosaic.version = 11 : i64} {
  func.func @_matmul_kernel(%arg0: i32, %arg1: i32, %arg2: i32, %arg3: memref<16x1024xbf16, #tpu.memory_space<vmem>>, %arg4: memref<1024x128xbf16, #tpu.memory_space<vmem>>, %arg5: memref<1x128xf32, #tpu.memory_space<vmem>>, %arg6: memref<16x128xbf16, #tpu.memory_space<vmem>>, %arg7: memref<16x128xf32, #tpu.memory_space<vmem>>) attributes {dimension_semantics = [#tpu.dimension_semantics<parallel>, #tpu.dimension_semantics<parallel>, #tpu.dimension_semantics<arbitrary>], iteration_bounds = array<i64: 2, 1, 1>, scalar_prefetch = 0 : i64, scratch_operands = 1 : i64, tpu.core_type = #tpu.core_type<tc>, window_params = [{transform_indices = @transform_0, window_bounds = array<i64: 16, 1024>}, {transform_indices = @transform_1, window_bounds = array<i64: 1024, 128>}, {transform_indices = @transform_2, window_bounds = array<i64: 1, 128>}, {transform_indices = @transform_3, window_bounds = array<i64: 16, 128>}]} {
    %c0_i32 = arith.constant 0 : i32
    %0 = arith.cmpi eq, %arg2, %c0_i32 : i32
    %1 = arith.extui %0 : i1 to i32
    %c0_i32_0 = arith.constant 0 : i32
    %2 = arith.cmpi ne, %1, %c0_i32_0 : i32
    scf.if %2 {
      %cst_10 = arith.constant 0.000000e+00 : f32
      %12 = vector.broadcast %cst_10 : f32 to vector<16x128xf32>
      %c0_11 = arith.constant 0 : index
      %c0_12 = arith.constant 0 : index
      %13 = vector.load %arg7[%c0_11, %c0_12] : memref<16x128xf32, #tpu.memory_space<vmem>>, vector<16x128xf32>
      tpu.vector_store %arg7[%c0_11, %c0_12], %12 {strides = array<i32>} : memref<16x128xf32, #tpu.memory_space<vmem>>, vector<16x128xf32>,
    } else {
    }
    %c0 = arith.constant 0 : index
    %c0_1 = arith.constant 0 : index
    %3 = vector.load %arg7[%c0, %c0_1] : memref<16x128xf32, #tpu.memory_space<vmem>>, vector<16x128xf32>
    %c0_2 = arith.constant 0 : index
    %c0_3 = arith.constant 0 : index
    %4 = vector.load %arg3[%c0_2, %c0_3] : memref<16x1024xbf16, #tpu.memory_space<vmem>>, vector<16x1024xbf16>
    %c0_4 = arith.constant 0 : index
    %c0_5 = arith.constant 0 : index
    %5 = vector.load %arg4[%c0_4, %c0_5] : memref<1024x128xbf16, #tpu.memory_space<vmem>>, vector<1024x128xbf16>
    %cst = arith.constant dense<0.000000e+00> : vector<16x128xf32>
    %6 = tpu.matmul %4, %5, %cst {dimension_numbers = #tpu.dot_dimension_numbers<[1], [0], [0], [1], [0, 0, 1, 1], [], []>} : vector<16x1024xbf16>, vector<1024x128xbf16>, vector<16x128xf32> -> vector<16x128xf32>
    %7 = arith.addf %3, %6 : vector<16x128xf32>
    %c0_6 = arith.constant 0 : index
    %c0_7 = arith.constant 0 : index
    %8 = vector.load %arg7[%c0_6, %c0_7] : memref<16x128xf32, #tpu.memory_space<vmem>>, vector<16x128xf32>
    tpu.vector_store %arg7[%c0_6, %c0_7], %7 {strides = array<i32>} : memref<16x128xf32, #tpu.memory_space<vmem>>, vector<16x128xf32>,
    %c0_i32_8 = arith.constant 0 : i32
    %9 = arith.cmpi eq, %arg2, %c0_i32_8 : i32
    %10 = arith.extui %9 : i1 to i32
    %c0_i32_9 = arith.constant 0 : i32
    %11 = arith.cmpi ne, %10, %c0_i32_9 : i32
    scf.if %11 {
      %c0_10 = arith.constant 0 : index
      %c0_11 = arith.constant 0 : index
      %12 = vector.load %arg7[%c0_10, %c0_11] : memref<16x128xf32, #tpu.memory_space<vmem>>, vector<16x128xf32>
      %c0_12 = arith.constant 0 : index
      %c0_13 = arith.constant 0 : index
      %13 = vector.load %arg5[%c0_12, %c0_13] : memref<1x128xf32, #tpu.memory_space<vmem>>, vector<1x128xf32>
      %14 = vector.broadcast %13 : vector<1x128xf32> to vector<16x128xf32>
      %15 = arith.addf %12, %14 : vector<16x128xf32>
      %cst_14 = arith.constant 0.000000e+00 : f32
      %16 = vector.broadcast %cst_14 : f32 to vector<16x128xf32>
      %17 = arith.cmpf oge, %15, %16 : vector<16x128xf32>
      %cst_15 = arith.constant 2.000000e-01 : f32
      %18 = vector.broadcast %cst_15 : f32 to vector<16x128xf32>
      %19 = arith.mulf %18, %15 : vector<16x128xf32>
      %20 = arith.select %17, %15, %19 : vector<16x128xi1>, vector<16x128xf32>
      %21 = arith.truncf %20 : vector<16x128xf32> to vector<16x128xbf16>
      %c0_16 = arith.constant 0 : index
      %c0_17 = arith.constant 0 : index
      %22 = vector.load %arg6[%c0_16, %c0_17] : memref<16x128xbf16, #tpu.memory_space<vmem>>, vector<16x128xbf16>
      tpu.vector_store %arg6[%c0_16, %c0_17], %21 {strides = array<i32>} : memref<16x128xbf16, #tpu.memory_space<vmem>>, vector<16x128xbf16>,
    } else {
    }
    return
  }
  func.func @transform_0(%arg0: i32, %arg1: i32, %arg2: i32) -> (i32, i32) {
    %c0_i32 = arith.constant 0 : i32
    return %arg0, %arg2 : i32, i32
  }
  func.func @transform_1(%arg0: i32, %arg1: i32, %arg2: i32) -> (i32, i32) {
    %c0_i32 = arith.constant 0 : i32
    return %arg2, %arg1 : i32, i32
  }
  func.func @transform_2(%arg0: i32, %arg1: i32, %arg2: i32) -> (i32, i32) {
    %c0_i32 = arith.constant 0 : i32
    %c0_i32_0 = arith.constant 0 : i32
    return %c0_i32, %arg1 : i32, i32
  }
  func.func @transform_3(%arg0: i32, %arg1: i32, %arg2: i32) -> (i32, i32) {
    %c0_i32 = arith.constant 0 : i32
    return %arg0, %arg1 : i32, i32
  }
}

module attributes {stable_mosaic.version = 11 : i64} {
  func.func @_matmul_kernel(%arg0: i32, %arg1: i32, %arg2: i32, %arg3: memref<8x2048xbf16, #tpu.memory_space<vmem>>, %arg4: memref<2048x256xbf16, #tpu.memory_space<vmem>>, %arg5: memref<1x256xf32, #tpu.memory_space<vmem>>, %arg6: memref<8x256xbf16, #tpu.memory_space<vmem>>, %arg7: memref<8x256xf32, #tpu.memory_space<vmem>>) attributes {dimension_semantics = [#tpu.dimension_semantics<parallel>, #tpu.dimension_semantics<parallel>, #tpu.dimension_semantics<arbitrary>], iteration_bounds = array<i64: 1, 1, 1>, scalar_prefetch = 0 : i64, scratch_operands = 1 : i64, tpu.core_type = #tpu.core_type<tc>, window_params = [{transform_indices = @transform_0, window_bounds = array<i64: 8, 2048>}, {transform_indices = @transform_1, window_bounds = array<i64: 2048, 256>}, {transform_indices = @transform_2, window_bounds = array<i64: 1, 256>}, {transform_indices = @transform_3, window_bounds = array<i64: 8, 256>}]} {
    %c0_i32 = arith.constant 0 : i32
    %0 = arith.cmpi eq, %arg2, %c0_i32 : i32
    %1 = arith.extui %0 : i1 to i32
    %c0_i32_0 = arith.constant 0 : i32
    %2 = arith.cmpi ne, %1, %c0_i32_0 : i32
    scf.if %2 {
      %cst_10 = arith.constant 0.000000e+00 : f32
      %12 = vector.broadcast %cst_10 : f32 to vector<8x256xf32>
      %c0_11 = arith.constant 0 : index
      %c0_12 = arith.constant 0 : index
      %13 = vector.load %arg7[%c0_11, %c0_12] : memref<8x256xf32, #tpu.memory_space<vmem>>, vector<8x256xf32>
      tpu.vector_store %arg7[%c0_11, %c0_12], %12 {strides = array<i32>} : memref<8x256xf32, #tpu.memory_space<vmem>>, vector<8x256xf32>,
    } else {
    }
    %c0 = arith.constant 0 : index
    %c0_1 = arith.constant 0 : index
    %3 = vector.load %arg7[%c0, %c0_1] : memref<8x256xf32, #tpu.memory_space<vmem>>, vector<8x256xf32>
    %c0_2 = arith.constant 0 : index
    %c0_3 = arith.constant 0 : index
    %4 = vector.load %arg3[%c0_2, %c0_3] : memref<8x2048xbf16, #tpu.memory_space<vmem>>, vector<8x2048xbf16>
    %c0_4 = arith.constant 0 : index
    %c0_5 = arith.constant 0 : index
    %5 = vector.load %arg4[%c0_4, %c0_5] : memref<2048x256xbf16, #tpu.memory_space<vmem>>, vector<2048x256xbf16>
    %cst = arith.constant dense<0.000000e+00> : vector<8x256xf32>
    %6 = tpu.matmul %4, %5, %cst {dimension_numbers = #tpu.dot_dimension_numbers<[1], [0], [0], [1], [0, 0, 1, 1], [], []>} : vector<8x2048xbf16>, vector<2048x256xbf16>, vector<8x256xf32> -> vector<8x256xf32>
    %7 = arith.addf %3, %6 : vector<8x256xf32>
    %c0_6 = arith.constant 0 : index
    %c0_7 = arith.constant 0 : index
    %8 = vector.load %arg7[%c0_6, %c0_7] : memref<8x256xf32, #tpu.memory_space<vmem>>, vector<8x256xf32>
    tpu.vector_store %arg7[%c0_6, %c0_7], %7 {strides = array<i32>} : memref<8x256xf32, #tpu.memory_space<vmem>>, vector<8x256xf32>,
    %c0_i32_8 = arith.constant 0 : i32
    %9 = arith.cmpi eq, %arg2, %c0_i32_8 : i32
    %10 = arith.extui %9 : i1 to i32
    %c0_i32_9 = arith.constant 0 : i32
    %11 = arith.cmpi ne, %10, %c0_i32_9 : i32
    scf.if %11 {
      %c0_10 = arith.constant 0 : index
      %c0_11 = arith.constant 0 : index
      %12 = vector.load %arg7[%c0_10, %c0_11] : memref<8x256xf32, #tpu.memory_space<vmem>>, vector<8x256xf32>
      %c0_12 = arith.constant 0 : index
      %c0_13 = arith.constant 0 : index
      %13 = vector.load %arg5[%c0_12, %c0_13] : memref<1x256xf32, #tpu.memory_space<vmem>>, vector<1x256xf32>
      %14 = vector.broadcast %13 : vector<1x256xf32> to vector<8x256xf32>
      %15 = arith.addf %12, %14 : vector<8x256xf32>
      %cst_14 = arith.constant 0.000000e+00 : f32
      %16 = vector.broadcast %cst_14 : f32 to vector<8x256xf32>
      %17 = arith.cmpf oge, %15, %16 : vector<8x256xf32>
      %cst_15 = arith.constant 2.000000e-01 : f32
      %18 = vector.broadcast %cst_15 : f32 to vector<8x256xf32>
      %19 = arith.mulf %18, %15 : vector<8x256xf32>
      %20 = arith.select %17, %15, %19 : vector<8x256xi1>, vector<8x256xf32>
      %21 = arith.truncf %20 : vector<8x256xf32> to vector<8x256xbf16>
      %c0_16 = arith.constant 0 : index
      %c0_17 = arith.constant 0 : index
      %22 = vector.load %arg6[%c0_16, %c0_17] : memref<8x256xbf16, #tpu.memory_space<vmem>>, vector<8x256xbf16>
      tpu.vector_store %arg6[%c0_16, %c0_17], %21 {strides = array<i32>} : memref<8x256xbf16, #tpu.memory_space<vmem>>, vector<8x256xbf16>,
    } else {
    }
    return
  }
  func.func @transform_0(%arg0: i32, %arg1: i32, %arg2: i32) -> (i32, i32) {
    %c0_i32 = arith.constant 0 : i32
    return %arg0, %arg2 : i32, i32
  }
  func.func @transform_1(%arg0: i32, %arg1: i32, %arg2: i32) -> (i32, i32) {
    %c0_i32 = arith.constant 0 : i32
    return %arg2, %arg1 : i32, i32
  }
  func.func @transform_2(%arg0: i32, %arg1: i32, %arg2: i32) -> (i32, i32) {
    %c0_i32 = arith.constant 0 : i32
    %c0_i32_0 = arith.constant 0 : i32
    return %c0_i32, %arg1 : i32, i32
  }
  func.func @transform_3(%arg0: i32, %arg1: i32, %arg2: i32) -> (i32, i32) {
    %c0_i32 = arith.constant 0 : i32
    return %arg0, %arg1 : i32, i32
  }
}

module attributes {stable_mosaic.version = 11 : i64} {
  func.func @_matmul_kernel(%arg0: i32, %arg1: i32, %arg2: i32, %arg3: memref<8x2048xbf16, #tpu.memory_space<vmem>>, %arg4: memref<2048x512xbf16, #tpu.memory_space<vmem>>, %arg5: memref<1x512xf32, #tpu.memory_space<vmem>>, %arg6: memref<8x512xbf16, #tpu.memory_space<vmem>>, %arg7: memref<8x512xf32, #tpu.memory_space<vmem>>) attributes {dimension_semantics = [#tpu.dimension_semantics<parallel>, #tpu.dimension_semantics<parallel>, #tpu.dimension_semantics<arbitrary>], iteration_bounds = array<i64: 1, 1, 2>, scalar_prefetch = 0 : i64, scratch_operands = 1 : i64, tpu.core_type = #tpu.core_type<tc>, window_params = [{transform_indices = @transform_0, window_bounds = array<i64: 8, 2048>}, {transform_indices = @transform_1, window_bounds = array<i64: 2048, 512>}, {transform_indices = @transform_2, window_bounds = array<i64: 1, 512>}, {transform_indices = @transform_3, window_bounds = array<i64: 8, 512>}]} {
    %c0_i32 = arith.constant 0 : i32
    %0 = arith.cmpi eq, %arg2, %c0_i32 : i32
    %1 = arith.extui %0 : i1 to i32
    %c0_i32_0 = arith.constant 0 : i32
    %2 = arith.cmpi ne, %1, %c0_i32_0 : i32
    scf.if %2 {
      %cst_9 = arith.constant 0.000000e+00 : f32
      %12 = vector.broadcast %cst_9 : f32 to vector<8x512xf32>
      %c0_10 = arith.constant 0 : index
      %c0_11 = arith.constant 0 : index
      %13 = vector.load %arg7[%c0_10, %c0_11] : memref<8x512xf32, #tpu.memory_space<vmem>>, vector<8x512xf32>
      tpu.vector_store %arg7[%c0_10, %c0_11], %12 {strides = array<i32>} : memref<8x512xf32, #tpu.memory_space<vmem>>, vector<8x512xf32>,
    } else {
    }
    %c0 = arith.constant 0 : index
    %c0_1 = arith.constant 0 : index
    %3 = vector.load %arg7[%c0, %c0_1] : memref<8x512xf32, #tpu.memory_space<vmem>>, vector<8x512xf32>
    %c0_2 = arith.constant 0 : index
    %c0_3 = arith.constant 0 : index
    %4 = vector.load %arg3[%c0_2, %c0_3] : memref<8x2048xbf16, #tpu.memory_space<vmem>>, vector<8x2048xbf16>
    %c0_4 = arith.constant 0 : index
    %c0_5 = arith.constant 0 : index
    %5 = vector.load %arg4[%c0_4, %c0_5] : memref<2048x512xbf16, #tpu.memory_space<vmem>>, vector<2048x512xbf16>
    %cst = arith.constant dense<0.000000e+00> : vector<8x512xf32>
    %6 = tpu.matmul %4, %5, %cst {dimension_numbers = #tpu.dot_dimension_numbers<[1], [0], [0], [1], [0, 0, 1, 1], [], []>} : vector<8x2048xbf16>, vector<2048x512xbf16>, vector<8x512xf32> -> vector<8x512xf32>
    %7 = arith.addf %3, %6 : vector<8x512xf32>
    %c0_6 = arith.constant 0 : index
    %c0_7 = arith.constant 0 : index
    %8 = vector.load %arg7[%c0_6, %c0_7] : memref<8x512xf32, #tpu.memory_space<vmem>>, vector<8x512xf32>
    tpu.vector_store %arg7[%c0_6, %c0_7], %7 {strides = array<i32>} : memref<8x512xf32, #tpu.memory_space<vmem>>, vector<8x512xf32>,
    %c1_i32 = arith.constant 1 : i32
    %9 = arith.cmpi eq, %arg2, %c1_i32 : i32
    %10 = arith.extui %9 : i1 to i32
    %c0_i32_8 = arith.constant 0 : i32
    %11 = arith.cmpi ne, %10, %c0_i32_8 : i32
    scf.if %11 {
      %c0_9 = arith.constant 0 : index
      %c0_10 = arith.constant 0 : index
      %12 = vector.load %arg7[%c0_9, %c0_10] : memref<8x512xf32, #tpu.memory_space<vmem>>, vector<8x512xf32>
      %c0_11 = arith.constant 0 : index
      %c0_12 = arith.constant 0 : index
      %13 = vector.load %arg5[%c0_11, %c0_12] : memref<1x512xf32, #tpu.memory_space<vmem>>, vector<1x512xf32>
      %14 = vector.broadcast %13 : vector<1x512xf32> to vector<8x512xf32>
      %15 = arith.addf %12, %14 : vector<8x512xf32>
      %cst_13 = arith.constant 0.000000e+00 : f32
      %16 = vector.broadcast %cst_13 : f32 to vector<8x512xf32>
      %17 = arith.cmpf oge, %15, %16 : vector<8x512xf32>
      %cst_14 = arith.constant 2.000000e-01 : f32
      %18 = vector.broadcast %cst_14 : f32 to vector<8x512xf32>
      %19 = arith.mulf %18, %15 : vector<8x512xf32>
      %20 = arith.select %17, %15, %19 : vector<8x512xi1>, vector<8x512xf32>
      %21 = arith.truncf %20 : vector<8x512xf32> to vector<8x512xbf16>
      %c0_15 = arith.constant 0 : index
      %c0_16 = arith.constant 0 : index
      %22 = vector.load %arg6[%c0_15, %c0_16] : memref<8x512xbf16, #tpu.memory_space<vmem>>, vector<8x512xbf16>
      tpu.vector_store %arg6[%c0_15, %c0_16], %21 {strides = array<i32>} : memref<8x512xbf16, #tpu.memory_space<vmem>>, vector<8x512xbf16>,
    } else {
    }
    return
  }
  func.func @transform_0(%arg0: i32, %arg1: i32, %arg2: i32) -> (i32, i32) {
    %c0_i32 = arith.constant 0 : i32
    return %arg0, %arg2 : i32, i32
  }
  func.func @transform_1(%arg0: i32, %arg1: i32, %arg2: i32) -> (i32, i32) {
    %c0_i32 = arith.constant 0 : i32
    return %arg2, %arg1 : i32, i32
  }
  func.func @transform_2(%arg0: i32, %arg1: i32, %arg2: i32) -> (i32, i32) {
    %c0_i32 = arith.constant 0 : i32
    %c0_i32_0 = arith.constant 0 : i32
    return %c0_i32, %arg1 : i32, i32
  }
  func.func @transform_3(%arg0: i32, %arg1: i32, %arg2: i32) -> (i32, i32) {
    %c0_i32 = arith.constant 0 : i32
    return %arg0, %arg1 : i32, i32
  }
}

module attributes {stable_mosaic.version = 11 : i64} {
  func.func @_matmul_kernel(%arg0: i32, %arg1: i32, %arg2: i32, %arg3: memref<8x512xbf16, #tpu.memory_space<vmem>>, %arg4: memref<512x128xbf16, #tpu.memory_space<vmem>>, %arg5: memref<1x128xf32, #tpu.memory_space<vmem>>, %arg6: memref<8x128xf32, #tpu.memory_space<vmem>>, %arg7: memref<8x128xf32, #tpu.memory_space<vmem>>) attributes {dimension_semantics = [#tpu.dimension_semantics<parallel>, #tpu.dimension_semantics<parallel>, #tpu.dimension_semantics<arbitrary>], iteration_bounds = array<i64: 1, 1, 1>, scalar_prefetch = 0 : i64, scratch_operands = 1 : i64, tpu.core_type = #tpu.core_type<tc>, window_params = [{transform_indices = @transform_0, window_bounds = array<i64: 8, 512>}, {transform_indices = @transform_1, window_bounds = array<i64: 512, 128>}, {transform_indices = @transform_2, window_bounds = array<i64: 1, 128>}, {transform_indices = @transform_3, window_bounds = array<i64: 8, 128>}]} {
    %c0_i32 = arith.constant 0 : i32
    %0 = arith.cmpi eq, %arg2, %c0_i32 : i32
    %1 = arith.extui %0 : i1 to i32
    %c0_i32_0 = arith.constant 0 : i32
    %2 = arith.cmpi ne, %1, %c0_i32_0 : i32
    scf.if %2 {
      %cst_10 = arith.constant 0.000000e+00 : f32
      %12 = vector.broadcast %cst_10 : f32 to vector<8x128xf32>
      %c0_11 = arith.constant 0 : index
      %c0_12 = arith.constant 0 : index
      %13 = vector.load %arg7[%c0_11, %c0_12] : memref<8x128xf32, #tpu.memory_space<vmem>>, vector<8x128xf32>
      tpu.vector_store %arg7[%c0_11, %c0_12], %12 {strides = array<i32>} : memref<8x128xf32, #tpu.memory_space<vmem>>, vector<8x128xf32>,
    } else {
    }
    %c0 = arith.constant 0 : index
    %c0_1 = arith.constant 0 : index
    %3 = vector.load %arg7[%c0, %c0_1] : memref<8x128xf32, #tpu.memory_space<vmem>>, vector<8x128xf32>
    %c0_2 = arith.constant 0 : index
    %c0_3 = arith.constant 0 : index
    %4 = vector.load %arg3[%c0_2, %c0_3] : memref<8x512xbf16, #tpu.memory_space<vmem>>, vector<8x512xbf16>
    %c0_4 = arith.constant 0 : index
    %c0_5 = arith.constant 0 : index
    %5 = vector.load %arg4[%c0_4, %c0_5] : memref<512x128xbf16, #tpu.memory_space<vmem>>, vector<512x128xbf16>
    %cst = arith.constant dense<0.000000e+00> : vector<8x128xf32>
    %6 = tpu.matmul %4, %5, %cst {dimension_numbers = #tpu.dot_dimension_numbers<[1], [0], [0], [1], [0, 0, 1, 1], [], []>} : vector<8x512xbf16>, vector<512x128xbf16>, vector<8x128xf32> -> vector<8x128xf32>
    %7 = arith.addf %3, %6 : vector<8x128xf32>
    %c0_6 = arith.constant 0 : index
    %c0_7 = arith.constant 0 : index
    %8 = vector.load %arg7[%c0_6, %c0_7] : memref<8x128xf32, #tpu.memory_space<vmem>>, vector<8x128xf32>
    tpu.vector_store %arg7[%c0_6, %c0_7], %7 {strides = array<i32>} : memref<8x128xf32, #tpu.memory_space<vmem>>, vector<8x128xf32>,
    %c0_i32_8 = arith.constant 0 : i32
    %9 = arith.cmpi eq, %arg2, %c0_i32_8 : i32
    %10 = arith.extui %9 : i1 to i32
    %c0_i32_9 = arith.constant 0 : i32
    %11 = arith.cmpi ne, %10, %c0_i32_9 : i32
    scf.if %11 {
      %c0_10 = arith.constant 0 : index
      %c0_11 = arith.constant 0 : index
      %12 = vector.load %arg7[%c0_10, %c0_11] : memref<8x128xf32, #tpu.memory_space<vmem>>, vector<8x128xf32>
      %c0_12 = arith.constant 0 : index
      %c0_13 = arith.constant 0 : index
      %13 = vector.load %arg5[%c0_12, %c0_13] : memref<1x128xf32, #tpu.memory_space<vmem>>, vector<1x128xf32>
      %14 = vector.broadcast %13 : vector<1x128xf32> to vector<8x128xf32>
      %15 = arith.addf %12, %14 : vector<8x128xf32>
      %c0_14 = arith.constant 0 : index
      %c0_15 = arith.constant 0 : index
      %16 = vector.load %arg6[%c0_14, %c0_15] : memref<8x128xf32, #tpu.memory_space<vmem>>, vector<8x128xf32>
      tpu.vector_store %arg6[%c0_14, %c0_15], %15 {strides = array<i32>} : memref<8x128xf32, #tpu.memory_space<vmem>>, vector<8x128xf32>,
    } else {
    }
    return
  }
  func.func @transform_0(%arg0: i32, %arg1: i32, %arg2: i32) -> (i32, i32) {
    %c0_i32 = arith.constant 0 : i32
    return %arg0, %arg2 : i32, i32
  }
  func.func @transform_1(%arg0: i32, %arg1: i32, %arg2: i32) -> (i32, i32) {
    %c0_i32 = arith.constant 0 : i32
    return %arg2, %arg1 : i32, i32
  }
  func.func @transform_2(%arg0: i32, %arg1: i32, %arg2: i32) -> (i32, i32) {
    %c0_i32 = arith.constant 0 : i32
    %c0_i32_0 = arith.constant 0 : i32
    return %c0_i32, %arg1 : i32, i32
  }
  func.func @transform_3(%arg0: i32, %arg1: i32, %arg2: i32) -> (i32, i32) {
    %c0_i32 = arith.constant 0 : i32
    return %arg0, %arg1 : i32, i32
  }
}

</mosaic_0001>

<llo_original>
// kernel: embedder_forward.5
$region0: #{embedder_forward.5}
  #allocation0 [shape = 'u32[]', space=smem, size = 0x4, offset = 0x4, fixed_abs, tag = 'smem constant byte address 0x4 - core index']
  #allocation1 [shape = 'u32[144,128]{1,0:T(1,128)}', space=vmem, size = 0x12000, scoped, tag = 'internal scratch']
  #allocation2 [shape = 'f32[64,128]{1,0:T(8,128)}', space=vmem, size = 0x8000, scoped, tag = 'scratch operand']
  %s0 = inlined_call_operand.vmem [shape: bf16[128,64], index: 0, kind: input, shape index: {}]
  %s1 = inlined_call_operand.vmem [shape: bf16[64,128], index: 1, kind: input, shape index: {}]
  %s2 = inlined_call_operand.vmem [shape: f32[1,128], index: 2, kind: input, shape index: {}]
  %s3 = inlined_call_operand.vmem [shape: bf16[128,128], index: 3, kind: output, shape index: {}]
  %s4 = sld [smem:[#allocation0]]
  $region53: #{embedder_forward.5} parent=0
    _
  %s6 = ssub.s32 1, %s4
  %s7 = scalar_select 0, %s6, %s4
  loop: start=0, step=1, limit=4
  $region2: #{embedder_forward.5} parent=0 // loop_pre_header
    _
  $region3: #{embedder_forward.5} parent=0 // loop_header
    %s9 = sphi 0, %s13
    %p10 = scmp.ge.s32.totalorder %s9, 4
    %s16 = sphi 0, %s35
    %s17 = sphi 0, %s31
    %s18 = sphi 0, %s27
    %s19 = sphi 0, %s16
    %s20 = sphi 0, %s17
    %s21 = sphi 0, %s18
    %s22 = sphi 0, %s19
    %s23 = sphi 0, %s20
    %s24 = sphi 0, %s21
    %s40 = sphi 0, %s42
    %s43 = sphi 0, %s40
    %s44 = sphi 0, %s43
    %s60 = sphi 0, %s44
    %s68 = sphi 0, %s70
    %s71 = sphi 0, %s68
    %s72 = sphi 0, %s71
    %s88 = sphi 0, %s72
    %s94 = sphi 0, %s96
    %s97 = sphi 0, %s94
    %s98 = sphi 0, %s97
    %s114 = sphi 0, %s98
    %s122 = sphi 0, %s124
    %s125 = sphi 0, %s122
    %s126 = sphi 0, %s125
    %s142 = sphi 0, %s126
  $region4: #{embedder_forward.5} parent=0 // loop_header_branch
    %12 = sbr.rel (%p10) target = $region8
  $region5: #{embedder_forward.5} parent=0 // loop_body
    %s14 = ssub.s32 %s9, 1
    %s15 = ssub.s32 %s9, 2
    %s25 = sadd.s32 1, %s18
    %p26 = scmp.ge.s32.totalorder %s25, 1
    %s27 = scalar_select %p26, 0, %s25
    %s28 = sadd.s32 1, %s17
    %s29 = scalar_select %p26, %s28, %s17
    %p30 = scmp.ge.s32.totalorder %s29, 1
    %s31 = scalar_select %p30, 0, %s29
    %s32 = sadd.s32 1, %s16
    %s33 = scalar_select %p30, %s32, %s16
    %p34 = scmp.ge.s32.totalorder %s33, 2
    %s35 = scalar_select %p34, 0, %s33
    %s36 = ssub.s32 %s16, %s35
    %s37 = ssub.s32 %s18, %s27
    %s38 = sor.u32 %s36, %s37
    %p39 = scmp.eq.s32.totalorder %s38, 0
    %s41 = sadd.s32 %s40, 1
    %s42 = scalar_select %p39, %s40, %s41
    %p45 = pneg %p39
    %p46 = scmp.eq.s32.totalorder %s9, 1
    %p47 = por %p45, %p46
    %p48 = scmp.ne.s32.totalorder %s40, %s43
    %p49 = scmp.eq.s32.totalorder %s9, 0
    %p50 = por %p48, %p49
    %p51 = scmp.ne.s32.totalorder %s40, %s43
    %p52 = scmp.eq.s32.totalorder %s14, 1
    %p53 = por %p51, %p52
    %p54 = scmp.ne.s32.totalorder %s43, %s44
    %p55 = scmp.eq.s32.totalorder %s14, 0
    %p56 = por %p54, %p55
    %p57 = scmp.ne.s32.totalorder %s43, %s44
    %p58 = scmp.eq.s32.totalorder %s15, 1
    %p59 = por %p57, %p58
    %p61 = scmp.ne.s32.totalorder %s44, %s60
    %p62 = scmp.eq.s32.totalorder %s15, 0
    %p63 = por %p61, %p62
    %s64 = ssub.s32 %s18, %s27
    %s65 = ssub.s32 %s17, %s31
    %s66 = sor.u32 %s64, %s65
    %p67 = scmp.eq.s32.totalorder %s66, 0
    %s69 = sadd.s32 %s68, 1
    %s70 = scalar_select %p67, %s68, %s69
    %p73 = pneg %p67
    %p74 = scmp.eq.s32.totalorder %s9, 1
    %p75 = por %p73, %p74
    %p76 = scmp.ne.s32.totalorder %s68, %s71
    %p77 = scmp.eq.s32.totalorder %s9, 0
    %p78 = por %p76, %p77
    %p79 = scmp.ne.s32.totalorder %s68, %s71
    %p80 = scmp.eq.s32.totalorder %s14, 1
    %p81 = por %p79, %p80
    %p82 = scmp.ne.s32.totalorder %s71, %s72
    %p83 = scmp.eq.s32.totalorder %s14, 0
    %p84 = por %p82, %p83
    %p85 = scmp.ne.s32.totalorder %s71, %s72
    %p86 = scmp.eq.s32.totalorder %s15, 1
    %p87 = por %p85, %p86
    %p89 = scmp.ne.s32.totalorder %s72, %s88
    %p90 = scmp.eq.s32.totalorder %s15, 0
    %p91 = por %p89, %p90
    %s92 = ssub.s32 %s17, %s31
    %p93 = scmp.eq.s32.totalorder %s92, 0
    %s95 = sadd.s32 %s94, 1
    %s96 = scalar_select %p93, %s94, %s95
    %p99 = pneg %p93
    %p100 = scmp.eq.s32.totalorder %s9, 1
    %p101 = por %p99, %p100
    %p102 = scmp.ne.s32.totalorder %s94, %s97
    %p103 = scmp.eq.s32.totalorder %s9, 0
    %p104 = por %p102, %p103
    %p105 = scmp.ne.s32.totalorder %s94, %s97
    %p106 = scmp.eq.s32.totalorder %s14, 1
    %p107 = por %p105, %p106
    %p108 = scmp.ne.s32.totalorder %s97, %s98
    %p109 = scmp.eq.s32.totalorder %s14, 0
    %p110 = por %p108, %p109
    %p111 = scmp.ne.s32.totalorder %s97, %s98
    %p112 = scmp.eq.s32.totalorder %s15, 1
    %p113 = por %p111, %p112
    %p115 = scmp.ne.s32.totalorder %s98, %s114
    %p116 = scmp.eq.s32.totalorder %s15, 0
    %p117 = por %p115, %p116
    %s118 = ssub.s32 %s16, %s35
    %s119 = ssub.s32 %s17, %s31
    %s120 = sor.u32 %s118, %s119
    %p121 = scmp.eq.s32.totalorder %s120, 0
    %s123 = sadd.s32 %s122, 1
    %s124 = scalar_select %p121, %s122, %s123
    %p127 = pneg %p121
    %p128 = scmp.eq.s32.totalorder %s9, 1
    %p129 = por %p127, %p128
    %p130 = scmp.ne.s32.totalorder %s122, %s125
    %p131 = scmp.eq.s32.totalorder %s9, 0
    %p132 = por %p130, %p131
    %p133 = scmp.ne.s32.totalorder %s122, %s125
    %p134 = scmp.eq.s32.totalorder %s14, 1
    %p135 = por %p133, %p134
    %p136 = scmp.ne.s32.totalorder %s125, %s126
    %p137 = scmp.eq.s32.totalorder %s14, 0
    %p138 = por %p136, %p137
    %p139 = scmp.ne.s32.totalorder %s125, %s126
    %p140 = scmp.eq.s32.totalorder %s15, 1
    %p141 = por %p139, %p140
    %p143 = scmp.ne.s32.totalorder %s126, %s142
    %p144 = scmp.eq.s32.totalorder %s15, 0
    %p145 = por %p143, %p144
    %p146 = scmp.le.s32.totalorder 1, %s9
    %p147 = scmp.lt.s32.totalorder %s9, 3
    %p148 = pnand %p146, %p147
    %p149 = pneg %p148
    // Predicated region
    $region9: #{embedder_forward.5} parent=5 // pred_check
      _
    $region10: #{embedder_forward.5} parent=5 // pred_check_branch
      %151 = sbr.rel (%p148) target = $region12
    $region11: #{embedder_forward.5} parent=5 // pred_region
      %s152 = ssub.s32 %s9, 1
      // Predicated region
      $region13: #{embedder_forward.5} parent=11 // pred_check
        %p153 = pneg %p84
      $region14: #{embedder_forward.5} parent=11 // pred_check_branch
        %155 = sbr.rel (%p153) target = $region16
      $region15: #{embedder_forward.5} parent=11 // pred_region
        %s156 = smul.u32 8, %s21
        %p157 = scmp.lt.s32.totalorder %s156, 7
        %s158 = scalar_select %p157, %s156, 7
        %p159 = scmp.lt.s32.totalorder %s20, 0
        %s160 = scalar_select %p159, %s20, 0
        %s161 = sadd.s32 %s160, %s158
        %s162 = smul.addr %s161, 4
        %s163 = scalar_lea.vmem %s1, %s162
        %s164 = smul.u32 8, %s21
      $region16: #{embedder_forward.5} parent=11 // pred_fallthru
        _
      // Predicated region
      $region17: #{embedder_forward.5} parent=11 // pred_check
        %p165 = pneg %p110
      $region18: #{embedder_forward.5} parent=11 // pred_check_branch
        %167 = sbr.rel (%p165) target = $region20
      $region19: #{embedder_forward.5} parent=11 // pred_region
        %p168 = scmp.lt.s32.totalorder %s20, 0
        %s169 = scalar_select %p168, %s20, 0
        %s170 = scalar_lea.vmem %s2, %s169
      $region20: #{embedder_forward.5} parent=11 // pred_fallthru
        _
    $region12: #{embedder_forward.5} parent=5 // pred_fallthru
      _
    %p171 = scmp.lt.s32.totalorder %s9, 2
    // Predicated region
    $region21: #{embedder_forward.5} parent=5 // pred_check
      %p172 = pneg %p171
    $region22: #{embedder_forward.5} parent=5 // pred_check_branch
      %174 = sbr.rel (%p172) target = $region24
    $region23: #{embedder_forward.5} parent=5 // pred_region
      // Predicated region
      $region25: #{embedder_forward.5} parent=23 // pred_check
        %p175 = pneg %p50
      $region26: #{embedder_forward.5} parent=23 // pred_check_branch
        %177 = sbr.rel (%p175) target = $region28
      $region27: #{embedder_forward.5} parent=23 // pred_region
        %s178 = smul.u32 8, %s16
        %p179 = scmp.lt.s32.totalorder %s178, 15
        %s180 = scalar_select %p179, %s178, 15
        %p181 = scmp.lt.s32.totalorder %s18, 0
        %s182 = scalar_select %p181, %s18, 0
        %s183 = sadd.s32 %s182, %s180
        %s184 = smul.addr %s183, 4
        %s185 = scalar_lea.vmem %s0, %s184
        %s186 = smul.u32 8, %s16
      $region28: #{embedder_forward.5} parent=23 // pred_fallthru
        _
    $region24: #{embedder_forward.5} parent=5 // pred_fallthru
      _
    %p187 = scmp.le.s32.totalorder 1, %s9
    %p188 = scmp.lt.s32.totalorder %s9, 3
    %p189 = pnand %p187, %p188
    %p190 = pneg %p189
    // Predicated region
    $region29: #{embedder_forward.5} parent=5 // pred_check
      _
    $region30: #{embedder_forward.5} parent=5 // pred_check_branch
      %192 = sbr.rel (%p189) target = $region32
    $region31: #{embedder_forward.5} parent=5 // pred_region
      %s193 = ssub.s32 %s9, 1
      %s194 = smul.u32 8, %s19
      %p195 = scmp.lt.s32.totalorder %s194, 15
      %s196 = scalar_select %p195, %s194, 15
      %p197 = scmp.lt.s32.totalorder %s21, 0
      %s198 = scalar_select %p197, %s21, 0
      %s199 = sadd.s32 %s198, %s196
      %s200 = smul.addr %s199, 4
      %s201 = scalar_lea.vmem %s0, %s200
      %p202 = pneg %p56
      %p203 = pneg %p53
      %s204 = smul.u32 8, %s21
      %p205 = scmp.lt.s32.totalorder %s204, 7
      %s206 = scalar_select %p205, %s204, 7
      %p207 = scmp.lt.s32.totalorder %s20, 0
      %s208 = scalar_select %p207, %s20, 0
      %s209 = sadd.s32 %s208, %s206
      %s210 = smul.addr %s209, 4
      %s211 = scalar_lea.vmem %s1, %s210
      %p212 = pneg %p84
      %p213 = pneg %p81
      %p214 = scmp.lt.s32.totalorder %s20, 0
      %s215 = scalar_select %p214, %s20, 0
      %s216 = scalar_lea.vmem %s2, %s215
      %p217 = pneg %p110
      %p218 = pneg %p107
      %p219 = pneg %p138
      %p220 = pneg %p135
      %s221 = smul.u32 8, %s19
      %p222 = scmp.lt.s32.totalorder %s221, 15
      %s223 = scalar_select %p222, %s221, 15
      %p224 = scmp.lt.s32.totalorder %s20, 0
      %s225 = scalar_select %p224, %s20, 0
      %s226 = sadd.s32 %s225, %s223
      %s227 = smul.addr %s226, 4
      %s228 = scalar_lea.vmem %s3, %s227
      %s229 = smul.u32 8, %s19
      %p230 = scmp.lt.s32.totalorder %s229, 15
      %s231 = scalar_select %p230, %s229, 15
      %p232 = scmp.lt.s32.totalorder %s21, 0
      %s233 = scalar_select %p232, %s21, 0
      %s234 = sadd.s32 %s233, %s231
      %s235 = smul.addr %s234, 4
      %s236 = scalar_lea.vmem %s0, %s235
      %s237 = smul.u32 8, %s19
      %s238 = smul.u32 8, %s21
      %p239 = scmp.lt.s32.totalorder %s238, 7
      %s240 = scalar_select %p239, %s238, 7
      %p241 = scmp.lt.s32.totalorder %s20, 0
      %s242 = scalar_select %p241, %s20, 0
      %s243 = sadd.s32 %s242, %s240
      %s244 = smul.addr %s243, 4
      %s245 = scalar_lea.vmem %s1, %s244
      %s246 = smul.u32 8, %s21
      %p247 = scmp.lt.s32.totalorder %s20, 0
      %s248 = scalar_select %p247, %s20, 0
      %s249 = scalar_lea.vmem %s2, %s248
      %s250 = smul.u32 8, %s19
      %p251 = scmp.lt.s32.totalorder %s250, 15
      %s252 = scalar_select %p251, %s250, 15
      %p253 = scmp.lt.s32.totalorder %s20, 0
      %s254 = scalar_select %p253, %s20, 0
      %s255 = sadd.s32 %s254, %s252
      %s256 = smul.addr %s255, 4
      %s257 = scalar_lea.vmem %s3, %s256
      %s258 = smul.u32 8, %s19
      %p260 = scmp.eq.s32.totalorder %s21, 0
      // Predicated region
      $region33: #{embedder_forward.5} parent=31 // pred_check
        %p261 = pneg %p260
      $region34: #{embedder_forward.5} parent=31 // pred_check_branch
        %263 = sbr.rel (%p261) target = $region36
      $region35: #{embedder_forward.5} parent=31 // pred_region
        %264 = vst [vmem:[#allocation2] sm:$0xff] 0.0
        %265 = vst [vmem:[#allocation2 + $0x8] sm:$0xff] 0.0
        %266 = vst [vmem:[#allocation2 + $0x10] sm:$0xff] 0.0
        %267 = vst [vmem:[#allocation2 + $0x18] sm:$0xff] 0.0
        %268 = vst [vmem:[#allocation2 + $0x20] sm:$0xff] 0.0
        %269 = vst [vmem:[#allocation2 + $0x28] sm:$0xff] 0.0
        %270 = vst [vmem:[#allocation2 + $0x30] sm:$0xff] 0.0
        %271 = vst [vmem:[#allocation2 + $0x38] sm:$0xff] 0.0
      $region36: #{embedder_forward.5} parent=31 // pred_fallthru
        _
      %v272 = vld [vmem:[#allocation2] sm:$0xff]
      %v273 = vld [vmem:[#allocation2 + $0x8] sm:$0xff]
      %v274 = vld [vmem:[#allocation2 + $0x10] sm:$0xff]
      %v275 = vld [vmem:[#allocation2 + $0x18] sm:$0xff]
      %v276 = vld [vmem:[#allocation2 + $0x20] sm:$0xff]
      %v277 = vld [vmem:[#allocation2 + $0x28] sm:$0xff]
      %v278 = vld [vmem:[#allocation2 + $0x30] sm:$0xff]
      %v279 = vld [vmem:[#allocation2 + $0x38] sm:$0xff]
      %v280 = vld [vmem:[%s236] sm:$0xf]
      %v281 = vld [vmem:[%s236 + $0x4] sm:$0xf]
      %v282 = vld [vmem:[%s236 + $0x8] sm:$0xf]
      %v283 = vld [vmem:[%s236 + $0xc] sm:$0xf]
      %v284 = vld [vmem:[%s236 + $0x10] sm:$0xf]
      %v285 = vld [vmem:[%s236 + $0x14] sm:$0xf]
      %v286 = vld [vmem:[%s236 + $0x18] sm:$0xf]
      %v287 = vld [vmem:[%s236 + $0x1c] sm:$0xf]
      %v288 = vld [vmem:[%s245] sm:$0xf]
      %v289 = vld [vmem:[%s245 + $0x4] sm:$0xf]
      %v290 = vld [vmem:[%s245 + $0x8] sm:$0xf]
      %v291 = vld [vmem:[%s245 + $0xc] sm:$0xf]
      %v292 = vld [vmem:[%s245 + $0x10] sm:$0xf]
      %v293 = vld [vmem:[%s245 + $0x14] sm:$0xf]
      %v294 = vld [vmem:[%s245 + $0x18] sm:$0xf]
      %v295 = vld [vmem:[%s245 + $0x1c] sm:$0xf]
      %v304 = vunpack.c.l.b16 %v280
      %v305 = vunpack.c.l.b16 %v281
      %v306 = vunpack.c.l.b16 %v282
      %v307 = vunpack.c.l.b16 %v283
      %v308 = vunpack.c.l.b16 %v284
      %v309 = vunpack.c.l.b16 %v285
      %v310 = vunpack.c.l.b16 %v286
      %v311 = vunpack.c.l.b16 %v287
      %v312 = vpack.c.b16 %v305, %v304
      %v313 = vpack.c.b16 %v307, %v306
      %v314 = vpack.c.b16 %v309, %v308
      %v315 = vpack.c.b16 %v311, %v310
      %v324 = vunpack.c.l.b16 %v288
      %v325 = vunpack.c.l.b16 %v289
      %v326 = vunpack.c.l.b16 %v290
      %v327 = vunpack.c.l.b16 %v291
      %v328 = vunpack.c.l.b16 %v292
      %v329 = vunpack.c.l.b16 %v293
      %v330 = vunpack.c.l.b16 %v294
      %v331 = vunpack.c.l.b16 %v295
      %v332 = vpack.c.b16 %v325, %v324
      %v333 = vpack.c.b16 %v327, %v326
      %v334 = vpack.c.b16 %v329, %v328
      %v335 = vpack.c.b16 %v331, %v330
      %vm340 = vcmask 523264
      %v342 = vsel %vm340, %v312, 0
      %v345 = vsel %vm340, %v313, 0
      %v348 = vsel %vm340, %v314, 0
      %v351 = vsel %vm340, %v315, 0
      %353 = vmatprep.subr.bf16.mxu0 0
      %354 = vmatpush1.bf16.msra.mxu0 0
      %355 = vmatprep.subr.bf16.mxu0 0
      %356 = vmatpush1.bf16.msra.mxu0 0
      %357 = vmatprep.subr.bf16.mxu0 0
      %358 = vmatpush1.bf16.msra.mxu0 0
      %359 = vmatprep.subr.bf16.mxu0 0
      %360 = vmatpush1.bf16.msra.mxu0 0
      %361 = vmatprep.subr.bf16.mxu0 0
      %362 = vmatpush1.bf16.msra.mxu0 %v335
      %363 = vmatprep.subr.bf16.mxu0 0
      %364 = vmatpush1.bf16.msra.mxu0 %v334
      %365 = vmatprep.subr.bf16.mxu0 0
      %366 = vmatpush1.bf16.msra.mxu0 %v333
      %367 = vmatprep.subr.bf16.mxu0 0
      %368 = vmatpush1.bf16.msra.mxu0 %v332
      %369 = vmatprep.subr.bf16.mxu0 0
      %370 = vmatpush2.bf16.msra.mxu0 0
      %371 = vmatprep.subr.bf16.mxu0 0
      %372 = vmatpush2.bf16.msra.mxu0 0
      %373 = vmatprep.subr.bf16.mxu0 0
      %374 = vmatpush2.bf16.msra.mxu0 0
      %375 = vmatprep.subr.bf16.mxu0 0
      %376 = vmatpush2.bf16.msra.mxu0 0
      %377 = vmatprep.subr.bf16.mxu0 0
      %378 = vmatpush2.bf16.msra.mxu0 0
      %379 = vmatprep.subr.bf16.mxu0 0
      %380 = vmatpush2.bf16.msra.mxu0 0
      %381 = vmatprep.subr.bf16.mxu0 0
      %382 = vmatpush2.bf16.msra.mxu0 0
      %383 = vmatprep.subr.bf16.mxu0 0
      %384 = vmatpush2.bf16.msra.mxu0 0
      %385 = vmatprep.mubr.bf16.mxu0 0
      %386 = vmatmul.mubr.bf16.gmra.mxu0 %v342
      %v387 = vpop.f32.mrf.mxu0
      %v388 = vadd.f32 0.0, %v387
      %v389 = vpop.f32.mrf.mxu0
      %v390 = vpop.f32.mrf.mxu0
      %v391 = vadd.f32 0.0, %v390
      %v392 = vpop.f32.mrf.mxu0
      %393 = vmatprep.mubr.bf16.mxu0 0
      %394 = vmatmul.mubr.bf16.gmra.mxu0 %v345
      %v395 = vpop.f32.mrf.mxu0
      %v396 = vadd.f32 0.0, %v395
      %v397 = vpop.f32.mrf.mxu0
      %v398 = vpop.f32.mrf.mxu0
      %v399 = vadd.f32 0.0, %v398
      %v400 = vpop.f32.mrf.mxu0
      %401 = vmatprep.mubr.bf16.mxu0 0
      %402 = vmatmul.mubr.bf16.gmra.mxu0 %v348
      %v403 = vpop.f32.mrf.mxu0
      %v404 = vadd.f32 0.0, %v403
      %v405 = vpop.f32.mrf.mxu0
      %v406 = vpop.f32.mrf.mxu0
      %v407 = vadd.f32 0.0, %v406
      %v408 = vpop.f32.mrf.mxu0
      %409 = vmatprep.mubr.bf16.mxu0 0
      %410 = vmatmul.mubr.bf16.gmra.mxu0 %v351
      %v411 = vpop.f32.mrf.mxu0
      %v412 = vadd.f32 0.0, %v411
      %v413 = vpop.f32.mrf.mxu0
      %v414 = vpop.f32.mrf.mxu0
      %v415 = vadd.f32 0.0, %v414
      %v416 = vpop.f32.mrf.mxu0
      %417 = vdwg.mxu0
      %v418 = vadd.f32 %v272, %v388
      %v419 = vadd.f32 %v273, %v391
      %v420 = vadd.f32 %v274, %v396
      %v421 = vadd.f32 %v275, %v399
      %v422 = vadd.f32 %v276, %v404
      %v423 = vadd.f32 %v277, %v407
      %v424 = vadd.f32 %v278, %v412
      %v425 = vadd.f32 %v279, %v415
      %426 = vst [vmem:[#allocation2] sm:$0xff] %v418
      %427 = vst [vmem:[#allocation2 + $0x8] sm:$0xff] %v419
      %428 = vst [vmem:[#allocation2 + $0x10] sm:$0xff] %v420
      %429 = vst [vmem:[#allocation2 + $0x18] sm:$0xff] %v421
      %430 = vst [vmem:[#allocation2 + $0x20] sm:$0xff] %v422
      %431 = vst [vmem:[#allocation2 + $0x28] sm:$0xff] %v423
      %432 = vst [vmem:[#allocation2 + $0x30] sm:$0xff] %v424
      %433 = vst [vmem:[#allocation2 + $0x38] sm:$0xff] %v425
      // Predicated region
      $region37: #{embedder_forward.5} parent=31 // pred_check
        %p434 = pneg %p260
      $region38: #{embedder_forward.5} parent=31 // pred_check_branch
        %436 = sbr.rel (%p434) target = $region40
      $region39: #{embedder_forward.5} parent=31 // pred_region
        %v437 = vld [vmem:[#allocation2] sm:$0xff]
        %v438 = vld [vmem:[#allocation2 + $0x8] sm:$0xff]
        %v439 = vld [vmem:[#allocation2 + $0x10] sm:$0xff]
        %v440 = vld [vmem:[#allocation2 + $0x18] sm:$0xff]
        %v441 = vld [vmem:[#allocation2 + $0x20] sm:$0xff]
        %v442 = vld [vmem:[#allocation2 + $0x28] sm:$0xff]
        %v443 = vld [vmem:[#allocation2 + $0x30] sm:$0xff]
        %v444 = vld [vmem:[#allocation2 + $0x38] sm:$0xff]
        %v445 = vld [vmem:[%s249] sm:$0x1]
        %v447 = vlaneseq
        %v448 = vshrl.u32 %v447, 7
        %v449 = vsub.s32 0, %v448
        %v450 = vrot.slane %v445, %v449
        %v452 = vadd.f32 %v437, %v450
        %v453 = vadd.f32 %v438, %v450
        %v454 = vadd.f32 %v439, %v450
        %v455 = vadd.f32 %v440, %v450
        %v456 = vadd.f32 %v441, %v450
        %v457 = vadd.f32 %v442, %v450
        %v458 = vadd.f32 %v443, %v450
        %v459 = vadd.f32 %v444, %v450
        %vm460 = vcmp.ge.f32.partialorder %v452, 0.0
        %vm461 = vcmp.ge.f32.partialorder %v453, 0.0
        %vm462 = vcmp.ge.f32.partialorder %v454, 0.0
        %vm463 = vcmp.ge.f32.partialorder %v455, 0.0
        %vm464 = vcmp.ge.f32.partialorder %v456, 0.0
        %vm465 = vcmp.ge.f32.partialorder %v457, 0.0
        %vm466 = vcmp.ge.f32.partialorder %v458, 0.0
        %vm467 = vcmp.ge.f32.partialorder %v459, 0.0
        %v468 = vmul.f32 %v452, 0.2
        %v469 = vmul.f32 %v453, 0.2
        %v470 = vmul.f32 %v454, 0.2
        %v471 = vmul.f32 %v455, 0.2
        %v472 = vmul.f32 %v456, 0.2
        %v473 = vmul.f32 %v457, 0.2
        %v474 = vmul.f32 %v458, 0.2
        %v475 = vmul.f32 %v459, 0.2
        %v476 = vsel %vm460, %v452, %v468
        %v477 = vsel %vm461, %v453, %v469
        %v478 = vsel %vm462, %v454, %v470
        %v479 = vsel %vm463, %v455, %v471
        %v480 = vsel %vm464, %v456, %v472
        %v481 = vsel %vm465, %v457, %v473
        %v482 = vsel %vm466, %v458, %v474
        %v483 = vsel %vm467, %v459, %v475
        %v484 = vpack.c.bf16 %v477, %v476
        %v485 = vpack.c.bf16 %v479, %v478
        %v486 = vpack.c.bf16 %v481, %v480
        %v487 = vpack.c.bf16 %v483, %v482
        %v492 = vunpack.c.l.b16 %v484
        %v493 = vunpack.c.h.b16 %v484
        %v494 = vunpack.c.l.b16 %v485
        %v495 = vunpack.c.h.b16 %v485
        %v496 = vunpack.c.l.b16 %v486
        %v497 = vunpack.c.h.b16 %v486
        %v498 = vunpack.c.l.b16 %v487
        %v499 = vunpack.c.h.b16 %v487
        %v500 = vpack.c.b16 %v492, %v492
        %v501 = vpack.c.b16 %v493, %v493
        %v502 = vpack.c.b16 %v494, %v494
        %v503 = vpack.c.b16 %v495, %v495
        %v504 = vpack.c.b16 %v496, %v496
        %v505 = vpack.c.b16 %v497, %v497
        %v506 = vpack.c.b16 %v498, %v498
        %v507 = vpack.c.b16 %v499, %v499
        %516 = vst [vmem:[%s257] sm:$0xf] %v500
        %517 = vst [vmem:[%s257 + $0x4] sm:$0xf] %v501
        %518 = vst [vmem:[%s257 + $0x8] sm:$0xf] %v502
        %519 = vst [vmem:[%s257 + $0xc] sm:$0xf] %v503
        %520 = vst [vmem:[%s257 + $0x10] sm:$0xf] %v504
        %521 = vst [vmem:[%s257 + $0x14] sm:$0xf] %v505
        %522 = vst [vmem:[%s257 + $0x18] sm:$0xf] %v506
        %523 = vst [vmem:[%s257 + $0x1c] sm:$0xf] %v507
      $region40: #{embedder_forward.5} parent=31 // pred_fallthru
        _
      %s524 = smul.u32 8, %s19
      %p525 = scmp.lt.s32.totalorder %s524, 15
      %s526 = scalar_select %p525, %s524, 15
      %p527 = scmp.lt.s32.totalorder %s20, 0
      %s528 = scalar_select %p527, %s20, 0
      %s529 = sadd.s32 %s528, %s526
      %s530 = smul.addr %s529, 4
      %s531 = scalar_lea.vmem %s3, %s530
      // Predicated region
      $region41: #{embedder_forward.5} parent=31 // pred_check
        %p532 = pneg %p135
      $region42: #{embedder_forward.5} parent=31 // pred_check_branch
        %534 = sbr.rel (%p532) target = $region44
      $region43: #{embedder_forward.5} parent=31 // pred_region
        %s535 = smul.u32 8, %s19
      $region44: #{embedder_forward.5} parent=31 // pred_fallthru
        _
    $region32: #{embedder_forward.5} parent=5 // pred_fallthru
      _
    %p536 = scmp.le.s32.totalorder 2, %s9
    // Predicated region
    $region45: #{embedder_forward.5} parent=5 // pred_check
      %p537 = pneg %p536
    $region46: #{embedder_forward.5} parent=5 // pred_check_branch
      %539 = sbr.rel (%p537) target = $region48
    $region47: #{embedder_forward.5} parent=5 // pred_region
      %s540 = ssub.s32 %s9, 2
      // Predicated region
      $region49: #{embedder_forward.5} parent=47 // pred_check
        %p541 = pneg %p141
      $region50: #{embedder_forward.5} parent=47 // pred_check_branch
        %543 = sbr.rel (%p541) target = $region52
      $region51: #{embedder_forward.5} parent=47 // pred_region
        %s544 = smul.u32 8, %s22
        %p545 = scmp.lt.s32.totalorder %s544, 15
        %s546 = scalar_select %p545, %s544, 15
        %p547 = scmp.lt.s32.totalorder %s23, 0
        %s548 = scalar_select %p547, %s23, 0
        %s549 = sadd.s32 %s548, %s546
        %s550 = smul.addr %s549, 4
        %s551 = scalar_lea.vmem %s3, %s550
      $region52: #{embedder_forward.5} parent=47 // pred_fallthru
        _
    $region48: #{embedder_forward.5} parent=5 // pred_fallthru
      _
  $region6: #{embedder_forward.5} parent=0 // loop_footer
    %s13 = sadd.s32 1, %s9
  $region7: #{embedder_forward.5} parent=0 // loop_footer_branch
    %8 = sbr.rel target = $region3
  $region8: #{embedder_forward.5} parent=0 // loop_exit
    _

// kernel: embedder_forward.6
$region0: #{embedder_forward.6}
  #allocation0 [shape = 'u32[]', space=smem, size = 0x4, offset = 0x4, fixed_abs, tag = 'smem constant byte address 0x4 - core index']
  #allocation1 [shape = 'u32[144,128]{1,0:T(1,128)}', space=vmem, size = 0x12000, scoped, tag = 'internal scratch']
  #allocation2 [shape = 'f32[16,128]{1,0:T(8,128)}', space=vmem, size = 0x2000, scoped, tag = 'scratch operand']
  %s0 = inlined_call_operand.vmem [shape: bf16[32,1024], index: 0, kind: input, shape index: {}]
  %s1 = inlined_call_operand.vmem [shape: bf16[1024,128], index: 1, kind: input, shape index: {}]
  %s2 = inlined_call_operand.hbm [shape: f32[1,128], index: 2, kind: input, shape index: {}]
  %s3 = inlined_call_operand.vmem [shape: bf16[32,128], index: 3, kind: output, shape index: {}]
  %s4 = sld [smem:[#allocation0]]
  $region57: #{embedder_forward.6} parent=0
    _
  %s6 = ssub.s32 1, %s4
  %s7 = scalar_select 0, %s6, %s4
  $region1: #{embedder_forward.6} parent=0
    #allocation3 [shape = 'u8[512]{0}', space=vmem, size = 0x400, scoped, tag = 'input window, operand 2, single buffered']
    #allocation4 [shape = 's32[2]{0}', space=sflag, size = 0x8, scoped, tag = 'scoped memory for embedder_forward.6']
    %8 = vsyncpa [#allocation4], 0
    loop: start=0, step=1, limit=4
    $region2: #{embedder_forward.6} parent=1 // loop_pre_header
      _
    $region3: #{embedder_forward.6} parent=1 // loop_header
      %s10 = sphi 0, %s14
      %p11 = scmp.ge.s32.totalorder %s10, 4
      %s17 = sphi 0, %s36
      %s18 = sphi 0, %s32
      %s19 = sphi 0, %s28
      %s20 = sphi 0, %s17
      %s21 = sphi 0, %s18
      %s22 = sphi 0, %s19
      %s23 = sphi 0, %s20
      %s24 = sphi 0, %s21
      %s25 = sphi 0, %s22
      %s41 = sphi 0, %s43
      %s44 = sphi 0, %s41
      %s45 = sphi 0, %s44
      %s61 = sphi 0, %s45
      %s69 = sphi 0, %s71
      %s72 = sphi 0, %s69
      %s73 = sphi 0, %s72
      %s89 = sphi 0, %s73
      %s95 = sphi 0, %s97
      %s98 = sphi 0, %s95
      %s99 = sphi 0, %s98
      %s115 = sphi 0, %s99
      %s123 = sphi 0, %s125
      %s126 = sphi 0, %s123
      %s127 = sphi 0, %s126
      %s143 = sphi 0, %s127
    $region4: #{embedder_forward.6} parent=1 // loop_header_branch
      %13 = sbr.rel (%p11) target = $region8
    $region5: #{embedder_forward.6} parent=1 // loop_body
      %s15 = ssub.s32 %s10, 1
      %s16 = ssub.s32 %s10, 2
      %s26 = sadd.s32 1, %s19
      %p27 = scmp.ge.s32.totalorder %s26, 1
      %s28 = scalar_select %p27, 0, %s26
      %s29 = sadd.s32 1, %s18
      %s30 = scalar_select %p27, %s29, %s18
      %p31 = scmp.ge.s32.totalorder %s30, 1
      %s32 = scalar_select %p31, 0, %s30
      %s33 = sadd.s32 1, %s17
      %s34 = scalar_select %p31, %s33, %s17
      %p35 = scmp.ge.s32.totalorder %s34, 2
      %s36 = scalar_select %p35, 0, %s34
      %s37 = ssub.s32 %s17, %s36
      %s38 = ssub.s32 %s19, %s28
      %s39 = sor.u32 %s37, %s38
      %p40 = scmp.eq.s32.totalorder %s39, 0
      %s42 = sadd.s32 %s41, 1
      %s43 = scalar_select %p40, %s41, %s42
      %p46 = pneg %p40
      %p47 = scmp.eq.s32.totalorder %s10, 1
      %p48 = por %p46, %p47
      %p49 = scmp.ne.s32.totalorder %s41, %s44
      %p50 = scmp.eq.s32.totalorder %s10, 0
      %p51 = por %p49, %p50
      %p52 = scmp.ne.s32.totalorder %s41, %s44
      %p53 = scmp.eq.s32.totalorder %s15, 1
      %p54 = por %p52, %p53
      %p55 = scmp.ne.s32.totalorder %s44, %s45
      %p56 = scmp.eq.s32.totalorder %s15, 0
      %p57 = por %p55, %p56
      %p58 = scmp.ne.s32.totalorder %s44, %s45
      %p59 = scmp.eq.s32.totalorder %s16, 1
      %p60 = por %p58, %p59
      %p62 = scmp.ne.s32.totalorder %s45, %s61
      %p63 = scmp.eq.s32.totalorder %s16, 0
      %p64 = por %p62, %p63
      %s65 = ssub.s32 %s19, %s28
      %s66 = ssub.s32 %s18, %s32
      %s67 = sor.u32 %s65, %s66
      %p68 = scmp.eq.s32.totalorder %s67, 0
      %s70 = sadd.s32 %s69, 1
      %s71 = scalar_select %p68, %s69, %s70
      %p74 = pneg %p68
      %p75 = scmp.eq.s32.totalorder %s10, 1
      %p76 = por %p74, %p75
      %p77 = scmp.ne.s32.totalorder %s69, %s72
      %p78 = scmp.eq.s32.totalorder %s10, 0
      %p79 = por %p77, %p78
      %p80 = scmp.ne.s32.totalorder %s69, %s72
      %p81 = scmp.eq.s32.totalorder %s15, 1
      %p82 = por %p80, %p81
      %p83 = scmp.ne.s32.totalorder %s72, %s73
      %p84 = scmp.eq.s32.totalorder %s15, 0
      %p85 = por %p83, %p84
      %p86 = scmp.ne.s32.totalorder %s72, %s73
      %p87 = scmp.eq.s32.totalorder %s16, 1
      %p88 = por %p86, %p87
      %p90 = scmp.ne.s32.totalorder %s73, %s89
      %p91 = scmp.eq.s32.totalorder %s16, 0
      %p92 = por %p90, %p91
      %s93 = ssub.s32 %s18, %s32
      %p94 = scmp.eq.s32.totalorder %s93, 0
      %s96 = sadd.s32 %s95, 1
      %s97 = scalar_select %p94, %s95, %s96
      %p100 = pneg %p94
      %p101 = scmp.eq.s32.totalorder %s10, 1
      %p102 = por %p100, %p101
      %p103 = scmp.ne.s32.totalorder %s95, %s98
      %p104 = scmp.eq.s32.totalorder %s10, 0
      %p105 = por %p103, %p104
      %p106 = scmp.ne.s32.totalorder %s95, %s98
      %p107 = scmp.eq.s32.totalorder %s15, 1
      %p108 = por %p106, %p107
      %p109 = scmp.ne.s32.totalorder %s98, %s99
      %p110 = scmp.eq.s32.totalorder %s15, 0
      %p111 = por %p109, %p110
      %p112 = scmp.ne.s32.totalorder %s98, %s99
      %p113 = scmp.eq.s32.totalorder %s16, 1
      %p114 = por %p112, %p113
      %p116 = scmp.ne.s32.totalorder %s99, %s115
      %p117 = scmp.eq.s32.totalorder %s16, 0
      %p118 = por %p116, %p117
      %s119 = ssub.s32 %s17, %s36
      %s120 = ssub.s32 %s18, %s32
      %s121 = sor.u32 %s119, %s120
      %p122 = scmp.eq.s32.totalorder %s121, 0
      %s124 = sadd.s32 %s123, 1
      %s125 = scalar_select %p122, %s123, %s124
      %p128 = pneg %p122
      %p129 = scmp.eq.s32.totalorder %s10, 1
      %p130 = por %p128, %p129
      %p131 = scmp.ne.s32.totalorder %s123, %s126
      %p132 = scmp.eq.s32.totalorder %s10, 0
      %p133 = por %p131, %p132
      %p134 = scmp.ne.s32.totalorder %s123, %s126
      %p135 = scmp.eq.s32.totalorder %s15, 1
      %p136 = por %p134, %p135
      %p137 = scmp.ne.s32.totalorder %s126, %s127
      %p138 = scmp.eq.s32.totalorder %s15, 0
      %p139 = por %p137, %p138
      %p140 = scmp.ne.s32.totalorder %s126, %s127
      %p141 = scmp.eq.s32.totalorder %s16, 1
      %p142 = por %p140, %p141
      %p144 = scmp.ne.s32.totalorder %s127, %s143
      %p145 = scmp.eq.s32.totalorder %s16, 0
      %p146 = por %p144, %p145
      %p147 = scmp.le.s32.totalorder 1, %s10
      %p148 = scmp.lt.s32.totalorder %s10, 3
      %p149 = pnand %p147, %p148
      %p150 = pneg %p149
      // Predicated region
      $region9: #{embedder_forward.6} parent=5 // pred_check
        _
      $region10: #{embedder_forward.6} parent=5 // pred_check_branch
        %152 = sbr.rel (%p149) target = $region12
      $region11: #{embedder_forward.6} parent=5 // pred_region
        %s153 = ssub.s32 %s10, 1
        // Predicated region
        $region13: #{embedder_forward.6} parent=11 // pred_check
          %p154 = pneg %p85
        $region14: #{embedder_forward.6} parent=11 // pred_check_branch
          %156 = sbr.rel (%p154) target = $region16
        $region15: #{embedder_forward.6} parent=11 // pred_region
          %s157 = smul.u32 128, %s22
          %p158 = scmp.lt.s32.totalorder %s157, 127
          %s159 = scalar_select %p158, %s157, 127
          %p160 = scmp.lt.s32.totalorder %s21, 0
          %s161 = scalar_select %p160, %s21, 0
          %s162 = sadd.s32 %s161, %s159
          %s163 = smul.addr %s162, 4
          %s164 = scalar_lea.vmem %s1, %s163
          %s165 = smul.u32 128, %s22
        $region16: #{embedder_forward.6} parent=11 // pred_fallthru
          _
        // Predicated region
        $region17: #{embedder_forward.6} parent=11 // pred_check
          %p166 = pneg %p111
        $region18: #{embedder_forward.6} parent=11 // pred_check_branch
          %168 = sbr.rel (%p166) target = $region20
        $region19: #{embedder_forward.6} parent=11 // pred_region
          %s170 = ssub.s32 16, 16
          %171 = vsyncadd [#allocation4], %s170
          %s172 = smul.addr %s21, 16
          %s173 = scalar_lea.hbm %s2, %s172
          %s175 = sshll.u32 [#allocation3], 4
          %s176 = int_to_ptr.vmem [resolvable:$true] %s175
          %178 = dma.hbm_to_vmem [thread:$0]  %s173, 16, %s176, [#allocation4]
        $region20: #{embedder_forward.6} parent=11 // pred_fallthru
          _
      $region12: #{embedder_forward.6} parent=5 // pred_fallthru
        _
      %p179 = scmp.lt.s32.totalorder %s10, 2
      // Predicated region
      $region21: #{embedder_forward.6} parent=5 // pred_check
        %p180 = pneg %p179
      $region22: #{embedder_forward.6} parent=5 // pred_check_branch
        %182 = sbr.rel (%p180) target = $region24
      $region23: #{embedder_forward.6} parent=5 // pred_region
        // Predicated region
        $region25: #{embedder_forward.6} parent=23 // pred_check
          %p183 = pneg %p51
        $region26: #{embedder_forward.6} parent=23 // pred_check_branch
          %185 = sbr.rel (%p183) target = $region28
        $region27: #{embedder_forward.6} parent=23 // pred_region
          %s186 = smul.u32 2, %s17
          %s187 = smul.u32 8, %s19
          %p188 = scmp.lt.s32.totalorder %s186, 3
          %s189 = scalar_select %p188, %s186, 3
          %p190 = scmp.lt.s32.totalorder %s187, 7
          %s191 = scalar_select %p190, %s187, 7
          %s192 = smul.addr %s189, 8
          %s193 = sadd.s32 %s191, %s192
          %s194 = smul.addr %s193, 4
          %s195 = scalar_lea.vmem %s0, %s194
          %s196 = smul.u32 2, %s17
          %s197 = smul.u32 8, %s19
        $region28: #{embedder_forward.6} parent=23 // pred_fallthru
          _
      $region24: #{embedder_forward.6} parent=5 // pred_fallthru
        _
      %p198 = scmp.le.s32.totalorder 1, %s10
      %p199 = scmp.lt.s32.totalorder %s10, 3
      %p200 = pnand %p198, %p199
      %p201 = pneg %p200
      // Predicated region
      $region29: #{embedder_forward.6} parent=5 // pred_check
        _
      $region30: #{embedder_forward.6} parent=5 // pred_check_branch
        %203 = sbr.rel (%p200) target = $region32
      $region31: #{embedder_forward.6} parent=5 // pred_region
        %s204 = ssub.s32 %s10, 1
        // Predicated region
        $region33: #{embedder_forward.6} parent=31 // pred_check
          %p205 = pneg %p111
        $region34: #{embedder_forward.6} parent=31 // pred_check_branch
          %207 = sbr.rel (%p205) target = $region36
        $region35: #{embedder_forward.6} parent=31 // pred_region
          %208 = dma.done [#allocation4], 16
        $region36: #{embedder_forward.6} parent=31 // pred_fallthru
          _
        %s209 = smul.u32 2, %s20
        %s210 = smul.u32 8, %s22
        %p211 = scmp.lt.s32.totalorder %s209, 3
        %s212 = scalar_select %p211, %s209, 3
        %p213 = scmp.lt.s32.totalorder %s210, 7
        %s214 = scalar_select %p213, %s210, 7
        %s215 = smul.addr %s212, 8
        %s216 = sadd.s32 %s214, %s215
        %s217 = smul.addr %s216, 4
        %s218 = scalar_lea.vmem %s0, %s217
        %p219 = pneg %p57
        %p220 = pneg %p54
        %s221 = smul.u32 128, %s22
        %p222 = scmp.lt.s32.totalorder %s221, 127
        %s223 = scalar_select %p222, %s221, 127
        %p224 = scmp.lt.s32.totalorder %s21, 0
        %s225 = scalar_select %p224, %s21, 0
        %s226 = sadd.s32 %s225, %s223
        %s227 = smul.addr %s226, 4
        %s228 = scalar_lea.vmem %s1, %s227
        %p229 = pneg %p85
        %p230 = pneg %p82
        %p231 = pneg %p111
        %p232 = pneg %p108
        %p233 = pneg %p139
        %p234 = pneg %p136
        %s235 = smul.u32 2, %s20
        %p236 = scmp.lt.s32.totalorder %s235, 3
        %s237 = scalar_select %p236, %s235, 3
        %p238 = scmp.lt.s32.totalorder %s21, 0
        %s239 = scalar_select %p238, %s21, 0
        %s240 = sadd.s32 %s239, %s237
        %s241 = smul.addr %s240, 4
        %s242 = scalar_lea.vmem %s3, %s241
        %s243 = smul.u32 2, %s20
        %s244 = smul.u32 8, %s22
        %p245 = scmp.lt.s32.totalorder %s243, 3
        %s246 = scalar_select %p245, %s243, 3
        %p247 = scmp.lt.s32.totalorder %s244, 7
        %s248 = scalar_select %p247, %s244, 7
        %s249 = smul.addr %s246, 8
        %s250 = sadd.s32 %s248, %s249
        %s251 = smul.addr %s250, 4
        %s252 = scalar_lea.vmem %s0, %s251
        %s253 = smul.u32 2, %s20
        %s254 = smul.u32 8, %s22
        %s255 = smul.u32 128, %s22
        %p256 = scmp.lt.s32.totalorder %s255, 127
        %s257 = scalar_select %p256, %s255, 127
        %p258 = scmp.lt.s32.totalorder %s21, 0
        %s259 = scalar_select %p258, %s21, 0
        %s260 = sadd.s32 %s259, %s257
        %s261 = smul.addr %s260, 4
        %s262 = scalar_lea.vmem %s1, %s261
        %s263 = smul.u32 128, %s22
        %s264 = smul.u32 2, %s20
        %p265 = scmp.lt.s32.totalorder %s264, 3
        %s266 = scalar_select %p265, %s264, 3
        %p267 = scmp.lt.s32.totalorder %s21, 0
        %s268 = scalar_select %p267, %s21, 0
        %s269 = sadd.s32 %s268, %s266
        %s270 = smul.addr %s269, 4
        %s271 = scalar_lea.vmem %s3, %s270
        %s272 = smul.u32 2, %s20
        %p274 = scmp.eq.s32.totalorder %s22, 0
        // Predicated region
        $region37: #{embedder_forward.6} parent=31 // pred_check
          %p275 = pneg %p274
        $region38: #{embedder_forward.6} parent=31 // pred_check_branch
          %277 = sbr.rel (%p275) target = $region40
        $region39: #{embedder_forward.6} parent=31 // pred_region
          %278 = vst [vmem:[#allocation2] sm:$0xff] 0.0
          %279 = vst [vmem:[#allocation2 + $0x8] sm:$0xff] 0.0
        $region40: #{embedder_forward.6} parent=31 // pred_fallthru
          _
        %v280 = vld [vmem:[#allocation2] sm:$0xff]
        %v281 = vld [vmem:[#allocation2 + $0x8] sm:$0xff]
        %v282 = vld [vmem:[%s252] sm:$0xff]
        %v283 = vld [vmem:[%s252 + $0x8] sm:$0xff]
        %v284 = vld [vmem:[%s252 + $0x10] sm:$0xff]
        %v285 = vld [vmem:[%s252 + $0x18] sm:$0xff]
        %v286 = vld [vmem:[%s252 + $0x20] sm:$0xff]
        %v287 = vld [vmem:[%s252 + $0x28] sm:$0xff]
        %v288 = vld [vmem:[%s252 + $0x30] sm:$0xff]
        %v289 = vld [vmem:[%s252 + $0x38] sm:$0xff]
        %v290 = vld [vmem:[%s262] sm:$0xf]
        %v291 = vld [vmem:[%s262 + $0x4] sm:$0xf]
        %v292 = vld [vmem:[%s262 + $0x8] sm:$0xf]
        %v293 = vld [vmem:[%s262 + $0xc] sm:$0xf]
        %v294 = vld [vmem:[%s262 + $0x10] sm:$0xf]
        %v295 = vld [vmem:[%s262 + $0x14] sm:$0xf]
        %v296 = vld [vmem:[%s262 + $0x18] sm:$0xf]
        %v297 = vld [vmem:[%s262 + $0x1c] sm:$0xf]
        %v298 = vld [vmem:[%s262 + $0x20] sm:$0xf]
        %v299 = vld [vmem:[%s262 + $0x24] sm:$0xf]
        %v300 = vld [vmem:[%s262 + $0x28] sm:$0xf]
        %v301 = vld [vmem:[%s262 + $0x2c] sm:$0xf]
        %v302 = vld [vmem:[%s262 + $0x30] sm:$0xf]
        %v303 = vld [vmem:[%s262 + $0x34] sm:$0xf]
        %v304 = vld [vmem:[%s262 + $0x38] sm:$0xf]
        %v305 = vld [vmem:[%s262 + $0x3c] sm:$0xf]
        %v306 = vld [vmem:[%s262 + $0x40] sm:$0xf]
        %v307 = vld [vmem:[%s262 + $0x44] sm:$0xf]
        %v308 = vld [vmem:[%s262 + $0x48] sm:$0xf]
        %v309 = vld [vmem:[%s262 + $0x4c] sm:$0xf]
        %v310 = vld [vmem:[%s262 + $0x50] sm:$0xf]
        %v311 = vld [vmem:[%s262 + $0x54] sm:$0xf]
        %v312 = vld [vmem:[%s262 + $0x58] sm:$0xf]
        %v313 = vld [vmem:[%s262 + $0x5c] sm:$0xf]
        %v314 = vld [vmem:[%s262 + $0x60] sm:$0xf]
        %v315 = vld [vmem:[%s262 + $0x64] sm:$0xf]
        %v316 = vld [vmem:[%s262 + $0x68] sm:$0xf]
        %v317 = vld [vmem:[%s262 + $0x6c] sm:$0xf]
        %v318 = vld [vmem:[%s262 + $0x70] sm:$0xf]
        %v319 = vld [vmem:[%s262 + $0x74] sm:$0xf]
        %v320 = vld [vmem:[%s262 + $0x78] sm:$0xf]
        %v321 = vld [vmem:[%s262 + $0x7c] sm:$0xf]
        %v322 = vld [vmem:[%s262 + $0x80] sm:$0xf]
        %v323 = vld [vmem:[%s262 + $0x84] sm:$0xf]
        %v324 = vld [vmem:[%s262 + $0x88] sm:$0xf]
        %v325 = vld [vmem:[%s262 + $0x8c] sm:$0xf]
        %v326 = vld [vmem:[%s262 + $0x90] sm:$0xf]
        %v327 = vld [vmem:[%s262 + $0x94] sm:$0xf]
        %v328 = vld [vmem:[%s262 + $0x98] sm:$0xf]
        %v329 = vld [vmem:[%s262 + $0x9c] sm:$0xf]
        %v330 = vld [vmem:[%s262 + $0xa0] sm:$0xf]
        %v331 = vld [vmem:[%s262 + $0xa4] sm:$0xf]
        %v332 = vld [vmem:[%s262 + $0xa8] sm:$0xf]
        %v333 = vld [vmem:[%s262 + $0xac] sm:$0xf]
        %v334 = vld [vmem:[%s262 + $0xb0] sm:$0xf]
        %v335 = vld [vmem:[%s262 + $0xb4] sm:$0xf]
        %v336 = vld [vmem:[%s262 + $0xb8] sm:$0xf]
        %v337 = vld [vmem:[%s262 + $0xbc] sm:$0xf]
        %v338 = vld [vmem:[%s262 + $0xc0] sm:$0xf]
        %v339 = vld [vmem:[%s262 + $0xc4] sm:$0xf]
        %v340 = vld [vmem:[%s262 + $0xc8] sm:$0xf]
        %v341 = vld [vmem:[%s262 + $0xcc] sm:$0xf]
        %v342 = vld [vmem:[%s262 + $0xd0] sm:$0xf]
        %v343 = vld [vmem:[%s262 + $0xd4] sm:$0xf]
        %v344 = vld [vmem:[%s262 + $0xd8] sm:$0xf]
        %v345 = vld [vmem:[%s262 + $0xdc] sm:$0xf]
        %v346 = vld [vmem:[%s262 + $0xe0] sm:$0xf]
        %v347 = vld [vmem:[%s262 + $0xe4] sm:$0xf]
        %v348 = vld [vmem:[%s262 + $0xe8] sm:$0xf]
        %v349 = vld [vmem:[%s262 + $0xec] sm:$0xf]
        %v350 = vld [vmem:[%s262 + $0xf0] sm:$0xf]
        %v351 = vld [vmem:[%s262 + $0xf4] sm:$0xf]
        %v352 = vld [vmem:[%s262 + $0xf8] sm:$0xf]
        %v353 = vld [vmem:[%s262 + $0xfc] sm:$0xf]
        %v354 = vld [vmem:[%s262 + $0x100] sm:$0xf]
        %v355 = vld [vmem:[%s262 + $0x104] sm:$0xf]
        %v356 = vld [vmem:[%s262 + $0x108] sm:$0xf]
        %v357 = vld [vmem:[%s262 + $0x10c] sm:$0xf]
        %v358 = vld [vmem:[%s262 + $0x110] sm:$0xf]
        %v359 = vld [vmem:[%s262 + $0x114] sm:$0xf]
        %v360 = vld [vmem:[%s262 + $0x118] sm:$0xf]
        %v361 = vld [vmem:[%s262 + $0x11c] sm:$0xf]
        %v362 = vld [vmem:[%s262 + $0x120] sm:$0xf]
        %v363 = vld [vmem:[%s262 + $0x124] sm:$0xf]
        %v364 = vld [vmem:[%s262 + $0x128] sm:$0xf]
        %v365 = vld [vmem:[%s262 + $0x12c] sm:$0xf]
        %v366 = vld [vmem:[%s262 + $0x130] sm:$0xf]
        %v367 = vld [vmem:[%s262 + $0x134] sm:$0xf]
        %v368 = vld [vmem:[%s262 + $0x138] sm:$0xf]
        %v369 = vld [vmem:[%s262 + $0x13c] sm:$0xf]
        %v370 = vld [vmem:[%s262 + $0x140] sm:$0xf]
        %v371 = vld [vmem:[%s262 + $0x144] sm:$0xf]
        %v372 = vld [vmem:[%s262 + $0x148] sm:$0xf]
        %v373 = vld [vmem:[%s262 + $0x14c] sm:$0xf]
        %v374 = vld [vmem:[%s262 + $0x150] sm:$0xf]
        %v375 = vld [vmem:[%s262 + $0x154] sm:$0xf]
        %v376 = vld [vmem:[%s262 + $0x158] sm:$0xf]
        %v377 = vld [vmem:[%s262 + $0x15c] sm:$0xf]
        %v378 = vld [vmem:[%s262 + $0x160] sm:$0xf]
        %v379 = vld [vmem:[%s262 + $0x164] sm:$0xf]
        %v380 = vld [vmem:[%s262 + $0x168] sm:$0xf]
        %v381 = vld [vmem:[%s262 + $0x16c] sm:$0xf]
        %v382 = vld [vmem:[%s262 + $0x170] sm:$0xf]
        %v383 = vld [vmem:[%s262 + $0x174] sm:$0xf]
        %v384 = vld [vmem:[%s262 + $0x178] sm:$0xf]
        %v385 = vld [vmem:[%s262 + $0x17c] sm:$0xf]
        %v386 = vld [vmem:[%s262 + $0x180] sm:$0xf]
        %v387 = vld [vmem:[%s262 + $0x184] sm:$0xf]
        %v388 = vld [vmem:[%s262 + $0x188] sm:$0xf]
        %v389 = vld [vmem:[%s262 + $0x18c] sm:$0xf]
        %v390 = vld [vmem:[%s262 + $0x190] sm:$0xf]
        %v391 = vld [vmem:[%s262 + $0x194] sm:$0xf]
        %v392 = vld [vmem:[%s262 + $0x198] sm:$0xf]
        %v393 = vld [vmem:[%s262 + $0x19c] sm:$0xf]
        %v394 = vld [vmem:[%s262 + $0x1a0] sm:$0xf]
        %v395 = vld [vmem:[%s262 + $0x1a4] sm:$0xf]
        %v396 = vld [vmem:[%s262 + $0x1a8] sm:$0xf]
        %v397 = vld [vmem:[%s262 + $0x1ac] sm:$0xf]
        %v398 = vld [vmem:[%s262 + $0x1b0] sm:$0xf]
        %v399 = vld [vmem:[%s262 + $0x1b4] sm:$0xf]
        %v400 = vld [vmem:[%s262 + $0x1b8] sm:$0xf]
        %v401 = vld [vmem:[%s262 + $0x1bc] sm:$0xf]
        %v402 = vld [vmem:[%s262 + $0x1c0] sm:$0xf]
        %v403 = vld [vmem:[%s262 + $0x1c4] sm:$0xf]
        %v404 = vld [vmem:[%s262 + $0x1c8] sm:$0xf]
        %v405 = vld [vmem:[%s262 + $0x1cc] sm:$0xf]
        %v406 = vld [vmem:[%s262 + $0x1d0] sm:$0xf]
        %v407 = vld [vmem:[%s262 + $0x1d4] sm:$0xf]
        %v408 = vld [vmem:[%s262 + $0x1d8] sm:$0xf]
        %v409 = vld [vmem:[%s262 + $0x1dc] sm:$0xf]
        %v410 = vld [vmem:[%s262 + $0x1e0] sm:$0xf]
        %v411 = vld [vmem:[%s262 + $0x1e4] sm:$0xf]
        %v412 = vld [vmem:[%s262 + $0x1e8] sm:$0xf]
        %v413 = vld [vmem:[%s262 + $0x1ec] sm:$0xf]
        %v414 = vld [vmem:[%s262 + $0x1f0] sm:$0xf]
        %v415 = vld [vmem:[%s262 + $0x1f4] sm:$0xf]
        %v416 = vld [vmem:[%s262 + $0x1f8] sm:$0xf]
        %v417 = vld [vmem:[%s262 + $0x1fc] sm:$0xf]
        %v426 = vunpack.c.l.b16 %v282
        %v427 = vunpack.c.h.b16 %v282
        %v428 = vunpack.c.l.b16 %v283
        %v429 = vunpack.c.h.b16 %v283
        %v430 = vunpack.c.l.b16 %v284
        %v431 = vunpack.c.h.b16 %v284
        %v432 = vunpack.c.l.b16 %v285
        %v433 = vunpack.c.h.b16 %v285
        %v434 = vunpack.c.l.b16 %v286
        %v435 = vunpack.c.h.b16 %v286
        %v436 = vunpack.c.l.b16 %v287
        %v437 = vunpack.c.h.b16 %v287
        %v438 = vunpack.c.l.b16 %v288
        %v439 = vunpack.c.h.b16 %v288
        %v440 = vunpack.c.l.b16 %v289
        %v441 = vunpack.c.h.b16 %v289
        %v442 = vpack.c.b16 %v434, %v426
        %v443 = vpack.c.b16 %v435, %v427
        %v444 = vpack.c.b16 %v436, %v428
        %v445 = vpack.c.b16 %v437, %v429
        %v446 = vpack.c.b16 %v438, %v430
        %v447 = vpack.c.b16 %v439, %v431
        %v448 = vpack.c.b16 %v440, %v432
        %v449 = vpack.c.b16 %v441, %v433
        %v586 = vunpack.c.l.b16 %v290
        %v587 = vunpack.c.l.b16 %v291
        %v588 = vunpack.c.l.b16 %v292
        %v589 = vunpack.c.l.b16 %v293
        %v590 = vunpack.c.l.b16 %v294
        %v591 = vunpack.c.l.b16 %v295
        %v592 = vunpack.c.l.b16 %v296
        %v593 = vunpack.c.l.b16 %v297
        %v594 = vunpack.c.l.b16 %v298
        %v595 = vunpack.c.l.b16 %v299
        %v596 = vunpack.c.l.b16 %v300
        %v597 = vunpack.c.l.b16 %v301
        %v598 = vunpack.c.l.b16 %v302
        %v599 = vunpack.c.l.b16 %v303
        %v600 = vunpack.c.l.b16 %v304
        %v601 = vunpack.c.l.b16 %v305
        %v602 = vunpack.c.l.b16 %v306
        %v603 = vunpack.c.l.b16 %v307
        %v604 = vunpack.c.l.b16 %v308
        %v605 = vunpack.c.l.b16 %v309
        %v606 = vunpack.c.l.b16 %v310
        %v607 = vunpack.c.l.b16 %v311
        %v608 = vunpack.c.l.b16 %v312
        %v609 = vunpack.c.l.b16 %v313
        %v610 = vunpack.c.l.b16 %v314
        %v611 = vunpack.c.l.b16 %v315
        %v612 = vunpack.c.l.b16 %v316
        %v613 = vunpack.c.l.b16 %v317
        %v614 = vunpack.c.l.b16 %v318
        %v615 = vunpack.c.l.b16 %v319
        %v616 = vunpack.c.l.b16 %v320
        %v617 = vunpack.c.l.b16 %v321
        %v618 = vunpack.c.l.b16 %v322
        %v619 = vunpack.c.l.b16 %v323
        %v620 = vunpack.c.l.b16 %v324
        %v621 = vunpack.c.l.b16 %v325
        %v622 = vunpack.c.l.b16 %v326
        %v623 = vunpack.c.l.b16 %v327
        %v624 = vunpack.c.l.b16 %v328
        %v625 = vunpack.c.l.b16 %v329
        %v626 = vunpack.c.l.b16 %v330
        %v627 = vunpack.c.l.b16 %v331
        %v628 = vunpack.c.l.b16 %v332
        %v629 = vunpack.c.l.b16 %v333
        %v630 = vunpack.c.l.b16 %v334
        %v631 = vunpack.c.l.b16 %v335
        %v632 = vunpack.c.l.b16 %v336
        %v633 = vunpack.c.l.b16 %v337
        %v634 = vunpack.c.l.b16 %v338
        %v635 = vunpack.c.l.b16 %v339
        %v636 = vunpack.c.l.b16 %v340
        %v637 = vunpack.c.l.b16 %v341
        %v638 = vunpack.c.l.b16 %v342
        %v639 = vunpack.c.l.b16 %v343
        %v640 = vunpack.c.l.b16 %v344
        %v641 = vunpack.c.l.b16 %v345
        %v642 = vunpack.c.l.b16 %v346
        %v643 = vunpack.c.l.b16 %v347
        %v644 = vunpack.c.l.b16 %v348
        %v645 = vunpack.c.l.b16 %v349
        %v646 = vunpack.c.l.b16 %v350
        %v647 = vunpack.c.l.b16 %v351
        %v648 = vunpack.c.l.b16 %v352
        %v649 = vunpack.c.l.b16 %v353
        %v650 = vunpack.c.l.b16 %v354
        %v651 = vunpack.c.l.b16 %v355
        %v652 = vunpack.c.l.b16 %v356
        %v653 = vunpack.c.l.b16 %v357
        %v654 = vunpack.c.l.b16 %v358
        %v655 = vunpack.c.l.b16 %v359
        %v656 = vunpack.c.l.b16 %v360
        %v657 = vunpack.c.l.b16 %v361
        %v658 = vunpack.c.l.b16 %v362
        %v659 = vunpack.c.l.b16 %v363
        %v660 = vunpack.c.l.b16 %v364
        %v661 = vunpack.c.l.b16 %v365
        %v662 = vunpack.c.l.b16 %v366
        %v663 = vunpack.c.l.b16 %v367
        %v664 = vunpack.c.l.b16 %v368
        %v665 = vunpack.c.l.b16 %v369
        %v666 = vunpack.c.l.b16 %v370
        %v667 = vunpack.c.l.b16 %v371
        %v668 = vunpack.c.l.b16 %v372
        %v669 = vunpack.c.l.b16 %v373
        %v670 = vunpack.c.l.b16 %v374
        %v671 = vunpack.c.l.b16 %v375
        %v672 = vunpack.c.l.b16 %v376
        %v673 = vunpack.c.l.b16 %v377
        %v674 = vunpack.c.l.b16 %v378
        %v675 = vunpack.c.l.b16 %v379
        %v676 = vunpack.c.l.b16 %v380
        %v677 = vunpack.c.l.b16 %v381
        %v678 = vunpack.c.l.b16 %v382
        %v679 = vunpack.c.l.b16 %v383
        %v680 = vunpack.c.l.b16 %v384
        %v681 = vunpack.c.l.b16 %v385
        %v682 = vunpack.c.l.b16 %v386
        %v683 = vunpack.c.l.b16 %v387
        %v684 = vunpack.c.l.b16 %v388
        %v685 = vunpack.c.l.b16 %v389
        %v686 = vunpack.c.l.b16 %v390
        %v687 = vunpack.c.l.b16 %v391
        %v688 = vunpack.c.l.b16 %v392
        %v689 = vunpack.c.l.b16 %v393
        %v690 = vunpack.c.l.b16 %v394
        %v691 = vunpack.c.l.b16 %v395
        %v692 = vunpack.c.l.b16 %v396
        %v693 = vunpack.c.l.b16 %v397
        %v694 = vunpack.c.l.b16 %v398
        %v695 = vunpack.c.l.b16 %v399
        %v696 = vunpack.c.l.b16 %v400
        %v697 = vunpack.c.l.b16 %v401
        %v698 = vunpack.c.l.b16 %v402
        %v699 = vunpack.c.l.b16 %v403
        %v700 = vunpack.c.l.b16 %v404
        %v701 = vunpack.c.l.b16 %v405
        %v702 = vunpack.c.l.b16 %v406
        %v703 = vunpack.c.l.b16 %v407
        %v704 = vunpack.c.l.b16 %v408
        %v705 = vunpack.c.l.b16 %v409
        %v706 = vunpack.c.l.b16 %v410
        %v707 = vunpack.c.l.b16 %v411
        %v708 = vunpack.c.l.b16 %v412
        %v709 = vunpack.c.l.b16 %v413
        %v710 = vunpack.c.l.b16 %v414
        %v711 = vunpack.c.l.b16 %v415
        %v712 = vunpack.c.l.b16 %v416
        %v713 = vunpack.c.l.b16 %v417
        %v714 = vpack.c.b16 %v587, %v586
        %v715 = vpack.c.b16 %v589, %v588
        %v716 = vpack.c.b16 %v591, %v590
        %v717 = vpack.c.b16 %v593, %v592
        %v718 = vpack.c.b16 %v595, %v594
        %v719 = vpack.c.b16 %v597, %v596
        %v720 = vpack.c.b16 %v599, %v598
        %v721 = vpack.c.b16 %v601, %v600
        %v722 = vpack.c.b16 %v603, %v602
        %v723 = vpack.c.b16 %v605, %v604
        %v724 = vpack.c.b16 %v607, %v606
        %v725 = vpack.c.b16 %v609, %v608
        %v726 = vpack.c.b16 %v611, %v610
        %v727 = vpack.c.b16 %v613, %v612
        %v728 = vpack.c.b16 %v615, %v614
        %v729 = vpack.c.b16 %v617, %v616
        %v730 = vpack.c.b16 %v619, %v618
        %v731 = vpack.c.b16 %v621, %v620
        %v732 = vpack.c.b16 %v623, %v622
        %v733 = vpack.c.b16 %v625, %v624
        %v734 = vpack.c.b16 %v627, %v626
        %v735 = vpack.c.b16 %v629, %v628
        %v736 = vpack.c.b16 %v631, %v630
        %v737 = vpack.c.b16 %v633, %v632
        %v738 = vpack.c.b16 %v635, %v634
        %v739 = vpack.c.b16 %v637, %v636
        %v740 = vpack.c.b16 %v639, %v638
        %v741 = vpack.c.b16 %v641, %v640
        %v742 = vpack.c.b16 %v643, %v642
        %v743 = vpack.c.b16 %v645, %v644
        %v744 = vpack.c.b16 %v647, %v646
        %v745 = vpack.c.b16 %v649, %v648
        %v746 = vpack.c.b16 %v651, %v650
        %v747 = vpack.c.b16 %v653, %v652
        %v748 = vpack.c.b16 %v655, %v654
        %v749 = vpack.c.b16 %v657, %v656
        %v750 = vpack.c.b16 %v659, %v658
        %v751 = vpack.c.b16 %v661, %v660
        %v752 = vpack.c.b16 %v663, %v662
        %v753 = vpack.c.b16 %v665, %v664
        %v754 = vpack.c.b16 %v667, %v666
        %v755 = vpack.c.b16 %v669, %v668
        %v756 = vpack.c.b16 %v671, %v670
        %v757 = vpack.c.b16 %v673, %v672
        %v758 = vpack.c.b16 %v675, %v674
        %v759 = vpack.c.b16 %v677, %v676
        %v760 = vpack.c.b16 %v679, %v678
        %v761 = vpack.c.b16 %v681, %v680
        %v762 = vpack.c.b16 %v683, %v682
        %v763 = vpack.c.b16 %v685, %v684
        %v764 = vpack.c.b16 %v687, %v686
        %v765 = vpack.c.b16 %v689, %v688
        %v766 = vpack.c.b16 %v691, %v690
        %v767 = vpack.c.b16 %v693, %v692
        %v768 = vpack.c.b16 %v695, %v694
        %v769 = vpack.c.b16 %v697, %v696
        %v770 = vpack.c.b16 %v699, %v698
        %v771 = vpack.c.b16 %v701, %v700
        %v772 = vpack.c.b16 %v703, %v702
        %v773 = vpack.c.b16 %v705, %v704
        %v774 = vpack.c.b16 %v707, %v706
        %v775 = vpack.c.b16 %v709, %v708
        %v776 = vpack.c.b16 %v711, %v710
        %v777 = vpack.c.b16 %v713, %v712
        %842 = vmatprep.subr.bf16.mxu0 0
        %843 = vmatpush1.bf16.msra.mxu0 %v721
        %844 = vmatprep.subr.bf16.mxu0 0
        %845 = vmatpush1.bf16.msra.mxu0 %v720
        %846 = vmatprep.subr.bf16.mxu0 0
        %847 = vmatpush1.bf16.msra.mxu0 %v719
        %848 = vmatprep.subr.bf16.mxu0 0
        %849 = vmatpush1.bf16.msra.mxu0 %v718
        %850 = vmatprep.subr.bf16.mxu0 0
        %851 = vmatpush1.bf16.msra.mxu0 %v717
        %852 = vmatprep.subr.bf16.mxu0 0
        %853 = vmatpush1.bf16.msra.mxu0 %v716
        %854 = vmatprep.subr.bf16.mxu0 0
        %855 = vmatpush1.bf16.msra.mxu0 %v715
        %856 = vmatprep.subr.bf16.mxu0 0
        %857 = vmatpush1.bf16.msra.mxu0 %v714
        %858 = vmatprep.subr.bf16.mxu0 0
        %859 = vmatpush2.bf16.msra.mxu0 %v729
        %860 = vmatprep.subr.bf16.mxu0 0
        %861 = vmatpush2.bf16.msra.mxu0 %v728
        %862 = vmatprep.subr.bf16.mxu0 0
        %863 = vmatpush2.bf16.msra.mxu0 %v727
        %864 = vmatprep.subr.bf16.mxu0 0
        %865 = vmatpush2.bf16.msra.mxu0 %v726
        %866 = vmatprep.subr.bf16.mxu0 0
        %867 = vmatpush2.bf16.msra.mxu0 %v725
        %868 = vmatprep.subr.bf16.mxu0 0
        %869 = vmatpush2.bf16.msra.mxu0 %v724
        %870 = vmatprep.subr.bf16.mxu0 0
        %871 = vmatpush2.bf16.msra.mxu0 %v723
        %872 = vmatprep.subr.bf16.mxu0 0
        %873 = vmatpush2.bf16.msra.mxu0 %v722
        %874 = vmatprep.mubr.bf16.mxu0 %v443
        %875 = vmatmul.mubr.bf16.gmra.mxu0 %v442
        %v876 = vpop.f32.mrf.mxu0
        %v877 = vadd.f32 0.0, %v876
        %v878 = vpop.f32.mrf.mxu0
        %v879 = vpop.f32.mrf.mxu0
        %v880 = vadd.f32 0.0, %v879
        %v881 = vpop.f32.mrf.mxu0
        %882 = vdwg.mxu0
        %883 = vmatprep.subr.bf16.mxu0 0
        %884 = vmatpush1.bf16.msra.mxu0 %v737
        %885 = vmatprep.subr.bf16.mxu0 0
        %886 = vmatpush1.bf16.msra.mxu0 %v736
        %887 = vmatprep.subr.bf16.mxu0 0
        %888 = vmatpush1.bf16.msra.mxu0 %v735
        %889 = vmatprep.subr.bf16.mxu0 0
        %890 = vmatpush1.bf16.msra.mxu0 %v734
        %891 = vmatprep.subr.bf16.mxu0 0
        %892 = vmatpush1.bf16.msra.mxu0 %v733
        %893 = vmatprep.subr.bf16.mxu0 0
        %894 = vmatpush1.bf16.msra.mxu0 %v732
        %895 = vmatprep.subr.bf16.mxu0 0
        %896 = vmatpush1.bf16.msra.mxu0 %v731
        %897 = vmatprep.subr.bf16.mxu0 0
        %898 = vmatpush1.bf16.msra.mxu0 %v730
        %899 = vmatprep.subr.bf16.mxu0 0
        %900 = vmatpush2.bf16.msra.mxu0 %v745
        %901 = vmatprep.subr.bf16.mxu0 0
        %902 = vmatpush2.bf16.msra.mxu0 %v744
        %903 = vmatprep.subr.bf16.mxu0 0
        %904 = vmatpush2.bf16.msra.mxu0 %v743
        %905 = vmatprep.subr.bf16.mxu0 0
        %906 = vmatpush2.bf16.msra.mxu0 %v742
        %907 = vmatprep.subr.bf16.mxu0 0
        %908 = vmatpush2.bf16.msra.mxu0 %v741
        %909 = vmatprep.subr.bf16.mxu0 0
        %910 = vmatpush2.bf16.msra.mxu0 %v740
        %911 = vmatprep.subr.bf16.mxu0 0
        %912 = vmatpush2.bf16.msra.mxu0 %v739
        %913 = vmatprep.subr.bf16.mxu0 0
        %914 = vmatpush2.bf16.msra.mxu0 %v738
        %915 = vmatprep.mubr.bf16.mxu0 %v445
        %916 = vmatmul.mubr.bf16.gmra.mxu0 %v444
        %v917 = vpop.f32.mrf.mxu0
        %v918 = vadd.f32 %v877, %v917
        %v919 = vpop.f32.mrf.mxu0
        %v920 = vpop.f32.mrf.mxu0
        %v921 = vadd.f32 %v880, %v920
        %v922 = vpop.f32.mrf.mxu0
        %923 = vdwg.mxu0
        %924 = vmatprep.subr.bf16.mxu0 0
        %925 = vmatpush1.bf16.msra.mxu0 %v753
        %926 = vmatprep.subr.bf16.mxu0 0
        %927 = vmatpush1.bf16.msra.mxu0 %v752
        %928 = vmatprep.subr.bf16.mxu0 0
        %929 = vmatpush1.bf16.msra.mxu0 %v751
        %930 = vmatprep.subr.bf16.mxu0 0
        %931 = vmatpush1.bf16.msra.mxu0 %v750
        %932 = vmatprep.subr.bf16.mxu0 0
        %933 = vmatpush1.bf16.msra.mxu0 %v749
        %934 = vmatprep.subr.bf16.mxu0 0
        %935 = vmatpush1.bf16.msra.mxu0 %v748
        %936 = vmatprep.subr.bf16.mxu0 0
        %937 = vmatpush1.bf16.msra.mxu0 %v747
        %938 = vmatprep.subr.bf16.mxu0 0
        %939 = vmatpush1.bf16.msra.mxu0 %v746
        %940 = vmatprep.subr.bf16.mxu0 0
        %941 = vmatpush2.bf16.msra.mxu0 %v761
        %942 = vmatprep.subr.bf16.mxu0 0
        %943 = vmatpush2.bf16.msra.mxu0 %v760
        %944 = vmatprep.subr.bf16.mxu0 0
        %945 = vmatpush2.bf16.msra.mxu0 %v759
        %946 = vmatprep.subr.bf16.mxu0 0
        %947 = vmatpush2.bf16.msra.mxu0 %v758
        %948 = vmatprep.subr.bf16.mxu0 0
        %949 = vmatpush2.bf16.msra.mxu0 %v757
        %950 = vmatprep.subr.bf16.mxu0 0
        %951 = vmatpush2.bf16.msra.mxu0 %v756
        %952 = vmatprep.subr.bf16.mxu0 0
        %953 = vmatpush2.bf16.msra.mxu0 %v755
        %954 = vmatprep.subr.bf16.mxu0 0
        %955 = vmatpush2.bf16.msra.mxu0 %v754
        %956 = vmatprep.mubr.bf16.mxu0 %v447
        %957 = vmatmul.mubr.bf16.gmra.mxu0 %v446
        %v958 = vpop.f32.mrf.mxu0
        %v959 = vadd.f32 %v918, %v958
        %v960 = vpop.f32.mrf.mxu0
        %v961 = vpop.f32.mrf.mxu0
        %v962 = vadd.f32 %v921, %v961
        %v963 = vpop.f32.mrf.mxu0
        %964 = vdwg.mxu0
        %965 = vmatprep.subr.bf16.mxu0 0
        %966 = vmatpush1.bf16.msra.mxu0 %v769
        %967 = vmatprep.subr.bf16.mxu0 0
        %968 = vmatpush1.bf16.msra.mxu0 %v768
        %969 = vmatprep.subr.bf16.mxu0 0
        %970 = vmatpush1.bf16.msra.mxu0 %v767
        %971 = vmatprep.subr.bf16.mxu0 0
        %972 = vmatpush1.bf16.msra.mxu0 %v766
        %973 = vmatprep.subr.bf16.mxu0 0
        %974 = vmatpush1.bf16.msra.mxu0 %v765
        %975 = vmatprep.subr.bf16.mxu0 0
        %976 = vmatpush1.bf16.msra.mxu0 %v764
        %977 = vmatprep.subr.bf16.mxu0 0
        %978 = vmatpush1.bf16.msra.mxu0 %v763
        %979 = vmatprep.subr.bf16.mxu0 0
        %980 = vmatpush1.bf16.msra.mxu0 %v762
        %981 = vmatprep.subr.bf16.mxu0 0
        %982 = vmatpush2.bf16.msra.mxu0 %v777
        %983 = vmatprep.subr.bf16.mxu0 0
        %984 = vmatpush2.bf16.msra.mxu0 %v776
        %985 = vmatprep.subr.bf16.mxu0 0
        %986 = vmatpush2.bf16.msra.mxu0 %v775
        %987 = vmatprep.subr.bf16.mxu0 0
        %988 = vmatpush2.bf16.msra.mxu0 %v774
        %989 = vmatprep.subr.bf16.mxu0 0
        %990 = vmatpush2.bf16.msra.mxu0 %v773
        %991 = vmatprep.subr.bf16.mxu0 0
        %992 = vmatpush2.bf16.msra.mxu0 %v772
        %993 = vmatprep.subr.bf16.mxu0 0
        %994 = vmatpush2.bf16.msra.mxu0 %v771
        %995 = vmatprep.subr.bf16.mxu0 0
        %996 = vmatpush2.bf16.msra.mxu0 %v770
        %997 = vmatprep.mubr.bf16.mxu0 %v449
        %998 = vmatmul.mubr.bf16.gmra.mxu0 %v448
        %v999 = vpop.f32.mrf.mxu0
        %v1000 = vadd.f32 %v959, %v999
        %v1001 = vpop.f32.mrf.mxu0
        %v1002 = vpop.f32.mrf.mxu0
        %v1003 = vadd.f32 %v962, %v1002
        %v1004 = vpop.f32.mrf.mxu0
        %1005 = vdwg.mxu0
        %v1006 = vadd.f32 %v280, %v1000
        %v1007 = vadd.f32 %v281, %v1003
        %1008 = vst [vmem:[#allocation2] sm:$0xff] %v1006
        %1009 = vst [vmem:[#allocation2 + $0x8] sm:$0xff] %v1007
        // Predicated region
        $region41: #{embedder_forward.6} parent=31 // pred_check
          %p1010 = pneg %p274
        $region42: #{embedder_forward.6} parent=31 // pred_check_branch
          %1012 = sbr.rel (%p1010) target = $region44
        $region43: #{embedder_forward.6} parent=31 // pred_region
          %v1013 = vld [vmem:[#allocation2] sm:$0xff]
          %v1014 = vld [vmem:[#allocation2 + $0x8] sm:$0xff]
          %v1015 = vld [vmem:[#allocation3] sm:$0x1]
          %v1017 = vlaneseq
          %v1018 = vshrl.u32 %v1017, 7
          %v1019 = vsub.s32 0, %v1018
          %v1020 = vrot.slane %v1015, %v1019
          %v1022 = vadd.f32 %v1013, %v1020
          %v1023 = vadd.f32 %v1014, %v1020
          %vm1024 = vcmp.ge.f32.partialorder %v1022, 0.0
          %vm1025 = vcmp.ge.f32.partialorder %v1023, 0.0
          %v1026 = vmul.f32 %v1022, 0.2
          %v1027 = vmul.f32 %v1023, 0.2
          %v1028 = vsel %vm1024, %v1022, %v1026
          %v1029 = vsel %vm1025, %v1023, %v1027
          %v1030 = vpack.c.bf16 %v1029, %v1028
          %v1032 = vunpack.c.l.b16 %v1030
          %v1033 = vunpack.c.h.b16 %v1030
          %v1034 = vpack.c.b16 %v1032, %v1032
          %v1035 = vpack.c.b16 %v1033, %v1033
          %1038 = vst [vmem:[%s271] sm:$0xf] %v1034
          %1039 = vst [vmem:[%s271 + $0x4] sm:$0xf] %v1035
        $region44: #{embedder_forward.6} parent=31 // pred_fallthru
          _
        %s1040 = smul.u32 2, %s20
        %p1041 = scmp.lt.s32.totalorder %s1040, 3
        %s1042 = scalar_select %p1041, %s1040, 3
        %p1043 = scmp.lt.s32.totalorder %s21, 0
        %s1044 = scalar_select %p1043, %s21, 0
        %s1045 = sadd.s32 %s1044, %s1042
        %s1046 = smul.addr %s1045, 4
        %s1047 = scalar_lea.vmem %s3, %s1046
        // Predicated region
        $region45: #{embedder_forward.6} parent=31 // pred_check
          %p1048 = pneg %p136
        $region46: #{embedder_forward.6} parent=31 // pred_check_branch
          %1050 = sbr.rel (%p1048) target = $region48
        $region47: #{embedder_forward.6} parent=31 // pred_region
          %s1051 = smul.u32 2, %s20
        $region48: #{embedder_forward.6} parent=31 // pred_fallthru
          _
      $region32: #{embedder_forward.6} parent=5 // pred_fallthru
        _
      %p1052 = scmp.le.s32.totalorder 2, %s10
      // Predicated region
      $region49: #{embedder_forward.6} parent=5 // pred_check
        %p1053 = pneg %p1052
      $region50: #{embedder_forward.6} parent=5 // pred_check_branch
        %1055 = sbr.rel (%p1053) target = $region52
      $region51: #{embedder_forward.6} parent=5 // pred_region
        %s1056 = ssub.s32 %s10, 2
        // Predicated region
        $region53: #{embedder_forward.6} parent=51 // pred_check
          %p1057 = pneg %p142
        $region54: #{embedder_forward.6} parent=51 // pred_check_branch
          %1059 = sbr.rel (%p1057) target = $region56
        $region55: #{embedder_forward.6} parent=51 // pred_region
          %s1060 = smul.u32 2, %s23
          %p1061 = scmp.lt.s32.totalorder %s1060, 3
          %s1062 = scalar_select %p1061, %s1060, 3
          %p1063 = scmp.lt.s32.totalorder %s24, 0
          %s1064 = scalar_select %p1063, %s24, 0
          %s1065 = sadd.s32 %s1064, %s1062
          %s1066 = smul.addr %s1065, 4
          %s1067 = scalar_lea.vmem %s3, %s1066
        $region56: #{embedder_forward.6} parent=51 // pred_fallthru
          _
      $region52: #{embedder_forward.6} parent=5 // pred_fallthru
        _
    $region6: #{embedder_forward.6} parent=1 // loop_footer
      %s14 = sadd.s32 1, %s10
    $region7: #{embedder_forward.6} parent=1 // loop_footer_branch
      %9 = sbr.rel target = $region3
    $region8: #{embedder_forward.6} parent=1 // loop_exit
      _
    %1068 = vsyncpa [#allocation4], 1
    %s1069 = scalar_lea.sflag [#allocation4], 1
    %1070 = vsyncpa %s1069, 1

// kernel: embedder_forward.7
$region0: #{embedder_forward.7}
  #allocation0 [shape = 'u32[]', space=smem, size = 0x4, offset = 0x4, fixed_abs, tag = 'smem constant byte address 0x4 - core index']
  #allocation1 [shape = 'u32[144,128]{1,0:T(1,128)}', space=vmem, size = 0x12000, scoped, tag = 'internal scratch']
  #allocation2 [shape = 'f32[8,256]{1,0:T(8,128)}', space=vmem, size = 0x2000, scoped, tag = 'scratch operand']
  %s0 = inlined_call_operand.vmem [shape: bf16[8,2048], index: 0, kind: input, shape index: {}]
  %s1 = inlined_call_operand.vmem [shape: bf16[2048,256], index: 1, kind: input, shape index: {}]
  %s2 = inlined_call_operand.vmem [shape: f32[1,256], index: 2, kind: input, shape index: {}]
  %s3 = inlined_call_operand.vmem [shape: bf16[8,256], index: 3, kind: output, shape index: {}]
  %s4 = sld [smem:[#allocation0]]
  $region30: #{embedder_forward.7} parent=0
    _
  %s6 = ssub.s32 1, %s4
  %s7 = scalar_select 0, %s6, %s4
  // Predicated region
  $region2: #{embedder_forward.7} parent=0 // pred_check
    _
  $region3: #{embedder_forward.7} parent=0 // pred_check_branch
    %9 = sbr.rel (0) target = $region5
  $region4: #{embedder_forward.7} parent=0 // pred_region
    _
  $region5: #{embedder_forward.7} parent=0 // pred_fallthru
    _
  // Predicated region
  $region6: #{embedder_forward.7} parent=0 // pred_check
    _
  $region7: #{embedder_forward.7} parent=0 // pred_check_branch
    %11 = sbr.rel (0) target = $region9
  $region8: #{embedder_forward.7} parent=0 // pred_region
    _
  $region9: #{embedder_forward.7} parent=0 // pred_fallthru
    _
  // Predicated region
  $region10: #{embedder_forward.7} parent=0 // pred_check
    _
  $region11: #{embedder_forward.7} parent=0 // pred_check_branch
    %13 = sbr.rel (0) target = $region13
  $region12: #{embedder_forward.7} parent=0 // pred_region
    _
  $region13: #{embedder_forward.7} parent=0 // pred_fallthru
    _
  %p14 = scmp.eq.s32.totalorder 0, 0
  // Predicated region
  $region14: #{embedder_forward.7} parent=0 // pred_check
    %p15 = pneg %p14
  $region15: #{embedder_forward.7} parent=0 // pred_check_branch
    %17 = sbr.rel (%p15) target = $region17
  $region16: #{embedder_forward.7} parent=0 // pred_region
    %18 = vst [vmem:[#allocation2] sm:$0xff] 0.0
    %19 = vst [vmem:[#allocation2 + $0x8] sm:$0xff] 0.0
  $region17: #{embedder_forward.7} parent=0 // pred_fallthru
    _
  %v20 = vld [vmem:[#allocation2] sm:$0xff]
  %v21 = vld [vmem:[#allocation2 + $0x8] sm:$0xff]
  %v22 = vld [vmem:[%s0] sm:$0xff]
  %v23 = vld [vmem:[%s0 + $0x8] sm:$0xff]
  %v24 = vld [vmem:[%s0 + $0x10] sm:$0xff]
  %v25 = vld [vmem:[%s0 + $0x18] sm:$0xff]
  %v26 = vld [vmem:[%s0 + $0x20] sm:$0xff]
  %v27 = vld [vmem:[%s0 + $0x28] sm:$0xff]
  %v28 = vld [vmem:[%s0 + $0x30] sm:$0xff]
  %v29 = vld [vmem:[%s0 + $0x38] sm:$0xff]
  %v30 = vld [vmem:[%s1] sm:$0xff]
  %v31 = vld [vmem:[%s1 + $0x8] sm:$0xff]
  %v32 = vld [vmem:[%s1 + $0x10] sm:$0xff]
  %v33 = vld [vmem:[%s1 + $0x18] sm:$0xff]
  %v34 = vld [vmem:[%s1 + $0x20] sm:$0xff]
  %v35 = vld [vmem:[%s1 + $0x28] sm:$0xff]
  %v36 = vld [vmem:[%s1 + $0x30] sm:$0xff]
  %v37 = vld [vmem:[%s1 + $0x38] sm:$0xff]
  %v38 = vld [vmem:[%s1 + $0x40] sm:$0xff]
  %v39 = vld [vmem:[%s1 + $0x48] sm:$0xff]
  %v40 = vld [vmem:[%s1 + $0x50] sm:$0xff]
  %v41 = vld [vmem:[%s1 + $0x58] sm:$0xff]
  %v42 = vld [vmem:[%s1 + $0x60] sm:$0xff]
  %v43 = vld [vmem:[%s1 + $0x68] sm:$0xff]
  %v44 = vld [vmem:[%s1 + $0x70] sm:$0xff]
  %v45 = vld [vmem:[%s1 + $0x78] sm:$0xff]
  %v46 = vld [vmem:[%s1 + $0x80] sm:$0xff]
  %v47 = vld [vmem:[%s1 + $0x88] sm:$0xff]
  %v48 = vld [vmem:[%s1 + $0x90] sm:$0xff]
  %v49 = vld [vmem:[%s1 + $0x98] sm:$0xff]
  %v50 = vld [vmem:[%s1 + $0xa0] sm:$0xff]
  %v51 = vld [vmem:[%s1 + $0xa8] sm:$0xff]
  %v52 = vld [vmem:[%s1 + $0xb0] sm:$0xff]
  %v53 = vld [vmem:[%s1 + $0xb8] sm:$0xff]
  %v54 = vld [vmem:[%s1 + $0xc0] sm:$0xff]
  %v55 = vld [vmem:[%s1 + $0xc8] sm:$0xff]
  %v56 = vld [vmem:[%s1 + $0xd0] sm:$0xff]
  %v57 = vld [vmem:[%s1 + $0xd8] sm:$0xff]
  %v58 = vld [vmem:[%s1 + $0xe0] sm:$0xff]
  %v59 = vld [vmem:[%s1 + $0xe8] sm:$0xff]
  %v60 = vld [vmem:[%s1 + $0xf0] sm:$0xff]
  %v61 = vld [vmem:[%s1 + $0xf8] sm:$0xff]
  %v62 = vld [vmem:[%s1 + $0x100] sm:$0xff]
  %v63 = vld [vmem:[%s1 + $0x108] sm:$0xff]
  %v64 = vld [vmem:[%s1 + $0x110] sm:$0xff]
  %v65 = vld [vmem:[%s1 + $0x118] sm:$0xff]
  %v66 = vld [vmem:[%s1 + $0x120] sm:$0xff]
  %v67 = vld [vmem:[%s1 + $0x128] sm:$0xff]
  %v68 = vld [vmem:[%s1 + $0x130] sm:$0xff]
  %v69 = vld [vmem:[%s1 + $0x138] sm:$0xff]
  %v70 = vld [vmem:[%s1 + $0x140] sm:$0xff]
  %v71 = vld [vmem:[%s1 + $0x148] sm:$0xff]
  %v72 = vld [vmem:[%s1 + $0x150] sm:$0xff]
  %v73 = vld [vmem:[%s1 + $0x158] sm:$0xff]
  %v74 = vld [vmem:[%s1 + $0x160] sm:$0xff]
  %v75 = vld [vmem:[%s1 + $0x168] sm:$0xff]
  %v76 = vld [vmem:[%s1 + $0x170] sm:$0xff]
  %v77 = vld [vmem:[%s1 + $0x178] sm:$0xff]
  %v78 = vld [vmem:[%s1 + $0x180] sm:$0xff]
  %v79 = vld [vmem:[%s1 + $0x188] sm:$0xff]
  %v80 = vld [vmem:[%s1 + $0x190] sm:$0xff]
  %v81 = vld [vmem:[%s1 + $0x198] sm:$0xff]
  %v82 = vld [vmem:[%s1 + $0x1a0] sm:$0xff]
  %v83 = vld [vmem:[%s1 + $0x1a8] sm:$0xff]
  %v84 = vld [vmem:[%s1 + $0x1b0] sm:$0xff]
  %v85 = vld [vmem:[%s1 + $0x1b8] sm:$0xff]
  %v86 = vld [vmem:[%s1 + $0x1c0] sm:$0xff]
  %v87 = vld [vmem:[%s1 + $0x1c8] sm:$0xff]
  %v88 = vld [vmem:[%s1 + $0x1d0] sm:$0xff]
  %v89 = vld [vmem:[%s1 + $0x1d8] sm:$0xff]
  %v90 = vld [vmem:[%s1 + $0x1e0] sm:$0xff]
  %v91 = vld [vmem:[%s1 + $0x1e8] sm:$0xff]
  %v92 = vld [vmem:[%s1 + $0x1f0] sm:$0xff]
  %v93 = vld [vmem:[%s1 + $0x1f8] sm:$0xff]
  %v94 = vld [vmem:[%s1 + $0x200] sm:$0xff]
  %v95 = vld [vmem:[%s1 + $0x208] sm:$0xff]
  %v96 = vld [vmem:[%s1 + $0x210] sm:$0xff]
  %v97 = vld [vmem:[%s1 + $0x218] sm:$0xff]
  %v98 = vld [vmem:[%s1 + $0x220] sm:$0xff]
  %v99 = vld [vmem:[%s1 + $0x228] sm:$0xff]
  %v100 = vld [vmem:[%s1 + $0x230] sm:$0xff]
  %v101 = vld [vmem:[%s1 + $0x238] sm:$0xff]
  %v102 = vld [vmem:[%s1 + $0x240] sm:$0xff]
  %v103 = vld [vmem:[%s1 + $0x248] sm:$0xff]
  %v104 = vld [vmem:[%s1 + $0x250] sm:$0xff]
  %v105 = vld [vmem:[%s1 + $0x258] sm:$0xff]
  %v106 = vld [vmem:[%s1 + $0x260] sm:$0xff]
  %v107 = vld [vmem:[%s1 + $0x268] sm:$0xff]
  %v108 = vld [vmem:[%s1 + $0x270] sm:$0xff]
  %v109 = vld [vmem:[%s1 + $0x278] sm:$0xff]
  %v110 = vld [vmem:[%s1 + $0x280] sm:$0xff]
  %v111 = vld [vmem:[%s1 + $0x288] sm:$0xff]
  %v112 = vld [vmem:[%s1 + $0x290] sm:$0xff]
  %v113 = vld [vmem:[%s1 + $0x298] sm:$0xff]
  %v114 = vld [vmem:[%s1 + $0x2a0] sm:$0xff]
  %v115 = vld [vmem:[%s1 + $0x2a8] sm:$0xff]
  %v116 = vld [vmem:[%s1 + $0x2b0] sm:$0xff]
  %v117 = vld [vmem:[%s1 + $0x2b8] sm:$0xff]
  %v118 = vld [vmem:[%s1 + $0x2c0] sm:$0xff]
  %v119 = vld [vmem:[%s1 + $0x2c8] sm:$0xff]
  %v120 = vld [vmem:[%s1 + $0x2d0] sm:$0xff]
  %v121 = vld [vmem:[%s1 + $0x2d8] sm:$0xff]
  %v122 = vld [vmem:[%s1 + $0x2e0] sm:$0xff]
  %v123 = vld [vmem:[%s1 + $0x2e8] sm:$0xff]
  %v124 = vld [vmem:[%s1 + $0x2f0] sm:$0xff]
  %v125 = vld [vmem:[%s1 + $0x2f8] sm:$0xff]
  %v126 = vld [vmem:[%s1 + $0x300] sm:$0xff]
  %v127 = vld [vmem:[%s1 + $0x308] sm:$0xff]
  %v128 = vld [vmem:[%s1 + $0x310] sm:$0xff]
  %v129 = vld [vmem:[%s1 + $0x318] sm:$0xff]
  %v130 = vld [vmem:[%s1 + $0x320] sm:$0xff]
  %v131 = vld [vmem:[%s1 + $0x328] sm:$0xff]
  %v132 = vld [vmem:[%s1 + $0x330] sm:$0xff]
  %v133 = vld [vmem:[%s1 + $0x338] sm:$0xff]
  %v134 = vld [vmem:[%s1 + $0x340] sm:$0xff]
  %v135 = vld [vmem:[%s1 + $0x348] sm:$0xff]
  %v136 = vld [vmem:[%s1 + $0x350] sm:$0xff]
  %v137 = vld [vmem:[%s1 + $0x358] sm:$0xff]
  %v138 = vld [vmem:[%s1 + $0x360] sm:$0xff]
  %v139 = vld [vmem:[%s1 + $0x368] sm:$0xff]
  %v140 = vld [vmem:[%s1 + $0x370] sm:$0xff]
  %v141 = vld [vmem:[%s1 + $0x378] sm:$0xff]
  %v142 = vld [vmem:[%s1 + $0x380] sm:$0xff]
  %v143 = vld [vmem:[%s1 + $0x388] sm:$0xff]
  %v144 = vld [vmem:[%s1 + $0x390] sm:$0xff]
  %v145 = vld [vmem:[%s1 + $0x398] sm:$0xff]
  %v146 = vld [vmem:[%s1 + $0x3a0] sm:$0xff]
  %v147 = vld [vmem:[%s1 + $0x3a8] sm:$0xff]
  %v148 = vld [vmem:[%s1 + $0x3b0] sm:$0xff]
  %v149 = vld [vmem:[%s1 + $0x3b8] sm:$0xff]
  %v150 = vld [vmem:[%s1 + $0x3c0] sm:$0xff]
  %v151 = vld [vmem:[%s1 + $0x3c8] sm:$0xff]
  %v152 = vld [vmem:[%s1 + $0x3d0] sm:$0xff]
  %v153 = vld [vmem:[%s1 + $0x3d8] sm:$0xff]
  %v154 = vld [vmem:[%s1 + $0x3e0] sm:$0xff]
  %v155 = vld [vmem:[%s1 + $0x3e8] sm:$0xff]
  %v156 = vld [vmem:[%s1 + $0x3f0] sm:$0xff]
  %v157 = vld [vmem:[%s1 + $0x3f8] sm:$0xff]
  %v158 = vld [vmem:[%s1 + $0x400] sm:$0xff]
  %v159 = vld [vmem:[%s1 + $0x408] sm:$0xff]
  %v160 = vld [vmem:[%s1 + $0x410] sm:$0xff]
  %v161 = vld [vmem:[%s1 + $0x418] sm:$0xff]
  %v162 = vld [vmem:[%s1 + $0x420] sm:$0xff]
  %v163 = vld [vmem:[%s1 + $0x428] sm:$0xff]
  %v164 = vld [vmem:[%s1 + $0x430] sm:$0xff]
  %v165 = vld [vmem:[%s1 + $0x438] sm:$0xff]
  %v166 = vld [vmem:[%s1 + $0x440] sm:$0xff]
  %v167 = vld [vmem:[%s1 + $0x448] sm:$0xff]
  %v168 = vld [vmem:[%s1 + $0x450] sm:$0xff]
  %v169 = vld [vmem:[%s1 + $0x458] sm:$0xff]
  %v170 = vld [vmem:[%s1 + $0x460] sm:$0xff]
  %v171 = vld [vmem:[%s1 + $0x468] sm:$0xff]
  %v172 = vld [vmem:[%s1 + $0x470] sm:$0xff]
  %v173 = vld [vmem:[%s1 + $0x478] sm:$0xff]
  %v174 = vld [vmem:[%s1 + $0x480] sm:$0xff]
  %v175 = vld [vmem:[%s1 + $0x488] sm:$0xff]
  %v176 = vld [vmem:[%s1 + $0x490] sm:$0xff]
  %v177 = vld [vmem:[%s1 + $0x498] sm:$0xff]
  %v178 = vld [vmem:[%s1 + $0x4a0] sm:$0xff]
  %v179 = vld [vmem:[%s1 + $0x4a8] sm:$0xff]
  %v180 = vld [vmem:[%s1 + $0x4b0] sm:$0xff]
  %v181 = vld [vmem:[%s1 + $0x4b8] sm:$0xff]
  %v182 = vld [vmem:[%s1 + $0x4c0] sm:$0xff]
  %v183 = vld [vmem:[%s1 + $0x4c8] sm:$0xff]
  %v184 = vld [vmem:[%s1 + $0x4d0] sm:$0xff]
  %v185 = vld [vmem:[%s1 + $0x4d8] sm:$0xff]
  %v186 = vld [vmem:[%s1 + $0x4e0] sm:$0xff]
  %v187 = vld [vmem:[%s1 + $0x4e8] sm:$0xff]
  %v188 = vld [vmem:[%s1 + $0x4f0] sm:$0xff]
  %v189 = vld [vmem:[%s1 + $0x4f8] sm:$0xff]
  %v190 = vld [vmem:[%s1 + $0x500] sm:$0xff]
  %v191 = vld [vmem:[%s1 + $0x508] sm:$0xff]
  %v192 = vld [vmem:[%s1 + $0x510] sm:$0xff]
  %v193 = vld [vmem:[%s1 + $0x518] sm:$0xff]
  %v194 = vld [vmem:[%s1 + $0x520] sm:$0xff]
  %v195 = vld [vmem:[%s1 + $0x528] sm:$0xff]
  %v196 = vld [vmem:[%s1 + $0x530] sm:$0xff]
  %v197 = vld [vmem:[%s1 + $0x538] sm:$0xff]
  %v198 = vld [vmem:[%s1 + $0x540] sm:$0xff]
  %v199 = vld [vmem:[%s1 + $0x548] sm:$0xff]
  %v200 = vld [vmem:[%s1 + $0x550] sm:$0xff]
  %v201 = vld [vmem:[%s1 + $0x558] sm:$0xff]
  %v202 = vld [vmem:[%s1 + $0x560] sm:$0xff]
  %v203 = vld [vmem:[%s1 + $0x568] sm:$0xff]
  %v204 = vld [vmem:[%s1 + $0x570] sm:$0xff]
  %v205 = vld [vmem:[%s1 + $0x578] sm:$0xff]
  %v206 = vld [vmem:[%s1 + $0x580] sm:$0xff]
  %v207 = vld [vmem:[%s1 + $0x588] sm:$0xff]
  %v208 = vld [vmem:[%s1 + $0x590] sm:$0xff]
  %v209 = vld [vmem:[%s1 + $0x598] sm:$0xff]
  %v210 = vld [vmem:[%s1 + $0x5a0] sm:$0xff]
  %v211 = vld [vmem:[%s1 + $0x5a8] sm:$0xff]
  %v212 = vld [vmem:[%s1 + $0x5b0] sm:$0xff]
  %v213 = vld [vmem:[%s1 + $0x5b8] sm:$0xff]
  %v214 = vld [vmem:[%s1 + $0x5c0] sm:$0xff]
  %v215 = vld [vmem:[%s1 + $0x5c8] sm:$0xff]
  %v216 = vld [vmem:[%s1 + $0x5d0] sm:$0xff]
  %v217 = vld [vmem:[%s1 + $0x5d8] sm:$0xff]
  %v218 = vld [vmem:[%s1 + $0x5e0] sm:$0xff]
  %v219 = vld [vmem:[%s1 + $0x5e8] sm:$0xff]
  %v220 = vld [vmem:[%s1 + $0x5f0] sm:$0xff]
  %v221 = vld [vmem:[%s1 + $0x5f8] sm:$0xff]
  %v222 = vld [vmem:[%s1 + $0x600] sm:$0xff]
  %v223 = vld [vmem:[%s1 + $0x608] sm:$0xff]
  %v224 = vld [vmem:[%s1 + $0x610] sm:$0xff]
  %v225 = vld [vmem:[%s1 + $0x618] sm:$0xff]
  %v226 = vld [vmem:[%s1 + $0x620] sm:$0xff]
  %v227 = vld [vmem:[%s1 + $0x628] sm:$0xff]
  %v228 = vld [vmem:[%s1 + $0x630] sm:$0xff]
  %v229 = vld [vmem:[%s1 + $0x638] sm:$0xff]
  %v230 = vld [vmem:[%s1 + $0x640] sm:$0xff]
  %v231 = vld [vmem:[%s1 + $0x648] sm:$0xff]
  %v232 = vld [vmem:[%s1 + $0x650] sm:$0xff]
  %v233 = vld [vmem:[%s1 + $0x658] sm:$0xff]
  %v234 = vld [vmem:[%s1 + $0x660] sm:$0xff]
  %v235 = vld [vmem:[%s1 + $0x668] sm:$0xff]
  %v236 = vld [vmem:[%s1 + $0x670] sm:$0xff]
  %v237 = vld [vmem:[%s1 + $0x678] sm:$0xff]
  %v238 = vld [vmem:[%s1 + $0x680] sm:$0xff]
  %v239 = vld [vmem:[%s1 + $0x688] sm:$0xff]
  %v240 = vld [vmem:[%s1 + $0x690] sm:$0xff]
  %v241 = vld [vmem:[%s1 + $0x698] sm:$0xff]
  %v242 = vld [vmem:[%s1 + $0x6a0] sm:$0xff]
  %v243 = vld [vmem:[%s1 + $0x6a8] sm:$0xff]
  %v244 = vld [vmem:[%s1 + $0x6b0] sm:$0xff]
  %v245 = vld [vmem:[%s1 + $0x6b8] sm:$0xff]
  %v246 = vld [vmem:[%s1 + $0x6c0] sm:$0xff]
  %v247 = vld [vmem:[%s1 + $0x6c8] sm:$0xff]
  %v248 = vld [vmem:[%s1 + $0x6d0] sm:$0xff]
  %v249 = vld [vmem:[%s1 + $0x6d8] sm:$0xff]
  %v250 = vld [vmem:[%s1 + $0x6e0] sm:$0xff]
  %v251 = vld [vmem:[%s1 + $0x6e8] sm:$0xff]
  %v252 = vld [vmem:[%s1 + $0x6f0] sm:$0xff]
  %v253 = vld [vmem:[%s1 + $0x6f8] sm:$0xff]
  %v254 = vld [vmem:[%s1 + $0x700] sm:$0xff]
  %v255 = vld [vmem:[%s1 + $0x708] sm:$0xff]
  %v256 = vld [vmem:[%s1 + $0x710] sm:$0xff]
  %v257 = vld [vmem:[%s1 + $0x718] sm:$0xff]
  %v258 = vld [vmem:[%s1 + $0x720] sm:$0xff]
  %v259 = vld [vmem:[%s1 + $0x728] sm:$0xff]
  %v260 = vld [vmem:[%s1 + $0x730] sm:$0xff]
  %v261 = vld [vmem:[%s1 + $0x738] sm:$0xff]
  %v262 = vld [vmem:[%s1 + $0x740] sm:$0xff]
  %v263 = vld [vmem:[%s1 + $0x748] sm:$0xff]
  %v264 = vld [vmem:[%s1 + $0x750] sm:$0xff]
  %v265 = vld [vmem:[%s1 + $0x758] sm:$0xff]
  %v266 = vld [vmem:[%s1 + $0x760] sm:$0xff]
  %v267 = vld [vmem:[%s1 + $0x768] sm:$0xff]
  %v268 = vld [vmem:[%s1 + $0x770] sm:$0xff]
  %v269 = vld [vmem:[%s1 + $0x778] sm:$0xff]
  %v270 = vld [vmem:[%s1 + $0x780] sm:$0xff]
  %v271 = vld [vmem:[%s1 + $0x788] sm:$0xff]
  %v272 = vld [vmem:[%s1 + $0x790] sm:$0xff]
  %v273 = vld [vmem:[%s1 + $0x798] sm:$0xff]
  %v274 = vld [vmem:[%s1 + $0x7a0] sm:$0xff]
  %v275 = vld [vmem:[%s1 + $0x7a8] sm:$0xff]
  %v276 = vld [vmem:[%s1 + $0x7b0] sm:$0xff]
  %v277 = vld [vmem:[%s1 + $0x7b8] sm:$0xff]
  %v278 = vld [vmem:[%s1 + $0x7c0] sm:$0xff]
  %v279 = vld [vmem:[%s1 + $0x7c8] sm:$0xff]
  %v280 = vld [vmem:[%s1 + $0x7d0] sm:$0xff]
  %v281 = vld [vmem:[%s1 + $0x7d8] sm:$0xff]
  %v282 = vld [vmem:[%s1 + $0x7e0] sm:$0xff]
  %v283 = vld [vmem:[%s1 + $0x7e8] sm:$0xff]
  %v284 = vld [vmem:[%s1 + $0x7f0] sm:$0xff]
  %v285 = vld [vmem:[%s1 + $0x7f8] sm:$0xff]
  %v294 = vunpack.c.l.b16 %v22
  %v295 = vunpack.c.h.b16 %v22
  %v296 = vunpack.c.l.b16 %v23
  %v297 = vunpack.c.h.b16 %v23
  %v298 = vunpack.c.l.b16 %v24
  %v299 = vunpack.c.h.b16 %v24
  %v300 = vunpack.c.l.b16 %v25
  %v301 = vunpack.c.h.b16 %v25
  %v302 = vunpack.c.l.b16 %v26
  %v303 = vunpack.c.h.b16 %v26
  %v304 = vunpack.c.l.b16 %v27
  %v305 = vunpack.c.h.b16 %v27
  %v306 = vunpack.c.l.b16 %v28
  %v307 = vunpack.c.h.b16 %v28
  %v308 = vunpack.c.l.b16 %v29
  %v309 = vunpack.c.h.b16 %v29
  %v310 = vpack.c.b16 %v294, %v294
  %v311 = vpack.c.b16 %v295, %v295
  %v312 = vpack.c.b16 %v296, %v296
  %v313 = vpack.c.b16 %v297, %v297
  %v314 = vpack.c.b16 %v298, %v298
  %v315 = vpack.c.b16 %v299, %v299
  %v316 = vpack.c.b16 %v300, %v300
  %v317 = vpack.c.b16 %v301, %v301
  %v318 = vpack.c.b16 %v302, %v302
  %v319 = vpack.c.b16 %v303, %v303
  %v320 = vpack.c.b16 %v304, %v304
  %v321 = vpack.c.b16 %v305, %v305
  %v322 = vpack.c.b16 %v306, %v306
  %v323 = vpack.c.b16 %v307, %v307
  %v324 = vpack.c.b16 %v308, %v308
  %v325 = vpack.c.b16 %v309, %v309
  %v598 = vunpack.c.l.b16 %v30
  %v599 = vunpack.c.h.b16 %v30
  %v600 = vunpack.c.l.b16 %v31
  %v601 = vunpack.c.h.b16 %v31
  %v602 = vunpack.c.l.b16 %v32
  %v603 = vunpack.c.h.b16 %v32
  %v604 = vunpack.c.l.b16 %v33
  %v605 = vunpack.c.h.b16 %v33
  %v606 = vunpack.c.l.b16 %v34
  %v607 = vunpack.c.h.b16 %v34
  %v608 = vunpack.c.l.b16 %v35
  %v609 = vunpack.c.h.b16 %v35
  %v610 = vunpack.c.l.b16 %v36
  %v611 = vunpack.c.h.b16 %v36
  %v612 = vunpack.c.l.b16 %v37
  %v613 = vunpack.c.h.b16 %v37
  %v614 = vunpack.c.l.b16 %v38
  %v615 = vunpack.c.h.b16 %v38
  %v616 = vunpack.c.l.b16 %v39
  %v617 = vunpack.c.h.b16 %v39
  %v618 = vunpack.c.l.b16 %v40
  %v619 = vunpack.c.h.b16 %v40
  %v620 = vunpack.c.l.b16 %v41
  %v621 = vunpack.c.h.b16 %v41
  %v622 = vunpack.c.l.b16 %v42
  %v623 = vunpack.c.h.b16 %v42
  %v624 = vunpack.c.l.b16 %v43
  %v625 = vunpack.c.h.b16 %v43
  %v626 = vunpack.c.l.b16 %v44
  %v627 = vunpack.c.h.b16 %v44
  %v628 = vunpack.c.l.b16 %v45
  %v629 = vunpack.c.h.b16 %v45
  %v630 = vunpack.c.l.b16 %v46
  %v631 = vunpack.c.h.b16 %v46
  %v632 = vunpack.c.l.b16 %v47
  %v633 = vunpack.c.h.b16 %v47
  %v634 = vunpack.c.l.b16 %v48
  %v635 = vunpack.c.h.b16 %v48
  %v636 = vunpack.c.l.b16 %v49
  %v637 = vunpack.c.h.b16 %v49
  %v638 = vunpack.c.l.b16 %v50
  %v639 = vunpack.c.h.b16 %v50
  %v640 = vunpack.c.l.b16 %v51
  %v641 = vunpack.c.h.b16 %v51
  %v642 = vunpack.c.l.b16 %v52
  %v643 = vunpack.c.h.b16 %v52
  %v644 = vunpack.c.l.b16 %v53
  %v645 = vunpack.c.h.b16 %v53
  %v646 = vunpack.c.l.b16 %v54
  %v647 = vunpack.c.h.b16 %v54
  %v648 = vunpack.c.l.b16 %v55
  %v649 = vunpack.c.h.b16 %v55
  %v650 = vunpack.c.l.b16 %v56
  %v651 = vunpack.c.h.b16 %v56
  %v652 = vunpack.c.l.b16 %v57
  %v653 = vunpack.c.h.b16 %v57
  %v654 = vunpack.c.l.b16 %v58
  %v655 = vunpack.c.h.b16 %v58
  %v656 = vunpack.c.l.b16 %v59
  %v657 = vunpack.c.h.b16 %v59
  %v658 = vunpack.c.l.b16 %v60
  %v659 = vunpack.c.h.b16 %v60
  %v660 = vunpack.c.l.b16 %v61
  %v661 = vunpack.c.h.b16 %v61
  %v662 = vunpack.c.l.b16 %v62
  %v663 = vunpack.c.h.b16 %v62
  %v664 = vunpack.c.l.b16 %v63
  %v665 = vunpack.c.h.b16 %v63
  %v666 = vunpack.c.l.b16 %v64
  %v667 = vunpack.c.h.b16 %v64
  %v668 = vunpack.c.l.b16 %v65
  %v669 = vunpack.c.h.b16 %v65
  %v670 = vunpack.c.l.b16 %v66
  %v671 = vunpack.c.h.b16 %v66
  %v672 = vunpack.c.l.b16 %v67
  %v673 = vunpack.c.h.b16 %v67
  %v674 = vunpack.c.l.b16 %v68
  %v675 = vunpack.c.h.b16 %v68
  %v676 = vunpack.c.l.b16 %v69
  %v677 = vunpack.c.h.b16 %v69
  %v678 = vunpack.c.l.b16 %v70
  %v679 = vunpack.c.h.b16 %v70
  %v680 = vunpack.c.l.b16 %v71
  %v681 = vunpack.c.h.b16 %v71
  %v682 = vunpack.c.l.b16 %v72
  %v683 = vunpack.c.h.b16 %v72
  %v684 = vunpack.c.l.b16 %v73
  %v685 = vunpack.c.h.b16 %v73
  %v686 = vunpack.c.l.b16 %v74
  %v687 = vunpack.c.h.b16 %v74
  %v688 = vunpack.c.l.b16 %v75
  %v689 = vunpack.c.h.b16 %v75
  %v690 = vunpack.c.l.b16 %v76
  %v691 = vunpack.c.h.b16 %v76
  %v692 = vunpack.c.l.b16 %v77
  %v693 = vunpack.c.h.b16 %v77
  %v694 = vunpack.c.l.b16 %v78
  %v695 = vunpack.c.h.b16 %v78
  %v696 = vunpack.c.l.b16 %v79
  %v697 = vunpack.c.h.b16 %v79
  %v698 = vunpack.c.l.b16 %v80
  %v699 = vunpack.c.h.b16 %v80
  %v700 = vunpack.c.l.b16 %v81
  %v701 = vunpack.c.h.b16 %v81
  %v702 = vunpack.c.l.b16 %v82
  %v703 = vunpack.c.h.b16 %v82
  %v704 = vunpack.c.l.b16 %v83
  %v705 = vunpack.c.h.b16 %v83
  %v706 = vunpack.c.l.b16 %v84
  %v707 = vunpack.c.h.b16 %v84
  %v708 = vunpack.c.l.b16 %v85
  %v709 = vunpack.c.h.b16 %v85
  %v710 = vunpack.c.l.b16 %v86
  %v711 = vunpack.c.h.b16 %v86
  %v712 = vunpack.c.l.b16 %v87
  %v713 = vunpack.c.h.b16 %v87
  %v714 = vunpack.c.l.b16 %v88
  %v715 = vunpack.c.h.b16 %v88
  %v716 = vunpack.c.l.b16 %v89
  %v717 = vunpack.c.h.b16 %v89
  %v718 = vunpack.c.l.b16 %v90
  %v719 = vunpack.c.h.b16 %v90
  %v720 = vunpack.c.l.b16 %v91
  %v721 = vunpack.c.h.b16 %v91
  %v722 = vunpack.c.l.b16 %v92
  %v723 = vunpack.c.h.b16 %v92
  %v724 = vunpack.c.l.b16 %v93
  %v725 = vunpack.c.h.b16 %v93
  %v726 = vunpack.c.l.b16 %v94
  %v727 = vunpack.c.h.b16 %v94
  %v728 = vunpack.c.l.b16 %v95
  %v729 = vunpack.c.h.b16 %v95
  %v730 = vunpack.c.l.b16 %v96
  %v731 = vunpack.c.h.b16 %v96
  %v732 = vunpack.c.l.b16 %v97
  %v733 = vunpack.c.h.b16 %v97
  %v734 = vunpack.c.l.b16 %v98
  %v735 = vunpack.c.h.b16 %v98
  %v736 = vunpack.c.l.b16 %v99
  %v737 = vunpack.c.h.b16 %v99
  %v738 = vunpack.c.l.b16 %v100
  %v739 = vunpack.c.h.b16 %v100
  %v740 = vunpack.c.l.b16 %v101
  %v741 = vunpack.c.h.b16 %v101
  %v742 = vunpack.c.l.b16 %v102
  %v743 = vunpack.c.h.b16 %v102
  %v744 = vunpack.c.l.b16 %v103
  %v745 = vunpack.c.h.b16 %v103
  %v746 = vunpack.c.l.b16 %v104
  %v747 = vunpack.c.h.b16 %v104
  %v748 = vunpack.c.l.b16 %v105
  %v749 = vunpack.c.h.b16 %v105
  %v750 = vunpack.c.l.b16 %v106
  %v751 = vunpack.c.h.b16 %v106
  %v752 = vunpack.c.l.b16 %v107
  %v753 = vunpack.c.h.b16 %v107
  %v754 = vunpack.c.l.b16 %v108
  %v755 = vunpack.c.h.b16 %v108
  %v756 = vunpack.c.l.b16 %v109
  %v757 = vunpack.c.h.b16 %v109
  %v758 = vunpack.c.l.b16 %v110
  %v759 = vunpack.c.h.b16 %v110
  %v760 = vunpack.c.l.b16 %v111
  %v761 = vunpack.c.h.b16 %v111
  %v762 = vunpack.c.l.b16 %v112
  %v763 = vunpack.c.h.b16 %v112
  %v764 = vunpack.c.l.b16 %v113
  %v765 = vunpack.c.h.b16 %v113
  %v766 = vunpack.c.l.b16 %v114
  %v767 = vunpack.c.h.b16 %v114
  %v768 = vunpack.c.l.b16 %v115
  %v769 = vunpack.c.h.b16 %v115
  %v770 = vunpack.c.l.b16 %v116
  %v771 = vunpack.c.h.b16 %v116
  %v772 = vunpack.c.l.b16 %v117
  %v773 = vunpack.c.h.b16 %v117
  %v774 = vunpack.c.l.b16 %v118
  %v775 = vunpack.c.h.b16 %v118
  %v776 = vunpack.c.l.b16 %v119
  %v777 = vunpack.c.h.b16 %v119
  %v778 = vunpack.c.l.b16 %v120
  %v779 = vunpack.c.h.b16 %v120
  %v780 = vunpack.c.l.b16 %v121
  %v781 = vunpack.c.h.b16 %v121
  %v782 = vunpack.c.l.b16 %v122
  %v783 = vunpack.c.h.b16 %v122
  %v784 = vunpack.c.l.b16 %v123
  %v785 = vunpack.c.h.b16 %v123
  %v786 = vunpack.c.l.b16 %v124
  %v787 = vunpack.c.h.b16 %v124
  %v788 = vunpack.c.l.b16 %v125
  %v789 = vunpack.c.h.b16 %v125
  %v790 = vunpack.c.l.b16 %v126
  %v791 = vunpack.c.h.b16 %v126
  %v792 = vunpack.c.l.b16 %v127
  %v793 = vunpack.c.h.b16 %v127
  %v794 = vunpack.c.l.b16 %v128
  %v795 = vunpack.c.h.b16 %v128
  %v796 = vunpack.c.l.b16 %v129
  %v797 = vunpack.c.h.b16 %v129
  %v798 = vunpack.c.l.b16 %v130
  %v799 = vunpack.c.h.b16 %v130
  %v800 = vunpack.c.l.b16 %v131
  %v801 = vunpack.c.h.b16 %v131
  %v802 = vunpack.c.l.b16 %v132
  %v803 = vunpack.c.h.b16 %v132
  %v804 = vunpack.c.l.b16 %v133
  %v805 = vunpack.c.h.b16 %v133
  %v806 = vunpack.c.l.b16 %v134
  %v807 = vunpack.c.h.b16 %v134
  %v808 = vunpack.c.l.b16 %v135
  %v809 = vunpack.c.h.b16 %v135
  %v810 = vunpack.c.l.b16 %v136
  %v811 = vunpack.c.h.b16 %v136
  %v812 = vunpack.c.l.b16 %v137
  %v813 = vunpack.c.h.b16 %v137
  %v814 = vunpack.c.l.b16 %v138
  %v815 = vunpack.c.h.b16 %v138
  %v816 = vunpack.c.l.b16 %v139
  %v817 = vunpack.c.h.b16 %v139
  %v818 = vunpack.c.l.b16 %v140
  %v819 = vunpack.c.h.b16 %v140
  %v820 = vunpack.c.l.b16 %v141
  %v821 = vunpack.c.h.b16 %v141
  %v822 = vunpack.c.l.b16 %v142
  %v823 = vunpack.c.h.b16 %v142
  %v824 = vunpack.c.l.b16 %v143
  %v825 = vunpack.c.h.b16 %v143
  %v826 = vunpack.c.l.b16 %v144
  %v827 = vunpack.c.h.b16 %v144
  %v828 = vunpack.c.l.b16 %v145
  %v829 = vunpack.c.h.b16 %v145
  %v830 = vunpack.c.l.b16 %v146
  %v831 = vunpack.c.h.b16 %v146
  %v832 = vunpack.c.l.b16 %v147
  %v833 = vunpack.c.h.b16 %v147
  %v834 = vunpack.c.l.b16 %v148
  %v835 = vunpack.c.h.b16 %v148
  %v836 = vunpack.c.l.b16 %v149
  %v837 = vunpack.c.h.b16 %v149
  %v838 = vunpack.c.l.b16 %v150
  %v839 = vunpack.c.h.b16 %v150
  %v840 = vunpack.c.l.b16 %v151
  %v841 = vunpack.c.h.b16 %v151
  %v842 = vunpack.c.l.b16 %v152
  %v843 = vunpack.c.h.b16 %v152
  %v844 = vunpack.c.l.b16 %v153
  %v845 = vunpack.c.h.b16 %v153
  %v846 = vunpack.c.l.b16 %v154
  %v847 = vunpack.c.h.b16 %v154
  %v848 = vunpack.c.l.b16 %v155
  %v849 = vunpack.c.h.b16 %v155
  %v850 = vunpack.c.l.b16 %v156
  %v851 = vunpack.c.h.b16 %v156
  %v852 = vunpack.c.l.b16 %v157
  %v853 = vunpack.c.h.b16 %v157
  %v854 = vunpack.c.l.b16 %v158
  %v855 = vunpack.c.h.b16 %v158
  %v856 = vunpack.c.l.b16 %v159
  %v857 = vunpack.c.h.b16 %v159
  %v858 = vunpack.c.l.b16 %v160
  %v859 = vunpack.c.h.b16 %v160
  %v860 = vunpack.c.l.b16 %v161
  %v861 = vunpack.c.h.b16 %v161
  %v862 = vunpack.c.l.b16 %v162
  %v863 = vunpack.c.h.b16 %v162
  %v864 = vunpack.c.l.b16 %v163
  %v865 = vunpack.c.h.b16 %v163
  %v866 = vunpack.c.l.b16 %v164
  %v867 = vunpack.c.h.b16 %v164
  %v868 = vunpack.c.l.b16 %v165
  %v869 = vunpack.c.h.b16 %v165
  %v870 = vunpack.c.l.b16 %v166
  %v871 = vunpack.c.h.b16 %v166
  %v872 = vunpack.c.l.b16 %v167
  %v873 = vunpack.c.h.b16 %v167
  %v874 = vunpack.c.l.b16 %v168
  %v875 = vunpack.c.h.b16 %v168
  %v876 = vunpack.c.l.b16 %v169
  %v877 = vunpack.c.h.b16 %v169
  %v878 = vunpack.c.l.b16 %v170
  %v879 = vunpack.c.h.b16 %v170
  %v880 = vunpack.c.l.b16 %v171
  %v881 = vunpack.c.h.b16 %v171
  %v882 = vunpack.c.l.b16 %v172
  %v883 = vunpack.c.h.b16 %v172
  %v884 = vunpack.c.l.b16 %v173
  %v885 = vunpack.c.h.b16 %v173
  %v886 = vunpack.c.l.b16 %v174
  %v887 = vunpack.c.h.b16 %v174
  %v888 = vunpack.c.l.b16 %v175
  %v889 = vunpack.c.h.b16 %v175
  %v890 = vunpack.c.l.b16 %v176
  %v891 = vunpack.c.h.b16 %v176
  %v892 = vunpack.c.l.b16 %v177
  %v893 = vunpack.c.h.b16 %v177
  %v894 = vunpack.c.l.b16 %v178
  %v895 = vunpack.c.h.b16 %v178
  %v896 = vunpack.c.l.b16 %v179
  %v897 = vunpack.c.h.b16 %v179
  %v898 = vunpack.c.l.b16 %v180
  %v899 = vunpack.c.h.b16 %v180
  %v900 = vunpack.c.l.b16 %v181
  %v901 = vunpack.c.h.b16 %v181
  %v902 = vunpack.c.l.b16 %v182
  %v903 = vunpack.c.h.b16 %v182
  %v904 = vunpack.c.l.b16 %v183
  %v905 = vunpack.c.h.b16 %v183
  %v906 = vunpack.c.l.b16 %v184
  %v907 = vunpack.c.h.b16 %v184
  %v908 = vunpack.c.l.b16 %v185
  %v909 = vunpack.c.h.b16 %v185
  %v910 = vunpack.c.l.b16 %v186
  %v911 = vunpack.c.h.b16 %v186
  %v912 = vunpack.c.l.b16 %v187
  %v913 = vunpack.c.h.b16 %v187
  %v914 = vunpack.c.l.b16 %v188
  %v915 = vunpack.c.h.b16 %v188
  %v916 = vunpack.c.l.b16 %v189
  %v917 = vunpack.c.h.b16 %v189
  %v918 = vunpack.c.l.b16 %v190
  %v919 = vunpack.c.h.b16 %v190
  %v920 = vunpack.c.l.b16 %v191
  %v921 = vunpack.c.h.b16 %v191
  %v922 = vunpack.c.l.b16 %v192
  %v923 = vunpack.c.h.b16 %v192
  %v924 = vunpack.c.l.b16 %v193
  %v925 = vunpack.c.h.b16 %v193
  %v926 = vunpack.c.l.b16 %v194
  %v927 = vunpack.c.h.b16 %v194
  %v928 = vunpack.c.l.b16 %v195
  %v929 = vunpack.c.h.b16 %v195
  %v930 = vunpack.c.l.b16 %v196
  %v931 = vunpack.c.h.b16 %v196
  %v932 = vunpack.c.l.b16 %v197
  %v933 = vunpack.c.h.b16 %v197
  %v934 = vunpack.c.l.b16 %v198
  %v935 = vunpack.c.h.b16 %v198
  %v936 = vunpack.c.l.b16 %v199
  %v937 = vunpack.c.h.b16 %v199
  %v938 = vunpack.c.l.b16 %v200
  %v939 = vunpack.c.h.b16 %v200
  %v940 = vunpack.c.l.b16 %v201
  %v941 = vunpack.c.h.b16 %v201
  %v942 = vunpack.c.l.b16 %v202
  %v943 = vunpack.c.h.b16 %v202
  %v944 = vunpack.c.l.b16 %v203
  %v945 = vunpack.c.h.b16 %v203
  %v946 = vunpack.c.l.b16 %v204
  %v947 = vunpack.c.h.b16 %v204
  %v948 = vunpack.c.l.b16 %v205
  %v949 = vunpack.c.h.b16 %v205
  %v950 = vunpack.c.l.b16 %v206
  %v951 = vunpack.c.h.b16 %v206
  %v952 = vunpack.c.l.b16 %v207
  %v953 = vunpack.c.h.b16 %v207
  %v954 = vunpack.c.l.b16 %v208
  %v955 = vunpack.c.h.b16 %v208
  %v956 = vunpack.c.l.b16 %v209
  %v957 = vunpack.c.h.b16 %v209
  %v958 = vunpack.c.l.b16 %v210
  %v959 = vunpack.c.h.b16 %v210
  %v960 = vunpack.c.l.b16 %v211
  %v961 = vunpack.c.h.b16 %v211
  %v962 = vunpack.c.l.b16 %v212
  %v963 = vunpack.c.h.b16 %v212
  %v964 = vunpack.c.l.b16 %v213
  %v965 = vunpack.c.h.b16 %v213
  %v966 = vunpack.c.l.b16 %v214
  %v967 = vunpack.c.h.b16 %v214
  %v968 = vunpack.c.l.b16 %v215
  %v969 = vunpack.c.h.b16 %v215
  %v970 = vunpack.c.l.b16 %v216
  %v971 = vunpack.c.h.b16 %v216
  %v972 = vunpack.c.l.b16 %v217
  %v973 = vunpack.c.h.b16 %v217
  %v974 = vunpack.c.l.b16 %v218
  %v975 = vunpack.c.h.b16 %v218
  %v976 = vunpack.c.l.b16 %v219
  %v977 = vunpack.c.h.b16 %v219
  %v978 = vunpack.c.l.b16 %v220
  %v979 = vunpack.c.h.b16 %v220
  %v980 = vunpack.c.l.b16 %v221
  %v981 = vunpack.c.h.b16 %v221
  %v982 = vunpack.c.l.b16 %v222
  %v983 = vunpack.c.h.b16 %v222
  %v984 = vunpack.c.l.b16 %v223
  %v985 = vunpack.c.h.b16 %v223
  %v986 = vunpack.c.l.b16 %v224
  %v987 = vunpack.c.h.b16 %v224
  %v988 = vunpack.c.l.b16 %v225
  %v989 = vunpack.c.h.b16 %v225
  %v990 = vunpack.c.l.b16 %v226
  %v991 = vunpack.c.h.b16 %v226
  %v992 = vunpack.c.l.b16 %v227
  %v993 = vunpack.c.h.b16 %v227
  %v994 = vunpack.c.l.b16 %v228
  %v995 = vunpack.c.h.b16 %v228
  %v996 = vunpack.c.l.b16 %v229
  %v997 = vunpack.c.h.b16 %v229
  %v998 = vunpack.c.l.b16 %v230
  %v999 = vunpack.c.h.b16 %v230
  %v1000 = vunpack.c.l.b16 %v231
  %v1001 = vunpack.c.h.b16 %v231
  %v1002 = vunpack.c.l.b16 %v232
  %v1003 = vunpack.c.h.b16 %v232
  %v1004 = vunpack.c.l.b16 %v233
  %v1005 = vunpack.c.h.b16 %v233
  %v1006 = vunpack.c.l.b16 %v234
  %v1007 = vunpack.c.h.b16 %v234
  %v1008 = vunpack.c.l.b16 %v235
  %v1009 = vunpack.c.h.b16 %v235
  %v1010 = vunpack.c.l.b16 %v236
  %v1011 = vunpack.c.h.b16 %v236
  %v1012 = vunpack.c.l.b16 %v237
  %v1013 = vunpack.c.h.b16 %v237
  %v1014 = vunpack.c.l.b16 %v238
  %v1015 = vunpack.c.h.b16 %v238
  %v1016 = vunpack.c.l.b16 %v239
  %v1017 = vunpack.c.h.b16 %v239
  %v1018 = vunpack.c.l.b16 %v240
  %v1019 = vunpack.c.h.b16 %v240
  %v1020 = vunpack.c.l.b16 %v241
  %v1021 = vunpack.c.h.b16 %v241
  %v1022 = vunpack.c.l.b16 %v242
  %v1023 = vunpack.c.h.b16 %v242
  %v1024 = vunpack.c.l.b16 %v243
  %v1025 = vunpack.c.h.b16 %v243
  %v1026 = vunpack.c.l.b16 %v244
  %v1027 = vunpack.c.h.b16 %v244
  %v1028 = vunpack.c.l.b16 %v245
  %v1029 = vunpack.c.h.b16 %v245
  %v1030 = vunpack.c.l.b16 %v246
  %v1031 = vunpack.c.h.b16 %v246
  %v1032 = vunpack.c.l.b16 %v247
  %v1033 = vunpack.c.h.b16 %v247
  %v1034 = vunpack.c.l.b16 %v248
  %v1035 = vunpack.c.h.b16 %v248
  %v1036 = vunpack.c.l.b16 %v249
  %v1037 = vunpack.c.h.b16 %v249
  %v1038 = vunpack.c.l.b16 %v250
  %v1039 = vunpack.c.h.b16 %v250
  %v1040 = vunpack.c.l.b16 %v251
  %v1041 = vunpack.c.h.b16 %v251
  %v1042 = vunpack.c.l.b16 %v252
  %v1043 = vunpack.c.h.b16 %v252
  %v1044 = vunpack.c.l.b16 %v253
  %v1045 = vunpack.c.h.b16 %v253
  %v1046 = vunpack.c.l.b16 %v254
  %v1047 = vunpack.c.h.b16 %v254
  %v1048 = vunpack.c.l.b16 %v255
  %v1049 = vunpack.c.h.b16 %v255
  %v1050 = vunpack.c.l.b16 %v256
  %v1051 = vunpack.c.h.b16 %v256
  %v1052 = vunpack.c.l.b16 %v257
  %v1053 = vunpack.c.h.b16 %v257
  %v1054 = vunpack.c.l.b16 %v258
  %v1055 = vunpack.c.h.b16 %v258
  %v1056 = vunpack.c.l.b16 %v259
  %v1057 = vunpack.c.h.b16 %v259
  %v1058 = vunpack.c.l.b16 %v260
  %v1059 = vunpack.c.h.b16 %v260
  %v1060 = vunpack.c.l.b16 %v261
  %v1061 = vunpack.c.h.b16 %v261
  %v1062 = vunpack.c.l.b16 %v262
  %v1063 = vunpack.c.h.b16 %v262
  %v1064 = vunpack.c.l.b16 %v263
  %v1065 = vunpack.c.h.b16 %v263
  %v1066 = vunpack.c.l.b16 %v264
  %v1067 = vunpack.c.h.b16 %v264
  %v1068 = vunpack.c.l.b16 %v265
  %v1069 = vunpack.c.h.b16 %v265
  %v1070 = vunpack.c.l.b16 %v266
  %v1071 = vunpack.c.h.b16 %v266
  %v1072 = vunpack.c.l.b16 %v267
  %v1073 = vunpack.c.h.b16 %v267
  %v1074 = vunpack.c.l.b16 %v268
  %v1075 = vunpack.c.h.b16 %v268
  %v1076 = vunpack.c.l.b16 %v269
  %v1077 = vunpack.c.h.b16 %v269
  %v1078 = vunpack.c.l.b16 %v270
  %v1079 = vunpack.c.h.b16 %v270
  %v1080 = vunpack.c.l.b16 %v271
  %v1081 = vunpack.c.h.b16 %v271
  %v1082 = vunpack.c.l.b16 %v272
  %v1083 = vunpack.c.h.b16 %v272
  %v1084 = vunpack.c.l.b16 %v273
  %v1085 = vunpack.c.h.b16 %v273
  %v1086 = vunpack.c.l.b16 %v274
  %v1087 = vunpack.c.h.b16 %v274
  %v1088 = vunpack.c.l.b16 %v275
  %v1089 = vunpack.c.h.b16 %v275
  %v1090 = vunpack.c.l.b16 %v276
  %v1091 = vunpack.c.h.b16 %v276
  %v1092 = vunpack.c.l.b16 %v277
  %v1093 = vunpack.c.h.b16 %v277
  %v1094 = vunpack.c.l.b16 %v278
  %v1095 = vunpack.c.h.b16 %v278
  %v1096 = vunpack.c.l.b16 %v279
  %v1097 = vunpack.c.h.b16 %v279
  %v1098 = vunpack.c.l.b16 %v280
  %v1099 = vunpack.c.h.b16 %v280
  %v1100 = vunpack.c.l.b16 %v281
  %v1101 = vunpack.c.h.b16 %v281
  %v1102 = vunpack.c.l.b16 %v282
  %v1103 = vunpack.c.h.b16 %v282
  %v1104 = vunpack.c.l.b16 %v283
  %v1105 = vunpack.c.h.b16 %v283
  %v1106 = vunpack.c.l.b16 %v284
  %v1107 = vunpack.c.h.b16 %v284
  %v1108 = vunpack.c.l.b16 %v285
  %v1109 = vunpack.c.h.b16 %v285
  %v1110 = vpack.c.b16 %v600, %v598
  %v1111 = vpack.c.b16 %v601, %v599
  %v1112 = vpack.c.b16 %v604, %v602
  %v1113 = vpack.c.b16 %v605, %v603
  %v1114 = vpack.c.b16 %v608, %v606
  %v1115 = vpack.c.b16 %v609, %v607
  %v1116 = vpack.c.b16 %v612, %v610
  %v1117 = vpack.c.b16 %v613, %v611
  %v1118 = vpack.c.b16 %v616, %v614
  %v1119 = vpack.c.b16 %v617, %v615
  %v1120 = vpack.c.b16 %v620, %v618
  %v1121 = vpack.c.b16 %v621, %v619
  %v1122 = vpack.c.b16 %v624, %v622
  %v1123 = vpack.c.b16 %v625, %v623
  %v1124 = vpack.c.b16 %v628, %v626
  %v1125 = vpack.c.b16 %v629, %v627
  %v1126 = vpack.c.b16 %v632, %v630
  %v1127 = vpack.c.b16 %v633, %v631
  %v1128 = vpack.c.b16 %v636, %v634
  %v1129 = vpack.c.b16 %v637, %v635
  %v1130 = vpack.c.b16 %v640, %v638
  %v1131 = vpack.c.b16 %v641, %v639
  %v1132 = vpack.c.b16 %v644, %v642
  %v1133 = vpack.c.b16 %v645, %v643
  %v1134 = vpack.c.b16 %v648, %v646
  %v1135 = vpack.c.b16 %v649, %v647
  %v1136 = vpack.c.b16 %v652, %v650
  %v1137 = vpack.c.b16 %v653, %v651
  %v1138 = vpack.c.b16 %v656, %v654
  %v1139 = vpack.c.b16 %v657, %v655
  %v1140 = vpack.c.b16 %v660, %v658
  %v1141 = vpack.c.b16 %v661, %v659
  %v1142 = vpack.c.b16 %v664, %v662
  %v1143 = vpack.c.b16 %v665, %v663
  %v1144 = vpack.c.b16 %v668, %v666
  %v1145 = vpack.c.b16 %v669, %v667
  %v1146 = vpack.c.b16 %v672, %v670
  %v1147 = vpack.c.b16 %v673, %v671
  %v1148 = vpack.c.b16 %v676, %v674
  %v1149 = vpack.c.b16 %v677, %v675
  %v1150 = vpack.c.b16 %v680, %v678
  %v1151 = vpack.c.b16 %v681, %v679
  %v1152 = vpack.c.b16 %v684, %v682
  %v1153 = vpack.c.b16 %v685, %v683
  %v1154 = vpack.c.b16 %v688, %v686
  %v1155 = vpack.c.b16 %v689, %v687
  %v1156 = vpack.c.b16 %v692, %v690
  %v1157 = vpack.c.b16 %v693, %v691
  %v1158 = vpack.c.b16 %v696, %v694
  %v1159 = vpack.c.b16 %v697, %v695
  %v1160 = vpack.c.b16 %v700, %v698
  %v1161 = vpack.c.b16 %v701, %v699
  %v1162 = vpack.c.b16 %v704, %v702
  %v1163 = vpack.c.b16 %v705, %v703
  %v1164 = vpack.c.b16 %v708, %v706
  %v1165 = vpack.c.b16 %v709, %v707
  %v1166 = vpack.c.b16 %v712, %v710
  %v1167 = vpack.c.b16 %v713, %v711
  %v1168 = vpack.c.b16 %v716, %v714
  %v1169 = vpack.c.b16 %v717, %v715
  %v1170 = vpack.c.b16 %v720, %v718
  %v1171 = vpack.c.b16 %v721, %v719
  %v1172 = vpack.c.b16 %v724, %v722
  %v1173 = vpack.c.b16 %v725, %v723
  %v1174 = vpack.c.b16 %v728, %v726
  %v1175 = vpack.c.b16 %v729, %v727
  %v1176 = vpack.c.b16 %v732, %v730
  %v1177 = vpack.c.b16 %v733, %v731
  %v1178 = vpack.c.b16 %v736, %v734
  %v1179 = vpack.c.b16 %v737, %v735
  %v1180 = vpack.c.b16 %v740, %v738
  %v1181 = vpack.c.b16 %v741, %v739
  %v1182 = vpack.c.b16 %v744, %v742
  %v1183 = vpack.c.b16 %v745, %v743
  %v1184 = vpack.c.b16 %v748, %v746
  %v1185 = vpack.c.b16 %v749, %v747
  %v1186 = vpack.c.b16 %v752, %v750
  %v1187 = vpack.c.b16 %v753, %v751
  %v1188 = vpack.c.b16 %v756, %v754
  %v1189 = vpack.c.b16 %v757, %v755
  %v1190 = vpack.c.b16 %v760, %v758
  %v1191 = vpack.c.b16 %v761, %v759
  %v1192 = vpack.c.b16 %v764, %v762
  %v1193 = vpack.c.b16 %v765, %v763
  %v1194 = vpack.c.b16 %v768, %v766
  %v1195 = vpack.c.b16 %v769, %v767
  %v1196 = vpack.c.b16 %v772, %v770
  %v1197 = vpack.c.b16 %v773, %v771
  %v1198 = vpack.c.b16 %v776, %v774
  %v1199 = vpack.c.b16 %v777, %v775
  %v1200 = vpack.c.b16 %v780, %v778
  %v1201 = vpack.c.b16 %v781, %v779
  %v1202 = vpack.c.b16 %v784, %v782
  %v1203 = vpack.c.b16 %v785, %v783
  %v1204 = vpack.c.b16 %v788, %v786
  %v1205 = vpack.c.b16 %v789, %v787
  %v1206 = vpack.c.b16 %v792, %v790
  %v1207 = vpack.c.b16 %v793, %v791
  %v1208 = vpack.c.b16 %v796, %v794
  %v1209 = vpack.c.b16 %v797, %v795
  %v1210 = vpack.c.b16 %v800, %v798
  %v1211 = vpack.c.b16 %v801, %v799
  %v1212 = vpack.c.b16 %v804, %v802
  %v1213 = vpack.c.b16 %v805, %v803
  %v1214 = vpack.c.b16 %v808, %v806
  %v1215 = vpack.c.b16 %v809, %v807
  %v1216 = vpack.c.b16 %v812, %v810
  %v1217 = vpack.c.b16 %v813, %v811
  %v1218 = vpack.c.b16 %v816, %v814
  %v1219 = vpack.c.b16 %v817, %v815
  %v1220 = vpack.c.b16 %v820, %v818
  %v1221 = vpack.c.b16 %v821, %v819
  %v1222 = vpack.c.b16 %v824, %v822
  %v1223 = vpack.c.b16 %v825, %v823
  %v1224 = vpack.c.b16 %v828, %v826
  %v1225 = vpack.c.b16 %v829, %v827
  %v1226 = vpack.c.b16 %v832, %v830
  %v1227 = vpack.c.b16 %v833, %v831
  %v1228 = vpack.c.b16 %v836, %v834
  %v1229 = vpack.c.b16 %v837, %v835
  %v1230 = vpack.c.b16 %v840, %v838
  %v1231 = vpack.c.b16 %v841, %v839
  %v1232 = vpack.c.b16 %v844, %v842
  %v1233 = vpack.c.b16 %v845, %v843
  %v1234 = vpack.c.b16 %v848, %v846
  %v1235 = vpack.c.b16 %v849, %v847
  %v1236 = vpack.c.b16 %v852, %v850
  %v1237 = vpack.c.b16 %v853, %v851
  %v1238 = vpack.c.b16 %v856, %v854
  %v1239 = vpack.c.b16 %v857, %v855
  %v1240 = vpack.c.b16 %v860, %v858
  %v1241 = vpack.c.b16 %v861, %v859
  %v1242 = vpack.c.b16 %v864, %v862
  %v1243 = vpack.c.b16 %v865, %v863
  %v1244 = vpack.c.b16 %v868, %v866
  %v1245 = vpack.c.b16 %v869, %v867
  %v1246 = vpack.c.b16 %v872, %v870
  %v1247 = vpack.c.b16 %v873, %v871
  %v1248 = vpack.c.b16 %v876, %v874
  %v1249 = vpack.c.b16 %v877, %v875
  %v1250 = vpack.c.b16 %v880, %v878
  %v1251 = vpack.c.b16 %v881, %v879
  %v1252 = vpack.c.b16 %v884, %v882
  %v1253 = vpack.c.b16 %v885, %v883
  %v1254 = vpack.c.b16 %v888, %v886
  %v1255 = vpack.c.b16 %v889, %v887
  %v1256 = vpack.c.b16 %v892, %v890
  %v1257 = vpack.c.b16 %v893, %v891
  %v1258 = vpack.c.b16 %v896, %v894
  %v1259 = vpack.c.b16 %v897, %v895
  %v1260 = vpack.c.b16 %v900, %v898
  %v1261 = vpack.c.b16 %v901, %v899
  %v1262 = vpack.c.b16 %v904, %v902
  %v1263 = vpack.c.b16 %v905, %v903
  %v1264 = vpack.c.b16 %v908, %v906
  %v1265 = vpack.c.b16 %v909, %v907
  %v1266 = vpack.c.b16 %v912, %v910
  %v1267 = vpack.c.b16 %v913, %v911
  %v1268 = vpack.c.b16 %v916, %v914
  %v1269 = vpack.c.b16 %v917, %v915
  %v1270 = vpack.c.b16 %v920, %v918
  %v1271 = vpack.c.b16 %v921, %v919
  %v1272 = vpack.c.b16 %v924, %v922
  %v1273 = vpack.c.b16 %v925, %v923
  %v1274 = vpack.c.b16 %v928, %v926
  %v1275 = vpack.c.b16 %v929, %v927
  %v1276 = vpack.c.b16 %v932, %v930
  %v1277 = vpack.c.b16 %v933, %v931
  %v1278 = vpack.c.b16 %v936, %v934
  %v1279 = vpack.c.b16 %v937, %v935
  %v1280 = vpack.c.b16 %v940, %v938
  %v1281 = vpack.c.b16 %v941, %v939
  %v1282 = vpack.c.b16 %v944, %v942
  %v1283 = vpack.c.b16 %v945, %v943
  %v1284 = vpack.c.b16 %v948, %v946
  %v1285 = vpack.c.b16 %v949, %v947
  %v1286 = vpack.c.b16 %v952, %v950
  %v1287 = vpack.c.b16 %v953, %v951
  %v1288 = vpack.c.b16 %v956, %v954
  %v1289 = vpack.c.b16 %v957, %v955
  %v1290 = vpack.c.b16 %v960, %v958
  %v1291 = vpack.c.b16 %v961, %v959
  %v1292 = vpack.c.b16 %v964, %v962
  %v1293 = vpack.c.b16 %v965, %v963
  %v1294 = vpack.c.b16 %v968, %v966
  %v1295 = vpack.c.b16 %v969, %v967
  %v1296 = vpack.c.b16 %v972, %v970
  %v1297 = vpack.c.b16 %v973, %v971
  %v1298 = vpack.c.b16 %v976, %v974
  %v1299 = vpack.c.b16 %v977, %v975
  %v1300 = vpack.c.b16 %v980, %v978
  %v1301 = vpack.c.b16 %v981, %v979
  %v1302 = vpack.c.b16 %v984, %v982
  %v1303 = vpack.c.b16 %v985, %v983
  %v1304 = vpack.c.b16 %v988, %v986
  %v1305 = vpack.c.b16 %v989, %v987
  %v1306 = vpack.c.b16 %v992, %v990
  %v1307 = vpack.c.b16 %v993, %v991
  %v1308 = vpack.c.b16 %v996, %v994
  %v1309 = vpack.c.b16 %v997, %v995
  %v1310 = vpack.c.b16 %v1000, %v998
  %v1311 = vpack.c.b16 %v1001, %v999
  %v1312 = vpack.c.b16 %v1004, %v1002
  %v1313 = vpack.c.b16 %v1005, %v1003
  %v1314 = vpack.c.b16 %v1008, %v1006
  %v1315 = vpack.c.b16 %v1009, %v1007
  %v1316 = vpack.c.b16 %v1012, %v1010
  %v1317 = vpack.c.b16 %v1013, %v1011
  %v1318 = vpack.c.b16 %v1016, %v1014
  %v1319 = vpack.c.b16 %v1017, %v1015
  %v1320 = vpack.c.b16 %v1020, %v1018
  %v1321 = vpack.c.b16 %v1021, %v1019
  %v1322 = vpack.c.b16 %v1024, %v1022
  %v1323 = vpack.c.b16 %v1025, %v1023
  %v1324 = vpack.c.b16 %v1028, %v1026
  %v1325 = vpack.c.b16 %v1029, %v1027
  %v1326 = vpack.c.b16 %v1032, %v1030
  %v1327 = vpack.c.b16 %v1033, %v1031
  %v1328 = vpack.c.b16 %v1036, %v1034
  %v1329 = vpack.c.b16 %v1037, %v1035
  %v1330 = vpack.c.b16 %v1040, %v1038
  %v1331 = vpack.c.b16 %v1041, %v1039
  %v1332 = vpack.c.b16 %v1044, %v1042
  %v1333 = vpack.c.b16 %v1045, %v1043
  %v1334 = vpack.c.b16 %v1048, %v1046
  %v1335 = vpack.c.b16 %v1049, %v1047
  %v1336 = vpack.c.b16 %v1052, %v1050
  %v1337 = vpack.c.b16 %v1053, %v1051
  %v1338 = vpack.c.b16 %v1056, %v1054
  %v1339 = vpack.c.b16 %v1057, %v1055
  %v1340 = vpack.c.b16 %v1060, %v1058
  %v1341 = vpack.c.b16 %v1061, %v1059
  %v1342 = vpack.c.b16 %v1064, %v1062
  %v1343 = vpack.c.b16 %v1065, %v1063
  %v1344 = vpack.c.b16 %v1068, %v1066
  %v1345 = vpack.c.b16 %v1069, %v1067
  %v1346 = vpack.c.b16 %v1072, %v1070
  %v1347 = vpack.c.b16 %v1073, %v1071
  %v1348 = vpack.c.b16 %v1076, %v1074
  %v1349 = vpack.c.b16 %v1077, %v1075
  %v1350 = vpack.c.b16 %v1080, %v1078
  %v1351 = vpack.c.b16 %v1081, %v1079
  %v1352 = vpack.c.b16 %v1084, %v1082
  %v1353 = vpack.c.b16 %v1085, %v1083
  %v1354 = vpack.c.b16 %v1088, %v1086
  %v1355 = vpack.c.b16 %v1089, %v1087
  %v1356 = vpack.c.b16 %v1092, %v1090
  %v1357 = vpack.c.b16 %v1093, %v1091
  %v1358 = vpack.c.b16 %v1096, %v1094
  %v1359 = vpack.c.b16 %v1097, %v1095
  %v1360 = vpack.c.b16 %v1100, %v1098
  %v1361 = vpack.c.b16 %v1101, %v1099
  %v1362 = vpack.c.b16 %v1104, %v1102
  %v1363 = vpack.c.b16 %v1105, %v1103
  %v1364 = vpack.c.b16 %v1108, %v1106
  %v1365 = vpack.c.b16 %v1109, %v1107
  %1622 = vmatprep.subr.bf16.mxu0 %v1125
  %1623 = vmatpush1.bf16.msra.mxu0 %v1124
  %1624 = vmatprep.subr.bf16.mxu0 %v1123
  %1625 = vmatpush1.bf16.msra.mxu0 %v1122
  %1626 = vmatprep.subr.bf16.mxu0 %v1121
  %1627 = vmatpush1.bf16.msra.mxu0 %v1120
  %1628 = vmatprep.subr.bf16.mxu0 %v1119
  %1629 = vmatpush1.bf16.msra.mxu0 %v1118
  %1630 = vmatprep.subr.bf16.mxu0 %v1117
  %1631 = vmatpush1.bf16.msra.mxu0 %v1116
  %1632 = vmatprep.subr.bf16.mxu0 %v1115
  %1633 = vmatpush1.bf16.msra.mxu0 %v1114
  %1634 = vmatprep.subr.bf16.mxu0 %v1113
  %1635 = vmatpush1.bf16.msra.mxu0 %v1112
  %1636 = vmatprep.subr.bf16.mxu0 %v1111
  %1637 = vmatpush1.bf16.msra.mxu0 %v1110
  %1638 = vmatprep.subr.bf16.mxu0 %v1141
  %1639 = vmatpush2.bf16.msra.mxu0 %v1140
  %1640 = vmatprep.subr.bf16.mxu0 %v1139
  %1641 = vmatpush2.bf16.msra.mxu0 %v1138
  %1642 = vmatprep.subr.bf16.mxu0 %v1137
  %1643 = vmatpush2.bf16.msra.mxu0 %v1136
  %1644 = vmatprep.subr.bf16.mxu0 %v1135
  %1645 = vmatpush2.bf16.msra.mxu0 %v1134
  %1646 = vmatprep.subr.bf16.mxu0 %v1133
  %1647 = vmatpush2.bf16.msra.mxu0 %v1132
  %1648 = vmatprep.subr.bf16.mxu0 %v1131
  %1649 = vmatpush2.bf16.msra.mxu0 %v1130
  %1650 = vmatprep.subr.bf16.mxu0 %v1129
  %1651 = vmatpush2.bf16.msra.mxu0 %v1128
  %1652 = vmatprep.subr.bf16.mxu0 %v1127
  %1653 = vmatpush2.bf16.msra.mxu0 %v1126
  %1654 = vmatprep.mubr.bf16.mxu0 %v311
  %1655 = vmatmul.mubr.bf16.gmra.mxu0 %v310
  %v1656 = vpop.f32.mrf.mxu0
  %v1657 = vadd.f32 0.0, %v1656
  %v1658 = vpop.f32.mrf.mxu0
  %v1659 = vadd.f32 0.0, %v1658
  %v1660 = vpop.f32.mrf.mxu0
  %v1661 = vpop.f32.mrf.mxu0
  %1662 = vdwg.mxu0
  %1663 = vmatprep.subr.bf16.mxu0 %v1157
  %1664 = vmatpush1.bf16.msra.mxu0 %v1156
  %1665 = vmatprep.subr.bf16.mxu0 %v1155
  %1666 = vmatpush1.bf16.msra.mxu0 %v1154
  %1667 = vmatprep.subr.bf16.mxu0 %v1153
  %1668 = vmatpush1.bf16.msra.mxu0 %v1152
  %1669 = vmatprep.subr.bf16.mxu0 %v1151
  %1670 = vmatpush1.bf16.msra.mxu0 %v1150
  %1671 = vmatprep.subr.bf16.mxu0 %v1149
  %1672 = vmatpush1.bf16.msra.mxu0 %v1148
  %1673 = vmatprep.subr.bf16.mxu0 %v1147
  %1674 = vmatpush1.bf16.msra.mxu0 %v1146
  %1675 = vmatprep.subr.bf16.mxu0 %v1145
  %1676 = vmatpush1.bf16.msra.mxu0 %v1144
  %1677 = vmatprep.subr.bf16.mxu0 %v1143
  %1678 = vmatpush1.bf16.msra.mxu0 %v1142
  %1679 = vmatprep.subr.bf16.mxu0 %v1173
  %1680 = vmatpush2.bf16.msra.mxu0 %v1172
  %1681 = vmatprep.subr.bf16.mxu0 %v1171
  %1682 = vmatpush2.bf16.msra.mxu0 %v1170
  %1683 = vmatprep.subr.bf16.mxu0 %v1169
  %1684 = vmatpush2.bf16.msra.mxu0 %v1168
  %1685 = vmatprep.subr.bf16.mxu0 %v1167
  %1686 = vmatpush2.bf16.msra.mxu0 %v1166
  %1687 = vmatprep.subr.bf16.mxu0 %v1165
  %1688 = vmatpush2.bf16.msra.mxu0 %v1164
  %1689 = vmatprep.subr.bf16.mxu0 %v1163
  %1690 = vmatpush2.bf16.msra.mxu0 %v1162
  %1691 = vmatprep.subr.bf16.mxu0 %v1161
  %1692 = vmatpush2.bf16.msra.mxu0 %v1160
  %1693 = vmatprep.subr.bf16.mxu0 %v1159
  %1694 = vmatpush2.bf16.msra.mxu0 %v1158
  %1695 = vmatprep.mubr.bf16.mxu0 %v313
  %1696 = vmatmul.mubr.bf16.gmra.mxu0 %v312
  %v1697 = vpop.f32.mrf.mxu0
  %v1698 = vadd.f32 %v1657, %v1697
  %v1699 = vpop.f32.mrf.mxu0
  %v1700 = vadd.f32 %v1659, %v1699
  %v1701 = vpop.f32.mrf.mxu0
  %v1702 = vpop.f32.mrf.mxu0
  %1703 = vdwg.mxu0
  %1704 = vmatprep.subr.bf16.mxu0 %v1189
  %1705 = vmatpush1.bf16.msra.mxu0 %v1188
  %1706 = vmatprep.subr.bf16.mxu0 %v1187
  %1707 = vmatpush1.bf16.msra.mxu0 %v1186
  %1708 = vmatprep.subr.bf16.mxu0 %v1185
  %1709 = vmatpush1.bf16.msra.mxu0 %v1184
  %1710 = vmatprep.subr.bf16.mxu0 %v1183
  %1711 = vmatpush1.bf16.msra.mxu0 %v1182
  %1712 = vmatprep.subr.bf16.mxu0 %v1181
  %1713 = vmatpush1.bf16.msra.mxu0 %v1180
  %1714 = vmatprep.subr.bf16.mxu0 %v1179
  %1715 = vmatpush1.bf16.msra.mxu0 %v1178
  %1716 = vmatprep.subr.bf16.mxu0 %v1177
  %1717 = vmatpush1.bf16.msra.mxu0 %v1176
  %1718 = vmatprep.subr.bf16.mxu0 %v1175
  %1719 = vmatpush1.bf16.msra.mxu0 %v1174
  %1720 = vmatprep.subr.bf16.mxu0 %v1205
  %1721 = vmatpush2.bf16.msra.mxu0 %v1204
  %1722 = vmatprep.subr.bf16.mxu0 %v1203
  %1723 = vmatpush2.bf16.msra.mxu0 %v1202
  %1724 = vmatprep.subr.bf16.mxu0 %v1201
  %1725 = vmatpush2.bf16.msra.mxu0 %v1200
  %1726 = vmatprep.subr.bf16.mxu0 %v1199
  %1727 = vmatpush2.bf16.msra.mxu0 %v1198
  %1728 = vmatprep.subr.bf16.mxu0 %v1197
  %1729 = vmatpush2.bf16.msra.mxu0 %v1196
  %1730 = vmatprep.subr.bf16.mxu0 %v1195
  %1731 = vmatpush2.bf16.msra.mxu0 %v1194
  %1732 = vmatprep.subr.bf16.mxu0 %v1193
  %1733 = vmatpush2.bf16.msra.mxu0 %v1192
  %1734 = vmatprep.subr.bf16.mxu0 %v1191
  %1735 = vmatpush2.bf16.msra.mxu0 %v1190
  %1736 = vmatprep.mubr.bf16.mxu0 %v315
  %1737 = vmatmul.mubr.bf16.gmra.mxu0 %v314
  %v1738 = vpop.f32.mrf.mxu0
  %v1739 = vadd.f32 %v1698, %v1738
  %v1740 = vpop.f32.mrf.mxu0
  %v1741 = vadd.f32 %v1700, %v1740
  %v1742 = vpop.f32.mrf.mxu0
  %v1743 = vpop.f32.mrf.mxu0
  %1744 = vdwg.mxu0
  %1745 = vmatprep.subr.bf16.mxu0 %v1221
  %1746 = vmatpush1.bf16.msra.mxu0 %v1220
  %1747 = vmatprep.subr.bf16.mxu0 %v1219
  %1748 = vmatpush1.bf16.msra.mxu0 %v1218
  %1749 = vmatprep.subr.bf16.mxu0 %v1217
  %1750 = vmatpush1.bf16.msra.mxu0 %v1216
  %1751 = vmatprep.subr.bf16.mxu0 %v1215
  %1752 = vmatpush1.bf16.msra.mxu0 %v1214
  %1753 = vmatprep.subr.bf16.mxu0 %v1213
  %1754 = vmatpush1.bf16.msra.mxu0 %v1212
  %1755 = vmatprep.subr.bf16.mxu0 %v1211
  %1756 = vmatpush1.bf16.msra.mxu0 %v1210
  %1757 = vmatprep.subr.bf16.mxu0 %v1209
  %1758 = vmatpush1.bf16.msra.mxu0 %v1208
  %1759 = vmatprep.subr.bf16.mxu0 %v1207
  %1760 = vmatpush1.bf16.msra.mxu0 %v1206
  %1761 = vmatprep.subr.bf16.mxu0 %v1237
  %1762 = vmatpush2.bf16.msra.mxu0 %v1236
  %1763 = vmatprep.subr.bf16.mxu0 %v1235
  %1764 = vmatpush2.bf16.msra.mxu0 %v1234
  %1765 = vmatprep.subr.bf16.mxu0 %v1233
  %1766 = vmatpush2.bf16.msra.mxu0 %v1232
  %1767 = vmatprep.subr.bf16.mxu0 %v1231
  %1768 = vmatpush2.bf16.msra.mxu0 %v1230
  %1769 = vmatprep.subr.bf16.mxu0 %v1229
  %1770 = vmatpush2.bf16.msra.mxu0 %v1228
  %1771 = vmatprep.subr.bf16.mxu0 %v1227
  %1772 = vmatpush2.bf16.msra.mxu0 %v1226
  %1773 = vmatprep.subr.bf16.mxu0 %v1225
  %1774 = vmatpush2.bf16.msra.mxu0 %v1224
  %1775 = vmatprep.subr.bf16.mxu0 %v1223
  %1776 = vmatpush2.bf16.msra.mxu0 %v1222
  %1777 = vmatprep.mubr.bf16.mxu0 %v317
  %1778 = vmatmul.mubr.bf16.gmra.mxu0 %v316
  %v1779 = vpop.f32.mrf.mxu0
  %v1780 = vadd.f32 %v1739, %v1779
  %v1781 = vpop.f32.mrf.mxu0
  %v1782 = vadd.f32 %v1741, %v1781
  %v1783 = vpop.f32.mrf.mxu0
  %v1784 = vpop.f32.mrf.mxu0
  %1785 = vdwg.mxu0
  %1786 = vmatprep.subr.bf16.mxu0 %v1253
  %1787 = vmatpush1.bf16.msra.mxu0 %v1252
  %1788 = vmatprep.subr.bf16.mxu0 %v1251
  %1789 = vmatpush1.bf16.msra.mxu0 %v1250
  %1790 = vmatprep.subr.bf16.mxu0 %v1249
  %1791 = vmatpush1.bf16.msra.mxu0 %v1248
  %1792 = vmatprep.subr.bf16.mxu0 %v1247
  %1793 = vmatpush1.bf16.msra.mxu0 %v1246
  %1794 = vmatprep.subr.bf16.mxu0 %v1245
  %1795 = vmatpush1.bf16.msra.mxu0 %v1244
  %1796 = vmatprep.subr.bf16.mxu0 %v1243
  %1797 = vmatpush1.bf16.msra.mxu0 %v1242
  %1798 = vmatprep.subr.bf16.mxu0 %v1241
  %1799 = vmatpush1.bf16.msra.mxu0 %v1240
  %1800 = vmatprep.subr.bf16.mxu0 %v1239
  %1801 = vmatpush1.bf16.msra.mxu0 %v1238
  %1802 = vmatprep.subr.bf16.mxu0 %v1269
  %1803 = vmatpush2.bf16.msra.mxu0 %v1268
  %1804 = vmatprep.subr.bf16.mxu0 %v1267
  %1805 = vmatpush2.bf16.msra.mxu0 %v1266
  %1806 = vmatprep.subr.bf16.mxu0 %v1265
  %1807 = vmatpush2.bf16.msra.mxu0 %v1264
  %1808 = vmatprep.subr.bf16.mxu0 %v1263
  %1809 = vmatpush2.bf16.msra.mxu0 %v1262
  %1810 = vmatprep.subr.bf16.mxu0 %v1261
  %1811 = vmatpush2.bf16.msra.mxu0 %v1260
  %1812 = vmatprep.subr.bf16.mxu0 %v1259
  %1813 = vmatpush2.bf16.msra.mxu0 %v1258
  %1814 = vmatprep.subr.bf16.mxu0 %v1257
  %1815 = vmatpush2.bf16.msra.mxu0 %v1256
  %1816 = vmatprep.subr.bf16.mxu0 %v1255
  %1817 = vmatpush2.bf16.msra.mxu0 %v1254
  %1818 = vmatprep.mubr.bf16.mxu0 %v319
  %1819 = vmatmul.mubr.bf16.gmra.mxu0 %v318
  %v1820 = vpop.f32.mrf.mxu0
  %v1821 = vadd.f32 %v1780, %v1820
  %v1822 = vpop.f32.mrf.mxu0
  %v1823 = vadd.f32 %v1782, %v1822
  %v1824 = vpop.f32.mrf.mxu0
  %v1825 = vpop.f32.mrf.mxu0
  %1826 = vdwg.mxu0
  %1827 = vmatprep.subr.bf16.mxu0 %v1285
  %1828 = vmatpush1.bf16.msra.mxu0 %v1284
  %1829 = vmatprep.subr.bf16.mxu0 %v1283
  %1830 = vmatpush1.bf16.msra.mxu0 %v1282
  %1831 = vmatprep.subr.bf16.mxu0 %v1281
  %1832 = vmatpush1.bf16.msra.mxu0 %v1280
  %1833 = vmatprep.subr.bf16.mxu0 %v1279
  %1834 = vmatpush1.bf16.msra.mxu0 %v1278
  %1835 = vmatprep.subr.bf16.mxu0 %v1277
  %1836 = vmatpush1.bf16.msra.mxu0 %v1276
  %1837 = vmatprep.subr.bf16.mxu0 %v1275
  %1838 = vmatpush1.bf16.msra.mxu0 %v1274
  %1839 = vmatprep.subr.bf16.mxu0 %v1273
  %1840 = vmatpush1.bf16.msra.mxu0 %v1272
  %1841 = vmatprep.subr.bf16.mxu0 %v1271
  %1842 = vmatpush1.bf16.msra.mxu0 %v1270
  %1843 = vmatprep.subr.bf16.mxu0 %v1301
  %1844 = vmatpush2.bf16.msra.mxu0 %v1300
  %1845 = vmatprep.subr.bf16.mxu0 %v1299
  %1846 = vmatpush2.bf16.msra.mxu0 %v1298
  %1847 = vmatprep.subr.bf16.mxu0 %v1297
  %1848 = vmatpush2.bf16.msra.mxu0 %v1296
  %1849 = vmatprep.subr.bf16.mxu0 %v1295
  %1850 = vmatpush2.bf16.msra.mxu0 %v1294
  %1851 = vmatprep.subr.bf16.mxu0 %v1293
  %1852 = vmatpush2.bf16.msra.mxu0 %v1292
  %1853 = vmatprep.subr.bf16.mxu0 %v1291
  %1854 = vmatpush2.bf16.msra.mxu0 %v1290
  %1855 = vmatprep.subr.bf16.mxu0 %v1289
  %1856 = vmatpush2.bf16.msra.mxu0 %v1288
  %1857 = vmatprep.subr.bf16.mxu0 %v1287
  %1858 = vmatpush2.bf16.msra.mxu0 %v1286
  %1859 = vmatprep.mubr.bf16.mxu0 %v321
  %1860 = vmatmul.mubr.bf16.gmra.mxu0 %v320
  %v1861 = vpop.f32.mrf.mxu0
  %v1862 = vadd.f32 %v1821, %v1861
  %v1863 = vpop.f32.mrf.mxu0
  %v1864 = vadd.f32 %v1823, %v1863
  %v1865 = vpop.f32.mrf.mxu0
  %v1866 = vpop.f32.mrf.mxu0
  %1867 = vdwg.mxu0
  %1868 = vmatprep.subr.bf16.mxu0 %v1317
  %1869 = vmatpush1.bf16.msra.mxu0 %v1316
  %1870 = vmatprep.subr.bf16.mxu0 %v1315
  %1871 = vmatpush1.bf16.msra.mxu0 %v1314
  %1872 = vmatprep.subr.bf16.mxu0 %v1313
  %1873 = vmatpush1.bf16.msra.mxu0 %v1312
  %1874 = vmatprep.subr.bf16.mxu0 %v1311
  %1875 = vmatpush1.bf16.msra.mxu0 %v1310
  %1876 = vmatprep.subr.bf16.mxu0 %v1309
  %1877 = vmatpush1.bf16.msra.mxu0 %v1308
  %1878 = vmatprep.subr.bf16.mxu0 %v1307
  %1879 = vmatpush1.bf16.msra.mxu0 %v1306
  %1880 = vmatprep.subr.bf16.mxu0 %v1305
  %1881 = vmatpush1.bf16.msra.mxu0 %v1304
  %1882 = vmatprep.subr.bf16.mxu0 %v1303
  %1883 = vmatpush1.bf16.msra.mxu0 %v1302
  %1884 = vmatprep.subr.bf16.mxu0 %v1333
  %1885 = vmatpush2.bf16.msra.mxu0 %v1332
  %1886 = vmatprep.subr.bf16.mxu0 %v1331
  %1887 = vmatpush2.bf16.msra.mxu0 %v1330
  %1888 = vmatprep.subr.bf16.mxu0 %v1329
  %1889 = vmatpush2.bf16.msra.mxu0 %v1328
  %1890 = vmatprep.subr.bf16.mxu0 %v1327
  %1891 = vmatpush2.bf16.msra.mxu0 %v1326
  %1892 = vmatprep.subr.bf16.mxu0 %v1325
  %1893 = vmatpush2.bf16.msra.mxu0 %v1324
  %1894 = vmatprep.subr.bf16.mxu0 %v1323
  %1895 = vmatpush2.bf16.msra.mxu0 %v1322
  %1896 = vmatprep.subr.bf16.mxu0 %v1321
  %1897 = vmatpush2.bf16.msra.mxu0 %v1320
  %1898 = vmatprep.subr.bf16.mxu0 %v1319
  %1899 = vmatpush2.bf16.msra.mxu0 %v1318
  %1900 = vmatprep.mubr.bf16.mxu0 %v323
  %1901 = vmatmul.mubr.bf16.gmra.mxu0 %v322
  %v1902 = vpop.f32.mrf.mxu0
  %v1903 = vadd.f32 %v1862, %v1902
  %v1904 = vpop.f32.mrf.mxu0
  %v1905 = vadd.f32 %v1864, %v1904
  %v1906 = vpop.f32.mrf.mxu0
  %v1907 = vpop.f32.mrf.mxu0
  %1908 = vdwg.mxu0
  %1909 = vmatprep.subr.bf16.mxu0 %v1349
  %1910 = vmatpush1.bf16.msra.mxu0 %v1348
  %1911 = vmatprep.subr.bf16.mxu0 %v1347
  %1912 = vmatpush1.bf16.msra.mxu0 %v1346
  %1913 = vmatprep.subr.bf16.mxu0 %v1345
  %1914 = vmatpush1.bf16.msra.mxu0 %v1344
  %1915 = vmatprep.subr.bf16.mxu0 %v1343
  %1916 = vmatpush1.bf16.msra.mxu0 %v1342
  %1917 = vmatprep.subr.bf16.mxu0 %v1341
  %1918 = vmatpush1.bf16.msra.mxu0 %v1340
  %1919 = vmatprep.subr.bf16.mxu0 %v1339
  %1920 = vmatpush1.bf16.msra.mxu0 %v1338
  %1921 = vmatprep.subr.bf16.mxu0 %v1337
  %1922 = vmatpush1.bf16.msra.mxu0 %v1336
  %1923 = vmatprep.subr.bf16.mxu0 %v1335
  %1924 = vmatpush1.bf16.msra.mxu0 %v1334
  %1925 = vmatprep.subr.bf16.mxu0 %v1365
  %1926 = vmatpush2.bf16.msra.mxu0 %v1364
  %1927 = vmatprep.subr.bf16.mxu0 %v1363
  %1928 = vmatpush2.bf16.msra.mxu0 %v1362
  %1929 = vmatprep.subr.bf16.mxu0 %v1361
  %1930 = vmatpush2.bf16.msra.mxu0 %v1360
  %1931 = vmatprep.subr.bf16.mxu0 %v1359
  %1932 = vmatpush2.bf16.msra.mxu0 %v1358
  %1933 = vmatprep.subr.bf16.mxu0 %v1357
  %1934 = vmatpush2.bf16.msra.mxu0 %v1356
  %1935 = vmatprep.subr.bf16.mxu0 %v1355
  %1936 = vmatpush2.bf16.msra.mxu0 %v1354
  %1937 = vmatprep.subr.bf16.mxu0 %v1353
  %1938 = vmatpush2.bf16.msra.mxu0 %v1352
  %1939 = vmatprep.subr.bf16.mxu0 %v1351
  %1940 = vmatpush2.bf16.msra.mxu0 %v1350
  %1941 = vmatprep.mubr.bf16.mxu0 %v325
  %1942 = vmatmul.mubr.bf16.gmra.mxu0 %v324
  %v1943 = vpop.f32.mrf.mxu0
  %v1944 = vadd.f32 %v1903, %v1943
  %v1945 = vpop.f32.mrf.mxu0
  %v1946 = vadd.f32 %v1905, %v1945
  %v1947 = vpop.f32.mrf.mxu0
  %v1948 = vpop.f32.mrf.mxu0
  %1949 = vdwg.mxu0
  %v1950 = vadd.f32 %v20, %v1944
  %v1951 = vadd.f32 %v21, %v1946
  %1952 = vst [vmem:[#allocation2] sm:$0xff] %v1950
  %1953 = vst [vmem:[#allocation2 + $0x8] sm:$0xff] %v1951
  // Predicated region
  $region18: #{embedder_forward.7} parent=0 // pred_check
    %p1954 = pneg %p14
  $region19: #{embedder_forward.7} parent=0 // pred_check_branch
    %1956 = sbr.rel (%p1954) target = $region21
  $region20: #{embedder_forward.7} parent=0 // pred_region
    %v1957 = vld [vmem:[#allocation2] sm:$0xff]
    %v1958 = vld [vmem:[#allocation2 + $0x8] sm:$0xff]
    %v1959 = vld [vmem:[%s2] sm:$0x3]
    %v1961 = vlaneseq
    %v1962 = vshrl.u32 %v1961, 7
    %v1963 = vsub.s32 0, %v1962
    %v1964 = vrot.slane %v1959, %v1963
    %v1965 = vlaneseq
    %v1966 = vshrl.u32 %v1965, 7
    %v1967 = vsub.s32 1, %v1966
    %v1968 = vrot.slane %v1959, %v1967
    %v1971 = vadd.f32 %v1957, %v1964
    %v1972 = vadd.f32 %v1958, %v1968
    %vm1973 = vcmp.ge.f32.partialorder %v1971, 0.0
    %vm1974 = vcmp.ge.f32.partialorder %v1972, 0.0
    %v1975 = vmul.f32 %v1971, 0.2
    %v1976 = vmul.f32 %v1972, 0.2
    %v1977 = vsel %vm1973, %v1971, %v1975
    %v1978 = vsel %vm1974, %v1972, %v1976
    %v1979 = vpack.c.bf16 %v1977, %v1977
    %v1980 = vpack.c.bf16 %v1978, %v1978
    %v1983 = vunpack.c.l.b16 %v1979
    %v1984 = vunpack.c.l.b16 %v1980
    %v1985 = vpack.c.b16 %v1984, %v1983
    %1987 = vst [vmem:[%s3] sm:$0xff] %v1985
  $region21: #{embedder_forward.7} parent=0 // pred_fallthru
    _
  // Predicated region
  $region22: #{embedder_forward.7} parent=0 // pred_check
    _
  $region23: #{embedder_forward.7} parent=0 // pred_check_branch
    %1989 = sbr.rel (0) target = $region25
  $region24: #{embedder_forward.7} parent=0 // pred_region
    _
  $region25: #{embedder_forward.7} parent=0 // pred_fallthru
    _
  // Predicated region
  $region26: #{embedder_forward.7} parent=0 // pred_check
    _
  $region27: #{embedder_forward.7} parent=0 // pred_check_branch
    %1991 = sbr.rel (0) target = $region29
  $region28: #{embedder_forward.7} parent=0 // pred_region
    _
  $region29: #{embedder_forward.7} parent=0 // pred_fallthru
    _

// kernel: embedder_forward.9
$region0: #{embedder_forward.9}
  #allocation0 [shape = 'u32[]', space=smem, size = 0x4, offset = 0x4, fixed_abs, tag = 'smem constant byte address 0x4 - core index']
  #allocation1 [shape = 'u32[144,128]{1,0:T(1,128)}', space=vmem, size = 0x12000, scoped, tag = 'internal scratch']
  #allocation2 [shape = 'f32[8,128]{1,0:T(8,128)}', space=vmem, size = 0x1000, scoped, tag = 'scratch operand']
  %s0 = inlined_call_operand.vmem [shape: bf16[8,512], index: 0, kind: input, shape index: {}]
  %s1 = inlined_call_operand.vmem [shape: bf16[512,128], index: 1, kind: input, shape index: {}]
  %s2 = inlined_call_operand.vmem [shape: f32[1,128], index: 2, kind: input, shape index: {}]
  %s3 = inlined_call_operand.vmem [shape: f32[8,128], index: 3, kind: output, shape index: {}]
  %s4 = sld [smem:[#allocation0]]
  $region30: #{embedder_forward.9} parent=0
    _
  %s6 = ssub.s32 1, %s4
  %s7 = scalar_select 0, %s6, %s4
  // Predicated region
  $region2: #{embedder_forward.9} parent=0 // pred_check
    _
  $region3: #{embedder_forward.9} parent=0 // pred_check_branch
    %9 = sbr.rel (0) target = $region5
  $region4: #{embedder_forward.9} parent=0 // pred_region
    _
  $region5: #{embedder_forward.9} parent=0 // pred_fallthru
    _
  // Predicated region
  $region6: #{embedder_forward.9} parent=0 // pred_check
    _
  $region7: #{embedder_forward.9} parent=0 // pred_check_branch
    %11 = sbr.rel (0) target = $region9
  $region8: #{embedder_forward.9} parent=0 // pred_region
    _
  $region9: #{embedder_forward.9} parent=0 // pred_fallthru
    _
  // Predicated region
  $region10: #{embedder_forward.9} parent=0 // pred_check
    _
  $region11: #{embedder_forward.9} parent=0 // pred_check_branch
    %13 = sbr.rel (0) target = $region13
  $region12: #{embedder_forward.9} parent=0 // pred_region
    _
  $region13: #{embedder_forward.9} parent=0 // pred_fallthru
    _
  %p15 = scmp.eq.s32.totalorder 0, 0
  // Predicated region
  $region14: #{embedder_forward.9} parent=0 // pred_check
    %p16 = pneg %p15
  $region15: #{embedder_forward.9} parent=0 // pred_check_branch
    %18 = sbr.rel (%p16) target = $region17
  $region16: #{embedder_forward.9} parent=0 // pred_region
    %19 = vst [vmem:[#allocation2] sm:$0xff] 0.0
  $region17: #{embedder_forward.9} parent=0 // pred_fallthru
    _
  %v20 = vld [vmem:[#allocation2] sm:$0xff]
  %v21 = vld [vmem:[%s0] sm:$0xff]
  %v22 = vld [vmem:[%s0 + $0x8] sm:$0xff]
  %v23 = vld [vmem:[%s1] sm:$0xf]
  %v24 = vld [vmem:[%s1 + $0x4] sm:$0xf]
  %v25 = vld [vmem:[%s1 + $0x8] sm:$0xf]
  %v26 = vld [vmem:[%s1 + $0xc] sm:$0xf]
  %v27 = vld [vmem:[%s1 + $0x10] sm:$0xf]
  %v28 = vld [vmem:[%s1 + $0x14] sm:$0xf]
  %v29 = vld [vmem:[%s1 + $0x18] sm:$0xf]
  %v30 = vld [vmem:[%s1 + $0x1c] sm:$0xf]
  %v31 = vld [vmem:[%s1 + $0x20] sm:$0xf]
  %v32 = vld [vmem:[%s1 + $0x24] sm:$0xf]
  %v33 = vld [vmem:[%s1 + $0x28] sm:$0xf]
  %v34 = vld [vmem:[%s1 + $0x2c] sm:$0xf]
  %v35 = vld [vmem:[%s1 + $0x30] sm:$0xf]
  %v36 = vld [vmem:[%s1 + $0x34] sm:$0xf]
  %v37 = vld [vmem:[%s1 + $0x38] sm:$0xf]
  %v38 = vld [vmem:[%s1 + $0x3c] sm:$0xf]
  %v39 = vld [vmem:[%s1 + $0x40] sm:$0xf]
  %v40 = vld [vmem:[%s1 + $0x44] sm:$0xf]
  %v41 = vld [vmem:[%s1 + $0x48] sm:$0xf]
  %v42 = vld [vmem:[%s1 + $0x4c] sm:$0xf]
  %v43 = vld [vmem:[%s1 + $0x50] sm:$0xf]
  %v44 = vld [vmem:[%s1 + $0x54] sm:$0xf]
  %v45 = vld [vmem:[%s1 + $0x58] sm:$0xf]
  %v46 = vld [vmem:[%s1 + $0x5c] sm:$0xf]
  %v47 = vld [vmem:[%s1 + $0x60] sm:$0xf]
  %v48 = vld [vmem:[%s1 + $0x64] sm:$0xf]
  %v49 = vld [vmem:[%s1 + $0x68] sm:$0xf]
  %v50 = vld [vmem:[%s1 + $0x6c] sm:$0xf]
  %v51 = vld [vmem:[%s1 + $0x70] sm:$0xf]
  %v52 = vld [vmem:[%s1 + $0x74] sm:$0xf]
  %v53 = vld [vmem:[%s1 + $0x78] sm:$0xf]
  %v54 = vld [vmem:[%s1 + $0x7c] sm:$0xf]
  %v55 = vld [vmem:[%s1 + $0x80] sm:$0xf]
  %v56 = vld [vmem:[%s1 + $0x84] sm:$0xf]
  %v57 = vld [vmem:[%s1 + $0x88] sm:$0xf]
  %v58 = vld [vmem:[%s1 + $0x8c] sm:$0xf]
  %v59 = vld [vmem:[%s1 + $0x90] sm:$0xf]
  %v60 = vld [vmem:[%s1 + $0x94] sm:$0xf]
  %v61 = vld [vmem:[%s1 + $0x98] sm:$0xf]
  %v62 = vld [vmem:[%s1 + $0x9c] sm:$0xf]
  %v63 = vld [vmem:[%s1 + $0xa0] sm:$0xf]
  %v64 = vld [vmem:[%s1 + $0xa4] sm:$0xf]
  %v65 = vld [vmem:[%s1 + $0xa8] sm:$0xf]
  %v66 = vld [vmem:[%s1 + $0xac] sm:$0xf]
  %v67 = vld [vmem:[%s1 + $0xb0] sm:$0xf]
  %v68 = vld [vmem:[%s1 + $0xb4] sm:$0xf]
  %v69 = vld [vmem:[%s1 + $0xb8] sm:$0xf]
  %v70 = vld [vmem:[%s1 + $0xbc] sm:$0xf]
  %v71 = vld [vmem:[%s1 + $0xc0] sm:$0xf]
  %v72 = vld [vmem:[%s1 + $0xc4] sm:$0xf]
  %v73 = vld [vmem:[%s1 + $0xc8] sm:$0xf]
  %v74 = vld [vmem:[%s1 + $0xcc] sm:$0xf]
  %v75 = vld [vmem:[%s1 + $0xd0] sm:$0xf]
  %v76 = vld [vmem:[%s1 + $0xd4] sm:$0xf]
  %v77 = vld [vmem:[%s1 + $0xd8] sm:$0xf]
  %v78 = vld [vmem:[%s1 + $0xdc] sm:$0xf]
  %v79 = vld [vmem:[%s1 + $0xe0] sm:$0xf]
  %v80 = vld [vmem:[%s1 + $0xe4] sm:$0xf]
  %v81 = vld [vmem:[%s1 + $0xe8] sm:$0xf]
  %v82 = vld [vmem:[%s1 + $0xec] sm:$0xf]
  %v83 = vld [vmem:[%s1 + $0xf0] sm:$0xf]
  %v84 = vld [vmem:[%s1 + $0xf4] sm:$0xf]
  %v85 = vld [vmem:[%s1 + $0xf8] sm:$0xf]
  %v86 = vld [vmem:[%s1 + $0xfc] sm:$0xf]
  %v89 = vunpack.c.l.b16 %v21
  %v90 = vunpack.c.h.b16 %v21
  %v91 = vunpack.c.l.b16 %v22
  %v92 = vunpack.c.h.b16 %v22
  %v93 = vpack.c.b16 %v89, %v89
  %v94 = vpack.c.b16 %v90, %v90
  %v95 = vpack.c.b16 %v91, %v91
  %v96 = vpack.c.b16 %v92, %v92
  %v165 = vunpack.c.l.b16 %v23
  %v166 = vunpack.c.l.b16 %v24
  %v167 = vunpack.c.l.b16 %v25
  %v168 = vunpack.c.l.b16 %v26
  %v169 = vunpack.c.l.b16 %v27
  %v170 = vunpack.c.l.b16 %v28
  %v171 = vunpack.c.l.b16 %v29
  %v172 = vunpack.c.l.b16 %v30
  %v173 = vunpack.c.l.b16 %v31
  %v174 = vunpack.c.l.b16 %v32
  %v175 = vunpack.c.l.b16 %v33
  %v176 = vunpack.c.l.b16 %v34
  %v177 = vunpack.c.l.b16 %v35
  %v178 = vunpack.c.l.b16 %v36
  %v179 = vunpack.c.l.b16 %v37
  %v180 = vunpack.c.l.b16 %v38
  %v181 = vunpack.c.l.b16 %v39
  %v182 = vunpack.c.l.b16 %v40
  %v183 = vunpack.c.l.b16 %v41
  %v184 = vunpack.c.l.b16 %v42
  %v185 = vunpack.c.l.b16 %v43
  %v186 = vunpack.c.l.b16 %v44
  %v187 = vunpack.c.l.b16 %v45
  %v188 = vunpack.c.l.b16 %v46
  %v189 = vunpack.c.l.b16 %v47
  %v190 = vunpack.c.l.b16 %v48
  %v191 = vunpack.c.l.b16 %v49
  %v192 = vunpack.c.l.b16 %v50
  %v193 = vunpack.c.l.b16 %v51
  %v194 = vunpack.c.l.b16 %v52
  %v195 = vunpack.c.l.b16 %v53
  %v196 = vunpack.c.l.b16 %v54
  %v197 = vunpack.c.l.b16 %v55
  %v198 = vunpack.c.l.b16 %v56
  %v199 = vunpack.c.l.b16 %v57
  %v200 = vunpack.c.l.b16 %v58
  %v201 = vunpack.c.l.b16 %v59
  %v202 = vunpack.c.l.b16 %v60
  %v203 = vunpack.c.l.b16 %v61
  %v204 = vunpack.c.l.b16 %v62
  %v205 = vunpack.c.l.b16 %v63
  %v206 = vunpack.c.l.b16 %v64
  %v207 = vunpack.c.l.b16 %v65
  %v208 = vunpack.c.l.b16 %v66
  %v209 = vunpack.c.l.b16 %v67
  %v210 = vunpack.c.l.b16 %v68
  %v211 = vunpack.c.l.b16 %v69
  %v212 = vunpack.c.l.b16 %v70
  %v213 = vunpack.c.l.b16 %v71
  %v214 = vunpack.c.l.b16 %v72
  %v215 = vunpack.c.l.b16 %v73
  %v216 = vunpack.c.l.b16 %v74
  %v217 = vunpack.c.l.b16 %v75
  %v218 = vunpack.c.l.b16 %v76
  %v219 = vunpack.c.l.b16 %v77
  %v220 = vunpack.c.l.b16 %v78
  %v221 = vunpack.c.l.b16 %v79
  %v222 = vunpack.c.l.b16 %v80
  %v223 = vunpack.c.l.b16 %v81
  %v224 = vunpack.c.l.b16 %v82
  %v225 = vunpack.c.l.b16 %v83
  %v226 = vunpack.c.l.b16 %v84
  %v227 = vunpack.c.l.b16 %v85
  %v228 = vunpack.c.l.b16 %v86
  %v229 = vpack.c.b16 %v166, %v165
  %v230 = vpack.c.b16 %v168, %v167
  %v231 = vpack.c.b16 %v170, %v169
  %v232 = vpack.c.b16 %v172, %v171
  %v233 = vpack.c.b16 %v174, %v173
  %v234 = vpack.c.b16 %v176, %v175
  %v235 = vpack.c.b16 %v178, %v177
  %v236 = vpack.c.b16 %v180, %v179
  %v237 = vpack.c.b16 %v182, %v181
  %v238 = vpack.c.b16 %v184, %v183
  %v239 = vpack.c.b16 %v186, %v185
  %v240 = vpack.c.b16 %v188, %v187
  %v241 = vpack.c.b16 %v190, %v189
  %v242 = vpack.c.b16 %v192, %v191
  %v243 = vpack.c.b16 %v194, %v193
  %v244 = vpack.c.b16 %v196, %v195
  %v245 = vpack.c.b16 %v198, %v197
  %v246 = vpack.c.b16 %v200, %v199
  %v247 = vpack.c.b16 %v202, %v201
  %v248 = vpack.c.b16 %v204, %v203
  %v249 = vpack.c.b16 %v206, %v205
  %v250 = vpack.c.b16 %v208, %v207
  %v251 = vpack.c.b16 %v210, %v209
  %v252 = vpack.c.b16 %v212, %v211
  %v253 = vpack.c.b16 %v214, %v213
  %v254 = vpack.c.b16 %v216, %v215
  %v255 = vpack.c.b16 %v218, %v217
  %v256 = vpack.c.b16 %v220, %v219
  %v257 = vpack.c.b16 %v222, %v221
  %v258 = vpack.c.b16 %v224, %v223
  %v259 = vpack.c.b16 %v226, %v225
  %v260 = vpack.c.b16 %v228, %v227
  %293 = vmatprep.subr.bf16.mxu0 0
  %294 = vmatpush1.bf16.msra.mxu0 %v236
  %295 = vmatprep.subr.bf16.mxu0 0
  %296 = vmatpush1.bf16.msra.mxu0 %v235
  %297 = vmatprep.subr.bf16.mxu0 0
  %298 = vmatpush1.bf16.msra.mxu0 %v234
  %299 = vmatprep.subr.bf16.mxu0 0
  %300 = vmatpush1.bf16.msra.mxu0 %v233
  %301 = vmatprep.subr.bf16.mxu0 0
  %302 = vmatpush1.bf16.msra.mxu0 %v232
  %303 = vmatprep.subr.bf16.mxu0 0
  %304 = vmatpush1.bf16.msra.mxu0 %v231
  %305 = vmatprep.subr.bf16.mxu0 0
  %306 = vmatpush1.bf16.msra.mxu0 %v230
  %307 = vmatprep.subr.bf16.mxu0 0
  %308 = vmatpush1.bf16.msra.mxu0 %v229
  %309 = vmatprep.subr.bf16.mxu0 0
  %310 = vmatpush2.bf16.msra.mxu0 %v244
  %311 = vmatprep.subr.bf16.mxu0 0
  %312 = vmatpush2.bf16.msra.mxu0 %v243
  %313 = vmatprep.subr.bf16.mxu0 0
  %314 = vmatpush2.bf16.msra.mxu0 %v242
  %315 = vmatprep.subr.bf16.mxu0 0
  %316 = vmatpush2.bf16.msra.mxu0 %v241
  %317 = vmatprep.subr.bf16.mxu0 0
  %318 = vmatpush2.bf16.msra.mxu0 %v240
  %319 = vmatprep.subr.bf16.mxu0 0
  %320 = vmatpush2.bf16.msra.mxu0 %v239
  %321 = vmatprep.subr.bf16.mxu0 0
  %322 = vmatpush2.bf16.msra.mxu0 %v238
  %323 = vmatprep.subr.bf16.mxu0 0
  %324 = vmatpush2.bf16.msra.mxu0 %v237
  %325 = vmatprep.mubr.bf16.mxu0 %v94
  %326 = vmatmul.mubr.bf16.gmra.mxu0 %v93
  %v327 = vpop.f32.mrf.mxu0
  %v328 = vadd.f32 0.0, %v327
  %v329 = vpop.f32.mrf.mxu0
  %v330 = vpop.f32.mrf.mxu0
  %v331 = vpop.f32.mrf.mxu0
  %332 = vdwg.mxu0
  %333 = vmatprep.subr.bf16.mxu0 0
  %334 = vmatpush1.bf16.msra.mxu0 %v252
  %335 = vmatprep.subr.bf16.mxu0 0
  %336 = vmatpush1.bf16.msra.mxu0 %v251
  %337 = vmatprep.subr.bf16.mxu0 0
  %338 = vmatpush1.bf16.msra.mxu0 %v250
  %339 = vmatprep.subr.bf16.mxu0 0
  %340 = vmatpush1.bf16.msra.mxu0 %v249
  %341 = vmatprep.subr.bf16.mxu0 0
  %342 = vmatpush1.bf16.msra.mxu0 %v248
  %343 = vmatprep.subr.bf16.mxu0 0
  %344 = vmatpush1.bf16.msra.mxu0 %v247
  %345 = vmatprep.subr.bf16.mxu0 0
  %346 = vmatpush1.bf16.msra.mxu0 %v246
  %347 = vmatprep.subr.bf16.mxu0 0
  %348 = vmatpush1.bf16.msra.mxu0 %v245
  %349 = vmatprep.subr.bf16.mxu0 0
  %350 = vmatpush2.bf16.msra.mxu0 %v260
  %351 = vmatprep.subr.bf16.mxu0 0
  %352 = vmatpush2.bf16.msra.mxu0 %v259
  %353 = vmatprep.subr.bf16.mxu0 0
  %354 = vmatpush2.bf16.msra.mxu0 %v258
  %355 = vmatprep.subr.bf16.mxu0 0
  %356 = vmatpush2.bf16.msra.mxu0 %v257
  %357 = vmatprep.subr.bf16.mxu0 0
  %358 = vmatpush2.bf16.msra.mxu0 %v256
  %359 = vmatprep.subr.bf16.mxu0 0
  %360 = vmatpush2.bf16.msra.mxu0 %v255
  %361 = vmatprep.subr.bf16.mxu0 0
  %362 = vmatpush2.bf16.msra.mxu0 %v254
  %363 = vmatprep.subr.bf16.mxu0 0
  %364 = vmatpush2.bf16.msra.mxu0 %v253
  %365 = vmatprep.mubr.bf16.mxu0 %v96
  %366 = vmatmul.mubr.bf16.gmra.mxu0 %v95
  %v367 = vpop.f32.mrf.mxu0
  %v368 = vadd.f32 %v328, %v367
  %v369 = vpop.f32.mrf.mxu0
  %v370 = vpop.f32.mrf.mxu0
  %v371 = vpop.f32.mrf.mxu0
  %372 = vdwg.mxu0
  %v373 = vadd.f32 %v20, %v368
  %374 = vst [vmem:[#allocation2] sm:$0xff] %v373
  // Predicated region
  $region18: #{embedder_forward.9} parent=0 // pred_check
    %p375 = pneg %p15
  $region19: #{embedder_forward.9} parent=0 // pred_check_branch
    %377 = sbr.rel (%p375) target = $region21
  $region20: #{embedder_forward.9} parent=0 // pred_region
    %v378 = vld [vmem:[#allocation2] sm:$0xff]
    %v379 = vld [vmem:[%s2] sm:$0x1]
    %v381 = vlaneseq
    %v382 = vshrl.u32 %v381, 7
    %v383 = vsub.s32 0, %v382
    %v384 = vrot.slane %v379, %v383
    %v386 = vadd.f32 %v378, %v384
    %387 = vst [vmem:[%s3] sm:$0xff] %v386
  $region21: #{embedder_forward.9} parent=0 // pred_fallthru
    _
  // Predicated region
  $region22: #{embedder_forward.9} parent=0 // pred_check
    _
  $region23: #{embedder_forward.9} parent=0 // pred_check_branch
    %389 = sbr.rel (0) target = $region25
  $region24: #{embedder_forward.9} parent=0 // pred_region
    _
  $region25: #{embedder_forward.9} parent=0 // pred_fallthru
    _
  // Predicated region
  $region26: #{embedder_forward.9} parent=0 // pred_check
    _
  $region27: #{embedder_forward.9} parent=0 // pred_check_branch
    %391 = sbr.rel (0) target = $region29
  $region28: #{embedder_forward.9} parent=0 // pred_region
    _
  $region29: #{embedder_forward.9} parent=0 // pred_fallthru
    _

// kernel: embedder_forward.8
$region0: #{embedder_forward.8}
  #allocation0 [shape = 'u32[]', space=smem, size = 0x4, offset = 0x4, fixed_abs, tag = 'smem constant byte address 0x4 - core index']
  #allocation1 [shape = 'u32[144,128]{1,0:T(1,128)}', space=vmem, size = 0x12000, scoped, tag = 'internal scratch']
  #allocation2 [shape = 'f32[8,512]{1,0:T(8,128)}', space=vmem, size = 0x4000, scoped, tag = 'scratch operand']
  %s0 = inlined_call_operand.vmem [shape: bf16[8,4096], index: 0, kind: input, shape index: {}]
  %s1 = inlined_call_operand.vmem [shape: bf16[4096,512], index: 1, kind: input, shape index: {}]
  %s2 = inlined_call_operand.vmem [shape: f32[1,512], index: 2, kind: input, shape index: {}]
  %s3 = inlined_call_operand.vmem [shape: bf16[8,512], index: 3, kind: output, shape index: {}]
  %s4 = sld [smem:[#allocation0]]
  $region53: #{embedder_forward.8} parent=0
    _
  %s6 = ssub.s32 1, %s4
  %s7 = scalar_select 0, %s6, %s4
  loop: start=0, step=1, limit=4
  $region2: #{embedder_forward.8} parent=0 // loop_pre_header
    _
  $region3: #{embedder_forward.8} parent=0 // loop_header
    %s9 = sphi 0, %s13
    %p10 = scmp.ge.s32.totalorder %s9, 4
    %s16 = sphi 0, %s35
    %s17 = sphi 0, %s31
    %s18 = sphi 0, %s27
    %s19 = sphi 0, %s16
    %s20 = sphi 0, %s17
    %s21 = sphi 0, %s18
    %s22 = sphi 0, %s19
    %s23 = sphi 0, %s20
    %s24 = sphi 0, %s21
    %s40 = sphi 0, %s42
    %s43 = sphi 0, %s40
    %s44 = sphi 0, %s43
    %s60 = sphi 0, %s44
    %s68 = sphi 0, %s70
    %s71 = sphi 0, %s68
    %s72 = sphi 0, %s71
    %s88 = sphi 0, %s72
    %s94 = sphi 0, %s96
    %s97 = sphi 0, %s94
    %s98 = sphi 0, %s97
    %s114 = sphi 0, %s98
    %s122 = sphi 0, %s124
    %s125 = sphi 0, %s122
    %s126 = sphi 0, %s125
    %s142 = sphi 0, %s126
  $region4: #{embedder_forward.8} parent=0 // loop_header_branch
    %12 = sbr.rel (%p10) target = $region8
  $region5: #{embedder_forward.8} parent=0 // loop_body
    %s14 = ssub.s32 %s9, 1
    %s15 = ssub.s32 %s9, 2
    %s25 = sadd.s32 1, %s18
    %p26 = scmp.ge.s32.totalorder %s25, 2
    %s27 = scalar_select %p26, 0, %s25
    %s28 = sadd.s32 1, %s17
    %s29 = scalar_select %p26, %s28, %s17
    %p30 = scmp.ge.s32.totalorder %s29, 1
    %s31 = scalar_select %p30, 0, %s29
    %s32 = sadd.s32 1, %s16
    %s33 = scalar_select %p30, %s32, %s16
    %p34 = scmp.ge.s32.totalorder %s33, 1
    %s35 = scalar_select %p34, 0, %s33
    %s36 = ssub.s32 %s16, %s35
    %s37 = ssub.s32 %s18, %s27
    %s38 = sor.u32 %s36, %s37
    %p39 = scmp.eq.s32.totalorder %s38, 0
    %s41 = sadd.s32 %s40, 1
    %s42 = scalar_select %p39, %s40, %s41
    %p45 = pneg %p39
    %p46 = scmp.eq.s32.totalorder %s9, 1
    %p47 = por %p45, %p46
    %p48 = scmp.ne.s32.totalorder %s40, %s43
    %p49 = scmp.eq.s32.totalorder %s9, 0
    %p50 = por %p48, %p49
    %p51 = scmp.ne.s32.totalorder %s40, %s43
    %p52 = scmp.eq.s32.totalorder %s14, 1
    %p53 = por %p51, %p52
    %p54 = scmp.ne.s32.totalorder %s43, %s44
    %p55 = scmp.eq.s32.totalorder %s14, 0
    %p56 = por %p54, %p55
    %p57 = scmp.ne.s32.totalorder %s43, %s44
    %p58 = scmp.eq.s32.totalorder %s15, 1
    %p59 = por %p57, %p58
    %p61 = scmp.ne.s32.totalorder %s44, %s60
    %p62 = scmp.eq.s32.totalorder %s15, 0
    %p63 = por %p61, %p62
    %s64 = ssub.s32 %s18, %s27
    %s65 = ssub.s32 %s17, %s31
    %s66 = sor.u32 %s64, %s65
    %p67 = scmp.eq.s32.totalorder %s66, 0
    %s69 = sadd.s32 %s68, 1
    %s70 = scalar_select %p67, %s68, %s69
    %p73 = pneg %p67
    %p74 = scmp.eq.s32.totalorder %s9, 1
    %p75 = por %p73, %p74
    %p76 = scmp.ne.s32.totalorder %s68, %s71
    %p77 = scmp.eq.s32.totalorder %s9, 0
    %p78 = por %p76, %p77
    %p79 = scmp.ne.s32.totalorder %s68, %s71
    %p80 = scmp.eq.s32.totalorder %s14, 1
    %p81 = por %p79, %p80
    %p82 = scmp.ne.s32.totalorder %s71, %s72
    %p83 = scmp.eq.s32.totalorder %s14, 0
    %p84 = por %p82, %p83
    %p85 = scmp.ne.s32.totalorder %s71, %s72
    %p86 = scmp.eq.s32.totalorder %s15, 1
    %p87 = por %p85, %p86
    %p89 = scmp.ne.s32.totalorder %s72, %s88
    %p90 = scmp.eq.s32.totalorder %s15, 0
    %p91 = por %p89, %p90
    %s92 = ssub.s32 %s17, %s31
    %p93 = scmp.eq.s32.totalorder %s92, 0
    %s95 = sadd.s32 %s94, 1
    %s96 = scalar_select %p93, %s94, %s95
    %p99 = pneg %p93
    %p100 = scmp.eq.s32.totalorder %s9, 1
    %p101 = por %p99, %p100
    %p102 = scmp.ne.s32.totalorder %s94, %s97
    %p103 = scmp.eq.s32.totalorder %s9, 0
    %p104 = por %p102, %p103
    %p105 = scmp.ne.s32.totalorder %s94, %s97
    %p106 = scmp.eq.s32.totalorder %s14, 1
    %p107 = por %p105, %p106
    %p108 = scmp.ne.s32.totalorder %s97, %s98
    %p109 = scmp.eq.s32.totalorder %s14, 0
    %p110 = por %p108, %p109
    %p111 = scmp.ne.s32.totalorder %s97, %s98
    %p112 = scmp.eq.s32.totalorder %s15, 1
    %p113 = por %p111, %p112
    %p115 = scmp.ne.s32.totalorder %s98, %s114
    %p116 = scmp.eq.s32.totalorder %s15, 0
    %p117 = por %p115, %p116
    %s118 = ssub.s32 %s16, %s35
    %s119 = ssub.s32 %s17, %s31
    %s120 = sor.u32 %s118, %s119
    %p121 = scmp.eq.s32.totalorder %s120, 0
    %s123 = sadd.s32 %s122, 1
    %s124 = scalar_select %p121, %s122, %s123
    %p127 = pneg %p121
    %p128 = scmp.eq.s32.totalorder %s9, 1
    %p129 = por %p127, %p128
    %p130 = scmp.ne.s32.totalorder %s122, %s125
    %p131 = scmp.eq.s32.totalorder %s9, 0
    %p132 = por %p130, %p131
    %p133 = scmp.ne.s32.totalorder %s122, %s125
    %p134 = scmp.eq.s32.totalorder %s14, 1
    %p135 = por %p133, %p134
    %p136 = scmp.ne.s32.totalorder %s125, %s126
    %p137 = scmp.eq.s32.totalorder %s14, 0
    %p138 = por %p136, %p137
    %p139 = scmp.ne.s32.totalorder %s125, %s126
    %p140 = scmp.eq.s32.totalorder %s15, 1
    %p141 = por %p139, %p140
    %p143 = scmp.ne.s32.totalorder %s126, %s142
    %p144 = scmp.eq.s32.totalorder %s15, 0
    %p145 = por %p143, %p144
    %p146 = scmp.le.s32.totalorder 1, %s9
    %p147 = scmp.lt.s32.totalorder %s9, 3
    %p148 = pnand %p146, %p147
    %p149 = pneg %p148
    // Predicated region
    $region9: #{embedder_forward.8} parent=5 // pred_check
      _
    $region10: #{embedder_forward.8} parent=5 // pred_check_branch
      %151 = sbr.rel (%p148) target = $region12
    $region11: #{embedder_forward.8} parent=5 // pred_region
      %s152 = ssub.s32 %s9, 1
      // Predicated region
      $region13: #{embedder_forward.8} parent=11 // pred_check
        %p153 = pneg %p110
      $region14: #{embedder_forward.8} parent=11 // pred_check_branch
        %155 = sbr.rel (%p153) target = $region16
      $region15: #{embedder_forward.8} parent=11 // pred_region
        %s156 = smul.u32 4, %s20
        %p157 = scmp.lt.s32.totalorder %s156, 3
        %s158 = scalar_select %p157, %s156, 3
        %s159 = scalar_lea.vmem %s2, %s158
        %s160 = smul.u32 4, %s20
      $region16: #{embedder_forward.8} parent=11 // pred_fallthru
        _
    $region12: #{embedder_forward.8} parent=5 // pred_fallthru
      _
    %p161 = scmp.lt.s32.totalorder %s9, 2
    // Predicated region
    $region17: #{embedder_forward.8} parent=5 // pred_check
      %p162 = pneg %p161
    $region18: #{embedder_forward.8} parent=5 // pred_check_branch
      %164 = sbr.rel (%p162) target = $region20
    $region19: #{embedder_forward.8} parent=5 // pred_region
      // Predicated region
      $region21: #{embedder_forward.8} parent=19 // pred_check
        %p165 = pneg %p50
      $region22: #{embedder_forward.8} parent=19 // pred_check_branch
        %167 = sbr.rel (%p165) target = $region24
      $region23: #{embedder_forward.8} parent=19 // pred_region
        %s168 = smul.u32 16, %s18
        %p169 = scmp.lt.s32.totalorder %s16, 0
        %s170 = scalar_select %p169, %s16, 0
        %p171 = scmp.lt.s32.totalorder %s168, 31
        %s172 = scalar_select %p171, %s168, 31
        %s173 = smul.addr %s170, 32
        %s174 = sadd.s32 %s172, %s173
        %s175 = smul.addr %s174, 4
        %s176 = scalar_lea.vmem %s0, %s175
        %s177 = smul.u32 16, %s18
      $region24: #{embedder_forward.8} parent=19 // pred_fallthru
        _
      // Predicated region
      $region25: #{embedder_forward.8} parent=19 // pred_check
        %p178 = pneg %p78
      $region26: #{embedder_forward.8} parent=19 // pred_check_branch
        %180 = sbr.rel (%p178) target = $region28
      $region27: #{embedder_forward.8} parent=19 // pred_region
        %s181 = smul.u32 256, %s18
        %s182 = smul.u32 4, %s17
        %p183 = scmp.lt.s32.totalorder %s181, 511
        %s184 = scalar_select %p183, %s181, 511
        %p185 = scmp.lt.s32.totalorder %s182, 3
        %s186 = scalar_select %p185, %s182, 3
        %s187 = smul.addr %s184, 4
        %s188 = sadd.s32 %s186, %s187
        %s189 = smul.addr %s188, 4
        %s190 = scalar_lea.vmem %s1, %s189
        %s191 = smul.u32 256, %s18
        %s192 = smul.u32 4, %s17
      $region28: #{embedder_forward.8} parent=19 // pred_fallthru
        _
    $region20: #{embedder_forward.8} parent=5 // pred_fallthru
      _
    %p193 = scmp.le.s32.totalorder 1, %s9
    %p194 = scmp.lt.s32.totalorder %s9, 3
    %p195 = pnand %p193, %p194
    %p196 = pneg %p195
    // Predicated region
    $region29: #{embedder_forward.8} parent=5 // pred_check
      _
    $region30: #{embedder_forward.8} parent=5 // pred_check_branch
      %198 = sbr.rel (%p195) target = $region32
    $region31: #{embedder_forward.8} parent=5 // pred_region
      %s199 = ssub.s32 %s9, 1
      %s200 = smul.u32 16, %s21
      %p201 = scmp.lt.s32.totalorder %s19, 0
      %s202 = scalar_select %p201, %s19, 0
      %p203 = scmp.lt.s32.totalorder %s200, 31
      %s204 = scalar_select %p203, %s200, 31
      %s205 = smul.addr %s202, 32
      %s206 = sadd.s32 %s204, %s205
      %s207 = smul.addr %s206, 4
      %s208 = scalar_lea.vmem %s0, %s207
      %p209 = pneg %p56
      %p210 = pneg %p53
      %s211 = smul.u32 256, %s21
      %s212 = smul.u32 4, %s20
      %p213 = scmp.lt.s32.totalorder %s211, 511
      %s214 = scalar_select %p213, %s211, 511
      %p215 = scmp.lt.s32.totalorder %s212, 3
      %s216 = scalar_select %p215, %s212, 3
      %s217 = smul.addr %s214, 4
      %s218 = sadd.s32 %s216, %s217
      %s219 = smul.addr %s218, 4
      %s220 = scalar_lea.vmem %s1, %s219
      %p221 = pneg %p84
      %p222 = pneg %p81
      %s223 = smul.u32 4, %s20
      %p224 = scmp.lt.s32.totalorder %s223, 3
      %s225 = scalar_select %p224, %s223, 3
      %s226 = scalar_lea.vmem %s2, %s225
      %p227 = pneg %p110
      %p228 = pneg %p107
      %p229 = pneg %p138
      %p230 = pneg %p135
      %s231 = smul.u32 4, %s20
      %p232 = scmp.lt.s32.totalorder %s19, 0
      %s233 = scalar_select %p232, %s19, 0
      %p234 = scmp.lt.s32.totalorder %s231, 3
      %s235 = scalar_select %p234, %s231, 3
      %s236 = smul.addr %s233, 4
      %s237 = sadd.s32 %s235, %s236
      %s238 = smul.addr %s237, 4
      %s239 = scalar_lea.vmem %s3, %s238
      %s240 = smul.u32 16, %s21
      %p241 = scmp.lt.s32.totalorder %s19, 0
      %s242 = scalar_select %p241, %s19, 0
      %p243 = scmp.lt.s32.totalorder %s240, 31
      %s244 = scalar_select %p243, %s240, 31
      %s245 = smul.addr %s242, 32
      %s246 = sadd.s32 %s244, %s245
      %s247 = smul.addr %s246, 4
      %s248 = scalar_lea.vmem %s0, %s247
      %s249 = smul.u32 16, %s21
      %s250 = smul.u32 256, %s21
      %s251 = smul.u32 4, %s20
      %p252 = scmp.lt.s32.totalorder %s250, 511
      %s253 = scalar_select %p252, %s250, 511
      %p254 = scmp.lt.s32.totalorder %s251, 3
      %s255 = scalar_select %p254, %s251, 3
      %s256 = smul.addr %s253, 4
      %s257 = sadd.s32 %s255, %s256
      %s258 = smul.addr %s257, 4
      %s259 = scalar_lea.vmem %s1, %s258
      %s260 = smul.u32 256, %s21
      %s261 = smul.u32 4, %s20
      %s262 = smul.u32 4, %s20
      %p263 = scmp.lt.s32.totalorder %s262, 3
      %s264 = scalar_select %p263, %s262, 3
      %s265 = scalar_lea.vmem %s2, %s264
      %s266 = smul.u32 4, %s20
      %s267 = smul.u32 4, %s20
      %p268 = scmp.lt.s32.totalorder %s19, 0
      %s269 = scalar_select %p268, %s19, 0
      %p270 = scmp.lt.s32.totalorder %s267, 3
      %s271 = scalar_select %p270, %s267, 3
      %s272 = smul.addr %s269, 4
      %s273 = sadd.s32 %s271, %s272
      %s274 = smul.addr %s273, 4
      %s275 = scalar_lea.vmem %s3, %s274
      %s276 = smul.u32 4, %s20
      %p277 = scmp.eq.s32.totalorder %s21, 0
      // Predicated region
      $region33: #{embedder_forward.8} parent=31 // pred_check
        %p278 = pneg %p277
      $region34: #{embedder_forward.8} parent=31 // pred_check_branch
        %280 = sbr.rel (%p278) target = $region36
      $region35: #{embedder_forward.8} parent=31 // pred_region
        %281 = vst [vmem:[#allocation2] sm:$0xff] 0.0
        %282 = vst [vmem:[#allocation2 + $0x8] sm:$0xff] 0.0
        %283 = vst [vmem:[#allocation2 + $0x10] sm:$0xff] 0.0
        %284 = vst [vmem:[#allocation2 + $0x18] sm:$0xff] 0.0
      $region36: #{embedder_forward.8} parent=31 // pred_fallthru
        _
      %v285 = vld [vmem:[#allocation2] sm:$0xff]
      %v286 = vld [vmem:[#allocation2 + $0x8] sm:$0xff]
      %v287 = vld [vmem:[#allocation2 + $0x10] sm:$0xff]
      %v288 = vld [vmem:[#allocation2 + $0x18] sm:$0xff]
      %v289 = vld [vmem:[%s248] sm:$0xff]
      %v290 = vld [vmem:[%s248 + $0x8] sm:$0xff]
      %v291 = vld [vmem:[%s248 + $0x10] sm:$0xff]
      %v292 = vld [vmem:[%s248 + $0x18] sm:$0xff]
      %v293 = vld [vmem:[%s248 + $0x20] sm:$0xff]
      %v294 = vld [vmem:[%s248 + $0x28] sm:$0xff]
      %v295 = vld [vmem:[%s248 + $0x30] sm:$0xff]
      %v296 = vld [vmem:[%s248 + $0x38] sm:$0xff]
      %v297 = vld [vmem:[%s259] sm:$0xff]
      %v298 = vld [vmem:[%s259 + $0x8] sm:$0xff]
      %v299 = vld [vmem:[%s259 + $0x10] sm:$0xff]
      %v300 = vld [vmem:[%s259 + $0x18] sm:$0xff]
      %v301 = vld [vmem:[%s259 + $0x20] sm:$0xff]
      %v302 = vld [vmem:[%s259 + $0x28] sm:$0xff]
      %v303 = vld [vmem:[%s259 + $0x30] sm:$0xff]
      %v304 = vld [vmem:[%s259 + $0x38] sm:$0xff]
      %v305 = vld [vmem:[%s259 + $0x40] sm:$0xff]
      %v306 = vld [vmem:[%s259 + $0x48] sm:$0xff]
      %v307 = vld [vmem:[%s259 + $0x50] sm:$0xff]
      %v308 = vld [vmem:[%s259 + $0x58] sm:$0xff]
      %v309 = vld [vmem:[%s259 + $0x60] sm:$0xff]
      %v310 = vld [vmem:[%s259 + $0x68] sm:$0xff]
      %v311 = vld [vmem:[%s259 + $0x70] sm:$0xff]
      %v312 = vld [vmem:[%s259 + $0x78] sm:$0xff]
      %v313 = vld [vmem:[%s259 + $0x80] sm:$0xff]
      %v314 = vld [vmem:[%s259 + $0x88] sm:$0xff]
      %v315 = vld [vmem:[%s259 + $0x90] sm:$0xff]
      %v316 = vld [vmem:[%s259 + $0x98] sm:$0xff]
      %v317 = vld [vmem:[%s259 + $0xa0] sm:$0xff]
      %v318 = vld [vmem:[%s259 + $0xa8] sm:$0xff]
      %v319 = vld [vmem:[%s259 + $0xb0] sm:$0xff]
      %v320 = vld [vmem:[%s259 + $0xb8] sm:$0xff]
      %v321 = vld [vmem:[%s259 + $0xc0] sm:$0xff]
      %v322 = vld [vmem:[%s259 + $0xc8] sm:$0xff]
      %v323 = vld [vmem:[%s259 + $0xd0] sm:$0xff]
      %v324 = vld [vmem:[%s259 + $0xd8] sm:$0xff]
      %v325 = vld [vmem:[%s259 + $0xe0] sm:$0xff]
      %v326 = vld [vmem:[%s259 + $0xe8] sm:$0xff]
      %v327 = vld [vmem:[%s259 + $0xf0] sm:$0xff]
      %v328 = vld [vmem:[%s259 + $0xf8] sm:$0xff]
      %v329 = vld [vmem:[%s259 + $0x100] sm:$0xff]
      %v330 = vld [vmem:[%s259 + $0x108] sm:$0xff]
      %v331 = vld [vmem:[%s259 + $0x110] sm:$0xff]
      %v332 = vld [vmem:[%s259 + $0x118] sm:$0xff]
      %v333 = vld [vmem:[%s259 + $0x120] sm:$0xff]
      %v334 = vld [vmem:[%s259 + $0x128] sm:$0xff]
      %v335 = vld [vmem:[%s259 + $0x130] sm:$0xff]
      %v336 = vld [vmem:[%s259 + $0x138] sm:$0xff]
      %v337 = vld [vmem:[%s259 + $0x140] sm:$0xff]
      %v338 = vld [vmem:[%s259 + $0x148] sm:$0xff]
      %v339 = vld [vmem:[%s259 + $0x150] sm:$0xff]
      %v340 = vld [vmem:[%s259 + $0x158] sm:$0xff]
      %v341 = vld [vmem:[%s259 + $0x160] sm:$0xff]
      %v342 = vld [vmem:[%s259 + $0x168] sm:$0xff]
      %v343 = vld [vmem:[%s259 + $0x170] sm:$0xff]
      %v344 = vld [vmem:[%s259 + $0x178] sm:$0xff]
      %v345 = vld [vmem:[%s259 + $0x180] sm:$0xff]
      %v346 = vld [vmem:[%s259 + $0x188] sm:$0xff]
      %v347 = vld [vmem:[%s259 + $0x190] sm:$0xff]
      %v348 = vld [vmem:[%s259 + $0x198] sm:$0xff]
      %v349 = vld [vmem:[%s259 + $0x1a0] sm:$0xff]
      %v350 = vld [vmem:[%s259 + $0x1a8] sm:$0xff]
      %v351 = vld [vmem:[%s259 + $0x1b0] sm:$0xff]
      %v352 = vld [vmem:[%s259 + $0x1b8] sm:$0xff]
      %v353 = vld [vmem:[%s259 + $0x1c0] sm:$0xff]
      %v354 = vld [vmem:[%s259 + $0x1c8] sm:$0xff]
      %v355 = vld [vmem:[%s259 + $0x1d0] sm:$0xff]
      %v356 = vld [vmem:[%s259 + $0x1d8] sm:$0xff]
      %v357 = vld [vmem:[%s259 + $0x1e0] sm:$0xff]
      %v358 = vld [vmem:[%s259 + $0x1e8] sm:$0xff]
      %v359 = vld [vmem:[%s259 + $0x1f0] sm:$0xff]
      %v360 = vld [vmem:[%s259 + $0x1f8] sm:$0xff]
      %v361 = vld [vmem:[%s259 + $0x200] sm:$0xff]
      %v362 = vld [vmem:[%s259 + $0x208] sm:$0xff]
      %v363 = vld [vmem:[%s259 + $0x210] sm:$0xff]
      %v364 = vld [vmem:[%s259 + $0x218] sm:$0xff]
      %v365 = vld [vmem:[%s259 + $0x220] sm:$0xff]
      %v366 = vld [vmem:[%s259 + $0x228] sm:$0xff]
      %v367 = vld [vmem:[%s259 + $0x230] sm:$0xff]
      %v368 = vld [vmem:[%s259 + $0x238] sm:$0xff]
      %v369 = vld [vmem:[%s259 + $0x240] sm:$0xff]
      %v370 = vld [vmem:[%s259 + $0x248] sm:$0xff]
      %v371 = vld [vmem:[%s259 + $0x250] sm:$0xff]
      %v372 = vld [vmem:[%s259 + $0x258] sm:$0xff]
      %v373 = vld [vmem:[%s259 + $0x260] sm:$0xff]
      %v374 = vld [vmem:[%s259 + $0x268] sm:$0xff]
      %v375 = vld [vmem:[%s259 + $0x270] sm:$0xff]
      %v376 = vld [vmem:[%s259 + $0x278] sm:$0xff]
      %v377 = vld [vmem:[%s259 + $0x280] sm:$0xff]
      %v378 = vld [vmem:[%s259 + $0x288] sm:$0xff]
      %v379 = vld [vmem:[%s259 + $0x290] sm:$0xff]
      %v380 = vld [vmem:[%s259 + $0x298] sm:$0xff]
      %v381 = vld [vmem:[%s259 + $0x2a0] sm:$0xff]
      %v382 = vld [vmem:[%s259 + $0x2a8] sm:$0xff]
      %v383 = vld [vmem:[%s259 + $0x2b0] sm:$0xff]
      %v384 = vld [vmem:[%s259 + $0x2b8] sm:$0xff]
      %v385 = vld [vmem:[%s259 + $0x2c0] sm:$0xff]
      %v386 = vld [vmem:[%s259 + $0x2c8] sm:$0xff]
      %v387 = vld [vmem:[%s259 + $0x2d0] sm:$0xff]
      %v388 = vld [vmem:[%s259 + $0x2d8] sm:$0xff]
      %v389 = vld [vmem:[%s259 + $0x2e0] sm:$0xff]
      %v390 = vld [vmem:[%s259 + $0x2e8] sm:$0xff]
      %v391 = vld [vmem:[%s259 + $0x2f0] sm:$0xff]
      %v392 = vld [vmem:[%s259 + $0x2f8] sm:$0xff]
      %v393 = vld [vmem:[%s259 + $0x300] sm:$0xff]
      %v394 = vld [vmem:[%s259 + $0x308] sm:$0xff]
      %v395 = vld [vmem:[%s259 + $0x310] sm:$0xff]
      %v396 = vld [vmem:[%s259 + $0x318] sm:$0xff]
      %v397 = vld [vmem:[%s259 + $0x320] sm:$0xff]
      %v398 = vld [vmem:[%s259 + $0x328] sm:$0xff]
      %v399 = vld [vmem:[%s259 + $0x330] sm:$0xff]
      %v400 = vld [vmem:[%s259 + $0x338] sm:$0xff]
      %v401 = vld [vmem:[%s259 + $0x340] sm:$0xff]
      %v402 = vld [vmem:[%s259 + $0x348] sm:$0xff]
      %v403 = vld [vmem:[%s259 + $0x350] sm:$0xff]
      %v404 = vld [vmem:[%s259 + $0x358] sm:$0xff]
      %v405 = vld [vmem:[%s259 + $0x360] sm:$0xff]
      %v406 = vld [vmem:[%s259 + $0x368] sm:$0xff]
      %v407 = vld [vmem:[%s259 + $0x370] sm:$0xff]
      %v408 = vld [vmem:[%s259 + $0x378] sm:$0xff]
      %v409 = vld [vmem:[%s259 + $0x380] sm:$0xff]
      %v410 = vld [vmem:[%s259 + $0x388] sm:$0xff]
      %v411 = vld [vmem:[%s259 + $0x390] sm:$0xff]
      %v412 = vld [vmem:[%s259 + $0x398] sm:$0xff]
      %v413 = vld [vmem:[%s259 + $0x3a0] sm:$0xff]
      %v414 = vld [vmem:[%s259 + $0x3a8] sm:$0xff]
      %v415 = vld [vmem:[%s259 + $0x3b0] sm:$0xff]
      %v416 = vld [vmem:[%s259 + $0x3b8] sm:$0xff]
      %v417 = vld [vmem:[%s259 + $0x3c0] sm:$0xff]
      %v418 = vld [vmem:[%s259 + $0x3c8] sm:$0xff]
      %v419 = vld [vmem:[%s259 + $0x3d0] sm:$0xff]
      %v420 = vld [vmem:[%s259 + $0x3d8] sm:$0xff]
      %v421 = vld [vmem:[%s259 + $0x3e0] sm:$0xff]
      %v422 = vld [vmem:[%s259 + $0x3e8] sm:$0xff]
      %v423 = vld [vmem:[%s259 + $0x3f0] sm:$0xff]
      %v424 = vld [vmem:[%s259 + $0x3f8] sm:$0xff]
      %v425 = vld [vmem:[%s259 + $0x400] sm:$0xff]
      %v426 = vld [vmem:[%s259 + $0x408] sm:$0xff]
      %v427 = vld [vmem:[%s259 + $0x410] sm:$0xff]
      %v428 = vld [vmem:[%s259 + $0x418] sm:$0xff]
      %v429 = vld [vmem:[%s259 + $0x420] sm:$0xff]
      %v430 = vld [vmem:[%s259 + $0x428] sm:$0xff]
      %v431 = vld [vmem:[%s259 + $0x430] sm:$0xff]
      %v432 = vld [vmem:[%s259 + $0x438] sm:$0xff]
      %v433 = vld [vmem:[%s259 + $0x440] sm:$0xff]
      %v434 = vld [vmem:[%s259 + $0x448] sm:$0xff]
      %v435 = vld [vmem:[%s259 + $0x450] sm:$0xff]
      %v436 = vld [vmem:[%s259 + $0x458] sm:$0xff]
      %v437 = vld [vmem:[%s259 + $0x460] sm:$0xff]
      %v438 = vld [vmem:[%s259 + $0x468] sm:$0xff]
      %v439 = vld [vmem:[%s259 + $0x470] sm:$0xff]
      %v440 = vld [vmem:[%s259 + $0x478] sm:$0xff]
      %v441 = vld [vmem:[%s259 + $0x480] sm:$0xff]
      %v442 = vld [vmem:[%s259 + $0x488] sm:$0xff]
      %v443 = vld [vmem:[%s259 + $0x490] sm:$0xff]
      %v444 = vld [vmem:[%s259 + $0x498] sm:$0xff]
      %v445 = vld [vmem:[%s259 + $0x4a0] sm:$0xff]
      %v446 = vld [vmem:[%s259 + $0x4a8] sm:$0xff]
      %v447 = vld [vmem:[%s259 + $0x4b0] sm:$0xff]
      %v448 = vld [vmem:[%s259 + $0x4b8] sm:$0xff]
      %v449 = vld [vmem:[%s259 + $0x4c0] sm:$0xff]
      %v450 = vld [vmem:[%s259 + $0x4c8] sm:$0xff]
      %v451 = vld [vmem:[%s259 + $0x4d0] sm:$0xff]
      %v452 = vld [vmem:[%s259 + $0x4d8] sm:$0xff]
      %v453 = vld [vmem:[%s259 + $0x4e0] sm:$0xff]
      %v454 = vld [vmem:[%s259 + $0x4e8] sm:$0xff]
      %v455 = vld [vmem:[%s259 + $0x4f0] sm:$0xff]
      %v456 = vld [vmem:[%s259 + $0x4f8] sm:$0xff]
      %v457 = vld [vmem:[%s259 + $0x500] sm:$0xff]
      %v458 = vld [vmem:[%s259 + $0x508] sm:$0xff]
      %v459 = vld [vmem:[%s259 + $0x510] sm:$0xff]
      %v460 = vld [vmem:[%s259 + $0x518] sm:$0xff]
      %v461 = vld [vmem:[%s259 + $0x520] sm:$0xff]
      %v462 = vld [vmem:[%s259 + $0x528] sm:$0xff]
      %v463 = vld [vmem:[%s259 + $0x530] sm:$0xff]
      %v464 = vld [vmem:[%s259 + $0x538] sm:$0xff]
      %v465 = vld [vmem:[%s259 + $0x540] sm:$0xff]
      %v466 = vld [vmem:[%s259 + $0x548] sm:$0xff]
      %v467 = vld [vmem:[%s259 + $0x550] sm:$0xff]
      %v468 = vld [vmem:[%s259 + $0x558] sm:$0xff]
      %v469 = vld [vmem:[%s259 + $0x560] sm:$0xff]
      %v470 = vld [vmem:[%s259 + $0x568] sm:$0xff]
      %v471 = vld [vmem:[%s259 + $0x570] sm:$0xff]
      %v472 = vld [vmem:[%s259 + $0x578] sm:$0xff]
      %v473 = vld [vmem:[%s259 + $0x580] sm:$0xff]
      %v474 = vld [vmem:[%s259 + $0x588] sm:$0xff]
      %v475 = vld [vmem:[%s259 + $0x590] sm:$0xff]
      %v476 = vld [vmem:[%s259 + $0x598] sm:$0xff]
      %v477 = vld [vmem:[%s259 + $0x5a0] sm:$0xff]
      %v478 = vld [vmem:[%s259 + $0x5a8] sm:$0xff]
      %v479 = vld [vmem:[%s259 + $0x5b0] sm:$0xff]
      %v480 = vld [vmem:[%s259 + $0x5b8] sm:$0xff]
      %v481 = vld [vmem:[%s259 + $0x5c0] sm:$0xff]
      %v482 = vld [vmem:[%s259 + $0x5c8] sm:$0xff]
      %v483 = vld [vmem:[%s259 + $0x5d0] sm:$0xff]
      %v484 = vld [vmem:[%s259 + $0x5d8] sm:$0xff]
      %v485 = vld [vmem:[%s259 + $0x5e0] sm:$0xff]
      %v486 = vld [vmem:[%s259 + $0x5e8] sm:$0xff]
      %v487 = vld [vmem:[%s259 + $0x5f0] sm:$0xff]
      %v488 = vld [vmem:[%s259 + $0x5f8] sm:$0xff]
      %v489 = vld [vmem:[%s259 + $0x600] sm:$0xff]
      %v490 = vld [vmem:[%s259 + $0x608] sm:$0xff]
      %v491 = vld [vmem:[%s259 + $0x610] sm:$0xff]
      %v492 = vld [vmem:[%s259 + $0x618] sm:$0xff]
      %v493 = vld [vmem:[%s259 + $0x620] sm:$0xff]
      %v494 = vld [vmem:[%s259 + $0x628] sm:$0xff]
      %v495 = vld [vmem:[%s259 + $0x630] sm:$0xff]
      %v496 = vld [vmem:[%s259 + $0x638] sm:$0xff]
      %v497 = vld [vmem:[%s259 + $0x640] sm:$0xff]
      %v498 = vld [vmem:[%s259 + $0x648] sm:$0xff]
      %v499 = vld [vmem:[%s259 + $0x650] sm:$0xff]
      %v500 = vld [vmem:[%s259 + $0x658] sm:$0xff]
      %v501 = vld [vmem:[%s259 + $0x660] sm:$0xff]
      %v502 = vld [vmem:[%s259 + $0x668] sm:$0xff]
      %v503 = vld [vmem:[%s259 + $0x670] sm:$0xff]
      %v504 = vld [vmem:[%s259 + $0x678] sm:$0xff]
      %v505 = vld [vmem:[%s259 + $0x680] sm:$0xff]
      %v506 = vld [vmem:[%s259 + $0x688] sm:$0xff]
      %v507 = vld [vmem:[%s259 + $0x690] sm:$0xff]
      %v508 = vld [vmem:[%s259 + $0x698] sm:$0xff]
      %v509 = vld [vmem:[%s259 + $0x6a0] sm:$0xff]
      %v510 = vld [vmem:[%s259 + $0x6a8] sm:$0xff]
      %v511 = vld [vmem:[%s259 + $0x6b0] sm:$0xff]
      %v512 = vld [vmem:[%s259 + $0x6b8] sm:$0xff]
      %v513 = vld [vmem:[%s259 + $0x6c0] sm:$0xff]
      %v514 = vld [vmem:[%s259 + $0x6c8] sm:$0xff]
      %v515 = vld [vmem:[%s259 + $0x6d0] sm:$0xff]
      %v516 = vld [vmem:[%s259 + $0x6d8] sm:$0xff]
      %v517 = vld [vmem:[%s259 + $0x6e0] sm:$0xff]
      %v518 = vld [vmem:[%s259 + $0x6e8] sm:$0xff]
      %v519 = vld [vmem:[%s259 + $0x6f0] sm:$0xff]
      %v520 = vld [vmem:[%s259 + $0x6f8] sm:$0xff]
      %v521 = vld [vmem:[%s259 + $0x700] sm:$0xff]
      %v522 = vld [vmem:[%s259 + $0x708] sm:$0xff]
      %v523 = vld [vmem:[%s259 + $0x710] sm:$0xff]
      %v524 = vld [vmem:[%s259 + $0x718] sm:$0xff]
      %v525 = vld [vmem:[%s259 + $0x720] sm:$0xff]
      %v526 = vld [vmem:[%s259 + $0x728] sm:$0xff]
      %v527 = vld [vmem:[%s259 + $0x730] sm:$0xff]
      %v528 = vld [vmem:[%s259 + $0x738] sm:$0xff]
      %v529 = vld [vmem:[%s259 + $0x740] sm:$0xff]
      %v530 = vld [vmem:[%s259 + $0x748] sm:$0xff]
      %v531 = vld [vmem:[%s259 + $0x750] sm:$0xff]
      %v532 = vld [vmem:[%s259 + $0x758] sm:$0xff]
      %v533 = vld [vmem:[%s259 + $0x760] sm:$0xff]
      %v534 = vld [vmem:[%s259 + $0x768] sm:$0xff]
      %v535 = vld [vmem:[%s259 + $0x770] sm:$0xff]
      %v536 = vld [vmem:[%s259 + $0x778] sm:$0xff]
      %v537 = vld [vmem:[%s259 + $0x780] sm:$0xff]
      %v538 = vld [vmem:[%s259 + $0x788] sm:$0xff]
      %v539 = vld [vmem:[%s259 + $0x790] sm:$0xff]
      %v540 = vld [vmem:[%s259 + $0x798] sm:$0xff]
      %v541 = vld [vmem:[%s259 + $0x7a0] sm:$0xff]
      %v542 = vld [vmem:[%s259 + $0x7a8] sm:$0xff]
      %v543 = vld [vmem:[%s259 + $0x7b0] sm:$0xff]
      %v544 = vld [vmem:[%s259 + $0x7b8] sm:$0xff]
      %v545 = vld [vmem:[%s259 + $0x7c0] sm:$0xff]
      %v546 = vld [vmem:[%s259 + $0x7c8] sm:$0xff]
      %v547 = vld [vmem:[%s259 + $0x7d0] sm:$0xff]
      %v548 = vld [vmem:[%s259 + $0x7d8] sm:$0xff]
      %v549 = vld [vmem:[%s259 + $0x7e0] sm:$0xff]
      %v550 = vld [vmem:[%s259 + $0x7e8] sm:$0xff]
      %v551 = vld [vmem:[%s259 + $0x7f0] sm:$0xff]
      %v552 = vld [vmem:[%s259 + $0x7f8] sm:$0xff]
      %v553 = vld [vmem:[%s259 + $0x800] sm:$0xff]
      %v554 = vld [vmem:[%s259 + $0x808] sm:$0xff]
      %v555 = vld [vmem:[%s259 + $0x810] sm:$0xff]
      %v556 = vld [vmem:[%s259 + $0x818] sm:$0xff]
      %v557 = vld [vmem:[%s259 + $0x820] sm:$0xff]
      %v558 = vld [vmem:[%s259 + $0x828] sm:$0xff]
      %v559 = vld [vmem:[%s259 + $0x830] sm:$0xff]
      %v560 = vld [vmem:[%s259 + $0x838] sm:$0xff]
      %v561 = vld [vmem:[%s259 + $0x840] sm:$0xff]
      %v562 = vld [vmem:[%s259 + $0x848] sm:$0xff]
      %v563 = vld [vmem:[%s259 + $0x850] sm:$0xff]
      %v564 = vld [vmem:[%s259 + $0x858] sm:$0xff]
      %v565 = vld [vmem:[%s259 + $0x860] sm:$0xff]
      %v566 = vld [vmem:[%s259 + $0x868] sm:$0xff]
      %v567 = vld [vmem:[%s259 + $0x870] sm:$0xff]
      %v568 = vld [vmem:[%s259 + $0x878] sm:$0xff]
      %v569 = vld [vmem:[%s259 + $0x880] sm:$0xff]
      %v570 = vld [vmem:[%s259 + $0x888] sm:$0xff]
      %v571 = vld [vmem:[%s259 + $0x890] sm:$0xff]
      %v572 = vld [vmem:[%s259 + $0x898] sm:$0xff]
      %v573 = vld [vmem:[%s259 + $0x8a0] sm:$0xff]
      %v574 = vld [vmem:[%s259 + $0x8a8] sm:$0xff]
      %v575 = vld [vmem:[%s259 + $0x8b0] sm:$0xff]
      %v576 = vld [vmem:[%s259 + $0x8b8] sm:$0xff]
      %v577 = vld [vmem:[%s259 + $0x8c0] sm:$0xff]
      %v578 = vld [vmem:[%s259 + $0x8c8] sm:$0xff]
      %v579 = vld [vmem:[%s259 + $0x8d0] sm:$0xff]
      %v580 = vld [vmem:[%s259 + $0x8d8] sm:$0xff]
      %v581 = vld [vmem:[%s259 + $0x8e0] sm:$0xff]
      %v582 = vld [vmem:[%s259 + $0x8e8] sm:$0xff]
      %v583 = vld [vmem:[%s259 + $0x8f0] sm:$0xff]
      %v584 = vld [vmem:[%s259 + $0x8f8] sm:$0xff]
      %v585 = vld [vmem:[%s259 + $0x900] sm:$0xff]
      %v586 = vld [vmem:[%s259 + $0x908] sm:$0xff]
      %v587 = vld [vmem:[%s259 + $0x910] sm:$0xff]
      %v588 = vld [vmem:[%s259 + $0x918] sm:$0xff]
      %v589 = vld [vmem:[%s259 + $0x920] sm:$0xff]
      %v590 = vld [vmem:[%s259 + $0x928] sm:$0xff]
      %v591 = vld [vmem:[%s259 + $0x930] sm:$0xff]
      %v592 = vld [vmem:[%s259 + $0x938] sm:$0xff]
      %v593 = vld [vmem:[%s259 + $0x940] sm:$0xff]
      %v594 = vld [vmem:[%s259 + $0x948] sm:$0xff]
      %v595 = vld [vmem:[%s259 + $0x950] sm:$0xff]
      %v596 = vld [vmem:[%s259 + $0x958] sm:$0xff]
      %v597 = vld [vmem:[%s259 + $0x960] sm:$0xff]
      %v598 = vld [vmem:[%s259 + $0x968] sm:$0xff]
      %v599 = vld [vmem:[%s259 + $0x970] sm:$0xff]
      %v600 = vld [vmem:[%s259 + $0x978] sm:$0xff]
      %v601 = vld [vmem:[%s259 + $0x980] sm:$0xff]
      %v602 = vld [vmem:[%s259 + $0x988] sm:$0xff]
      %v603 = vld [vmem:[%s259 + $0x990] sm:$0xff]
      %v604 = vld [vmem:[%s259 + $0x998] sm:$0xff]
      %v605 = vld [vmem:[%s259 + $0x9a0] sm:$0xff]
      %v606 = vld [vmem:[%s259 + $0x9a8] sm:$0xff]
      %v607 = vld [vmem:[%s259 + $0x9b0] sm:$0xff]
      %v608 = vld [vmem:[%s259 + $0x9b8] sm:$0xff]
      %v609 = vld [vmem:[%s259 + $0x9c0] sm:$0xff]
      %v610 = vld [vmem:[%s259 + $0x9c8] sm:$0xff]
      %v611 = vld [vmem:[%s259 + $0x9d0] sm:$0xff]
      %v612 = vld [vmem:[%s259 + $0x9d8] sm:$0xff]
      %v613 = vld [vmem:[%s259 + $0x9e0] sm:$0xff]
      %v614 = vld [vmem:[%s259 + $0x9e8] sm:$0xff]
      %v615 = vld [vmem:[%s259 + $0x9f0] sm:$0xff]
      %v616 = vld [vmem:[%s259 + $0x9f8] sm:$0xff]
      %v617 = vld [vmem:[%s259 + $0xa00] sm:$0xff]
      %v618 = vld [vmem:[%s259 + $0xa08] sm:$0xff]
      %v619 = vld [vmem:[%s259 + $0xa10] sm:$0xff]
      %v620 = vld [vmem:[%s259 + $0xa18] sm:$0xff]
      %v621 = vld [vmem:[%s259 + $0xa20] sm:$0xff]
      %v622 = vld [vmem:[%s259 + $0xa28] sm:$0xff]
      %v623 = vld [vmem:[%s259 + $0xa30] sm:$0xff]
      %v624 = vld [vmem:[%s259 + $0xa38] sm:$0xff]
      %v625 = vld [vmem:[%s259 + $0xa40] sm:$0xff]
      %v626 = vld [vmem:[%s259 + $0xa48] sm:$0xff]
      %v627 = vld [vmem:[%s259 + $0xa50] sm:$0xff]
      %v628 = vld [vmem:[%s259 + $0xa58] sm:$0xff]
      %v629 = vld [vmem:[%s259 + $0xa60] sm:$0xff]
      %v630 = vld [vmem:[%s259 + $0xa68] sm:$0xff]
      %v631 = vld [vmem:[%s259 + $0xa70] sm:$0xff]
      %v632 = vld [vmem:[%s259 + $0xa78] sm:$0xff]
      %v633 = vld [vmem:[%s259 + $0xa80] sm:$0xff]
      %v634 = vld [vmem:[%s259 + $0xa88] sm:$0xff]
      %v635 = vld [vmem:[%s259 + $0xa90] sm:$0xff]
      %v636 = vld [vmem:[%s259 + $0xa98] sm:$0xff]
      %v637 = vld [vmem:[%s259 + $0xaa0] sm:$0xff]
      %v638 = vld [vmem:[%s259 + $0xaa8] sm:$0xff]
      %v639 = vld [vmem:[%s259 + $0xab0] sm:$0xff]
      %v640 = vld [vmem:[%s259 + $0xab8] sm:$0xff]
      %v641 = vld [vmem:[%s259 + $0xac0] sm:$0xff]
      %v642 = vld [vmem:[%s259 + $0xac8] sm:$0xff]
      %v643 = vld [vmem:[%s259 + $0xad0] sm:$0xff]
      %v644 = vld [vmem:[%s259 + $0xad8] sm:$0xff]
      %v645 = vld [vmem:[%s259 + $0xae0] sm:$0xff]
      %v646 = vld [vmem:[%s259 + $0xae8] sm:$0xff]
      %v647 = vld [vmem:[%s259 + $0xaf0] sm:$0xff]
      %v648 = vld [vmem:[%s259 + $0xaf8] sm:$0xff]
      %v649 = vld [vmem:[%s259 + $0xb00] sm:$0xff]
      %v650 = vld [vmem:[%s259 + $0xb08] sm:$0xff]
      %v651 = vld [vmem:[%s259 + $0xb10] sm:$0xff]
      %v652 = vld [vmem:[%s259 + $0xb18] sm:$0xff]
      %v653 = vld [vmem:[%s259 + $0xb20] sm:$0xff]
      %v654 = vld [vmem:[%s259 + $0xb28] sm:$0xff]
      %v655 = vld [vmem:[%s259 + $0xb30] sm:$0xff]
      %v656 = vld [vmem:[%s259 + $0xb38] sm:$0xff]
      %v657 = vld [vmem:[%s259 + $0xb40] sm:$0xff]
      %v658 = vld [vmem:[%s259 + $0xb48] sm:$0xff]
      %v659 = vld [vmem:[%s259 + $0xb50] sm:$0xff]
      %v660 = vld [vmem:[%s259 + $0xb58] sm:$0xff]
      %v661 = vld [vmem:[%s259 + $0xb60] sm:$0xff]
      %v662 = vld [vmem:[%s259 + $0xb68] sm:$0xff]
      %v663 = vld [vmem:[%s259 + $0xb70] sm:$0xff]
      %v664 = vld [vmem:[%s259 + $0xb78] sm:$0xff]
      %v665 = vld [vmem:[%s259 + $0xb80] sm:$0xff]
      %v666 = vld [vmem:[%s259 + $0xb88] sm:$0xff]
      %v667 = vld [vmem:[%s259 + $0xb90] sm:$0xff]
      %v668 = vld [vmem:[%s259 + $0xb98] sm:$0xff]
      %v669 = vld [vmem:[%s259 + $0xba0] sm:$0xff]
      %v670 = vld [vmem:[%s259 + $0xba8] sm:$0xff]
      %v671 = vld [vmem:[%s259 + $0xbb0] sm:$0xff]
      %v672 = vld [vmem:[%s259 + $0xbb8] sm:$0xff]
      %v673 = vld [vmem:[%s259 + $0xbc0] sm:$0xff]
      %v674 = vld [vmem:[%s259 + $0xbc8] sm:$0xff]
      %v675 = vld [vmem:[%s259 + $0xbd0] sm:$0xff]
      %v676 = vld [vmem:[%s259 + $0xbd8] sm:$0xff]
      %v677 = vld [vmem:[%s259 + $0xbe0] sm:$0xff]
      %v678 = vld [vmem:[%s259 + $0xbe8] sm:$0xff]
      %v679 = vld [vmem:[%s259 + $0xbf0] sm:$0xff]
      %v680 = vld [vmem:[%s259 + $0xbf8] sm:$0xff]
      %v681 = vld [vmem:[%s259 + $0xc00] sm:$0xff]
      %v682 = vld [vmem:[%s259 + $0xc08] sm:$0xff]
      %v683 = vld [vmem:[%s259 + $0xc10] sm:$0xff]
      %v684 = vld [vmem:[%s259 + $0xc18] sm:$0xff]
      %v685 = vld [vmem:[%s259 + $0xc20] sm:$0xff]
      %v686 = vld [vmem:[%s259 + $0xc28] sm:$0xff]
      %v687 = vld [vmem:[%s259 + $0xc30] sm:$0xff]
      %v688 = vld [vmem:[%s259 + $0xc38] sm:$0xff]
      %v689 = vld [vmem:[%s259 + $0xc40] sm:$0xff]
      %v690 = vld [vmem:[%s259 + $0xc48] sm:$0xff]
      %v691 = vld [vmem:[%s259 + $0xc50] sm:$0xff]
      %v692 = vld [vmem:[%s259 + $0xc58] sm:$0xff]
      %v693 = vld [vmem:[%s259 + $0xc60] sm:$0xff]
      %v694 = vld [vmem:[%s259 + $0xc68] sm:$0xff]
      %v695 = vld [vmem:[%s259 + $0xc70] sm:$0xff]
      %v696 = vld [vmem:[%s259 + $0xc78] sm:$0xff]
      %v697 = vld [vmem:[%s259 + $0xc80] sm:$0xff]
      %v698 = vld [vmem:[%s259 + $0xc88] sm:$0xff]
      %v699 = vld [vmem:[%s259 + $0xc90] sm:$0xff]
      %v700 = vld [vmem:[%s259 + $0xc98] sm:$0xff]
      %v701 = vld [vmem:[%s259 + $0xca0] sm:$0xff]
      %v702 = vld [vmem:[%s259 + $0xca8] sm:$0xff]
      %v703 = vld [vmem:[%s259 + $0xcb0] sm:$0xff]
      %v704 = vld [vmem:[%s259 + $0xcb8] sm:$0xff]
      %v705 = vld [vmem:[%s259 + $0xcc0] sm:$0xff]
      %v706 = vld [vmem:[%s259 + $0xcc8] sm:$0xff]
      %v707 = vld [vmem:[%s259 + $0xcd0] sm:$0xff]
      %v708 = vld [vmem:[%s259 + $0xcd8] sm:$0xff]
      %v709 = vld [vmem:[%s259 + $0xce0] sm:$0xff]
      %v710 = vld [vmem:[%s259 + $0xce8] sm:$0xff]
      %v711 = vld [vmem:[%s259 + $0xcf0] sm:$0xff]
      %v712 = vld [vmem:[%s259 + $0xcf8] sm:$0xff]
      %v713 = vld [vmem:[%s259 + $0xd00] sm:$0xff]
      %v714 = vld [vmem:[%s259 + $0xd08] sm:$0xff]
      %v715 = vld [vmem:[%s259 + $0xd10] sm:$0xff]
      %v716 = vld [vmem:[%s259 + $0xd18] sm:$0xff]
      %v717 = vld [vmem:[%s259 + $0xd20] sm:$0xff]
      %v718 = vld [vmem:[%s259 + $0xd28] sm:$0xff]
      %v719 = vld [vmem:[%s259 + $0xd30] sm:$0xff]
      %v720 = vld [vmem:[%s259 + $0xd38] sm:$0xff]
      %v721 = vld [vmem:[%s259 + $0xd40] sm:$0xff]
      %v722 = vld [vmem:[%s259 + $0xd48] sm:$0xff]
      %v723 = vld [vmem:[%s259 + $0xd50] sm:$0xff]
      %v724 = vld [vmem:[%s259 + $0xd58] sm:$0xff]
      %v725 = vld [vmem:[%s259 + $0xd60] sm:$0xff]
      %v726 = vld [vmem:[%s259 + $0xd68] sm:$0xff]
      %v727 = vld [vmem:[%s259 + $0xd70] sm:$0xff]
      %v728 = vld [vmem:[%s259 + $0xd78] sm:$0xff]
      %v729 = vld [vmem:[%s259 + $0xd80] sm:$0xff]
      %v730 = vld [vmem:[%s259 + $0xd88] sm:$0xff]
      %v731 = vld [vmem:[%s259 + $0xd90] sm:$0xff]
      %v732 = vld [vmem:[%s259 + $0xd98] sm:$0xff]
      %v733 = vld [vmem:[%s259 + $0xda0] sm:$0xff]
      %v734 = vld [vmem:[%s259 + $0xda8] sm:$0xff]
      %v735 = vld [vmem:[%s259 + $0xdb0] sm:$0xff]
      %v736 = vld [vmem:[%s259 + $0xdb8] sm:$0xff]
      %v737 = vld [vmem:[%s259 + $0xdc0] sm:$0xff]
      %v738 = vld [vmem:[%s259 + $0xdc8] sm:$0xff]
      %v739 = vld [vmem:[%s259 + $0xdd0] sm:$0xff]
      %v740 = vld [vmem:[%s259 + $0xdd8] sm:$0xff]
      %v741 = vld [vmem:[%s259 + $0xde0] sm:$0xff]
      %v742 = vld [vmem:[%s259 + $0xde8] sm:$0xff]
      %v743 = vld [vmem:[%s259 + $0xdf0] sm:$0xff]
      %v744 = vld [vmem:[%s259 + $0xdf8] sm:$0xff]
      %v745 = vld [vmem:[%s259 + $0xe00] sm:$0xff]
      %v746 = vld [vmem:[%s259 + $0xe08] sm:$0xff]
      %v747 = vld [vmem:[%s259 + $0xe10] sm:$0xff]
      %v748 = vld [vmem:[%s259 + $0xe18] sm:$0xff]
      %v749 = vld [vmem:[%s259 + $0xe20] sm:$0xff]
      %v750 = vld [vmem:[%s259 + $0xe28] sm:$0xff]
      %v751 = vld [vmem:[%s259 + $0xe30] sm:$0xff]
      %v752 = vld [vmem:[%s259 + $0xe38] sm:$0xff]
      %v753 = vld [vmem:[%s259 + $0xe40] sm:$0xff]
      %v754 = vld [vmem:[%s259 + $0xe48] sm:$0xff]
      %v755 = vld [vmem:[%s259 + $0xe50] sm:$0xff]
      %v756 = vld [vmem:[%s259 + $0xe58] sm:$0xff]
      %v757 = vld [vmem:[%s259 + $0xe60] sm:$0xff]
      %v758 = vld [vmem:[%s259 + $0xe68] sm:$0xff]
      %v759 = vld [vmem:[%s259 + $0xe70] sm:$0xff]
      %v760 = vld [vmem:[%s259 + $0xe78] sm:$0xff]
      %v761 = vld [vmem:[%s259 + $0xe80] sm:$0xff]
      %v762 = vld [vmem:[%s259 + $0xe88] sm:$0xff]
      %v763 = vld [vmem:[%s259 + $0xe90] sm:$0xff]
      %v764 = vld [vmem:[%s259 + $0xe98] sm:$0xff]
      %v765 = vld [vmem:[%s259 + $0xea0] sm:$0xff]
      %v766 = vld [vmem:[%s259 + $0xea8] sm:$0xff]
      %v767 = vld [vmem:[%s259 + $0xeb0] sm:$0xff]
      %v768 = vld [vmem:[%s259 + $0xeb8] sm:$0xff]
      %v769 = vld [vmem:[%s259 + $0xec0] sm:$0xff]
      %v770 = vld [vmem:[%s259 + $0xec8] sm:$0xff]
      %v771 = vld [vmem:[%s259 + $0xed0] sm:$0xff]
      %v772 = vld [vmem:[%s259 + $0xed8] sm:$0xff]
      %v773 = vld [vmem:[%s259 + $0xee0] sm:$0xff]
      %v774 = vld [vmem:[%s259 + $0xee8] sm:$0xff]
      %v775 = vld [vmem:[%s259 + $0xef0] sm:$0xff]
      %v776 = vld [vmem:[%s259 + $0xef8] sm:$0xff]
      %v777 = vld [vmem:[%s259 + $0xf00] sm:$0xff]
      %v778 = vld [vmem:[%s259 + $0xf08] sm:$0xff]
      %v779 = vld [vmem:[%s259 + $0xf10] sm:$0xff]
      %v780 = vld [vmem:[%s259 + $0xf18] sm:$0xff]
      %v781 = vld [vmem:[%s259 + $0xf20] sm:$0xff]
      %v782 = vld [vmem:[%s259 + $0xf28] sm:$0xff]
      %v783 = vld [vmem:[%s259 + $0xf30] sm:$0xff]
      %v784 = vld [vmem:[%s259 + $0xf38] sm:$0xff]
      %v785 = vld [vmem:[%s259 + $0xf40] sm:$0xff]
      %v786 = vld [vmem:[%s259 + $0xf48] sm:$0xff]
      %v787 = vld [vmem:[%s259 + $0xf50] sm:$0xff]
      %v788 = vld [vmem:[%s259 + $0xf58] sm:$0xff]
      %v789 = vld [vmem:[%s259 + $0xf60] sm:$0xff]
      %v790 = vld [vmem:[%s259 + $0xf68] sm:$0xff]
      %v791 = vld [vmem:[%s259 + $0xf70] sm:$0xff]
      %v792 = vld [vmem:[%s259 + $0xf78] sm:$0xff]
      %v793 = vld [vmem:[%s259 + $0xf80] sm:$0xff]
      %v794 = vld [vmem:[%s259 + $0xf88] sm:$0xff]
      %v795 = vld [vmem:[%s259 + $0xf90] sm:$0xff]
      %v796 = vld [vmem:[%s259 + $0xf98] sm:$0xff]
      %v797 = vld [vmem:[%s259 + $0xfa0] sm:$0xff]
      %v798 = vld [vmem:[%s259 + $0xfa8] sm:$0xff]
      %v799 = vld [vmem:[%s259 + $0xfb0] sm:$0xff]
      %v800 = vld [vmem:[%s259 + $0xfb8] sm:$0xff]
      %v801 = vld [vmem:[%s259 + $0xfc0] sm:$0xff]
      %v802 = vld [vmem:[%s259 + $0xfc8] sm:$0xff]
      %v803 = vld [vmem:[%s259 + $0xfd0] sm:$0xff]
      %v804 = vld [vmem:[%s259 + $0xfd8] sm:$0xff]
      %v805 = vld [vmem:[%s259 + $0xfe0] sm:$0xff]
      %v806 = vld [vmem:[%s259 + $0xfe8] sm:$0xff]
      %v807 = vld [vmem:[%s259 + $0xff0] sm:$0xff]
      %v808 = vld [vmem:[%s259 + $0xff8] sm:$0xff]
      %v817 = vunpack.c.l.b16 %v289
      %v818 = vunpack.c.h.b16 %v289
      %v819 = vunpack.c.l.b16 %v290
      %v820 = vunpack.c.h.b16 %v290
      %v821 = vunpack.c.l.b16 %v291
      %v822 = vunpack.c.h.b16 %v291
      %v823 = vunpack.c.l.b16 %v292
      %v824 = vunpack.c.h.b16 %v292
      %v825 = vunpack.c.l.b16 %v293
      %v826 = vunpack.c.h.b16 %v293
      %v827 = vunpack.c.l.b16 %v294
      %v828 = vunpack.c.h.b16 %v294
      %v829 = vunpack.c.l.b16 %v295
      %v830 = vunpack.c.h.b16 %v295
      %v831 = vunpack.c.l.b16 %v296
      %v832 = vunpack.c.h.b16 %v296
      %v833 = vpack.c.b16 %v817, %v817
      %v834 = vpack.c.b16 %v818, %v818
      %v835 = vpack.c.b16 %v819, %v819
      %v836 = vpack.c.b16 %v820, %v820
      %v837 = vpack.c.b16 %v821, %v821
      %v838 = vpack.c.b16 %v822, %v822
      %v839 = vpack.c.b16 %v823, %v823
      %v840 = vpack.c.b16 %v824, %v824
      %v841 = vpack.c.b16 %v825, %v825
      %v842 = vpack.c.b16 %v826, %v826
      %v843 = vpack.c.b16 %v827, %v827
      %v844 = vpack.c.b16 %v828, %v828
      %v845 = vpack.c.b16 %v829, %v829
      %v846 = vpack.c.b16 %v830, %v830
      %v847 = vpack.c.b16 %v831, %v831
      %v848 = vpack.c.b16 %v832, %v832
      %v1377 = vunpack.c.l.b16 %v297
      %v1378 = vunpack.c.h.b16 %v297
      %v1379 = vunpack.c.l.b16 %v298
      %v1380 = vunpack.c.h.b16 %v298
      %v1381 = vunpack.c.l.b16 %v299
      %v1382 = vunpack.c.h.b16 %v299
      %v1383 = vunpack.c.l.b16 %v300
      %v1384 = vunpack.c.h.b16 %v300
      %v1385 = vunpack.c.l.b16 %v301
      %v1386 = vunpack.c.h.b16 %v301
      %v1387 = vunpack.c.l.b16 %v302
      %v1388 = vunpack.c.h.b16 %v302
      %v1389 = vunpack.c.l.b16 %v303
      %v1390 = vunpack.c.h.b16 %v303
      %v1391 = vunpack.c.l.b16 %v304
      %v1392 = vunpack.c.h.b16 %v304
      %v1393 = vunpack.c.l.b16 %v305
      %v1394 = vunpack.c.h.b16 %v305
      %v1395 = vunpack.c.l.b16 %v306
      %v1396 = vunpack.c.h.b16 %v306
      %v1397 = vunpack.c.l.b16 %v307
      %v1398 = vunpack.c.h.b16 %v307
      %v1399 = vunpack.c.l.b16 %v308
      %v1400 = vunpack.c.h.b16 %v308
      %v1401 = vunpack.c.l.b16 %v309
      %v1402 = vunpack.c.h.b16 %v309
      %v1403 = vunpack.c.l.b16 %v310
      %v1404 = vunpack.c.h.b16 %v310
      %v1405 = vunpack.c.l.b16 %v311
      %v1406 = vunpack.c.h.b16 %v311
      %v1407 = vunpack.c.l.b16 %v312
      %v1408 = vunpack.c.h.b16 %v312
      %v1409 = vunpack.c.l.b16 %v313
      %v1410 = vunpack.c.h.b16 %v313
      %v1411 = vunpack.c.l.b16 %v314
      %v1412 = vunpack.c.h.b16 %v314
      %v1413 = vunpack.c.l.b16 %v315
      %v1414 = vunpack.c.h.b16 %v315
      %v1415 = vunpack.c.l.b16 %v316
      %v1416 = vunpack.c.h.b16 %v316
      %v1417 = vunpack.c.l.b16 %v317
      %v1418 = vunpack.c.h.b16 %v317
      %v1419 = vunpack.c.l.b16 %v318
      %v1420 = vunpack.c.h.b16 %v318
      %v1421 = vunpack.c.l.b16 %v319
      %v1422 = vunpack.c.h.b16 %v319
      %v1423 = vunpack.c.l.b16 %v320
      %v1424 = vunpack.c.h.b16 %v320
      %v1425 = vunpack.c.l.b16 %v321
      %v1426 = vunpack.c.h.b16 %v321
      %v1427 = vunpack.c.l.b16 %v322
      %v1428 = vunpack.c.h.b16 %v322
      %v1429 = vunpack.c.l.b16 %v323
      %v1430 = vunpack.c.h.b16 %v323
      %v1431 = vunpack.c.l.b16 %v324
      %v1432 = vunpack.c.h.b16 %v324
      %v1433 = vunpack.c.l.b16 %v325
      %v1434 = vunpack.c.h.b16 %v325
      %v1435 = vunpack.c.l.b16 %v326
      %v1436 = vunpack.c.h.b16 %v326
      %v1437 = vunpack.c.l.b16 %v327
      %v1438 = vunpack.c.h.b16 %v327
      %v1439 = vunpack.c.l.b16 %v328
      %v1440 = vunpack.c.h.b16 %v328
      %v1441 = vunpack.c.l.b16 %v329
      %v1442 = vunpack.c.h.b16 %v329
      %v1443 = vunpack.c.l.b16 %v330
      %v1444 = vunpack.c.h.b16 %v330
      %v1445 = vunpack.c.l.b16 %v331
      %v1446 = vunpack.c.h.b16 %v331
      %v1447 = vunpack.c.l.b16 %v332
      %v1448 = vunpack.c.h.b16 %v332
      %v1449 = vunpack.c.l.b16 %v333
      %v1450 = vunpack.c.h.b16 %v333
      %v1451 = vunpack.c.l.b16 %v334
      %v1452 = vunpack.c.h.b16 %v334
      %v1453 = vunpack.c.l.b16 %v335
      %v1454 = vunpack.c.h.b16 %v335
      %v1455 = vunpack.c.l.b16 %v336
      %v1456 = vunpack.c.h.b16 %v336
      %v1457 = vunpack.c.l.b16 %v337
      %v1458 = vunpack.c.h.b16 %v337
      %v1459 = vunpack.c.l.b16 %v338
      %v1460 = vunpack.c.h.b16 %v338
      %v1461 = vunpack.c.l.b16 %v339
      %v1462 = vunpack.c.h.b16 %v339
      %v1463 = vunpack.c.l.b16 %v340
      %v1464 = vunpack.c.h.b16 %v340
      %v1465 = vunpack.c.l.b16 %v341
      %v1466 = vunpack.c.h.b16 %v341
      %v1467 = vunpack.c.l.b16 %v342
      %v1468 = vunpack.c.h.b16 %v342
      %v1469 = vunpack.c.l.b16 %v343
      %v1470 = vunpack.c.h.b16 %v343
      %v1471 = vunpack.c.l.b16 %v344
      %v1472 = vunpack.c.h.b16 %v344
      %v1473 = vunpack.c.l.b16 %v345
      %v1474 = vunpack.c.h.b16 %v345
      %v1475 = vunpack.c.l.b16 %v346
      %v1476 = vunpack.c.h.b16 %v346
      %v1477 = vunpack.c.l.b16 %v347
      %v1478 = vunpack.c.h.b16 %v347
      %v1479 = vunpack.c.l.b16 %v348
      %v1480 = vunpack.c.h.b16 %v348
      %v1481 = vunpack.c.l.b16 %v349
      %v1482 = vunpack.c.h.b16 %v349
      %v1483 = vunpack.c.l.b16 %v350
      %v1484 = vunpack.c.h.b16 %v350
      %v1485 = vunpack.c.l.b16 %v351
      %v1486 = vunpack.c.h.b16 %v351
      %v1487 = vunpack.c.l.b16 %v352
      %v1488 = vunpack.c.h.b16 %v352
      %v1489 = vunpack.c.l.b16 %v353
      %v1490 = vunpack.c.h.b16 %v353
      %v1491 = vunpack.c.l.b16 %v354
      %v1492 = vunpack.c.h.b16 %v354
      %v1493 = vunpack.c.l.b16 %v355
      %v1494 = vunpack.c.h.b16 %v355
      %v1495 = vunpack.c.l.b16 %v356
      %v1496 = vunpack.c.h.b16 %v356
      %v1497 = vunpack.c.l.b16 %v357
      %v1498 = vunpack.c.h.b16 %v357
      %v1499 = vunpack.c.l.b16 %v358
      %v1500 = vunpack.c.h.b16 %v358
      %v1501 = vunpack.c.l.b16 %v359
      %v1502 = vunpack.c.h.b16 %v359
      %v1503 = vunpack.c.l.b16 %v360
      %v1504 = vunpack.c.h.b16 %v360
      %v1505 = vunpack.c.l.b16 %v361
      %v1506 = vunpack.c.h.b16 %v361
      %v1507 = vunpack.c.l.b16 %v362
      %v1508 = vunpack.c.h.b16 %v362
      %v1509 = vunpack.c.l.b16 %v363
      %v1510 = vunpack.c.h.b16 %v363
      %v1511 = vunpack.c.l.b16 %v364
      %v1512 = vunpack.c.h.b16 %v364
      %v1513 = vunpack.c.l.b16 %v365
      %v1514 = vunpack.c.h.b16 %v365
      %v1515 = vunpack.c.l.b16 %v366
      %v1516 = vunpack.c.h.b16 %v366
      %v1517 = vunpack.c.l.b16 %v367
      %v1518 = vunpack.c.h.b16 %v367
      %v1519 = vunpack.c.l.b16 %v368
      %v1520 = vunpack.c.h.b16 %v368
      %v1521 = vunpack.c.l.b16 %v369
      %v1522 = vunpack.c.h.b16 %v369
      %v1523 = vunpack.c.l.b16 %v370
      %v1524 = vunpack.c.h.b16 %v370
      %v1525 = vunpack.c.l.b16 %v371
      %v1526 = vunpack.c.h.b16 %v371
      %v1527 = vunpack.c.l.b16 %v372
      %v1528 = vunpack.c.h.b16 %v372
      %v1529 = vunpack.c.l.b16 %v373
      %v1530 = vunpack.c.h.b16 %v373
      %v1531 = vunpack.c.l.b16 %v374
      %v1532 = vunpack.c.h.b16 %v374
      %v1533 = vunpack.c.l.b16 %v375
      %v1534 = vunpack.c.h.b16 %v375
      %v1535 = vunpack.c.l.b16 %v376
      %v1536 = vunpack.c.h.b16 %v376
      %v1537 = vunpack.c.l.b16 %v377
      %v1538 = vunpack.c.h.b16 %v377
      %v1539 = vunpack.c.l.b16 %v378
      %v1540 = vunpack.c.h.b16 %v378
      %v1541 = vunpack.c.l.b16 %v379
      %v1542 = vunpack.c.h.b16 %v379
      %v1543 = vunpack.c.l.b16 %v380
      %v1544 = vunpack.c.h.b16 %v380
      %v1545 = vunpack.c.l.b16 %v381
      %v1546 = vunpack.c.h.b16 %v381
      %v1547 = vunpack.c.l.b16 %v382
      %v1548 = vunpack.c.h.b16 %v382
      %v1549 = vunpack.c.l.b16 %v383
      %v1550 = vunpack.c.h.b16 %v383
      %v1551 = vunpack.c.l.b16 %v384
      %v1552 = vunpack.c.h.b16 %v384
      %v1553 = vunpack.c.l.b16 %v385
      %v1554 = vunpack.c.h.b16 %v385
      %v1555 = vunpack.c.l.b16 %v386
      %v1556 = vunpack.c.h.b16 %v386
      %v1557 = vunpack.c.l.b16 %v387
      %v1558 = vunpack.c.h.b16 %v387
      %v1559 = vunpack.c.l.b16 %v388
      %v1560 = vunpack.c.h.b16 %v388
      %v1561 = vunpack.c.l.b16 %v389
      %v1562 = vunpack.c.h.b16 %v389
      %v1563 = vunpack.c.l.b16 %v390
      %v1564 = vunpack.c.h.b16 %v390
      %v1565 = vunpack.c.l.b16 %v391
      %v1566 = vunpack.c.h.b16 %v391
      %v1567 = vunpack.c.l.b16 %v392
      %v1568 = vunpack.c.h.b16 %v392
      %v1569 = vunpack.c.l.b16 %v393
      %v1570 = vunpack.c.h.b16 %v393
      %v1571 = vunpack.c.l.b16 %v394
      %v1572 = vunpack.c.h.b16 %v394
      %v1573 = vunpack.c.l.b16 %v395
      %v1574 = vunpack.c.h.b16 %v395
      %v1575 = vunpack.c.l.b16 %v396
      %v1576 = vunpack.c.h.b16 %v396
      %v1577 = vunpack.c.l.b16 %v397
      %v1578 = vunpack.c.h.b16 %v397
      %v1579 = vunpack.c.l.b16 %v398
      %v1580 = vunpack.c.h.b16 %v398
      %v1581 = vunpack.c.l.b16 %v399
      %v1582 = vunpack.c.h.b16 %v399
      %v1583 = vunpack.c.l.b16 %v400
      %v1584 = vunpack.c.h.b16 %v400
      %v1585 = vunpack.c.l.b16 %v401
      %v1586 = vunpack.c.h.b16 %v401
      %v1587 = vunpack.c.l.b16 %v402
      %v1588 = vunpack.c.h.b16 %v402
      %v1589 = vunpack.c.l.b16 %v403
      %v1590 = vunpack.c.h.b16 %v403
      %v1591 = vunpack.c.l.b16 %v404
      %v1592 = vunpack.c.h.b16 %v404
      %v1593 = vunpack.c.l.b16 %v405
      %v1594 = vunpack.c.h.b16 %v405
      %v1595 = vunpack.c.l.b16 %v406
      %v1596 = vunpack.c.h.b16 %v406
      %v1597 = vunpack.c.l.b16 %v407
      %v1598 = vunpack.c.h.b16 %v407
      %v1599 = vunpack.c.l.b16 %v408
      %v1600 = vunpack.c.h.b16 %v408
      %v1601 = vunpack.c.l.b16 %v409
      %v1602 = vunpack.c.h.b16 %v409
      %v1603 = vunpack.c.l.b16 %v410
      %v1604 = vunpack.c.h.b16 %v410
      %v1605 = vunpack.c.l.b16 %v411
      %v1606 = vunpack.c.h.b16 %v411
      %v1607 = vunpack.c.l.b16 %v412
      %v1608 = vunpack.c.h.b16 %v412
      %v1609 = vunpack.c.l.b16 %v413
      %v1610 = vunpack.c.h.b16 %v413
      %v1611 = vunpack.c.l.b16 %v414
      %v1612 = vunpack.c.h.b16 %v414
      %v1613 = vunpack.c.l.b16 %v415
      %v1614 = vunpack.c.h.b16 %v415
      %v1615 = vunpack.c.l.b16 %v416
      %v1616 = vunpack.c.h.b16 %v416
      %v1617 = vunpack.c.l.b16 %v417
      %v1618 = vunpack.c.h.b16 %v417
      %v1619 = vunpack.c.l.b16 %v418
      %v1620 = vunpack.c.h.b16 %v418
      %v1621 = vunpack.c.l.b16 %v419
      %v1622 = vunpack.c.h.b16 %v419
      %v1623 = vunpack.c.l.b16 %v420
      %v1624 = vunpack.c.h.b16 %v420
      %v1625 = vunpack.c.l.b16 %v421
      %v1626 = vunpack.c.h.b16 %v421
      %v1627 = vunpack.c.l.b16 %v422
      %v1628 = vunpack.c.h.b16 %v422
      %v1629 = vunpack.c.l.b16 %v423
      %v1630 = vunpack.c.h.b16 %v423
      %v1631 = vunpack.c.l.b16 %v424
      %v1632 = vunpack.c.h.b16 %v424
      %v1633 = vunpack.c.l.b16 %v425
      %v1634 = vunpack.c.h.b16 %v425
      %v1635 = vunpack.c.l.b16 %v426
      %v1636 = vunpack.c.h.b16 %v426
      %v1637 = vunpack.c.l.b16 %v427
      %v1638 = vunpack.c.h.b16 %v427
      %v1639 = vunpack.c.l.b16 %v428
      %v1640 = vunpack.c.h.b16 %v428
      %v1641 = vunpack.c.l.b16 %v429
      %v1642 = vunpack.c.h.b16 %v429
      %v1643 = vunpack.c.l.b16 %v430
      %v1644 = vunpack.c.h.b16 %v430
      %v1645 = vunpack.c.l.b16 %v431
      %v1646 = vunpack.c.h.b16 %v431
      %v1647 = vunpack.c.l.b16 %v432
      %v1648 = vunpack.c.h.b16 %v432
      %v1649 = vunpack.c.l.b16 %v433
      %v1650 = vunpack.c.h.b16 %v433
      %v1651 = vunpack.c.l.b16 %v434
      %v1652 = vunpack.c.h.b16 %v434
      %v1653 = vunpack.c.l.b16 %v435
      %v1654 = vunpack.c.h.b16 %v435
      %v1655 = vunpack.c.l.b16 %v436
      %v1656 = vunpack.c.h.b16 %v436
      %v1657 = vunpack.c.l.b16 %v437
      %v1658 = vunpack.c.h.b16 %v437
      %v1659 = vunpack.c.l.b16 %v438
      %v1660 = vunpack.c.h.b16 %v438
      %v1661 = vunpack.c.l.b16 %v439
      %v1662 = vunpack.c.h.b16 %v439
      %v1663 = vunpack.c.l.b16 %v440
      %v1664 = vunpack.c.h.b16 %v440
      %v1665 = vunpack.c.l.b16 %v441
      %v1666 = vunpack.c.h.b16 %v441
      %v1667 = vunpack.c.l.b16 %v442
      %v1668 = vunpack.c.h.b16 %v442
      %v1669 = vunpack.c.l.b16 %v443
      %v1670 = vunpack.c.h.b16 %v443
      %v1671 = vunpack.c.l.b16 %v444
      %v1672 = vunpack.c.h.b16 %v444
      %v1673 = vunpack.c.l.b16 %v445
      %v1674 = vunpack.c.h.b16 %v445
      %v1675 = vunpack.c.l.b16 %v446
      %v1676 = vunpack.c.h.b16 %v446
      %v1677 = vunpack.c.l.b16 %v447
      %v1678 = vunpack.c.h.b16 %v447
      %v1679 = vunpack.c.l.b16 %v448
      %v1680 = vunpack.c.h.b16 %v448
      %v1681 = vunpack.c.l.b16 %v449
      %v1682 = vunpack.c.h.b16 %v449
      %v1683 = vunpack.c.l.b16 %v450
      %v1684 = vunpack.c.h.b16 %v450
      %v1685 = vunpack.c.l.b16 %v451
      %v1686 = vunpack.c.h.b16 %v451
      %v1687 = vunpack.c.l.b16 %v452
      %v1688 = vunpack.c.h.b16 %v452
      %v1689 = vunpack.c.l.b16 %v453
      %v1690 = vunpack.c.h.b16 %v453
      %v1691 = vunpack.c.l.b16 %v454
      %v1692 = vunpack.c.h.b16 %v454
      %v1693 = vunpack.c.l.b16 %v455
      %v1694 = vunpack.c.h.b16 %v455
      %v1695 = vunpack.c.l.b16 %v456
      %v1696 = vunpack.c.h.b16 %v456
      %v1697 = vunpack.c.l.b16 %v457
      %v1698 = vunpack.c.h.b16 %v457
      %v1699 = vunpack.c.l.b16 %v458
      %v1700 = vunpack.c.h.b16 %v458
      %v1701 = vunpack.c.l.b16 %v459
      %v1702 = vunpack.c.h.b16 %v459
      %v1703 = vunpack.c.l.b16 %v460
      %v1704 = vunpack.c.h.b16 %v460
      %v1705 = vunpack.c.l.b16 %v461
      %v1706 = vunpack.c.h.b16 %v461
      %v1707 = vunpack.c.l.b16 %v462
      %v1708 = vunpack.c.h.b16 %v462
      %v1709 = vunpack.c.l.b16 %v463
      %v1710 = vunpack.c.h.b16 %v463
      %v1711 = vunpack.c.l.b16 %v464
      %v1712 = vunpack.c.h.b16 %v464
      %v1713 = vunpack.c.l.b16 %v465
      %v1714 = vunpack.c.h.b16 %v465
      %v1715 = vunpack.c.l.b16 %v466
      %v1716 = vunpack.c.h.b16 %v466
      %v1717 = vunpack.c.l.b16 %v467
      %v1718 = vunpack.c.h.b16 %v467
      %v1719 = vunpack.c.l.b16 %v468
      %v1720 = vunpack.c.h.b16 %v468
      %v1721 = vunpack.c.l.b16 %v469
      %v1722 = vunpack.c.h.b16 %v469
      %v1723 = vunpack.c.l.b16 %v470
      %v1724 = vunpack.c.h.b16 %v470
      %v1725 = vunpack.c.l.b16 %v471
      %v1726 = vunpack.c.h.b16 %v471
      %v1727 = vunpack.c.l.b16 %v472
      %v1728 = vunpack.c.h.b16 %v472
      %v1729 = vunpack.c.l.b16 %v473
      %v1730 = vunpack.c.h.b16 %v473
      %v1731 = vunpack.c.l.b16 %v474
      %v1732 = vunpack.c.h.b16 %v474
      %v1733 = vunpack.c.l.b16 %v475
      %v1734 = vunpack.c.h.b16 %v475
      %v1735 = vunpack.c.l.b16 %v476
      %v1736 = vunpack.c.h.b16 %v476
      %v1737 = vunpack.c.l.b16 %v477
      %v1738 = vunpack.c.h.b16 %v477
      %v1739 = vunpack.c.l.b16 %v478
      %v1740 = vunpack.c.h.b16 %v478
      %v1741 = vunpack.c.l.b16 %v479
      %v1742 = vunpack.c.h.b16 %v479
      %v1743 = vunpack.c.l.b16 %v480
      %v1744 = vunpack.c.h.b16 %v480
      %v1745 = vunpack.c.l.b16 %v481
      %v1746 = vunpack.c.h.b16 %v481
      %v1747 = vunpack.c.l.b16 %v482
      %v1748 = vunpack.c.h.b16 %v482
      %v1749 = vunpack.c.l.b16 %v483
      %v1750 = vunpack.c.h.b16 %v483
      %v1751 = vunpack.c.l.b16 %v484
      %v1752 = vunpack.c.h.b16 %v484
      %v1753 = vunpack.c.l.b16 %v485
      %v1754 = vunpack.c.h.b16 %v485
      %v1755 = vunpack.c.l.b16 %v486
      %v1756 = vunpack.c.h.b16 %v486
      %v1757 = vunpack.c.l.b16 %v487
      %v1758 = vunpack.c.h.b16 %v487
      %v1759 = vunpack.c.l.b16 %v488
      %v1760 = vunpack.c.h.b16 %v488
      %v1761 = vunpack.c.l.b16 %v489
      %v1762 = vunpack.c.h.b16 %v489
      %v1763 = vunpack.c.l.b16 %v490
      %v1764 = vunpack.c.h.b16 %v490
      %v1765 = vunpack.c.l.b16 %v491
      %v1766 = vunpack.c.h.b16 %v491
      %v1767 = vunpack.c.l.b16 %v492
      %v1768 = vunpack.c.h.b16 %v492
      %v1769 = vunpack.c.l.b16 %v493
      %v1770 = vunpack.c.h.b16 %v493
      %v1771 = vunpack.c.l.b16 %v494
      %v1772 = vunpack.c.h.b16 %v494
      %v1773 = vunpack.c.l.b16 %v495
      %v1774 = vunpack.c.h.b16 %v495
      %v1775 = vunpack.c.l.b16 %v496
      %v1776 = vunpack.c.h.b16 %v496
      %v1777 = vunpack.c.l.b16 %v497
      %v1778 = vunpack.c.h.b16 %v497
      %v1779 = vunpack.c.l.b16 %v498
      %v1780 = vunpack.c.h.b16 %v498
      %v1781 = vunpack.c.l.b16 %v499
      %v1782 = vunpack.c.h.b16 %v499
      %v1783 = vunpack.c.l.b16 %v500
      %v1784 = vunpack.c.h.b16 %v500
      %v1785 = vunpack.c.l.b16 %v501
      %v1786 = vunpack.c.h.b16 %v501
      %v1787 = vunpack.c.l.b16 %v502
      %v1788 = vunpack.c.h.b16 %v502
      %v1789 = vunpack.c.l.b16 %v503
      %v1790 = vunpack.c.h.b16 %v503
      %v1791 = vunpack.c.l.b16 %v504
      %v1792 = vunpack.c.h.b16 %v504
      %v1793 = vunpack.c.l.b16 %v505
      %v1794 = vunpack.c.h.b16 %v505
      %v1795 = vunpack.c.l.b16 %v506
      %v1796 = vunpack.c.h.b16 %v506
      %v1797 = vunpack.c.l.b16 %v507
      %v1798 = vunpack.c.h.b16 %v507
      %v1799 = vunpack.c.l.b16 %v508
      %v1800 = vunpack.c.h.b16 %v508
      %v1801 = vunpack.c.l.b16 %v509
      %v1802 = vunpack.c.h.b16 %v509
      %v1803 = vunpack.c.l.b16 %v510
      %v1804 = vunpack.c.h.b16 %v510
      %v1805 = vunpack.c.l.b16 %v511
      %v1806 = vunpack.c.h.b16 %v511
      %v1807 = vunpack.c.l.b16 %v512
      %v1808 = vunpack.c.h.b16 %v512
      %v1809 = vunpack.c.l.b16 %v513
      %v1810 = vunpack.c.h.b16 %v513
      %v1811 = vunpack.c.l.b16 %v514
      %v1812 = vunpack.c.h.b16 %v514
      %v1813 = vunpack.c.l.b16 %v515
      %v1814 = vunpack.c.h.b16 %v515
      %v1815 = vunpack.c.l.b16 %v516
      %v1816 = vunpack.c.h.b16 %v516
      %v1817 = vunpack.c.l.b16 %v517
      %v1818 = vunpack.c.h.b16 %v517
      %v1819 = vunpack.c.l.b16 %v518
      %v1820 = vunpack.c.h.b16 %v518
      %v1821 = vunpack.c.l.b16 %v519
      %v1822 = vunpack.c.h.b16 %v519
      %v1823 = vunpack.c.l.b16 %v520
      %v1824 = vunpack.c.h.b16 %v520
      %v1825 = vunpack.c.l.b16 %v521
      %v1826 = vunpack.c.h.b16 %v521
      %v1827 = vunpack.c.l.b16 %v522
      %v1828 = vunpack.c.h.b16 %v522
      %v1829 = vunpack.c.l.b16 %v523
      %v1830 = vunpack.c.h.b16 %v523
      %v1831 = vunpack.c.l.b16 %v524
      %v1832 = vunpack.c.h.b16 %v524
      %v1833 = vunpack.c.l.b16 %v525
      %v1834 = vunpack.c.h.b16 %v525
      %v1835 = vunpack.c.l.b16 %v526
      %v1836 = vunpack.c.h.b16 %v526
      %v1837 = vunpack.c.l.b16 %v527
      %v1838 = vunpack.c.h.b16 %v527
      %v1839 = vunpack.c.l.b16 %v528
      %v1840 = vunpack.c.h.b16 %v528
      %v1841 = vunpack.c.l.b16 %v529
      %v1842 = vunpack.c.h.b16 %v529
      %v1843 = vunpack.c.l.b16 %v530
      %v1844 = vunpack.c.h.b16 %v530
      %v1845 = vunpack.c.l.b16 %v531
      %v1846 = vunpack.c.h.b16 %v531
      %v1847 = vunpack.c.l.b16 %v532
      %v1848 = vunpack.c.h.b16 %v532
      %v1849 = vunpack.c.l.b16 %v533
      %v1850 = vunpack.c.h.b16 %v533
      %v1851 = vunpack.c.l.b16 %v534
      %v1852 = vunpack.c.h.b16 %v534
      %v1853 = vunpack.c.l.b16 %v535
      %v1854 = vunpack.c.h.b16 %v535
      %v1855 = vunpack.c.l.b16 %v536
      %v1856 = vunpack.c.h.b16 %v536
      %v1857 = vunpack.c.l.b16 %v537
      %v1858 = vunpack.c.h.b16 %v537
      %v1859 = vunpack.c.l.b16 %v538
      %v1860 = vunpack.c.h.b16 %v538
      %v1861 = vunpack.c.l.b16 %v539
      %v1862 = vunpack.c.h.b16 %v539
      %v1863 = vunpack.c.l.b16 %v540
      %v1864 = vunpack.c.h.b16 %v540
      %v1865 = vunpack.c.l.b16 %v541
      %v1866 = vunpack.c.h.b16 %v541
      %v1867 = vunpack.c.l.b16 %v542
      %v1868 = vunpack.c.h.b16 %v542
      %v1869 = vunpack.c.l.b16 %v543
      %v1870 = vunpack.c.h.b16 %v543
      %v1871 = vunpack.c.l.b16 %v544
      %v1872 = vunpack.c.h.b16 %v544
      %v1873 = vunpack.c.l.b16 %v545
      %v1874 = vunpack.c.h.b16 %v545
      %v1875 = vunpack.c.l.b16 %v546
      %v1876 = vunpack.c.h.b16 %v546
      %v1877 = vunpack.c.l.b16 %v547
      %v1878 = vunpack.c.h.b16 %v547
      %v1879 = vunpack.c.l.b16 %v548
      %v1880 = vunpack.c.h.b16 %v548
      %v1881 = vunpack.c.l.b16 %v549
      %v1882 = vunpack.c.h.b16 %v549
      %v1883 = vunpack.c.l.b16 %v550
      %v1884 = vunpack.c.h.b16 %v550
      %v1885 = vunpack.c.l.b16 %v551
      %v1886 = vunpack.c.h.b16 %v551
      %v1887 = vunpack.c.l.b16 %v552
      %v1888 = vunpack.c.h.b16 %v552
      %v1889 = vunpack.c.l.b16 %v553
      %v1890 = vunpack.c.h.b16 %v553
      %v1891 = vunpack.c.l.b16 %v554
      %v1892 = vunpack.c.h.b16 %v554
      %v1893 = vunpack.c.l.b16 %v555
      %v1894 = vunpack.c.h.b16 %v555
      %v1895 = vunpack.c.l.b16 %v556
      %v1896 = vunpack.c.h.b16 %v556
      %v1897 = vunpack.c.l.b16 %v557
      %v1898 = vunpack.c.h.b16 %v557
      %v1899 = vunpack.c.l.b16 %v558
      %v1900 = vunpack.c.h.b16 %v558
      %v1901 = vunpack.c.l.b16 %v559
      %v1902 = vunpack.c.h.b16 %v559
      %v1903 = vunpack.c.l.b16 %v560
      %v1904 = vunpack.c.h.b16 %v560
      %v1905 = vunpack.c.l.b16 %v561
      %v1906 = vunpack.c.h.b16 %v561
      %v1907 = vunpack.c.l.b16 %v562
      %v1908 = vunpack.c.h.b16 %v562
      %v1909 = vunpack.c.l.b16 %v563
      %v1910 = vunpack.c.h.b16 %v563
      %v1911 = vunpack.c.l.b16 %v564
      %v1912 = vunpack.c.h.b16 %v564
      %v1913 = vunpack.c.l.b16 %v565
      %v1914 = vunpack.c.h.b16 %v565
      %v1915 = vunpack.c.l.b16 %v566
      %v1916 = vunpack.c.h.b16 %v566
      %v1917 = vunpack.c.l.b16 %v567
      %v1918 = vunpack.c.h.b16 %v567
      %v1919 = vunpack.c.l.b16 %v568
      %v1920 = vunpack.c.h.b16 %v568
      %v1921 = vunpack.c.l.b16 %v569
      %v1922 = vunpack.c.h.b16 %v569
      %v1923 = vunpack.c.l.b16 %v570
      %v1924 = vunpack.c.h.b16 %v570
      %v1925 = vunpack.c.l.b16 %v571
      %v1926 = vunpack.c.h.b16 %v571
      %v1927 = vunpack.c.l.b16 %v572
      %v1928 = vunpack.c.h.b16 %v572
      %v1929 = vunpack.c.l.b16 %v573
      %v1930 = vunpack.c.h.b16 %v573
      %v1931 = vunpack.c.l.b16 %v574
      %v1932 = vunpack.c.h.b16 %v574
      %v1933 = vunpack.c.l.b16 %v575
      %v1934 = vunpack.c.h.b16 %v575
      %v1935 = vunpack.c.l.b16 %v576
      %v1936 = vunpack.c.h.b16 %v576
      %v1937 = vunpack.c.l.b16 %v577
      %v1938 = vunpack.c.h.b16 %v577
      %v1939 = vunpack.c.l.b16 %v578
      %v1940 = vunpack.c.h.b16 %v578
      %v1941 = vunpack.c.l.b16 %v579
      %v1942 = vunpack.c.h.b16 %v579
      %v1943 = vunpack.c.l.b16 %v580
      %v1944 = vunpack.c.h.b16 %v580
      %v1945 = vunpack.c.l.b16 %v581
      %v1946 = vunpack.c.h.b16 %v581
      %v1947 = vunpack.c.l.b16 %v582
      %v1948 = vunpack.c.h.b16 %v582
      %v1949 = vunpack.c.l.b16 %v583
      %v1950 = vunpack.c.h.b16 %v583
      %v1951 = vunpack.c.l.b16 %v584
      %v1952 = vunpack.c.h.b16 %v584
      %v1953 = vunpack.c.l.b16 %v585
      %v1954 = vunpack.c.h.b16 %v585
      %v1955 = vunpack.c.l.b16 %v586
      %v1956 = vunpack.c.h.b16 %v586
      %v1957 = vunpack.c.l.b16 %v587
      %v1958 = vunpack.c.h.b16 %v587
      %v1959 = vunpack.c.l.b16 %v588
      %v1960 = vunpack.c.h.b16 %v588
      %v1961 = vunpack.c.l.b16 %v589
      %v1962 = vunpack.c.h.b16 %v589
      %v1963 = vunpack.c.l.b16 %v590
      %v1964 = vunpack.c.h.b16 %v590
      %v1965 = vunpack.c.l.b16 %v591
      %v1966 = vunpack.c.h.b16 %v591
      %v1967 = vunpack.c.l.b16 %v592
      %v1968 = vunpack.c.h.b16 %v592
      %v1969 = vunpack.c.l.b16 %v593
      %v1970 = vunpack.c.h.b16 %v593
      %v1971 = vunpack.c.l.b16 %v594
      %v1972 = vunpack.c.h.b16 %v594
      %v1973 = vunpack.c.l.b16 %v595
      %v1974 = vunpack.c.h.b16 %v595
      %v1975 = vunpack.c.l.b16 %v596
      %v1976 = vunpack.c.h.b16 %v596
      %v1977 = vunpack.c.l.b16 %v597
      %v1978 = vunpack.c.h.b16 %v597
      %v1979 = vunpack.c.l.b16 %v598
      %v1980 = vunpack.c.h.b16 %v598
      %v1981 = vunpack.c.l.b16 %v599
      %v1982 = vunpack.c.h.b16 %v599
      %v1983 = vunpack.c.l.b16 %v600
      %v1984 = vunpack.c.h.b16 %v600
      %v1985 = vunpack.c.l.b16 %v601
      %v1986 = vunpack.c.h.b16 %v601
      %v1987 = vunpack.c.l.b16 %v602
      %v1988 = vunpack.c.h.b16 %v602
      %v1989 = vunpack.c.l.b16 %v603
      %v1990 = vunpack.c.h.b16 %v603
      %v1991 = vunpack.c.l.b16 %v604
      %v1992 = vunpack.c.h.b16 %v604
      %v1993 = vunpack.c.l.b16 %v605
      %v1994 = vunpack.c.h.b16 %v605
      %v1995 = vunpack.c.l.b16 %v606
      %v1996 = vunpack.c.h.b16 %v606
      %v1997 = vunpack.c.l.b16 %v607
      %v1998 = vunpack.c.h.b16 %v607
      %v1999 = vunpack.c.l.b16 %v608
      %v2000 = vunpack.c.h.b16 %v608
      %v2001 = vunpack.c.l.b16 %v609
      %v2002 = vunpack.c.h.b16 %v609
      %v2003 = vunpack.c.l.b16 %v610
      %v2004 = vunpack.c.h.b16 %v610
      %v2005 = vunpack.c.l.b16 %v611
      %v2006 = vunpack.c.h.b16 %v611
      %v2007 = vunpack.c.l.b16 %v612
      %v2008 = vunpack.c.h.b16 %v612
      %v2009 = vunpack.c.l.b16 %v613
      %v2010 = vunpack.c.h.b16 %v613
      %v2011 = vunpack.c.l.b16 %v614
      %v2012 = vunpack.c.h.b16 %v614
      %v2013 = vunpack.c.l.b16 %v615
      %v2014 = vunpack.c.h.b16 %v615
      %v2015 = vunpack.c.l.b16 %v616
      %v2016 = vunpack.c.h.b16 %v616
      %v2017 = vunpack.c.l.b16 %v617
      %v2018 = vunpack.c.h.b16 %v617
      %v2019 = vunpack.c.l.b16 %v618
      %v2020 = vunpack.c.h.b16 %v618
      %v2021 = vunpack.c.l.b16 %v619
      %v2022 = vunpack.c.h.b16 %v619
      %v2023 = vunpack.c.l.b16 %v620
      %v2024 = vunpack.c.h.b16 %v620
      %v2025 = vunpack.c.l.b16 %v621
      %v2026 = vunpack.c.h.b16 %v621
      %v2027 = vunpack.c.l.b16 %v622
      %v2028 = vunpack.c.h.b16 %v622
      %v2029 = vunpack.c.l.b16 %v623
      %v2030 = vunpack.c.h.b16 %v623
      %v2031 = vunpack.c.l.b16 %v624
      %v2032 = vunpack.c.h.b16 %v624
      %v2033 = vunpack.c.l.b16 %v625
      %v2034 = vunpack.c.h.b16 %v625
      %v2035 = vunpack.c.l.b16 %v626
      %v2036 = vunpack.c.h.b16 %v626
      %v2037 = vunpack.c.l.b16 %v627
      %v2038 = vunpack.c.h.b16 %v627
      %v2039 = vunpack.c.l.b16 %v628
      %v2040 = vunpack.c.h.b16 %v628
      %v2041 = vunpack.c.l.b16 %v629
      %v2042 = vunpack.c.h.b16 %v629
      %v2043 = vunpack.c.l.b16 %v630
      %v2044 = vunpack.c.h.b16 %v630
      %v2045 = vunpack.c.l.b16 %v631
      %v2046 = vunpack.c.h.b16 %v631
      %v2047 = vunpack.c.l.b16 %v632
      %v2048 = vunpack.c.h.b16 %v632
      %v2049 = vunpack.c.l.b16 %v633
      %v2050 = vunpack.c.h.b16 %v633
      %v2051 = vunpack.c.l.b16 %v634
      %v2052 = vunpack.c.h.b16 %v634
      %v2053 = vunpack.c.l.b16 %v635
      %v2054 = vunpack.c.h.b16 %v635
      %v2055 = vunpack.c.l.b16 %v636
      %v2056 = vunpack.c.h.b16 %v636
      %v2057 = vunpack.c.l.b16 %v637
      %v2058 = vunpack.c.h.b16 %v637
      %v2059 = vunpack.c.l.b16 %v638
      %v2060 = vunpack.c.h.b16 %v638
      %v2061 = vunpack.c.l.b16 %v639
      %v2062 = vunpack.c.h.b16 %v639
      %v2063 = vunpack.c.l.b16 %v640
      %v2064 = vunpack.c.h.b16 %v640
      %v2065 = vunpack.c.l.b16 %v641
      %v2066 = vunpack.c.h.b16 %v641
      %v2067 = vunpack.c.l.b16 %v642
      %v2068 = vunpack.c.h.b16 %v642
      %v2069 = vunpack.c.l.b16 %v643
      %v2070 = vunpack.c.h.b16 %v643
      %v2071 = vunpack.c.l.b16 %v644
      %v2072 = vunpack.c.h.b16 %v644
      %v2073 = vunpack.c.l.b16 %v645
      %v2074 = vunpack.c.h.b16 %v645
      %v2075 = vunpack.c.l.b16 %v646
      %v2076 = vunpack.c.h.b16 %v646
      %v2077 = vunpack.c.l.b16 %v647
      %v2078 = vunpack.c.h.b16 %v647
      %v2079 = vunpack.c.l.b16 %v648
      %v2080 = vunpack.c.h.b16 %v648
      %v2081 = vunpack.c.l.b16 %v649
      %v2082 = vunpack.c.h.b16 %v649
      %v2083 = vunpack.c.l.b16 %v650
      %v2084 = vunpack.c.h.b16 %v650
      %v2085 = vunpack.c.l.b16 %v651
      %v2086 = vunpack.c.h.b16 %v651
      %v2087 = vunpack.c.l.b16 %v652
      %v2088 = vunpack.c.h.b16 %v652
      %v2089 = vunpack.c.l.b16 %v653
      %v2090 = vunpack.c.h.b16 %v653
      %v2091 = vunpack.c.l.b16 %v654
      %v2092 = vunpack.c.h.b16 %v654
      %v2093 = vunpack.c.l.b16 %v655
      %v2094 = vunpack.c.h.b16 %v655
      %v2095 = vunpack.c.l.b16 %v656
      %v2096 = vunpack.c.h.b16 %v656
      %v2097 = vunpack.c.l.b16 %v657
      %v2098 = vunpack.c.h.b16 %v657
      %v2099 = vunpack.c.l.b16 %v658
      %v2100 = vunpack.c.h.b16 %v658
      %v2101 = vunpack.c.l.b16 %v659
      %v2102 = vunpack.c.h.b16 %v659
      %v2103 = vunpack.c.l.b16 %v660
      %v2104 = vunpack.c.h.b16 %v660
      %v2105 = vunpack.c.l.b16 %v661
      %v2106 = vunpack.c.h.b16 %v661
      %v2107 = vunpack.c.l.b16 %v662
      %v2108 = vunpack.c.h.b16 %v662
      %v2109 = vunpack.c.l.b16 %v663
      %v2110 = vunpack.c.h.b16 %v663
      %v2111 = vunpack.c.l.b16 %v664
      %v2112 = vunpack.c.h.b16 %v664
      %v2113 = vunpack.c.l.b16 %v665
      %v2114 = vunpack.c.h.b16 %v665
      %v2115 = vunpack.c.l.b16 %v666
      %v2116 = vunpack.c.h.b16 %v666
      %v2117 = vunpack.c.l.b16 %v667
      %v2118 = vunpack.c.h.b16 %v667
      %v2119 = vunpack.c.l.b16 %v668
      %v2120 = vunpack.c.h.b16 %v668
      %v2121 = vunpack.c.l.b16 %v669
      %v2122 = vunpack.c.h.b16 %v669
      %v2123 = vunpack.c.l.b16 %v670
      %v2124 = vunpack.c.h.b16 %v670
      %v2125 = vunpack.c.l.b16 %v671
      %v2126 = vunpack.c.h.b16 %v671
      %v2127 = vunpack.c.l.b16 %v672
      %v2128 = vunpack.c.h.b16 %v672
      %v2129 = vunpack.c.l.b16 %v673
      %v2130 = vunpack.c.h.b16 %v673
      %v2131 = vunpack.c.l.b16 %v674
      %v2132 = vunpack.c.h.b16 %v674
      %v2133 = vunpack.c.l.b16 %v675
      %v2134 = vunpack.c.h.b16 %v675
      %v2135 = vunpack.c.l.b16 %v676
      %v2136 = vunpack.c.h.b16 %v676
      %v2137 = vunpack.c.l.b16 %v677
      %v2138 = vunpack.c.h.b16 %v677
      %v2139 = vunpack.c.l.b16 %v678
      %v2140 = vunpack.c.h.b16 %v678
      %v2141 = vunpack.c.l.b16 %v679
      %v2142 = vunpack.c.h.b16 %v679
      %v2143 = vunpack.c.l.b16 %v680
      %v2144 = vunpack.c.h.b16 %v680
      %v2145 = vunpack.c.l.b16 %v681
      %v2146 = vunpack.c.h.b16 %v681
      %v2147 = vunpack.c.l.b16 %v682
      %v2148 = vunpack.c.h.b16 %v682
      %v2149 = vunpack.c.l.b16 %v683
      %v2150 = vunpack.c.h.b16 %v683
      %v2151 = vunpack.c.l.b16 %v684
      %v2152 = vunpack.c.h.b16 %v684
      %v2153 = vunpack.c.l.b16 %v685
      %v2154 = vunpack.c.h.b16 %v685
      %v2155 = vunpack.c.l.b16 %v686
      %v2156 = vunpack.c.h.b16 %v686
      %v2157 = vunpack.c.l.b16 %v687
      %v2158 = vunpack.c.h.b16 %v687
      %v2159 = vunpack.c.l.b16 %v688
      %v2160 = vunpack.c.h.b16 %v688
      %v2161 = vunpack.c.l.b16 %v689
      %v2162 = vunpack.c.h.b16 %v689
      %v2163 = vunpack.c.l.b16 %v690
      %v2164 = vunpack.c.h.b16 %v690
      %v2165 = vunpack.c.l.b16 %v691
      %v2166 = vunpack.c.h.b16 %v691
      %v2167 = vunpack.c.l.b16 %v692
      %v2168 = vunpack.c.h.b16 %v692
      %v2169 = vunpack.c.l.b16 %v693
      %v2170 = vunpack.c.h.b16 %v693
      %v2171 = vunpack.c.l.b16 %v694
      %v2172 = vunpack.c.h.b16 %v694
      %v2173 = vunpack.c.l.b16 %v695
      %v2174 = vunpack.c.h.b16 %v695
      %v2175 = vunpack.c.l.b16 %v696
      %v2176 = vunpack.c.h.b16 %v696
      %v2177 = vunpack.c.l.b16 %v697
      %v2178 = vunpack.c.h.b16 %v697
      %v2179 = vunpack.c.l.b16 %v698
      %v2180 = vunpack.c.h.b16 %v698
      %v2181 = vunpack.c.l.b16 %v699
      %v2182 = vunpack.c.h.b16 %v699
      %v2183 = vunpack.c.l.b16 %v700
      %v2184 = vunpack.c.h.b16 %v700
      %v2185 = vunpack.c.l.b16 %v701
      %v2186 = vunpack.c.h.b16 %v701
      %v2187 = vunpack.c.l.b16 %v702
      %v2188 = vunpack.c.h.b16 %v702
      %v2189 = vunpack.c.l.b16 %v703
      %v2190 = vunpack.c.h.b16 %v703
      %v2191 = vunpack.c.l.b16 %v704
      %v2192 = vunpack.c.h.b16 %v704
      %v2193 = vunpack.c.l.b16 %v705
      %v2194 = vunpack.c.h.b16 %v705
      %v2195 = vunpack.c.l.b16 %v706
      %v2196 = vunpack.c.h.b16 %v706
      %v2197 = vunpack.c.l.b16 %v707
      %v2198 = vunpack.c.h.b16 %v707
      %v2199 = vunpack.c.l.b16 %v708
      %v2200 = vunpack.c.h.b16 %v708
      %v2201 = vunpack.c.l.b16 %v709
      %v2202 = vunpack.c.h.b16 %v709
      %v2203 = vunpack.c.l.b16 %v710
      %v2204 = vunpack.c.h.b16 %v710
      %v2205 = vunpack.c.l.b16 %v711
      %v2206 = vunpack.c.h.b16 %v711
      %v2207 = vunpack.c.l.b16 %v712
      %v2208 = vunpack.c.h.b16 %v712
      %v2209 = vunpack.c.l.b16 %v713
      %v2210 = vunpack.c.h.b16 %v713
      %v2211 = vunpack.c.l.b16 %v714
      %v2212 = vunpack.c.h.b16 %v714
      %v2213 = vunpack.c.l.b16 %v715
      %v2214 = vunpack.c.h.b16 %v715
      %v2215 = vunpack.c.l.b16 %v716
      %v2216 = vunpack.c.h.b16 %v716
      %v2217 = vunpack.c.l.b16 %v717
      %v2218 = vunpack.c.h.b16 %v717
      %v2219 = vunpack.c.l.b16 %v718
      %v2220 = vunpack.c.h.b16 %v718
      %v2221 = vunpack.c.l.b16 %v719
      %v2222 = vunpack.c.h.b16 %v719
      %v2223 = vunpack.c.l.b16 %v720
      %v2224 = vunpack.c.h.b16 %v720
      %v2225 = vunpack.c.l.b16 %v721
      %v2226 = vunpack.c.h.b16 %v721
      %v2227 = vunpack.c.l.b16 %v722
      %v2228 = vunpack.c.h.b16 %v722
      %v2229 = vunpack.c.l.b16 %v723
      %v2230 = vunpack.c.h.b16 %v723
      %v2231 = vunpack.c.l.b16 %v724
      %v2232 = vunpack.c.h.b16 %v724
      %v2233 = vunpack.c.l.b16 %v725
      %v2234 = vunpack.c.h.b16 %v725
      %v2235 = vunpack.c.l.b16 %v726
      %v2236 = vunpack.c.h.b16 %v726
      %v2237 = vunpack.c.l.b16 %v727
      %v2238 = vunpack.c.h.b16 %v727
      %v2239 = vunpack.c.l.b16 %v728
      %v2240 = vunpack.c.h.b16 %v728
      %v2241 = vunpack.c.l.b16 %v729
      %v2242 = vunpack.c.h.b16 %v729
      %v2243 = vunpack.c.l.b16 %v730
      %v2244 = vunpack.c.h.b16 %v730
      %v2245 = vunpack.c.l.b16 %v731
      %v2246 = vunpack.c.h.b16 %v731
      %v2247 = vunpack.c.l.b16 %v732
      %v2248 = vunpack.c.h.b16 %v732
      %v2249 = vunpack.c.l.b16 %v733
      %v2250 = vunpack.c.h.b16 %v733
      %v2251 = vunpack.c.l.b16 %v734
      %v2252 = vunpack.c.h.b16 %v734
      %v2253 = vunpack.c.l.b16 %v735
      %v2254 = vunpack.c.h.b16 %v735
      %v2255 = vunpack.c.l.b16 %v736
      %v2256 = vunpack.c.h.b16 %v736
      %v2257 = vunpack.c.l.b16 %v737
      %v2258 = vunpack.c.h.b16 %v737
      %v2259 = vunpack.c.l.b16 %v738
      %v2260 = vunpack.c.h.b16 %v738
      %v2261 = vunpack.c.l.b16 %v739
      %v2262 = vunpack.c.h.b16 %v739
      %v2263 = vunpack.c.l.b16 %v740
      %v2264 = vunpack.c.h.b16 %v740
      %v2265 = vunpack.c.l.b16 %v741
      %v2266 = vunpack.c.h.b16 %v741
      %v2267 = vunpack.c.l.b16 %v742
      %v2268 = vunpack.c.h.b16 %v742
      %v2269 = vunpack.c.l.b16 %v743
      %v2270 = vunpack.c.h.b16 %v743
      %v2271 = vunpack.c.l.b16 %v744
      %v2272 = vunpack.c.h.b16 %v744
      %v2273 = vunpack.c.l.b16 %v745
      %v2274 = vunpack.c.h.b16 %v745
      %v2275 = vunpack.c.l.b16 %v746
      %v2276 = vunpack.c.h.b16 %v746
      %v2277 = vunpack.c.l.b16 %v747
      %v2278 = vunpack.c.h.b16 %v747
      %v2279 = vunpack.c.l.b16 %v748
      %v2280 = vunpack.c.h.b16 %v748
      %v2281 = vunpack.c.l.b16 %v749
      %v2282 = vunpack.c.h.b16 %v749
      %v2283 = vunpack.c.l.b16 %v750
      %v2284 = vunpack.c.h.b16 %v750
      %v2285 = vunpack.c.l.b16 %v751
      %v2286 = vunpack.c.h.b16 %v751
      %v2287 = vunpack.c.l.b16 %v752
      %v2288 = vunpack.c.h.b16 %v752
      %v2289 = vunpack.c.l.b16 %v753
      %v2290 = vunpack.c.h.b16 %v753
      %v2291 = vunpack.c.l.b16 %v754
      %v2292 = vunpack.c.h.b16 %v754
      %v2293 = vunpack.c.l.b16 %v755
      %v2294 = vunpack.c.h.b16 %v755
      %v2295 = vunpack.c.l.b16 %v756
      %v2296 = vunpack.c.h.b16 %v756
      %v2297 = vunpack.c.l.b16 %v757
      %v2298 = vunpack.c.h.b16 %v757
      %v2299 = vunpack.c.l.b16 %v758
      %v2300 = vunpack.c.h.b16 %v758
      %v2301 = vunpack.c.l.b16 %v759
      %v2302 = vunpack.c.h.b16 %v759
      %v2303 = vunpack.c.l.b16 %v760
      %v2304 = vunpack.c.h.b16 %v760
      %v2305 = vunpack.c.l.b16 %v761
      %v2306 = vunpack.c.h.b16 %v761
      %v2307 = vunpack.c.l.b16 %v762
      %v2308 = vunpack.c.h.b16 %v762
      %v2309 = vunpack.c.l.b16 %v763
      %v2310 = vunpack.c.h.b16 %v763
      %v2311 = vunpack.c.l.b16 %v764
      %v2312 = vunpack.c.h.b16 %v764
      %v2313 = vunpack.c.l.b16 %v765
      %v2314 = vunpack.c.h.b16 %v765
      %v2315 = vunpack.c.l.b16 %v766
      %v2316 = vunpack.c.h.b16 %v766
      %v2317 = vunpack.c.l.b16 %v767
      %v2318 = vunpack.c.h.b16 %v767
      %v2319 = vunpack.c.l.b16 %v768
      %v2320 = vunpack.c.h.b16 %v768
      %v2321 = vunpack.c.l.b16 %v769
      %v2322 = vunpack.c.h.b16 %v769
      %v2323 = vunpack.c.l.b16 %v770
      %v2324 = vunpack.c.h.b16 %v770
      %v2325 = vunpack.c.l.b16 %v771
      %v2326 = vunpack.c.h.b16 %v771
      %v2327 = vunpack.c.l.b16 %v772
      %v2328 = vunpack.c.h.b16 %v772
      %v2329 = vunpack.c.l.b16 %v773
      %v2330 = vunpack.c.h.b16 %v773
      %v2331 = vunpack.c.l.b16 %v774
      %v2332 = vunpack.c.h.b16 %v774
      %v2333 = vunpack.c.l.b16 %v775
      %v2334 = vunpack.c.h.b16 %v775
      %v2335 = vunpack.c.l.b16 %v776
      %v2336 = vunpack.c.h.b16 %v776
      %v2337 = vunpack.c.l.b16 %v777
      %v2338 = vunpack.c.h.b16 %v777
      %v2339 = vunpack.c.l.b16 %v778
      %v2340 = vunpack.c.h.b16 %v778
      %v2341 = vunpack.c.l.b16 %v779
      %v2342 = vunpack.c.h.b16 %v779
      %v2343 = vunpack.c.l.b16 %v780
      %v2344 = vunpack.c.h.b16 %v780
      %v2345 = vunpack.c.l.b16 %v781
      %v2346 = vunpack.c.h.b16 %v781
      %v2347 = vunpack.c.l.b16 %v782
      %v2348 = vunpack.c.h.b16 %v782
      %v2349 = vunpack.c.l.b16 %v783
      %v2350 = vunpack.c.h.b16 %v783
      %v2351 = vunpack.c.l.b16 %v784
      %v2352 = vunpack.c.h.b16 %v784
      %v2353 = vunpack.c.l.b16 %v785
      %v2354 = vunpack.c.h.b16 %v785
      %v2355 = vunpack.c.l.b16 %v786
      %v2356 = vunpack.c.h.b16 %v786
      %v2357 = vunpack.c.l.b16 %v787
      %v2358 = vunpack.c.h.b16 %v787
      %v2359 = vunpack.c.l.b16 %v788
      %v2360 = vunpack.c.h.b16 %v788
      %v2361 = vunpack.c.l.b16 %v789
      %v2362 = vunpack.c.h.b16 %v789
      %v2363 = vunpack.c.l.b16 %v790
      %v2364 = vunpack.c.h.b16 %v790
      %v2365 = vunpack.c.l.b16 %v791
      %v2366 = vunpack.c.h.b16 %v791
      %v2367 = vunpack.c.l.b16 %v792
      %v2368 = vunpack.c.h.b16 %v792
      %v2369 = vunpack.c.l.b16 %v793
      %v2370 = vunpack.c.h.b16 %v793
      %v2371 = vunpack.c.l.b16 %v794
      %v2372 = vunpack.c.h.b16 %v794
      %v2373 = vunpack.c.l.b16 %v795
      %v2374 = vunpack.c.h.b16 %v795
      %v2375 = vunpack.c.l.b16 %v796
      %v2376 = vunpack.c.h.b16 %v796
      %v2377 = vunpack.c.l.b16 %v797
      %v2378 = vunpack.c.h.b16 %v797
      %v2379 = vunpack.c.l.b16 %v798
      %v2380 = vunpack.c.h.b16 %v798
      %v2381 = vunpack.c.l.b16 %v799
      %v2382 = vunpack.c.h.b16 %v799
      %v2383 = vunpack.c.l.b16 %v800
      %v2384 = vunpack.c.h.b16 %v800
      %v2385 = vunpack.c.l.b16 %v801
      %v2386 = vunpack.c.h.b16 %v801
      %v2387 = vunpack.c.l.b16 %v802
      %v2388 = vunpack.c.h.b16 %v802
      %v2389 = vunpack.c.l.b16 %v803
      %v2390 = vunpack.c.h.b16 %v803
      %v2391 = vunpack.c.l.b16 %v804
      %v2392 = vunpack.c.h.b16 %v804
      %v2393 = vunpack.c.l.b16 %v805
      %v2394 = vunpack.c.h.b16 %v805
      %v2395 = vunpack.c.l.b16 %v806
      %v2396 = vunpack.c.h.b16 %v806
      %v2397 = vunpack.c.l.b16 %v807
      %v2398 = vunpack.c.h.b16 %v807
      %v2399 = vunpack.c.l.b16 %v808
      %v2400 = vunpack.c.h.b16 %v808
      %v2401 = vpack.c.b16 %v1381, %v1377
      %v2402 = vpack.c.b16 %v1382, %v1378
      %v2403 = vpack.c.b16 %v1383, %v1379
      %v2404 = vpack.c.b16 %v1384, %v1380
      %v2405 = vpack.c.b16 %v1389, %v1385
      %v2406 = vpack.c.b16 %v1390, %v1386
      %v2407 = vpack.c.b16 %v1391, %v1387
      %v2408 = vpack.c.b16 %v1392, %v1388
      %v2409 = vpack.c.b16 %v1397, %v1393
      %v2410 = vpack.c.b16 %v1398, %v1394
      %v2411 = vpack.c.b16 %v1399, %v1395
      %v2412 = vpack.c.b16 %v1400, %v1396
      %v2413 = vpack.c.b16 %v1405, %v1401
      %v2414 = vpack.c.b16 %v1406, %v1402
      %v2415 = vpack.c.b16 %v1407, %v1403
      %v2416 = vpack.c.b16 %v1408, %v1404
      %v2417 = vpack.c.b16 %v1413, %v1409
      %v2418 = vpack.c.b16 %v1414, %v1410
      %v2419 = vpack.c.b16 %v1415, %v1411
      %v2420 = vpack.c.b16 %v1416, %v1412
      %v2421 = vpack.c.b16 %v1421, %v1417
      %v2422 = vpack.c.b16 %v1422, %v1418
      %v2423 = vpack.c.b16 %v1423, %v1419
      %v2424 = vpack.c.b16 %v1424, %v1420
      %v2425 = vpack.c.b16 %v1429, %v1425
      %v2426 = vpack.c.b16 %v1430, %v1426
      %v2427 = vpack.c.b16 %v1431, %v1427
      %v2428 = vpack.c.b16 %v1432, %v1428
      %v2429 = vpack.c.b16 %v1437, %v1433
      %v2430 = vpack.c.b16 %v1438, %v1434
      %v2431 = vpack.c.b16 %v1439, %v1435
      %v2432 = vpack.c.b16 %v1440, %v1436
      %v2433 = vpack.c.b16 %v1445, %v1441
      %v2434 = vpack.c.b16 %v1446, %v1442
      %v2435 = vpack.c.b16 %v1447, %v1443
      %v2436 = vpack.c.b16 %v1448, %v1444
      %v2437 = vpack.c.b16 %v1453, %v1449
      %v2438 = vpack.c.b16 %v1454, %v1450
      %v2439 = vpack.c.b16 %v1455, %v1451
      %v2440 = vpack.c.b16 %v1456, %v1452
      %v2441 = vpack.c.b16 %v1461, %v1457
      %v2442 = vpack.c.b16 %v1462, %v1458
      %v2443 = vpack.c.b16 %v1463, %v1459
      %v2444 = vpack.c.b16 %v1464, %v1460
      %v2445 = vpack.c.b16 %v1469, %v1465
      %v2446 = vpack.c.b16 %v1470, %v1466
      %v2447 = vpack.c.b16 %v1471, %v1467
      %v2448 = vpack.c.b16 %v1472, %v1468
      %v2449 = vpack.c.b16 %v1477, %v1473
      %v2450 = vpack.c.b16 %v1478, %v1474
      %v2451 = vpack.c.b16 %v1479, %v1475
      %v2452 = vpack.c.b16 %v1480, %v1476
      %v2453 = vpack.c.b16 %v1485, %v1481
      %v2454 = vpack.c.b16 %v1486, %v1482
      %v2455 = vpack.c.b16 %v1487, %v1483
      %v2456 = vpack.c.b16 %v1488, %v1484
      %v2457 = vpack.c.b16 %v1493, %v1489
      %v2458 = vpack.c.b16 %v1494, %v1490
      %v2459 = vpack.c.b16 %v1495, %v1491
      %v2460 = vpack.c.b16 %v1496, %v1492
      %v2461 = vpack.c.b16 %v1501, %v1497
      %v2462 = vpack.c.b16 %v1502, %v1498
      %v2463 = vpack.c.b16 %v1503, %v1499
      %v2464 = vpack.c.b16 %v1504, %v1500
      %v2465 = vpack.c.b16 %v1509, %v1505
      %v2466 = vpack.c.b16 %v1510, %v1506
      %v2467 = vpack.c.b16 %v1511, %v1507
      %v2468 = vpack.c.b16 %v1512, %v1508
      %v2469 = vpack.c.b16 %v1517, %v1513
      %v2470 = vpack.c.b16 %v1518, %v1514
      %v2471 = vpack.c.b16 %v1519, %v1515
      %v2472 = vpack.c.b16 %v1520, %v1516
      %v2473 = vpack.c.b16 %v1525, %v1521
      %v2474 = vpack.c.b16 %v1526, %v1522
      %v2475 = vpack.c.b16 %v1527, %v1523
      %v2476 = vpack.c.b16 %v1528, %v1524
      %v2477 = vpack.c.b16 %v1533, %v1529
      %v2478 = vpack.c.b16 %v1534, %v1530
      %v2479 = vpack.c.b16 %v1535, %v1531
      %v2480 = vpack.c.b16 %v1536, %v1532
      %v2481 = vpack.c.b16 %v1541, %v1537
      %v2482 = vpack.c.b16 %v1542, %v1538
      %v2483 = vpack.c.b16 %v1543, %v1539
      %v2484 = vpack.c.b16 %v1544, %v1540
      %v2485 = vpack.c.b16 %v1549, %v1545
      %v2486 = vpack.c.b16 %v1550, %v1546
      %v2487 = vpack.c.b16 %v1551, %v1547
      %v2488 = vpack.c.b16 %v1552, %v1548
      %v2489 = vpack.c.b16 %v1557, %v1553
      %v2490 = vpack.c.b16 %v1558, %v1554
      %v2491 = vpack.c.b16 %v1559, %v1555
      %v2492 = vpack.c.b16 %v1560, %v1556
      %v2493 = vpack.c.b16 %v1565, %v1561
      %v2494 = vpack.c.b16 %v1566, %v1562
      %v2495 = vpack.c.b16 %v1567, %v1563
      %v2496 = vpack.c.b16 %v1568, %v1564
      %v2497 = vpack.c.b16 %v1573, %v1569
      %v2498 = vpack.c.b16 %v1574, %v1570
      %v2499 = vpack.c.b16 %v1575, %v1571
      %v2500 = vpack.c.b16 %v1576, %v1572
      %v2501 = vpack.c.b16 %v1581, %v1577
      %v2502 = vpack.c.b16 %v1582, %v1578
      %v2503 = vpack.c.b16 %v1583, %v1579
      %v2504 = vpack.c.b16 %v1584, %v1580
      %v2505 = vpack.c.b16 %v1589, %v1585
      %v2506 = vpack.c.b16 %v1590, %v1586
      %v2507 = vpack.c.b16 %v1591, %v1587
      %v2508 = vpack.c.b16 %v1592, %v1588
      %v2509 = vpack.c.b16 %v1597, %v1593
      %v2510 = vpack.c.b16 %v1598, %v1594
      %v2511 = vpack.c.b16 %v1599, %v1595
      %v2512 = vpack.c.b16 %v1600, %v1596
      %v2513 = vpack.c.b16 %v1605, %v1601
      %v2514 = vpack.c.b16 %v1606, %v1602
      %v2515 = vpack.c.b16 %v1607, %v1603
      %v2516 = vpack.c.b16 %v1608, %v1604
      %v2517 = vpack.c.b16 %v1613, %v1609
      %v2518 = vpack.c.b16 %v1614, %v1610
      %v2519 = vpack.c.b16 %v1615, %v1611
      %v2520 = vpack.c.b16 %v1616, %v1612
      %v2521 = vpack.c.b16 %v1621, %v1617
      %v2522 = vpack.c.b16 %v1622, %v1618
      %v2523 = vpack.c.b16 %v1623, %v1619
      %v2524 = vpack.c.b16 %v1624, %v1620
      %v2525 = vpack.c.b16 %v1629, %v1625
      %v2526 = vpack.c.b16 %v1630, %v1626
      %v2527 = vpack.c.b16 %v1631, %v1627
      %v2528 = vpack.c.b16 %v1632, %v1628
      %v2529 = vpack.c.b16 %v1637, %v1633
      %v2530 = vpack.c.b16 %v1638, %v1634
      %v2531 = vpack.c.b16 %v1639, %v1635
      %v2532 = vpack.c.b16 %v1640, %v1636
      %v2533 = vpack.c.b16 %v1645, %v1641
      %v2534 = vpack.c.b16 %v1646, %v1642
      %v2535 = vpack.c.b16 %v1647, %v1643
      %v2536 = vpack.c.b16 %v1648, %v1644
      %v2537 = vpack.c.b16 %v1653, %v1649
      %v2538 = vpack.c.b16 %v1654, %v1650
      %v2539 = vpack.c.b16 %v1655, %v1651
      %v2540 = vpack.c.b16 %v1656, %v1652
      %v2541 = vpack.c.b16 %v1661, %v1657
      %v2542 = vpack.c.b16 %v1662, %v1658
      %v2543 = vpack.c.b16 %v1663, %v1659
      %v2544 = vpack.c.b16 %v1664, %v1660
      %v2545 = vpack.c.b16 %v1669, %v1665
      %v2546 = vpack.c.b16 %v1670, %v1666
      %v2547 = vpack.c.b16 %v1671, %v1667
      %v2548 = vpack.c.b16 %v1672, %v1668
      %v2549 = vpack.c.b16 %v1677, %v1673
      %v2550 = vpack.c.b16 %v1678, %v1674
      %v2551 = vpack.c.b16 %v1679, %v1675
      %v2552 = vpack.c.b16 %v1680, %v1676
      %v2553 = vpack.c.b16 %v1685, %v1681
      %v2554 = vpack.c.b16 %v1686, %v1682
      %v2555 = vpack.c.b16 %v1687, %v1683
      %v2556 = vpack.c.b16 %v1688, %v1684
      %v2557 = vpack.c.b16 %v1693, %v1689
      %v2558 = vpack.c.b16 %v1694, %v1690
      %v2559 = vpack.c.b16 %v1695, %v1691
      %v2560 = vpack.c.b16 %v1696, %v1692
      %v2561 = vpack.c.b16 %v1701, %v1697
      %v2562 = vpack.c.b16 %v1702, %v1698
      %v2563 = vpack.c.b16 %v1703, %v1699
      %v2564 = vpack.c.b16 %v1704, %v1700
      %v2565 = vpack.c.b16 %v1709, %v1705
      %v2566 = vpack.c.b16 %v1710, %v1706
      %v2567 = vpack.c.b16 %v1711, %v1707
      %v2568 = vpack.c.b16 %v1712, %v1708
      %v2569 = vpack.c.b16 %v1717, %v1713
      %v2570 = vpack.c.b16 %v1718, %v1714
      %v2571 = vpack.c.b16 %v1719, %v1715
      %v2572 = vpack.c.b16 %v1720, %v1716
      %v2573 = vpack.c.b16 %v1725, %v1721
      %v2574 = vpack.c.b16 %v1726, %v1722
      %v2575 = vpack.c.b16 %v1727, %v1723
      %v2576 = vpack.c.b16 %v1728, %v1724
      %v2577 = vpack.c.b16 %v1733, %v1729
      %v2578 = vpack.c.b16 %v1734, %v1730
      %v2579 = vpack.c.b16 %v1735, %v1731
      %v2580 = vpack.c.b16 %v1736, %v1732
      %v2581 = vpack.c.b16 %v1741, %v1737
      %v2582 = vpack.c.b16 %v1742, %v1738
      %v2583 = vpack.c.b16 %v1743, %v1739
      %v2584 = vpack.c.b16 %v1744, %v1740
      %v2585 = vpack.c.b16 %v1749, %v1745
      %v2586 = vpack.c.b16 %v1750, %v1746
      %v2587 = vpack.c.b16 %v1751, %v1747
      %v2588 = vpack.c.b16 %v1752, %v1748
      %v2589 = vpack.c.b16 %v1757, %v1753
      %v2590 = vpack.c.b16 %v1758, %v1754
      %v2591 = vpack.c.b16 %v1759, %v1755
      %v2592 = vpack.c.b16 %v1760, %v1756
      %v2593 = vpack.c.b16 %v1765, %v1761
      %v2594 = vpack.c.b16 %v1766, %v1762
      %v2595 = vpack.c.b16 %v1767, %v1763
      %v2596 = vpack.c.b16 %v1768, %v1764
      %v2597 = vpack.c.b16 %v1773, %v1769
      %v2598 = vpack.c.b16 %v1774, %v1770
      %v2599 = vpack.c.b16 %v1775, %v1771
      %v2600 = vpack.c.b16 %v1776, %v1772
      %v2601 = vpack.c.b16 %v1781, %v1777
      %v2602 = vpack.c.b16 %v1782, %v1778
      %v2603 = vpack.c.b16 %v1783, %v1779
      %v2604 = vpack.c.b16 %v1784, %v1780
      %v2605 = vpack.c.b16 %v1789, %v1785
      %v2606 = vpack.c.b16 %v1790, %v1786
      %v2607 = vpack.c.b16 %v1791, %v1787
      %v2608 = vpack.c.b16 %v1792, %v1788
      %v2609 = vpack.c.b16 %v1797, %v1793
      %v2610 = vpack.c.b16 %v1798, %v1794
      %v2611 = vpack.c.b16 %v1799, %v1795
      %v2612 = vpack.c.b16 %v1800, %v1796
      %v2613 = vpack.c.b16 %v1805, %v1801
      %v2614 = vpack.c.b16 %v1806, %v1802
      %v2615 = vpack.c.b16 %v1807, %v1803
      %v2616 = vpack.c.b16 %v1808, %v1804
      %v2617 = vpack.c.b16 %v1813, %v1809
      %v2618 = vpack.c.b16 %v1814, %v1810
      %v2619 = vpack.c.b16 %v1815, %v1811
      %v2620 = vpack.c.b16 %v1816, %v1812
      %v2621 = vpack.c.b16 %v1821, %v1817
      %v2622 = vpack.c.b16 %v1822, %v1818
      %v2623 = vpack.c.b16 %v1823, %v1819
      %v2624 = vpack.c.b16 %v1824, %v1820
      %v2625 = vpack.c.b16 %v1829, %v1825
      %v2626 = vpack.c.b16 %v1830, %v1826
      %v2627 = vpack.c.b16 %v1831, %v1827
      %v2628 = vpack.c.b16 %v1832, %v1828
      %v2629 = vpack.c.b16 %v1837, %v1833
      %v2630 = vpack.c.b16 %v1838, %v1834
      %v2631 = vpack.c.b16 %v1839, %v1835
      %v2632 = vpack.c.b16 %v1840, %v1836
      %v2633 = vpack.c.b16 %v1845, %v1841
      %v2634 = vpack.c.b16 %v1846, %v1842
      %v2635 = vpack.c.b16 %v1847, %v1843
      %v2636 = vpack.c.b16 %v1848, %v1844
      %v2637 = vpack.c.b16 %v1853, %v1849
      %v2638 = vpack.c.b16 %v1854, %v1850
      %v2639 = vpack.c.b16 %v1855, %v1851
      %v2640 = vpack.c.b16 %v1856, %v1852
      %v2641 = vpack.c.b16 %v1861, %v1857
      %v2642 = vpack.c.b16 %v1862, %v1858
      %v2643 = vpack.c.b16 %v1863, %v1859
      %v2644 = vpack.c.b16 %v1864, %v1860
      %v2645 = vpack.c.b16 %v1869, %v1865
      %v2646 = vpack.c.b16 %v1870, %v1866
      %v2647 = vpack.c.b16 %v1871, %v1867
      %v2648 = vpack.c.b16 %v1872, %v1868
      %v2649 = vpack.c.b16 %v1877, %v1873
      %v2650 = vpack.c.b16 %v1878, %v1874
      %v2651 = vpack.c.b16 %v1879, %v1875
      %v2652 = vpack.c.b16 %v1880, %v1876
      %v2653 = vpack.c.b16 %v1885, %v1881
      %v2654 = vpack.c.b16 %v1886, %v1882
      %v2655 = vpack.c.b16 %v1887, %v1883
      %v2656 = vpack.c.b16 %v1888, %v1884
      %v2657 = vpack.c.b16 %v1893, %v1889
      %v2658 = vpack.c.b16 %v1894, %v1890
      %v2659 = vpack.c.b16 %v1895, %v1891
      %v2660 = vpack.c.b16 %v1896, %v1892
      %v2661 = vpack.c.b16 %v1901, %v1897
      %v2662 = vpack.c.b16 %v1902, %v1898
      %v2663 = vpack.c.b16 %v1903, %v1899
      %v2664 = vpack.c.b16 %v1904, %v1900
      %v2665 = vpack.c.b16 %v1909, %v1905
      %v2666 = vpack.c.b16 %v1910, %v1906
      %v2667 = vpack.c.b16 %v1911, %v1907
      %v2668 = vpack.c.b16 %v1912, %v1908
      %v2669 = vpack.c.b16 %v1917, %v1913
      %v2670 = vpack.c.b16 %v1918, %v1914
      %v2671 = vpack.c.b16 %v1919, %v1915
      %v2672 = vpack.c.b16 %v1920, %v1916
      %v2673 = vpack.c.b16 %v1925, %v1921
      %v2674 = vpack.c.b16 %v1926, %v1922
      %v2675 = vpack.c.b16 %v1927, %v1923
      %v2676 = vpack.c.b16 %v1928, %v1924
      %v2677 = vpack.c.b16 %v1933, %v1929
      %v2678 = vpack.c.b16 %v1934, %v1930
      %v2679 = vpack.c.b16 %v1935, %v1931
      %v2680 = vpack.c.b16 %v1936, %v1932
      %v2681 = vpack.c.b16 %v1941, %v1937
      %v2682 = vpack.c.b16 %v1942, %v1938
      %v2683 = vpack.c.b16 %v1943, %v1939
      %v2684 = vpack.c.b16 %v1944, %v1940
      %v2685 = vpack.c.b16 %v1949, %v1945
      %v2686 = vpack.c.b16 %v1950, %v1946
      %v2687 = vpack.c.b16 %v1951, %v1947
      %v2688 = vpack.c.b16 %v1952, %v1948
      %v2689 = vpack.c.b16 %v1957, %v1953
      %v2690 = vpack.c.b16 %v1958, %v1954
      %v2691 = vpack.c.b16 %v1959, %v1955
      %v2692 = vpack.c.b16 %v1960, %v1956
      %v2693 = vpack.c.b16 %v1965, %v1961
      %v2694 = vpack.c.b16 %v1966, %v1962
      %v2695 = vpack.c.b16 %v1967, %v1963
      %v2696 = vpack.c.b16 %v1968, %v1964
      %v2697 = vpack.c.b16 %v1973, %v1969
      %v2698 = vpack.c.b16 %v1974, %v1970
      %v2699 = vpack.c.b16 %v1975, %v1971
      %v2700 = vpack.c.b16 %v1976, %v1972
      %v2701 = vpack.c.b16 %v1981, %v1977
      %v2702 = vpack.c.b16 %v1982, %v1978
      %v2703 = vpack.c.b16 %v1983, %v1979
      %v2704 = vpack.c.b16 %v1984, %v1980
      %v2705 = vpack.c.b16 %v1989, %v1985
      %v2706 = vpack.c.b16 %v1990, %v1986
      %v2707 = vpack.c.b16 %v1991, %v1987
      %v2708 = vpack.c.b16 %v1992, %v1988
      %v2709 = vpack.c.b16 %v1997, %v1993
      %v2710 = vpack.c.b16 %v1998, %v1994
      %v2711 = vpack.c.b16 %v1999, %v1995
      %v2712 = vpack.c.b16 %v2000, %v1996
      %v2713 = vpack.c.b16 %v2005, %v2001
      %v2714 = vpack.c.b16 %v2006, %v2002
      %v2715 = vpack.c.b16 %v2007, %v2003
      %v2716 = vpack.c.b16 %v2008, %v2004
      %v2717 = vpack.c.b16 %v2013, %v2009
      %v2718 = vpack.c.b16 %v2014, %v2010
      %v2719 = vpack.c.b16 %v2015, %v2011
      %v2720 = vpack.c.b16 %v2016, %v2012
      %v2721 = vpack.c.b16 %v2021, %v2017
      %v2722 = vpack.c.b16 %v2022, %v2018
      %v2723 = vpack.c.b16 %v2023, %v2019
      %v2724 = vpack.c.b16 %v2024, %v2020
      %v2725 = vpack.c.b16 %v2029, %v2025
      %v2726 = vpack.c.b16 %v2030, %v2026
      %v2727 = vpack.c.b16 %v2031, %v2027
      %v2728 = vpack.c.b16 %v2032, %v2028
      %v2729 = vpack.c.b16 %v2037, %v2033
      %v2730 = vpack.c.b16 %v2038, %v2034
      %v2731 = vpack.c.b16 %v2039, %v2035
      %v2732 = vpack.c.b16 %v2040, %v2036
      %v2733 = vpack.c.b16 %v2045, %v2041
      %v2734 = vpack.c.b16 %v2046, %v2042
      %v2735 = vpack.c.b16 %v2047, %v2043
      %v2736 = vpack.c.b16 %v2048, %v2044
      %v2737 = vpack.c.b16 %v2053, %v2049
      %v2738 = vpack.c.b16 %v2054, %v2050
      %v2739 = vpack.c.b16 %v2055, %v2051
      %v2740 = vpack.c.b16 %v2056, %v2052
      %v2741 = vpack.c.b16 %v2061, %v2057
      %v2742 = vpack.c.b16 %v2062, %v2058
      %v2743 = vpack.c.b16 %v2063, %v2059
      %v2744 = vpack.c.b16 %v2064, %v2060
      %v2745 = vpack.c.b16 %v2069, %v2065
      %v2746 = vpack.c.b16 %v2070, %v2066
      %v2747 = vpack.c.b16 %v2071, %v2067
      %v2748 = vpack.c.b16 %v2072, %v2068
      %v2749 = vpack.c.b16 %v2077, %v2073
      %v2750 = vpack.c.b16 %v2078, %v2074
      %v2751 = vpack.c.b16 %v2079, %v2075
      %v2752 = vpack.c.b16 %v2080, %v2076
      %v2753 = vpack.c.b16 %v2085, %v2081
      %v2754 = vpack.c.b16 %v2086, %v2082
      %v2755 = vpack.c.b16 %v2087, %v2083
      %v2756 = vpack.c.b16 %v2088, %v2084
      %v2757 = vpack.c.b16 %v2093, %v2089
      %v2758 = vpack.c.b16 %v2094, %v2090
      %v2759 = vpack.c.b16 %v2095, %v2091
      %v2760 = vpack.c.b16 %v2096, %v2092
      %v2761 = vpack.c.b16 %v2101, %v2097
      %v2762 = vpack.c.b16 %v2102, %v2098
      %v2763 = vpack.c.b16 %v2103, %v2099
      %v2764 = vpack.c.b16 %v2104, %v2100
      %v2765 = vpack.c.b16 %v2109, %v2105
      %v2766 = vpack.c.b16 %v2110, %v2106
      %v2767 = vpack.c.b16 %v2111, %v2107
      %v2768 = vpack.c.b16 %v2112, %v2108
      %v2769 = vpack.c.b16 %v2117, %v2113
      %v2770 = vpack.c.b16 %v2118, %v2114
      %v2771 = vpack.c.b16 %v2119, %v2115
      %v2772 = vpack.c.b16 %v2120, %v2116
      %v2773 = vpack.c.b16 %v2125, %v2121
      %v2774 = vpack.c.b16 %v2126, %v2122
      %v2775 = vpack.c.b16 %v2127, %v2123
      %v2776 = vpack.c.b16 %v2128, %v2124
      %v2777 = vpack.c.b16 %v2133, %v2129
      %v2778 = vpack.c.b16 %v2134, %v2130
      %v2779 = vpack.c.b16 %v2135, %v2131
      %v2780 = vpack.c.b16 %v2136, %v2132
      %v2781 = vpack.c.b16 %v2141, %v2137
      %v2782 = vpack.c.b16 %v2142, %v2138
      %v2783 = vpack.c.b16 %v2143, %v2139
      %v2784 = vpack.c.b16 %v2144, %v2140
      %v2785 = vpack.c.b16 %v2149, %v2145
      %v2786 = vpack.c.b16 %v2150, %v2146
      %v2787 = vpack.c.b16 %v2151, %v2147
      %v2788 = vpack.c.b16 %v2152, %v2148
      %v2789 = vpack.c.b16 %v2157, %v2153
      %v2790 = vpack.c.b16 %v2158, %v2154
      %v2791 = vpack.c.b16 %v2159, %v2155
      %v2792 = vpack.c.b16 %v2160, %v2156
      %v2793 = vpack.c.b16 %v2165, %v2161
      %v2794 = vpack.c.b16 %v2166, %v2162
      %v2795 = vpack.c.b16 %v2167, %v2163
      %v2796 = vpack.c.b16 %v2168, %v2164
      %v2797 = vpack.c.b16 %v2173, %v2169
      %v2798 = vpack.c.b16 %v2174, %v2170
      %v2799 = vpack.c.b16 %v2175, %v2171
      %v2800 = vpack.c.b16 %v2176, %v2172
      %v2801 = vpack.c.b16 %v2181, %v2177
      %v2802 = vpack.c.b16 %v2182, %v2178
      %v2803 = vpack.c.b16 %v2183, %v2179
      %v2804 = vpack.c.b16 %v2184, %v2180
      %v2805 = vpack.c.b16 %v2189, %v2185
      %v2806 = vpack.c.b16 %v2190, %v2186
      %v2807 = vpack.c.b16 %v2191, %v2187
      %v2808 = vpack.c.b16 %v2192, %v2188
      %v2809 = vpack.c.b16 %v2197, %v2193
      %v2810 = vpack.c.b16 %v2198, %v2194
      %v2811 = vpack.c.b16 %v2199, %v2195
      %v2812 = vpack.c.b16 %v2200, %v2196
      %v2813 = vpack.c.b16 %v2205, %v2201
      %v2814 = vpack.c.b16 %v2206, %v2202
      %v2815 = vpack.c.b16 %v2207, %v2203
      %v2816 = vpack.c.b16 %v2208, %v2204
      %v2817 = vpack.c.b16 %v2213, %v2209
      %v2818 = vpack.c.b16 %v2214, %v2210
      %v2819 = vpack.c.b16 %v2215, %v2211
      %v2820 = vpack.c.b16 %v2216, %v2212
      %v2821 = vpack.c.b16 %v2221, %v2217
      %v2822 = vpack.c.b16 %v2222, %v2218
      %v2823 = vpack.c.b16 %v2223, %v2219
      %v2824 = vpack.c.b16 %v2224, %v2220
      %v2825 = vpack.c.b16 %v2229, %v2225
      %v2826 = vpack.c.b16 %v2230, %v2226
      %v2827 = vpack.c.b16 %v2231, %v2227
      %v2828 = vpack.c.b16 %v2232, %v2228
      %v2829 = vpack.c.b16 %v2237, %v2233
      %v2830 = vpack.c.b16 %v2238, %v2234
      %v2831 = vpack.c.b16 %v2239, %v2235
      %v2832 = vpack.c.b16 %v2240, %v2236
      %v2833 = vpack.c.b16 %v2245, %v2241
      %v2834 = vpack.c.b16 %v2246, %v2242
      %v2835 = vpack.c.b16 %v2247, %v2243
      %v2836 = vpack.c.b16 %v2248, %v2244
      %v2837 = vpack.c.b16 %v2253, %v2249
      %v2838 = vpack.c.b16 %v2254, %v2250
      %v2839 = vpack.c.b16 %v2255, %v2251
      %v2840 = vpack.c.b16 %v2256, %v2252
      %v2841 = vpack.c.b16 %v2261, %v2257
      %v2842 = vpack.c.b16 %v2262, %v2258
      %v2843 = vpack.c.b16 %v2263, %v2259
      %v2844 = vpack.c.b16 %v2264, %v2260
      %v2845 = vpack.c.b16 %v2269, %v2265
      %v2846 = vpack.c.b16 %v2270, %v2266
      %v2847 = vpack.c.b16 %v2271, %v2267
      %v2848 = vpack.c.b16 %v2272, %v2268
      %v2849 = vpack.c.b16 %v2277, %v2273
      %v2850 = vpack.c.b16 %v2278, %v2274
      %v2851 = vpack.c.b16 %v2279, %v2275
      %v2852 = vpack.c.b16 %v2280, %v2276
      %v2853 = vpack.c.b16 %v2285, %v2281
      %v2854 = vpack.c.b16 %v2286, %v2282
      %v2855 = vpack.c.b16 %v2287, %v2283
      %v2856 = vpack.c.b16 %v2288, %v2284
      %v2857 = vpack.c.b16 %v2293, %v2289
      %v2858 = vpack.c.b16 %v2294, %v2290
      %v2859 = vpack.c.b16 %v2295, %v2291
      %v2860 = vpack.c.b16 %v2296, %v2292
      %v2861 = vpack.c.b16 %v2301, %v2297
      %v2862 = vpack.c.b16 %v2302, %v2298
      %v2863 = vpack.c.b16 %v2303, %v2299
      %v2864 = vpack.c.b16 %v2304, %v2300
      %v2865 = vpack.c.b16 %v2309, %v2305
      %v2866 = vpack.c.b16 %v2310, %v2306
      %v2867 = vpack.c.b16 %v2311, %v2307
      %v2868 = vpack.c.b16 %v2312, %v2308
      %v2869 = vpack.c.b16 %v2317, %v2313
      %v2870 = vpack.c.b16 %v2318, %v2314
      %v2871 = vpack.c.b16 %v2319, %v2315
      %v2872 = vpack.c.b16 %v2320, %v2316
      %v2873 = vpack.c.b16 %v2325, %v2321
      %v2874 = vpack.c.b16 %v2326, %v2322
      %v2875 = vpack.c.b16 %v2327, %v2323
      %v2876 = vpack.c.b16 %v2328, %v2324
      %v2877 = vpack.c.b16 %v2333, %v2329
      %v2878 = vpack.c.b16 %v2334, %v2330
      %v2879 = vpack.c.b16 %v2335, %v2331
      %v2880 = vpack.c.b16 %v2336, %v2332
      %v2881 = vpack.c.b16 %v2341, %v2337
      %v2882 = vpack.c.b16 %v2342, %v2338
      %v2883 = vpack.c.b16 %v2343, %v2339
      %v2884 = vpack.c.b16 %v2344, %v2340
      %v2885 = vpack.c.b16 %v2349, %v2345
      %v2886 = vpack.c.b16 %v2350, %v2346
      %v2887 = vpack.c.b16 %v2351, %v2347
      %v2888 = vpack.c.b16 %v2352, %v2348
      %v2889 = vpack.c.b16 %v2357, %v2353
      %v2890 = vpack.c.b16 %v2358, %v2354
      %v2891 = vpack.c.b16 %v2359, %v2355
      %v2892 = vpack.c.b16 %v2360, %v2356
      %v2893 = vpack.c.b16 %v2365, %v2361
      %v2894 = vpack.c.b16 %v2366, %v2362
      %v2895 = vpack.c.b16 %v2367, %v2363
      %v2896 = vpack.c.b16 %v2368, %v2364
      %v2897 = vpack.c.b16 %v2373, %v2369
      %v2898 = vpack.c.b16 %v2374, %v2370
      %v2899 = vpack.c.b16 %v2375, %v2371
      %v2900 = vpack.c.b16 %v2376, %v2372
      %v2901 = vpack.c.b16 %v2381, %v2377
      %v2902 = vpack.c.b16 %v2382, %v2378
      %v2903 = vpack.c.b16 %v2383, %v2379
      %v2904 = vpack.c.b16 %v2384, %v2380
      %v2905 = vpack.c.b16 %v2389, %v2385
      %v2906 = vpack.c.b16 %v2390, %v2386
      %v2907 = vpack.c.b16 %v2391, %v2387
      %v2908 = vpack.c.b16 %v2392, %v2388
      %v2909 = vpack.c.b16 %v2397, %v2393
      %v2910 = vpack.c.b16 %v2398, %v2394
      %v2911 = vpack.c.b16 %v2399, %v2395
      %v2912 = vpack.c.b16 %v2400, %v2396
      %3425 = vmatprep.subr.bf16.mxu0 %v2430
      %3426 = vmatpush1.bf16.msra.mxu0 %v2429
      %3427 = vmatprep.subr.bf16.mxu0 %v2426
      %3428 = vmatpush1.bf16.msra.mxu0 %v2425
      %3429 = vmatprep.subr.bf16.mxu0 %v2422
      %3430 = vmatpush1.bf16.msra.mxu0 %v2421
      %3431 = vmatprep.subr.bf16.mxu0 %v2418
      %3432 = vmatpush1.bf16.msra.mxu0 %v2417
      %3433 = vmatprep.subr.bf16.mxu0 %v2414
      %3434 = vmatpush1.bf16.msra.mxu0 %v2413
      %3435 = vmatprep.subr.bf16.mxu0 %v2410
      %3436 = vmatpush1.bf16.msra.mxu0 %v2409
      %3437 = vmatprep.subr.bf16.mxu0 %v2406
      %3438 = vmatpush1.bf16.msra.mxu0 %v2405
      %3439 = vmatprep.subr.bf16.mxu0 %v2402
      %3440 = vmatpush1.bf16.msra.mxu0 %v2401
      %3441 = vmatprep.subr.bf16.mxu0 %v2462
      %3442 = vmatpush2.bf16.msra.mxu0 %v2461
      %3443 = vmatprep.subr.bf16.mxu0 %v2458
      %3444 = vmatpush2.bf16.msra.mxu0 %v2457
      %3445 = vmatprep.subr.bf16.mxu0 %v2454
      %3446 = vmatpush2.bf16.msra.mxu0 %v2453
      %3447 = vmatprep.subr.bf16.mxu0 %v2450
      %3448 = vmatpush2.bf16.msra.mxu0 %v2449
      %3449 = vmatprep.subr.bf16.mxu0 %v2446
      %3450 = vmatpush2.bf16.msra.mxu0 %v2445
      %3451 = vmatprep.subr.bf16.mxu0 %v2442
      %3452 = vmatpush2.bf16.msra.mxu0 %v2441
      %3453 = vmatprep.subr.bf16.mxu0 %v2438
      %3454 = vmatpush2.bf16.msra.mxu0 %v2437
      %3455 = vmatprep.subr.bf16.mxu0 %v2434
      %3456 = vmatpush2.bf16.msra.mxu0 %v2433
      %3457 = vmatprep.mubr.bf16.mxu0 %v834
      %3458 = vmatmul.mubr.bf16.gmra.mxu0 %v833
      %v3459 = vpop.f32.mrf.mxu0
      %v3460 = vadd.f32 0.0, %v3459
      %v3461 = vpop.f32.mrf.mxu0
      %v3462 = vadd.f32 0.0, %v3461
      %v3463 = vpop.f32.mrf.mxu0
      %v3464 = vpop.f32.mrf.mxu0
      %3465 = vdwg.mxu0
      %3466 = vmatprep.subr.bf16.mxu0 %v2494
      %3467 = vmatpush1.bf16.msra.mxu0 %v2493
      %3468 = vmatprep.subr.bf16.mxu0 %v2490
      %3469 = vmatpush1.bf16.msra.mxu0 %v2489
      %3470 = vmatprep.subr.bf16.mxu0 %v2486
      %3471 = vmatpush1.bf16.msra.mxu0 %v2485
      %3472 = vmatprep.subr.bf16.mxu0 %v2482
      %3473 = vmatpush1.bf16.msra.mxu0 %v2481
      %3474 = vmatprep.subr.bf16.mxu0 %v2478
      %3475 = vmatpush1.bf16.msra.mxu0 %v2477
      %3476 = vmatprep.subr.bf16.mxu0 %v2474
      %3477 = vmatpush1.bf16.msra.mxu0 %v2473
      %3478 = vmatprep.subr.bf16.mxu0 %v2470
      %3479 = vmatpush1.bf16.msra.mxu0 %v2469
      %3480 = vmatprep.subr.bf16.mxu0 %v2466
      %3481 = vmatpush1.bf16.msra.mxu0 %v2465
      %3482 = vmatprep.subr.bf16.mxu0 %v2526
      %3483 = vmatpush2.bf16.msra.mxu0 %v2525
      %3484 = vmatprep.subr.bf16.mxu0 %v2522
      %3485 = vmatpush2.bf16.msra.mxu0 %v2521
      %3486 = vmatprep.subr.bf16.mxu0 %v2518
      %3487 = vmatpush2.bf16.msra.mxu0 %v2517
      %3488 = vmatprep.subr.bf16.mxu0 %v2514
      %3489 = vmatpush2.bf16.msra.mxu0 %v2513
      %3490 = vmatprep.subr.bf16.mxu0 %v2510
      %3491 = vmatpush2.bf16.msra.mxu0 %v2509
      %3492 = vmatprep.subr.bf16.mxu0 %v2506
      %3493 = vmatpush2.bf16.msra.mxu0 %v2505
      %3494 = vmatprep.subr.bf16.mxu0 %v2502
      %3495 = vmatpush2.bf16.msra.mxu0 %v2501
      %3496 = vmatprep.subr.bf16.mxu0 %v2498
      %3497 = vmatpush2.bf16.msra.mxu0 %v2497
      %3498 = vmatprep.mubr.bf16.mxu0 %v836
      %3499 = vmatmul.mubr.bf16.gmra.mxu0 %v835
      %v3500 = vpop.f32.mrf.mxu0
      %v3501 = vadd.f32 %v3460, %v3500
      %v3502 = vpop.f32.mrf.mxu0
      %v3503 = vadd.f32 %v3462, %v3502
      %v3504 = vpop.f32.mrf.mxu0
      %v3505 = vpop.f32.mrf.mxu0
      %3506 = vdwg.mxu0
      %3507 = vmatprep.subr.bf16.mxu0 %v2558
      %3508 = vmatpush1.bf16.msra.mxu0 %v2557
      %3509 = vmatprep.subr.bf16.mxu0 %v2554
      %3510 = vmatpush1.bf16.msra.mxu0 %v2553
      %3511 = vmatprep.subr.bf16.mxu0 %v2550
      %3512 = vmatpush1.bf16.msra.mxu0 %v2549
      %3513 = vmatprep.subr.bf16.mxu0 %v2546
      %3514 = vmatpush1.bf16.msra.mxu0 %v2545
      %3515 = vmatprep.subr.bf16.mxu0 %v2542
      %3516 = vmatpush1.bf16.msra.mxu0 %v2541
      %3517 = vmatprep.subr.bf16.mxu0 %v2538
      %3518 = vmatpush1.bf16.msra.mxu0 %v2537
      %3519 = vmatprep.subr.bf16.mxu0 %v2534
      %3520 = vmatpush1.bf16.msra.mxu0 %v2533
      %3521 = vmatprep.subr.bf16.mxu0 %v2530
      %3522 = vmatpush1.bf16.msra.mxu0 %v2529
      %3523 = vmatprep.subr.bf16.mxu0 %v2590
      %3524 = vmatpush2.bf16.msra.mxu0 %v2589
      %3525 = vmatprep.subr.bf16.mxu0 %v2586
      %3526 = vmatpush2.bf16.msra.mxu0 %v2585
      %3527 = vmatprep.subr.bf16.mxu0 %v2582
      %3528 = vmatpush2.bf16.msra.mxu0 %v2581
      %3529 = vmatprep.subr.bf16.mxu0 %v2578
      %3530 = vmatpush2.bf16.msra.mxu0 %v2577
      %3531 = vmatprep.subr.bf16.mxu0 %v2574
      %3532 = vmatpush2.bf16.msra.mxu0 %v2573
      %3533 = vmatprep.subr.bf16.mxu0 %v2570
      %3534 = vmatpush2.bf16.msra.mxu0 %v2569
      %3535 = vmatprep.subr.bf16.mxu0 %v2566
      %3536 = vmatpush2.bf16.msra.mxu0 %v2565
      %3537 = vmatprep.subr.bf16.mxu0 %v2562
      %3538 = vmatpush2.bf16.msra.mxu0 %v2561
      %3539 = vmatprep.mubr.bf16.mxu0 %v838
      %3540 = vmatmul.mubr.bf16.gmra.mxu0 %v837
      %v3541 = vpop.f32.mrf.mxu0
      %v3542 = vadd.f32 %v3501, %v3541
      %v3543 = vpop.f32.mrf.mxu0
      %v3544 = vadd.f32 %v3503, %v3543
      %v3545 = vpop.f32.mrf.mxu0
      %v3546 = vpop.f32.mrf.mxu0
      %3547 = vdwg.mxu0
      %3548 = vmatprep.subr.bf16.mxu0 %v2622
      %3549 = vmatpush1.bf16.msra.mxu0 %v2621
      %3550 = vmatprep.subr.bf16.mxu0 %v2618
      %3551 = vmatpush1.bf16.msra.mxu0 %v2617
      %3552 = vmatprep.subr.bf16.mxu0 %v2614
      %3553 = vmatpush1.bf16.msra.mxu0 %v2613
      %3554 = vmatprep.subr.bf16.mxu0 %v2610
      %3555 = vmatpush1.bf16.msra.mxu0 %v2609
      %3556 = vmatprep.subr.bf16.mxu0 %v2606
      %3557 = vmatpush1.bf16.msra.mxu0 %v2605
      %3558 = vmatprep.subr.bf16.mxu0 %v2602
      %3559 = vmatpush1.bf16.msra.mxu0 %v2601
      %3560 = vmatprep.subr.bf16.mxu0 %v2598
      %3561 = vmatpush1.bf16.msra.mxu0 %v2597
      %3562 = vmatprep.subr.bf16.mxu0 %v2594
      %3563 = vmatpush1.bf16.msra.mxu0 %v2593
      %3564 = vmatprep.subr.bf16.mxu0 %v2654
      %3565 = vmatpush2.bf16.msra.mxu0 %v2653
      %3566 = vmatprep.subr.bf16.mxu0 %v2650
      %3567 = vmatpush2.bf16.msra.mxu0 %v2649
      %3568 = vmatprep.subr.bf16.mxu0 %v2646
      %3569 = vmatpush2.bf16.msra.mxu0 %v2645
      %3570 = vmatprep.subr.bf16.mxu0 %v2642
      %3571 = vmatpush2.bf16.msra.mxu0 %v2641
      %3572 = vmatprep.subr.bf16.mxu0 %v2638
      %3573 = vmatpush2.bf16.msra.mxu0 %v2637
      %3574 = vmatprep.subr.bf16.mxu0 %v2634
      %3575 = vmatpush2.bf16.msra.mxu0 %v2633
      %3576 = vmatprep.subr.bf16.mxu0 %v2630
      %3577 = vmatpush2.bf16.msra.mxu0 %v2629
      %3578 = vmatprep.subr.bf16.mxu0 %v2626
      %3579 = vmatpush2.bf16.msra.mxu0 %v2625
      %3580 = vmatprep.mubr.bf16.mxu0 %v840
      %3581 = vmatmul.mubr.bf16.gmra.mxu0 %v839
      %v3582 = vpop.f32.mrf.mxu0
      %v3583 = vadd.f32 %v3542, %v3582
      %v3584 = vpop.f32.mrf.mxu0
      %v3585 = vadd.f32 %v3544, %v3584
      %v3586 = vpop.f32.mrf.mxu0
      %v3587 = vpop.f32.mrf.mxu0
      %3588 = vdwg.mxu0
      %3589 = vmatprep.subr.bf16.mxu0 %v2686
      %3590 = vmatpush1.bf16.msra.mxu0 %v2685
      %3591 = vmatprep.subr.bf16.mxu0 %v2682
      %3592 = vmatpush1.bf16.msra.mxu0 %v2681
      %3593 = vmatprep.subr.bf16.mxu0 %v2678
      %3594 = vmatpush1.bf16.msra.mxu0 %v2677
      %3595 = vmatprep.subr.bf16.mxu0 %v2674
      %3596 = vmatpush1.bf16.msra.mxu0 %v2673
      %3597 = vmatprep.subr.bf16.mxu0 %v2670
      %3598 = vmatpush1.bf16.msra.mxu0 %v2669
      %3599 = vmatprep.subr.bf16.mxu0 %v2666
      %3600 = vmatpush1.bf16.msra.mxu0 %v2665
      %3601 = vmatprep.subr.bf16.mxu0 %v2662
      %3602 = vmatpush1.bf16.msra.mxu0 %v2661
      %3603 = vmatprep.subr.bf16.mxu0 %v2658
      %3604 = vmatpush1.bf16.msra.mxu0 %v2657
      %3605 = vmatprep.subr.bf16.mxu0 %v2718
      %3606 = vmatpush2.bf16.msra.mxu0 %v2717
      %3607 = vmatprep.subr.bf16.mxu0 %v2714
      %3608 = vmatpush2.bf16.msra.mxu0 %v2713
      %3609 = vmatprep.subr.bf16.mxu0 %v2710
      %3610 = vmatpush2.bf16.msra.mxu0 %v2709
      %3611 = vmatprep.subr.bf16.mxu0 %v2706
      %3612 = vmatpush2.bf16.msra.mxu0 %v2705
      %3613 = vmatprep.subr.bf16.mxu0 %v2702
      %3614 = vmatpush2.bf16.msra.mxu0 %v2701
      %3615 = vmatprep.subr.bf16.mxu0 %v2698
      %3616 = vmatpush2.bf16.msra.mxu0 %v2697
      %3617 = vmatprep.subr.bf16.mxu0 %v2694
      %3618 = vmatpush2.bf16.msra.mxu0 %v2693
      %3619 = vmatprep.subr.bf16.mxu0 %v2690
      %3620 = vmatpush2.bf16.msra.mxu0 %v2689
      %3621 = vmatprep.mubr.bf16.mxu0 %v842
      %3622 = vmatmul.mubr.bf16.gmra.mxu0 %v841
      %v3623 = vpop.f32.mrf.mxu0
      %v3624 = vadd.f32 %v3583, %v3623
      %v3625 = vpop.f32.mrf.mxu0
      %v3626 = vadd.f32 %v3585, %v3625
      %v3627 = vpop.f32.mrf.mxu0
      %v3628 = vpop.f32.mrf.mxu0
      %3629 = vdwg.mxu0
      %3630 = vmatprep.subr.bf16.mxu0 %v2750
      %3631 = vmatpush1.bf16.msra.mxu0 %v2749
      %3632 = vmatprep.subr.bf16.mxu0 %v2746
      %3633 = vmatpush1.bf16.msra.mxu0 %v2745
      %3634 = vmatprep.subr.bf16.mxu0 %v2742
      %3635 = vmatpush1.bf16.msra.mxu0 %v2741
      %3636 = vmatprep.subr.bf16.mxu0 %v2738
      %3637 = vmatpush1.bf16.msra.mxu0 %v2737
      %3638 = vmatprep.subr.bf16.mxu0 %v2734
      %3639 = vmatpush1.bf16.msra.mxu0 %v2733
      %3640 = vmatprep.subr.bf16.mxu0 %v2730
      %3641 = vmatpush1.bf16.msra.mxu0 %v2729
      %3642 = vmatprep.subr.bf16.mxu0 %v2726
      %3643 = vmatpush1.bf16.msra.mxu0 %v2725
      %3644 = vmatprep.subr.bf16.mxu0 %v2722
      %3645 = vmatpush1.bf16.msra.mxu0 %v2721
      %3646 = vmatprep.subr.bf16.mxu0 %v2782
      %3647 = vmatpush2.bf16.msra.mxu0 %v2781
      %3648 = vmatprep.subr.bf16.mxu0 %v2778
      %3649 = vmatpush2.bf16.msra.mxu0 %v2777
      %3650 = vmatprep.subr.bf16.mxu0 %v2774
      %3651 = vmatpush2.bf16.msra.mxu0 %v2773
      %3652 = vmatprep.subr.bf16.mxu0 %v2770
      %3653 = vmatpush2.bf16.msra.mxu0 %v2769
      %3654 = vmatprep.subr.bf16.mxu0 %v2766
      %3655 = vmatpush2.bf16.msra.mxu0 %v2765
      %3656 = vmatprep.subr.bf16.mxu0 %v2762
      %3657 = vmatpush2.bf16.msra.mxu0 %v2761
      %3658 = vmatprep.subr.bf16.mxu0 %v2758
      %3659 = vmatpush2.bf16.msra.mxu0 %v2757
      %3660 = vmatprep.subr.bf16.mxu0 %v2754
      %3661 = vmatpush2.bf16.msra.mxu0 %v2753
      %3662 = vmatprep.mubr.bf16.mxu0 %v844
      %3663 = vmatmul.mubr.bf16.gmra.mxu0 %v843
      %v3664 = vpop.f32.mrf.mxu0
      %v3665 = vadd.f32 %v3624, %v3664
      %v3666 = vpop.f32.mrf.mxu0
      %v3667 = vadd.f32 %v3626, %v3666
      %v3668 = vpop.f32.mrf.mxu0
      %v3669 = vpop.f32.mrf.mxu0
      %3670 = vdwg.mxu0
      %3671 = vmatprep.subr.bf16.mxu0 %v2814
      %3672 = vmatpush1.bf16.msra.mxu0 %v2813
      %3673 = vmatprep.subr.bf16.mxu0 %v2810
      %3674 = vmatpush1.bf16.msra.mxu0 %v2809
      %3675 = vmatprep.subr.bf16.mxu0 %v2806
      %3676 = vmatpush1.bf16.msra.mxu0 %v2805
      %3677 = vmatprep.subr.bf16.mxu0 %v2802
      %3678 = vmatpush1.bf16.msra.mxu0 %v2801
      %3679 = vmatprep.subr.bf16.mxu0 %v2798
      %3680 = vmatpush1.bf16.msra.mxu0 %v2797
      %3681 = vmatprep.subr.bf16.mxu0 %v2794
      %3682 = vmatpush1.bf16.msra.mxu0 %v2793
      %3683 = vmatprep.subr.bf16.mxu0 %v2790
      %3684 = vmatpush1.bf16.msra.mxu0 %v2789
      %3685 = vmatprep.subr.bf16.mxu0 %v2786
      %3686 = vmatpush1.bf16.msra.mxu0 %v2785
      %3687 = vmatprep.subr.bf16.mxu0 %v2846
      %3688 = vmatpush2.bf16.msra.mxu0 %v2845
      %3689 = vmatprep.subr.bf16.mxu0 %v2842
      %3690 = vmatpush2.bf16.msra.mxu0 %v2841
      %3691 = vmatprep.subr.bf16.mxu0 %v2838
      %3692 = vmatpush2.bf16.msra.mxu0 %v2837
      %3693 = vmatprep.subr.bf16.mxu0 %v2834
      %3694 = vmatpush2.bf16.msra.mxu0 %v2833
      %3695 = vmatprep.subr.bf16.mxu0 %v2830
      %3696 = vmatpush2.bf16.msra.mxu0 %v2829
      %3697 = vmatprep.subr.bf16.mxu0 %v2826
      %3698 = vmatpush2.bf16.msra.mxu0 %v2825
      %3699 = vmatprep.subr.bf16.mxu0 %v2822
      %3700 = vmatpush2.bf16.msra.mxu0 %v2821
      %3701 = vmatprep.subr.bf16.mxu0 %v2818
      %3702 = vmatpush2.bf16.msra.mxu0 %v2817
      %3703 = vmatprep.mubr.bf16.mxu0 %v846
      %3704 = vmatmul.mubr.bf16.gmra.mxu0 %v845
      %v3705 = vpop.f32.mrf.mxu0
      %v3706 = vadd.f32 %v3665, %v3705
      %v3707 = vpop.f32.mrf.mxu0
      %v3708 = vadd.f32 %v3667, %v3707
      %v3709 = vpop.f32.mrf.mxu0
      %v3710 = vpop.f32.mrf.mxu0
      %3711 = vdwg.mxu0
      %3712 = vmatprep.subr.bf16.mxu0 %v2878
      %3713 = vmatpush1.bf16.msra.mxu0 %v2877
      %3714 = vmatprep.subr.bf16.mxu0 %v2874
      %3715 = vmatpush1.bf16.msra.mxu0 %v2873
      %3716 = vmatprep.subr.bf16.mxu0 %v2870
      %3717 = vmatpush1.bf16.msra.mxu0 %v2869
      %3718 = vmatprep.subr.bf16.mxu0 %v2866
      %3719 = vmatpush1.bf16.msra.mxu0 %v2865
      %3720 = vmatprep.subr.bf16.mxu0 %v2862
      %3721 = vmatpush1.bf16.msra.mxu0 %v2861
      %3722 = vmatprep.subr.bf16.mxu0 %v2858
      %3723 = vmatpush1.bf16.msra.mxu0 %v2857
      %3724 = vmatprep.subr.bf16.mxu0 %v2854
      %3725 = vmatpush1.bf16.msra.mxu0 %v2853
      %3726 = vmatprep.subr.bf16.mxu0 %v2850
      %3727 = vmatpush1.bf16.msra.mxu0 %v2849
      %3728 = vmatprep.subr.bf16.mxu0 %v2910
      %3729 = vmatpush2.bf16.msra.mxu0 %v2909
      %3730 = vmatprep.subr.bf16.mxu0 %v2906
      %3731 = vmatpush2.bf16.msra.mxu0 %v2905
      %3732 = vmatprep.subr.bf16.mxu0 %v2902
      %3733 = vmatpush2.bf16.msra.mxu0 %v2901
      %3734 = vmatprep.subr.bf16.mxu0 %v2898
      %3735 = vmatpush2.bf16.msra.mxu0 %v2897
      %3736 = vmatprep.subr.bf16.mxu0 %v2894
      %3737 = vmatpush2.bf16.msra.mxu0 %v2893
      %3738 = vmatprep.subr.bf16.mxu0 %v2890
      %3739 = vmatpush2.bf16.msra.mxu0 %v2889
      %3740 = vmatprep.subr.bf16.mxu0 %v2886
      %3741 = vmatpush2.bf16.msra.mxu0 %v2885
      %3742 = vmatprep.subr.bf16.mxu0 %v2882
      %3743 = vmatpush2.bf16.msra.mxu0 %v2881
      %3744 = vmatprep.mubr.bf16.mxu0 %v848
      %3745 = vmatmul.mubr.bf16.gmra.mxu0 %v847
      %v3746 = vpop.f32.mrf.mxu0
      %v3747 = vadd.f32 %v3706, %v3746
      %v3748 = vpop.f32.mrf.mxu0
      %v3749 = vadd.f32 %v3708, %v3748
      %v3750 = vpop.f32.mrf.mxu0
      %v3751 = vpop.f32.mrf.mxu0
      %3752 = vdwg.mxu0
      %3753 = vmatprep.subr.bf16.mxu0 %v2432
      %3754 = vmatpush1.bf16.msra.mxu0 %v2431
      %3755 = vmatprep.subr.bf16.mxu0 %v2428
      %3756 = vmatpush1.bf16.msra.mxu0 %v2427
      %3757 = vmatprep.subr.bf16.mxu0 %v2424
      %3758 = vmatpush1.bf16.msra.mxu0 %v2423
      %3759 = vmatprep.subr.bf16.mxu0 %v2420
      %3760 = vmatpush1.bf16.msra.mxu0 %v2419
      %3761 = vmatprep.subr.bf16.mxu0 %v2416
      %3762 = vmatpush1.bf16.msra.mxu0 %v2415
      %3763 = vmatprep.subr.bf16.mxu0 %v2412
      %3764 = vmatpush1.bf16.msra.mxu0 %v2411
      %3765 = vmatprep.subr.bf16.mxu0 %v2408
      %3766 = vmatpush1.bf16.msra.mxu0 %v2407
      %3767 = vmatprep.subr.bf16.mxu0 %v2404
      %3768 = vmatpush1.bf16.msra.mxu0 %v2403
      %3769 = vmatprep.subr.bf16.mxu0 %v2464
      %3770 = vmatpush2.bf16.msra.mxu0 %v2463
      %3771 = vmatprep.subr.bf16.mxu0 %v2460
      %3772 = vmatpush2.bf16.msra.mxu0 %v2459
      %3773 = vmatprep.subr.bf16.mxu0 %v2456
      %3774 = vmatpush2.bf16.msra.mxu0 %v2455
      %3775 = vmatprep.subr.bf16.mxu0 %v2452
      %3776 = vmatpush2.bf16.msra.mxu0 %v2451
      %3777 = vmatprep.subr.bf16.mxu0 %v2448
      %3778 = vmatpush2.bf16.msra.mxu0 %v2447
      %3779 = vmatprep.subr.bf16.mxu0 %v2444
      %3780 = vmatpush2.bf16.msra.mxu0 %v2443
      %3781 = vmatprep.subr.bf16.mxu0 %v2440
      %3782 = vmatpush2.bf16.msra.mxu0 %v2439
      %3783 = vmatprep.subr.bf16.mxu0 %v2436
      %3784 = vmatpush2.bf16.msra.mxu0 %v2435
      %3785 = vmatprep.mubr.bf16.mxu0 %v834
      %3786 = vmatmul.mubr.bf16.gmra.mxu0 %v833
      %v3787 = vpop.f32.mrf.mxu0
      %v3788 = vadd.f32 0.0, %v3787
      %v3789 = vpop.f32.mrf.mxu0
      %v3790 = vadd.f32 0.0, %v3789
      %v3791 = vpop.f32.mrf.mxu0
      %v3792 = vpop.f32.mrf.mxu0
      %3793 = vdwg.mxu0
      %3794 = vmatprep.subr.bf16.mxu0 %v2496
      %3795 = vmatpush1.bf16.msra.mxu0 %v2495
      %3796 = vmatprep.subr.bf16.mxu0 %v2492
      %3797 = vmatpush1.bf16.msra.mxu0 %v2491
      %3798 = vmatprep.subr.bf16.mxu0 %v2488
      %3799 = vmatpush1.bf16.msra.mxu0 %v2487
      %3800 = vmatprep.subr.bf16.mxu0 %v2484
      %3801 = vmatpush1.bf16.msra.mxu0 %v2483
      %3802 = vmatprep.subr.bf16.mxu0 %v2480
      %3803 = vmatpush1.bf16.msra.mxu0 %v2479
      %3804 = vmatprep.subr.bf16.mxu0 %v2476
      %3805 = vmatpush1.bf16.msra.mxu0 %v2475
      %3806 = vmatprep.subr.bf16.mxu0 %v2472
      %3807 = vmatpush1.bf16.msra.mxu0 %v2471
      %3808 = vmatprep.subr.bf16.mxu0 %v2468
      %3809 = vmatpush1.bf16.msra.mxu0 %v2467
      %3810 = vmatprep.subr.bf16.mxu0 %v2528
      %3811 = vmatpush2.bf16.msra.mxu0 %v2527
      %3812 = vmatprep.subr.bf16.mxu0 %v2524
      %3813 = vmatpush2.bf16.msra.mxu0 %v2523
      %3814 = vmatprep.subr.bf16.mxu0 %v2520
      %3815 = vmatpush2.bf16.msra.mxu0 %v2519
      %3816 = vmatprep.subr.bf16.mxu0 %v2516
      %3817 = vmatpush2.bf16.msra.mxu0 %v2515
      %3818 = vmatprep.subr.bf16.mxu0 %v2512
      %3819 = vmatpush2.bf16.msra.mxu0 %v2511
      %3820 = vmatprep.subr.bf16.mxu0 %v2508
      %3821 = vmatpush2.bf16.msra.mxu0 %v2507
      %3822 = vmatprep.subr.bf16.mxu0 %v2504
      %3823 = vmatpush2.bf16.msra.mxu0 %v2503
      %3824 = vmatprep.subr.bf16.mxu0 %v2500
      %3825 = vmatpush2.bf16.msra.mxu0 %v2499
      %3826 = vmatprep.mubr.bf16.mxu0 %v836
      %3827 = vmatmul.mubr.bf16.gmra.mxu0 %v835
      %v3828 = vpop.f32.mrf.mxu0
      %v3829 = vadd.f32 %v3788, %v3828
      %v3830 = vpop.f32.mrf.mxu0
      %v3831 = vadd.f32 %v3790, %v3830
      %v3832 = vpop.f32.mrf.mxu0
      %v3833 = vpop.f32.mrf.mxu0
      %3834 = vdwg.mxu0
      %3835 = vmatprep.subr.bf16.mxu0 %v2560
      %3836 = vmatpush1.bf16.msra.mxu0 %v2559
      %3837 = vmatprep.subr.bf16.mxu0 %v2556
      %3838 = vmatpush1.bf16.msra.mxu0 %v2555
      %3839 = vmatprep.subr.bf16.mxu0 %v2552
      %3840 = vmatpush1.bf16.msra.mxu0 %v2551
      %3841 = vmatprep.subr.bf16.mxu0 %v2548
      %3842 = vmatpush1.bf16.msra.mxu0 %v2547
      %3843 = vmatprep.subr.bf16.mxu0 %v2544
      %3844 = vmatpush1.bf16.msra.mxu0 %v2543
      %3845 = vmatprep.subr.bf16.mxu0 %v2540
      %3846 = vmatpush1.bf16.msra.mxu0 %v2539
      %3847 = vmatprep.subr.bf16.mxu0 %v2536
      %3848 = vmatpush1.bf16.msra.mxu0 %v2535
      %3849 = vmatprep.subr.bf16.mxu0 %v2532
      %3850 = vmatpush1.bf16.msra.mxu0 %v2531
      %3851 = vmatprep.subr.bf16.mxu0 %v2592
      %3852 = vmatpush2.bf16.msra.mxu0 %v2591
      %3853 = vmatprep.subr.bf16.mxu0 %v2588
      %3854 = vmatpush2.bf16.msra.mxu0 %v2587
      %3855 = vmatprep.subr.bf16.mxu0 %v2584
      %3856 = vmatpush2.bf16.msra.mxu0 %v2583
      %3857 = vmatprep.subr.bf16.mxu0 %v2580
      %3858 = vmatpush2.bf16.msra.mxu0 %v2579
      %3859 = vmatprep.subr.bf16.mxu0 %v2576
      %3860 = vmatpush2.bf16.msra.mxu0 %v2575
      %3861 = vmatprep.subr.bf16.mxu0 %v2572
      %3862 = vmatpush2.bf16.msra.mxu0 %v2571
      %3863 = vmatprep.subr.bf16.mxu0 %v2568
      %3864 = vmatpush2.bf16.msra.mxu0 %v2567
      %3865 = vmatprep.subr.bf16.mxu0 %v2564
      %3866 = vmatpush2.bf16.msra.mxu0 %v2563
      %3867 = vmatprep.mubr.bf16.mxu0 %v838
      %3868 = vmatmul.mubr.bf16.gmra.mxu0 %v837
      %v3869 = vpop.f32.mrf.mxu0
      %v3870 = vadd.f32 %v3829, %v3869
      %v3871 = vpop.f32.mrf.mxu0
      %v3872 = vadd.f32 %v3831, %v3871
      %v3873 = vpop.f32.mrf.mxu0
      %v3874 = vpop.f32.mrf.mxu0
      %3875 = vdwg.mxu0
      %3876 = vmatprep.subr.bf16.mxu0 %v2624
      %3877 = vmatpush1.bf16.msra.mxu0 %v2623
      %3878 = vmatprep.subr.bf16.mxu0 %v2620
      %3879 = vmatpush1.bf16.msra.mxu0 %v2619
      %3880 = vmatprep.subr.bf16.mxu0 %v2616
      %3881 = vmatpush1.bf16.msra.mxu0 %v2615
      %3882 = vmatprep.subr.bf16.mxu0 %v2612
      %3883 = vmatpush1.bf16.msra.mxu0 %v2611
      %3884 = vmatprep.subr.bf16.mxu0 %v2608
      %3885 = vmatpush1.bf16.msra.mxu0 %v2607
      %3886 = vmatprep.subr.bf16.mxu0 %v2604
      %3887 = vmatpush1.bf16.msra.mxu0 %v2603
      %3888 = vmatprep.subr.bf16.mxu0 %v2600
      %3889 = vmatpush1.bf16.msra.mxu0 %v2599
      %3890 = vmatprep.subr.bf16.mxu0 %v2596
      %3891 = vmatpush1.bf16.msra.mxu0 %v2595
      %3892 = vmatprep.subr.bf16.mxu0 %v2656
      %3893 = vmatpush2.bf16.msra.mxu0 %v2655
      %3894 = vmatprep.subr.bf16.mxu0 %v2652
      %3895 = vmatpush2.bf16.msra.mxu0 %v2651
      %3896 = vmatprep.subr.bf16.mxu0 %v2648
      %3897 = vmatpush2.bf16.msra.mxu0 %v2647
      %3898 = vmatprep.subr.bf16.mxu0 %v2644
      %3899 = vmatpush2.bf16.msra.mxu0 %v2643
      %3900 = vmatprep.subr.bf16.mxu0 %v2640
      %3901 = vmatpush2.bf16.msra.mxu0 %v2639
      %3902 = vmatprep.subr.bf16.mxu0 %v2636
      %3903 = vmatpush2.bf16.msra.mxu0 %v2635
      %3904 = vmatprep.subr.bf16.mxu0 %v2632
      %3905 = vmatpush2.bf16.msra.mxu0 %v2631
      %3906 = vmatprep.subr.bf16.mxu0 %v2628
      %3907 = vmatpush2.bf16.msra.mxu0 %v2627
      %3908 = vmatprep.mubr.bf16.mxu0 %v840
      %3909 = vmatmul.mubr.bf16.gmra.mxu0 %v839
      %v3910 = vpop.f32.mrf.mxu0
      %v3911 = vadd.f32 %v3870, %v3910
      %v3912 = vpop.f32.mrf.mxu0
      %v3913 = vadd.f32 %v3872, %v3912
      %v3914 = vpop.f32.mrf.mxu0
      %v3915 = vpop.f32.mrf.mxu0
      %3916 = vdwg.mxu0
      %3917 = vmatprep.subr.bf16.mxu0 %v2688
      %3918 = vmatpush1.bf16.msra.mxu0 %v2687
      %3919 = vmatprep.subr.bf16.mxu0 %v2684
      %3920 = vmatpush1.bf16.msra.mxu0 %v2683
      %3921 = vmatprep.subr.bf16.mxu0 %v2680
      %3922 = vmatpush1.bf16.msra.mxu0 %v2679
      %3923 = vmatprep.subr.bf16.mxu0 %v2676
      %3924 = vmatpush1.bf16.msra.mxu0 %v2675
      %3925 = vmatprep.subr.bf16.mxu0 %v2672
      %3926 = vmatpush1.bf16.msra.mxu0 %v2671
      %3927 = vmatprep.subr.bf16.mxu0 %v2668
      %3928 = vmatpush1.bf16.msra.mxu0 %v2667
      %3929 = vmatprep.subr.bf16.mxu0 %v2664
      %3930 = vmatpush1.bf16.msra.mxu0 %v2663
      %3931 = vmatprep.subr.bf16.mxu0 %v2660
      %3932 = vmatpush1.bf16.msra.mxu0 %v2659
      %3933 = vmatprep.subr.bf16.mxu0 %v2720
      %3934 = vmatpush2.bf16.msra.mxu0 %v2719
      %3935 = vmatprep.subr.bf16.mxu0 %v2716
      %3936 = vmatpush2.bf16.msra.mxu0 %v2715
      %3937 = vmatprep.subr.bf16.mxu0 %v2712
      %3938 = vmatpush2.bf16.msra.mxu0 %v2711
      %3939 = vmatprep.subr.bf16.mxu0 %v2708
      %3940 = vmatpush2.bf16.msra.mxu0 %v2707
      %3941 = vmatprep.subr.bf16.mxu0 %v2704
      %3942 = vmatpush2.bf16.msra.mxu0 %v2703
      %3943 = vmatprep.subr.bf16.mxu0 %v2700
      %3944 = vmatpush2.bf16.msra.mxu0 %v2699
      %3945 = vmatprep.subr.bf16.mxu0 %v2696
      %3946 = vmatpush2.bf16.msra.mxu0 %v2695
      %3947 = vmatprep.subr.bf16.mxu0 %v2692
      %3948 = vmatpush2.bf16.msra.mxu0 %v2691
      %3949 = vmatprep.mubr.bf16.mxu0 %v842
      %3950 = vmatmul.mubr.bf16.gmra.mxu0 %v841
      %v3951 = vpop.f32.mrf.mxu0
      %v3952 = vadd.f32 %v3911, %v3951
      %v3953 = vpop.f32.mrf.mxu0
      %v3954 = vadd.f32 %v3913, %v3953
      %v3955 = vpop.f32.mrf.mxu0
      %v3956 = vpop.f32.mrf.mxu0
      %3957 = vdwg.mxu0
      %3958 = vmatprep.subr.bf16.mxu0 %v2752
      %3959 = vmatpush1.bf16.msra.mxu0 %v2751
      %3960 = vmatprep.subr.bf16.mxu0 %v2748
      %3961 = vmatpush1.bf16.msra.mxu0 %v2747
      %3962 = vmatprep.subr.bf16.mxu0 %v2744
      %3963 = vmatpush1.bf16.msra.mxu0 %v2743
      %3964 = vmatprep.subr.bf16.mxu0 %v2740
      %3965 = vmatpush1.bf16.msra.mxu0 %v2739
      %3966 = vmatprep.subr.bf16.mxu0 %v2736
      %3967 = vmatpush1.bf16.msra.mxu0 %v2735
      %3968 = vmatprep.subr.bf16.mxu0 %v2732
      %3969 = vmatpush1.bf16.msra.mxu0 %v2731
      %3970 = vmatprep.subr.bf16.mxu0 %v2728
      %3971 = vmatpush1.bf16.msra.mxu0 %v2727
      %3972 = vmatprep.subr.bf16.mxu0 %v2724
      %3973 = vmatpush1.bf16.msra.mxu0 %v2723
      %3974 = vmatprep.subr.bf16.mxu0 %v2784
      %3975 = vmatpush2.bf16.msra.mxu0 %v2783
      %3976 = vmatprep.subr.bf16.mxu0 %v2780
      %3977 = vmatpush2.bf16.msra.mxu0 %v2779
      %3978 = vmatprep.subr.bf16.mxu0 %v2776
      %3979 = vmatpush2.bf16.msra.mxu0 %v2775
      %3980 = vmatprep.subr.bf16.mxu0 %v2772
      %3981 = vmatpush2.bf16.msra.mxu0 %v2771
      %3982 = vmatprep.subr.bf16.mxu0 %v2768
      %3983 = vmatpush2.bf16.msra.mxu0 %v2767
      %3984 = vmatprep.subr.bf16.mxu0 %v2764
      %3985 = vmatpush2.bf16.msra.mxu0 %v2763
      %3986 = vmatprep.subr.bf16.mxu0 %v2760
      %3987 = vmatpush2.bf16.msra.mxu0 %v2759
      %3988 = vmatprep.subr.bf16.mxu0 %v2756
      %3989 = vmatpush2.bf16.msra.mxu0 %v2755
      %3990 = vmatprep.mubr.bf16.mxu0 %v844
      %3991 = vmatmul.mubr.bf16.gmra.mxu0 %v843
      %v3992 = vpop.f32.mrf.mxu0
      %v3993 = vadd.f32 %v3952, %v3992
      %v3994 = vpop.f32.mrf.mxu0
      %v3995 = vadd.f32 %v3954, %v3994
      %v3996 = vpop.f32.mrf.mxu0
      %v3997 = vpop.f32.mrf.mxu0
      %3998 = vdwg.mxu0
      %3999 = vmatprep.subr.bf16.mxu0 %v2816
      %4000 = vmatpush1.bf16.msra.mxu0 %v2815
      %4001 = vmatprep.subr.bf16.mxu0 %v2812
      %4002 = vmatpush1.bf16.msra.mxu0 %v2811
      %4003 = vmatprep.subr.bf16.mxu0 %v2808
      %4004 = vmatpush1.bf16.msra.mxu0 %v2807
      %4005 = vmatprep.subr.bf16.mxu0 %v2804
      %4006 = vmatpush1.bf16.msra.mxu0 %v2803
      %4007 = vmatprep.subr.bf16.mxu0 %v2800
      %4008 = vmatpush1.bf16.msra.mxu0 %v2799
      %4009 = vmatprep.subr.bf16.mxu0 %v2796
      %4010 = vmatpush1.bf16.msra.mxu0 %v2795
      %4011 = vmatprep.subr.bf16.mxu0 %v2792
      %4012 = vmatpush1.bf16.msra.mxu0 %v2791
      %4013 = vmatprep.subr.bf16.mxu0 %v2788
      %4014 = vmatpush1.bf16.msra.mxu0 %v2787
      %4015 = vmatprep.subr.bf16.mxu0 %v2848
      %4016 = vmatpush2.bf16.msra.mxu0 %v2847
      %4017 = vmatprep.subr.bf16.mxu0 %v2844
      %4018 = vmatpush2.bf16.msra.mxu0 %v2843
      %4019 = vmatprep.subr.bf16.mxu0 %v2840
      %4020 = vmatpush2.bf16.msra.mxu0 %v2839
      %4021 = vmatprep.subr.bf16.mxu0 %v2836
      %4022 = vmatpush2.bf16.msra.mxu0 %v2835
      %4023 = vmatprep.subr.bf16.mxu0 %v2832
      %4024 = vmatpush2.bf16.msra.mxu0 %v2831
      %4025 = vmatprep.subr.bf16.mxu0 %v2828
      %4026 = vmatpush2.bf16.msra.mxu0 %v2827
      %4027 = vmatprep.subr.bf16.mxu0 %v2824
      %4028 = vmatpush2.bf16.msra.mxu0 %v2823
      %4029 = vmatprep.subr.bf16.mxu0 %v2820
      %4030 = vmatpush2.bf16.msra.mxu0 %v2819
      %4031 = vmatprep.mubr.bf16.mxu0 %v846
      %4032 = vmatmul.mubr.bf16.gmra.mxu0 %v845
      %v4033 = vpop.f32.mrf.mxu0
      %v4034 = vadd.f32 %v3993, %v4033
      %v4035 = vpop.f32.mrf.mxu0
      %v4036 = vadd.f32 %v3995, %v4035
      %v4037 = vpop.f32.mrf.mxu0
      %v4038 = vpop.f32.mrf.mxu0
      %4039 = vdwg.mxu0
      %4040 = vmatprep.subr.bf16.mxu0 %v2880
      %4041 = vmatpush1.bf16.msra.mxu0 %v2879
      %4042 = vmatprep.subr.bf16.mxu0 %v2876
      %4043 = vmatpush1.bf16.msra.mxu0 %v2875
      %4044 = vmatprep.subr.bf16.mxu0 %v2872
      %4045 = vmatpush1.bf16.msra.mxu0 %v2871
      %4046 = vmatprep.subr.bf16.mxu0 %v2868
      %4047 = vmatpush1.bf16.msra.mxu0 %v2867
      %4048 = vmatprep.subr.bf16.mxu0 %v2864
      %4049 = vmatpush1.bf16.msra.mxu0 %v2863
      %4050 = vmatprep.subr.bf16.mxu0 %v2860
      %4051 = vmatpush1.bf16.msra.mxu0 %v2859
      %4052 = vmatprep.subr.bf16.mxu0 %v2856
      %4053 = vmatpush1.bf16.msra.mxu0 %v2855
      %4054 = vmatprep.subr.bf16.mxu0 %v2852
      %4055 = vmatpush1.bf16.msra.mxu0 %v2851
      %4056 = vmatprep.subr.bf16.mxu0 %v2912
      %4057 = vmatpush2.bf16.msra.mxu0 %v2911
      %4058 = vmatprep.subr.bf16.mxu0 %v2908
      %4059 = vmatpush2.bf16.msra.mxu0 %v2907
      %4060 = vmatprep.subr.bf16.mxu0 %v2904
      %4061 = vmatpush2.bf16.msra.mxu0 %v2903
      %4062 = vmatprep.subr.bf16.mxu0 %v2900
      %4063 = vmatpush2.bf16.msra.mxu0 %v2899
      %4064 = vmatprep.subr.bf16.mxu0 %v2896
      %4065 = vmatpush2.bf16.msra.mxu0 %v2895
      %4066 = vmatprep.subr.bf16.mxu0 %v2892
      %4067 = vmatpush2.bf16.msra.mxu0 %v2891
      %4068 = vmatprep.subr.bf16.mxu0 %v2888
      %4069 = vmatpush2.bf16.msra.mxu0 %v2887
      %4070 = vmatprep.subr.bf16.mxu0 %v2884
      %4071 = vmatpush2.bf16.msra.mxu0 %v2883
      %4072 = vmatprep.mubr.bf16.mxu0 %v848
      %4073 = vmatmul.mubr.bf16.gmra.mxu0 %v847
      %v4074 = vpop.f32.mrf.mxu0
      %v4075 = vadd.f32 %v4034, %v4074
      %v4076 = vpop.f32.mrf.mxu0
      %v4077 = vadd.f32 %v4036, %v4076
      %v4078 = vpop.f32.mrf.mxu0
      %v4079 = vpop.f32.mrf.mxu0
      %4080 = vdwg.mxu0
      %v4081 = vadd.f32 %v285, %v3747
      %v4082 = vadd.f32 %v286, %v3749
      %v4083 = vadd.f32 %v287, %v4075
      %v4084 = vadd.f32 %v288, %v4077
      %4085 = vst [vmem:[#allocation2] sm:$0xff] %v4081
      %4086 = vst [vmem:[#allocation2 + $0x8] sm:$0xff] %v4082
      %4087 = vst [vmem:[#allocation2 + $0x10] sm:$0xff] %v4083
      %4088 = vst [vmem:[#allocation2 + $0x18] sm:$0xff] %v4084
      %p4089 = scmp.eq.s32.totalorder %s21, 1
      // Predicated region
      $region37: #{embedder_forward.8} parent=31 // pred_check
        %p4090 = pneg %p4089
      $region38: #{embedder_forward.8} parent=31 // pred_check_branch
        %4092 = sbr.rel (%p4090) target = $region40
      $region39: #{embedder_forward.8} parent=31 // pred_region
        %v4093 = vld [vmem:[#allocation2] sm:$0xff]
        %v4094 = vld [vmem:[#allocation2 + $0x8] sm:$0xff]
        %v4095 = vld [vmem:[#allocation2 + $0x10] sm:$0xff]
        %v4096 = vld [vmem:[#allocation2 + $0x18] sm:$0xff]
        %v4097 = vld [vmem:[%s265] sm:$0xf]
        %v4099 = vlaneseq
        %v4100 = vshrl.u32 %v4099, 7
        %v4101 = vsub.s32 0, %v4100
        %v4102 = vrot.slane %v4097, %v4101
        %v4103 = vlaneseq
        %v4104 = vshrl.u32 %v4103, 7
        %v4105 = vsub.s32 1, %v4104
        %v4106 = vrot.slane %v4097, %v4105
        %v4107 = vlaneseq
        %v4108 = vshrl.u32 %v4107, 7
        %v4109 = vsub.s32 2, %v4108
        %v4110 = vrot.slane %v4097, %v4109
        %v4111 = vlaneseq
        %v4112 = vshrl.u32 %v4111, 7
        %v4113 = vsub.s32 3, %v4112
        %v4114 = vrot.slane %v4097, %v4113
        %v4119 = vadd.f32 %v4093, %v4102
        %v4120 = vadd.f32 %v4094, %v4106
        %v4121 = vadd.f32 %v4095, %v4110
        %v4122 = vadd.f32 %v4096, %v4114
        %vm4123 = vcmp.ge.f32.partialorder %v4119, 0.0
        %vm4124 = vcmp.ge.f32.partialorder %v4120, 0.0
        %vm4125 = vcmp.ge.f32.partialorder %v4121, 0.0
        %vm4126 = vcmp.ge.f32.partialorder %v4122, 0.0
        %v4127 = vmul.f32 %v4119, 0.2
        %v4128 = vmul.f32 %v4120, 0.2
        %v4129 = vmul.f32 %v4121, 0.2
        %v4130 = vmul.f32 %v4122, 0.2
        %v4131 = vsel %vm4123, %v4119, %v4127
        %v4132 = vsel %vm4124, %v4120, %v4128
        %v4133 = vsel %vm4125, %v4121, %v4129
        %v4134 = vsel %vm4126, %v4122, %v4130
        %v4135 = vpack.c.bf16 %v4131, %v4131
        %v4136 = vpack.c.bf16 %v4132, %v4132
        %v4137 = vpack.c.bf16 %v4133, %v4133
        %v4138 = vpack.c.bf16 %v4134, %v4134
        %v4143 = vunpack.c.l.b16 %v4135
        %v4144 = vunpack.c.l.b16 %v4136
        %v4145 = vunpack.c.l.b16 %v4137
        %v4146 = vunpack.c.l.b16 %v4138
        %v4147 = vpack.c.b16 %v4144, %v4143
        %v4148 = vpack.c.b16 %v4146, %v4145
        %4151 = vst [vmem:[%s275] sm:$0xff] %v4147
        %4152 = vst [vmem:[%s275 + $0x8] sm:$0xff] %v4148
      $region40: #{embedder_forward.8} parent=31 // pred_fallthru
        _
      %s4153 = smul.u32 4, %s20
      %p4154 = scmp.lt.s32.totalorder %s19, 0
      %s4155 = scalar_select %p4154, %s19, 0
      %p4156 = scmp.lt.s32.totalorder %s4153, 3
      %s4157 = scalar_select %p4156, %s4153, 3
      %s4158 = smul.addr %s4155, 4
      %s4159 = sadd.s32 %s4157, %s4158
      %s4160 = smul.addr %s4159, 4
      %s4161 = scalar_lea.vmem %s3, %s4160
      // Predicated region
      $region41: #{embedder_forward.8} parent=31 // pred_check
        %p4162 = pneg %p135
      $region42: #{embedder_forward.8} parent=31 // pred_check_branch
        %4164 = sbr.rel (%p4162) target = $region44
      $region43: #{embedder_forward.8} parent=31 // pred_region
        %s4165 = smul.u32 4, %s20
      $region44: #{embedder_forward.8} parent=31 // pred_fallthru
        _
      // Predicated region
      $region45: #{embedder_forward.8} parent=31 // pred_check
        %p4166 = pneg %p135
      $region46: #{embedder_forward.8} parent=31 // pred_check_branch
        %4168 = sbr.rel (%p4166) target = $region48
      $region47: #{embedder_forward.8} parent=31 // pred_region
        %s4169 = smul.u32 4, %s20
        %p4170 = scmp.lt.s32.totalorder %s19, 0
        %s4171 = scalar_select %p4170, %s19, 0
        %p4172 = scmp.lt.s32.totalorder %s4169, 3
        %s4173 = scalar_select %p4172, %s4169, 3
        %s4174 = smul.addr %s4171, 4
        %s4175 = sadd.s32 %s4173, %s4174
        %s4176 = smul.addr %s4175, 4
        %s4177 = scalar_lea.vmem %s3, %s4176
      $region48: #{embedder_forward.8} parent=31 // pred_fallthru
        _
    $region32: #{embedder_forward.8} parent=5 // pred_fallthru
      _
    %p4178 = scmp.le.s32.totalorder 2, %s9
    // Predicated region
    $region49: #{embedder_forward.8} parent=5 // pred_check
      %p4179 = pneg %p4178
    $region50: #{embedder_forward.8} parent=5 // pred_check_branch
      %4181 = sbr.rel (%p4179) target = $region52
    $region51: #{embedder_forward.8} parent=5 // pred_region
      %s4182 = ssub.s32 %s9, 2
    $region52: #{embedder_forward.8} parent=5 // pred_fallthru
      _
  $region6: #{embedder_forward.8} parent=0 // loop_footer
    %s13 = sadd.s32 1, %s9
  $region7: #{embedder_forward.8} parent=0 // loop_footer_branch
    %8 = sbr.rel target = $region3
  $region8: #{embedder_forward.8} parent=0 // loop_exit
    _

</llo_original>
